<compile_context>
chip_gen: v6e
topology: v6e:2x2x1
jax: 0.10.0
libtpu: 0.0.40
codegen_flags: <defaults>
</compile_context>

<pallas_src>
import functools
import math

import jax
import jax.numpy as jnp
from jax.experimental import pallas as pl
from jax.experimental.pallas import tpu as pltpu

BN_EPS = 1e-5
LANE = 128        # pad every channel dim to a multiple of this (lane-dense loads/stores)
ROW_TILE = 256    # matmul row tile (multiple of 16); use 512-1024 for production sizes
PAR = 2           # outer M-split "parallel" axis -> feeds both v7x TensorCores

_VMEM_LIMIT = 48 * 1024 * 1024   # < v7x physical 64 MiB VMEM, safe on v5e/v6e too
_CPARAMS_MM = pltpu.CompilerParams(
    # grid = (M-split, Cout tiles, M tiles): the first two axes are independent
    # ("parallel", shard across TensorCores); the last carries the fused BN-stats
    # accumulator so it stays sequential ("arbitrary").
    dimension_semantics=("parallel", "parallel", "arbitrary"),
    vmem_limit_bytes=_VMEM_LIMIT,
)
_CPARAMS_EW = pltpu.CompilerParams(
    dimension_semantics=("parallel",),
    vmem_limit_bytes=_VMEM_LIMIT,
)


def _rup(x, m):
    return (x + m - 1) // m * m


def _pick_halo(tm, need):
    """Smallest multiple of 16 that divides tm and covers the 3x3 halo (2*wp + 2 rows)."""
    for h in range(16, tm + 1, 16):
        if tm % h == 0 and h >= need:
            return h
    return tm


# --------------------------------- Pallas kernels ---------------------------------

def _mm_stats_kernel(x_ref, w_ref, y_ref, stats_ref):
    """1x1-conv tile: y = x @ w (bf16 in, f32 acc) + fused per-channel sum / sum(y^2)."""
    i = pl.program_id(2)
    y = jnp.dot(x_ref[...], w_ref[...], preferred_element_type=jnp.float32)

    @pl.when(i == 0)
    def _():
        stats_ref[...] = jnp.zeros_like(stats_ref)

    stats_ref[...] += jnp.concatenate(
        [jnp.sum(y, axis=0, keepdims=True),
         jnp.sum(y * y, axis=0, keepdims=True)], axis=0)[None]
    y_ref[...] = y.astype(y_ref.dtype)


def _conv3x3_stats_kernel(cur_ref, halo_ref, w_ref, mask_ref, y_ref, stats_ref, *,
                          tap_offsets):
    """3x3 conv tile as 9 shifted bf16 matmuls over a (row-tile + halo) window.

    cur/halo are a row tile and a small trailing halo block of the SAME flattened,
    spatially padded NHWC activation (no im2col, no f32 widen).  mask zeroes rows
    that are not valid (strided) output positions so the fused BN stats stay exact.
    """
    i = pl.program_id(2)
    tm = cur_ref.shape[0]
    cin = cur_ref.shape[1]
    # bf16 window: (tm + halo, Cin).  Tap slices feed the MXU directly in bf16; the
    # occasional sublane-unaligned slice is a cheap XLU repack, not a full f32 pass.
    x = jnp.concatenate([cur_ref[...], halo_ref[...]], axis=0)
    acc = jnp.zeros(y_ref.shape, jnp.float32)
    for t, off in enumerate(tap_offsets):                          # 9 static taps
        acc += jnp.dot(x[off:off + tm, :],
                       w_ref[t * cin:(t + 1) * cin, :],
                       preferred_element_type=jnp.float32)
    y = acc * mask_ref[...]

    @pl.when(i == 0)
    def _():
        stats_ref[...] = jnp.zeros_like(stats_ref)

    stats_ref[...] += jnp.concatenate(
        [jnp.sum(y, axis=0, keepdims=True),
         jnp.sum(y * y, axis=0, keepdims=True)], axis=0)[None]
    y_ref[...] = y.astype(y_ref.dtype)


def _bn_res_relu_kernel(y_ref, sc_ref, sh_ref, r_ref, rsc_ref, rsh_ref, o_ref):
    """Fused epilogue: BN3(y) + BN_downsample(residual) + add + ReLU (one mem-bound pass)."""
    o = y_ref[...].astype(jnp.float32) * sc_ref[...] + sh_ref[...]
    r = r_ref[...].astype(jnp.float32) * rsc_ref[...] + rsh_ref[...]
    o_ref[...] = jnp.maximum(o + r, 0.0).astype(o_ref.dtype)


# --------------------------------- Pallas wrappers --------------------------------

def _matmul_1x1_bn_stats(x2d, w2d, tm):
    """x2d: [Mpad, Kpad] bf16 (zero row/channel padded), w2d: [Kpad, Cpad] bf16.
    Returns (y [Mpad, Cpad] bf16, stats [PAR, 2, Cpad] f32 = per-half sum / sum(y^2))."""
    mpad, kpad = x2d.shape
    cpad = w2d.shape[1]
    assert mpad % (PAR * tm) == 0 and kpad % LANE == 0 and cpad % LANE == 0
    tn = 256 if cpad % 256 == 0 else 128     # NOTE: prefer tn=128 on v5e (4x128 MXU)
    gj = cpad // tn
    gi = mpad // (PAR * tm)
    return pl.pallas_call(
        _mm_stats_kernel,
        grid=(PAR, gj, gi),
        in_specs=[
            pl.BlockSpec((tm, kpad), lambda p, j, i: (p * gi + i, 0)),
            pl.BlockSpec((kpad, tn), lambda p, j, i: (0, j)),    # M-invariant -> resident
        ],
        out_specs=(
            pl.BlockSpec((tm, tn), lambda p, j, i: (p * gi + i, j)),
            pl.BlockSpec((1, 2, tn), lambda p, j, i: (p, 0, j)),  # resident accumulator
        ),
        out_shape=(
            jax.ShapeDtypeStruct((mpad, cpad), jnp.bfloat16),
            jax.ShapeDtypeStruct((PAR, 2, cpad), jnp.float32),
        ),
        compiler_params=_CPARAMS_MM,
    )(x2d, w2d)


def _conv3x3_bn_stats(xf, w9, mask, wp, tm, halo):
    """xf: [rows2 + halo, Cpad] bf16 flattened, spatially padded NHWC input,
    w9: [9*Cpad, Cout_pad] bf16, mask: [rows2, 1] f32 output-row validity, wp: padded W."""
    cin_pad = xf.shape[1]
    rows_out = mask.shape[0]
    cpad = w9.shape[1]
    assert rows_out % (PAR * tm) == 0 and xf.shape[0] >= rows_out + halo
    tn = 256 if cpad % 256 == 0 else 128
    gj = cpad // tn
    gi = rows_out // (PAR * tm)
    hb = tm // halo                                     # halo block size divides tm
    taps = tuple(di * wp + dj for di in range(3) for dj in range(3))
    assert max(taps) <= halo, "halo block too small for the 3x3 window"
    kern = functools.partial(_conv3x3_stats_kernel, tap_offsets=taps)
    return pl.pallas_call(
        kern,
        grid=(PAR, gj, gi),
        in_specs=[
            pl.BlockSpec((tm, cin_pad), lambda p, j, i: (p * gi + i, 0)),        # row tile
            pl.BlockSpec((halo, cin_pad), lambda p, j, i: ((p * gi + i + 1) * hb, 0)),  # halo
            pl.BlockSpec((9 * cin_pad, tn), lambda p, j, i: (0, j)),             # weights
            pl.BlockSpec((tm, 1), lambda p, j, i: (p * gi + i, 0)),              # validity
        ],
        out_specs=(
            pl.BlockSpec((tm, tn), lambda p, j, i: (p * gi + i, j)),
            pl.BlockSpec((1, 2, tn), lambda p, j, i: (p, 0, j)),
        ),
        out_shape=(
            jax.ShapeDtypeStruct((rows_out, cpad), jnp.bfloat16),
            jax.ShapeDtypeStruct((PAR, 2, cpad), jnp.float32),
        ),
        compiler_params=_CPARAMS_MM,
    )(xf, xf, w9, mask)


def _bn_residual_relu(y, res, sc, sh, rsc, rsh):
    """One fused mem-bound pass: relu(bn3(y) + bn_d(res)), large row tile, f32 out."""
    mpad, cpad = y.shape
    tm_ew = math.gcd(mpad, 2048)                       # big tile, divides mpad, mult of 8
    big = pl.BlockSpec((tm_ew, cpad), lambda i: (i, 0))
    vec = pl.BlockSpec((1, cpad), lambda i: (0, 0))
    return pl.pallas_call(
        _bn_res_relu_kernel,
        grid=(mpad // tm_ew,),
        in_specs=[big, vec, vec, big, vec, vec],
        out_specs=big,
        out_shape=jax.ShapeDtypeStruct((mpad, cpad), jnp.float32),
        compiler_params=_CPARAMS_EW,
    )(y, sc, sh, res, rsc, rsh)


def _fold_bn(stats, gamma, beta, count):
    """Fold train-mode batch statistics into per-channel (scale, shift), f32."""
    st = jnp.sum(stats, axis=0)                               # sum the per-core halves
    mean = st[0] / count
    var = jnp.maximum(st[1] / count - mean * mean, 0.0)       # biased var (PyTorch fwd)
    inv = jax.lax.rsqrt(var + BN_EPS)
    scale = gamma * inv
    shift = beta - mean * scale
    return scale.reshape(1, -1), shift.reshape(1, -1)


# ----------------------------------- parameters -----------------------------------

def make_bottleneck_params(key, in_channel, out_channel, stride=1, downsample=None,
                           groups=1, width_per_group=64):
    """Parameters matching torch Bottleneck(in_channel, out_channel, stride, downsample).

    downsample=True -> (1x1 conv stride=s + BN) shortcut; None/False -> identity shortcut.
    Weights are stored pre-reshaped for the matmul kernels ([K, Cout], bf16) with every
    channel dim zero-padded to a multiple of LANE (padded channels carry zero weights,
    gamma=0, beta=0, so they stay exactly zero through the whole block).
    """
    assert groups == 1  # TODO(synk): grouped conv2 (groups > 1) not implemented
    width = int(out_channel * (width_per_group / 64.0)) * groups
    outc = out_channel * 4                                     # expansion = 4
    cin_p, w_p, out_p = _rup(in_channel, LANE), _rup(width, LANE), _rup(outc, LANE)
    k1, k2, k3, k4 = jax.random.split(key, 4)

    def conv_w(k, cin, cout, cin_pad, cout_pad, kh=1, kw=1):
        std = math.sqrt(2.0 / (cout * kh * kw))
        w = jax.random.normal(k, (kh, kw, cin, cout), jnp.float32) * std
        w = jnp.pad(w, ((0, 0), (0, 0), (0, cin_pad - cin), (0, cout_pad - cout)))
        return w.reshape(kh * kw * cin_pad, cout_pad).astype(jnp.bfloat16)

    def bn_p(c, c_pad):
        return (jnp.pad(jnp.ones((c,), jnp.float32), (0, c_pad - c)),
                jnp.pad(jnp.zeros((c,), jnp.float32), (0, c_pad - c)))

    p = {
        "stride": int(stride), "in_channel": in_channel, "outc": outc, "width": width,
        "cin_p": cin_p, "w_p": w_p, "out_p": out_p,
        "w1": conv_w(k1, in_channel, width, cin_p, w_p, 1, 1),
        "w2": conv_w(k2, width, width, w_p, w_p, 3, 3),
        "w3": conv_w(k3, width, outc, w_p, out_p, 1, 1),
    }
    p["g1"], p["b1"] = bn_p(width, w_p)
    p["g2"], p["b2"] = bn_p(width, w_p)
    p["g3"], p["b3"] = bn_p(outc, out_p)
    if downsample:
        p["wd"] = conv_w(k4, in_channel, outc, cin_p, out_p, 1, 1)
        p["gd"], p["bd"] = bn_p(outc, out_p)
    return p


# ------------------------------------- forward -------------------------------------

def bottleneck_forward(params, x_nchw, tm=ROW_TILE):
    """Bottleneck forward: 1x1-BN-ReLU -> 3x3(stride)-BN-ReLU -> 1x1-BN
    -> (+identity / downsample-BN) -> ReLU.  Input and output are NCHW float32."""
    n, cin, h, w = x_nchw.shape
    s = params["stride"]
    cin_p, w_p, out_p = params["cin_p"], params["w_p"], params["out_p"]
    oh, ow = (h - 1) // s + 1, (w - 1) // s + 1
    hp, wp = h + 2, w + 2
    assert tm % 16 == 0 and 2 * wp + 2 <= tm

    # NCHW -> NHWC, bf16, lane-pad channels; flatten rows in (n, h, w) order.
    x = jnp.transpose(x_nchw, (0, 2, 3, 1)).astype(jnp.bfloat16)
    x = jnp.pad(x, ((0, 0), (0, 0), (0, 0), (0, cin_p - cin)))
    m1, m2 = n * h * w, n * oh * ow
    mt = PAR * tm
    m1_pad, m2_pad = _rup(m1, mt), _rup(m2, mt)
    x2d = jnp.pad(x.reshape(m1, cin_p), ((0, m1_pad - m1), (0, 0)))

    # ---- conv1 (1x1, stride 1) + fused BN1 statistics ----
    y1, st1 = _matmul_1x1_bn_stats(x2d, params["w1"], tm)
    sc1, sh1 = _fold_bn(st1, params["g1"], params["b1"], m1)

    # ---- BN1 apply + ReLU folded into the (required) spatial-pad copy (XLA glue) ----
    a1 = jnp.maximum(y1[:m1].astype(jnp.float32) * sc1 + sh1, 0.0).astype(jnp.bfloat16)
    a1_pad = jnp.pad(a1.reshape(n, h, w, w_p), ((0, 0), (1, 1), (1, 1), (0, 0)))
    mf = n * hp * wp
    rows2 = _rup(mf, mt)
    halo = _pick_halo(tm, 2 * wp + 2)
    xf = jnp.pad(a1_pad.reshape(mf, w_p), ((0, rows2 + halo - mf), (0, 0)))

    # Row-validity mask over the padded grid: only strided output positions count
    # toward the BN2 statistics (and are kept in the output).
    r = jnp.arange(hp)[:, None]
    c = jnp.arange(wp)[None, :]
    valid = ((r % s == 0) & (r <= (oh - 1) * s) &
             (c % s == 0) & (c <= (ow - 1) * s)).astype(jnp.float32)
    mask = jnp.broadcast_to(valid[None], (n, hp, wp)).reshape(mf, 1)
    mask = jnp.pad(mask, ((0, rows2 - mf), (0, 0)))

    # ---- conv2 (3x3, pad 1, stride s) + fused BN2 statistics ----
    y2f, st2 = _conv3x3_bn_stats(xf, params["w2"], mask, wp, tm, halo)
    sc2, sh2 = _fold_bn(st2, params["g2"], params["b2"], m2)

    # ---- BN2 apply + ReLU folded into the (required) compaction copy (XLA glue) ----
    y2v = y2f[:mf].reshape(n, hp, wp, w_p)[:, :(oh - 1) * s + 1:s, :(ow - 1) * s + 1:s, :]
    a2 = jnp.maximum(y2v.reshape(m2, w_p).astype(jnp.float32) * sc2 + sh2, 0.0)
    a2 = jnp.pad(a2.astype(jnp.bfloat16), ((0, m2_pad - m2), (0, 0)))

    # ---- conv3 (1x1) + fused BN3 statistics ----
    y3, st3 = _matmul_1x1_bn_stats(a2, params["w3"], tm)
    sc3, sh3 = _fold_bn(st3, params["g3"], params["b3"], m2)

    # ---- identity / downsample branch ----
    if "wd" in params:
        xs = x if s == 1 else x[:, ::s, ::s, :]
        xs2d = jnp.pad(xs.reshape(m2, cin_p), ((0, m2_pad - m2), (0, 0)))
        res, std_ = _matmul_1x1_bn_stats(xs2d, params["wd"], tm)
        rsc, rsh = _fold_bn(std_, params["gd"], params["bd"], m2)
    else:
        assert s == 1 and params["in_channel"] == params["outc"] and m1_pad == m2_pad
        res = x2d
        rsc = jnp.ones((1, out_p), jnp.float32)
        rsh = jnp.zeros((1, out_p), jnp.float32)

    # ---- BN3(y3) + BN_d(residual) + add + ReLU: one fused Pallas pass ----
    out = _bn_residual_relu(y3, res, sc3, sh3, rsc, rsh)

    outc = params["outc"]
    out = out[:m2, :outc].reshape(n, oh, ow, outc)
    return jnp.transpose(out, (0, 3, 1, 2))


# ---------------------------- pure-JAX reference (f32) -----------------------------

def bottleneck_reference(params, x_nchw):
    p = params
    s, cin, width, outc = p["stride"], p["in_channel"], p["width"], p["outc"]
    x = jnp.transpose(x_nchw, (0, 2, 3, 1)).astype(jnp.float32)

    def conv(inp, wflat, kh, kw, cin_r, cout_r, stride, pad):
        wf = wflat.astype(jnp.float32).reshape(kh, kw, -1, wflat.shape[-1])
        wf = wf[:, :, :cin_r, :cout_r]
        return jax.lax.conv_general_dilated(
            inp, wf, (stride, stride), pad,
            dimension_numbers=("NHWC", "HWIO", "NHWC"))

    def bn(y, gamma, beta, cr):
        m = jnp.mean(y, axis=(0, 1, 2))
        v = jnp.mean((y - m) ** 2, axis=(0, 1, 2))
        return (y - m) * jax.lax.rsqrt(v + BN_EPS) * gamma[:cr] + beta[:cr]

    o = jax.nn.relu(bn(conv(x, p["w1"], 1, 1, cin, width, 1, "VALID"),
                       p["g1"], p["b1"], width))
    o = jax.nn.relu(bn(conv(o, p["w2"], 3, 3, width, width, s, [(1, 1), (1, 1)]),
                       p["g2"], p["b2"], width))
    o = bn(conv(o, p["w3"], 1, 1, width, outc, 1, "VALID"), p["g3"], p["b3"], outc)
    if "wd" in p:
        idn = bn(conv(x, p["wd"], 1, 1, cin, outc, s, "VALID"), p["gd"], p["bd"], outc)
    else:
        idn = x
    return jnp.transpose(jax.nn.relu(o + idn), (0, 3, 1, 2))


if __name__ == "__main__":
    key = jax.random.PRNGKey(0)
    pkey, xkey = jax.random.split(key)
    # Canonical ResNet-50 layer1 block 0: in=64 -> (64, 64, 256), stride 1, with a
    # 1x1-conv + BN downsample shortcut.
    params = make_bottleneck_params(pkey, in_channel=64, out_channel=64,
                                    stride=1, downsample=True)
    x = jax.random.normal(xkey, (2, 64, 16, 16), jnp.float32)

    fwd = jax.jit(functools.partial(bottleneck_forward, params))
    out = jax.block_until_ready(fwd(x))
    assert out.shape == (2, 256, 16, 16), out.shape
    assert bool(jnp.all(jnp.isfinite(out)))

    # Loose bf16-level check against the pure-JAX f32 reference (catches indexing bugs).
    ref = bottleneck_reference(params, x)
    err = float(jnp.mean(jnp.abs(out - ref)) / (jnp.mean(jnp.abs(ref)) + 1e-6))
    assert err < 0.15, f"mismatch vs reference: rel_err={err:.4f}"

    print("KERNEL_OK")
</pallas_src>

<mosaic_0001>
module attributes {stable_mosaic.version = 11 : i64} {
  func.func @_mm_stats_kernel(%arg0: i32, %arg1: i32, %arg2: i32, %arg3: memref<256x128xbf16, #tpu.memory_space<vmem>>, %arg4: memref<128x128xbf16, #tpu.memory_space<vmem>>, %arg5: memref<256x128xbf16, #tpu.memory_space<vmem>>, %arg6: memref<1x2x128xf32, #tpu.memory_space<vmem>>) attributes {dimension_semantics = [#tpu.dimension_semantics<parallel>, #tpu.dimension_semantics<parallel>, #tpu.dimension_semantics<arbitrary>], iteration_bounds = array<i64: 2, 1, 1>, scalar_prefetch = 0 : i64, scratch_operands = 0 : i64, tpu.core_type = #tpu.core_type<tc>, window_params = [{transform_indices = @transform_0, window_bounds = array<i64: 256, 128>}, {transform_indices = @transform_1, window_bounds = array<i64: 128, 128>}, {transform_indices = @transform_2, window_bounds = array<i64: 256, 128>}, {transform_indices = @transform_3, window_bounds = array<i64: 1, 2, 128>}]} {
    %c0 = arith.constant 0 : index
    %c0_0 = arith.constant 0 : index
    %0 = vector.load %arg3[%c0, %c0_0] : memref<256x128xbf16, #tpu.memory_space<vmem>>, vector<256x128xbf16>
    %c0_1 = arith.constant 0 : index
    %c0_2 = arith.constant 0 : index
    %1 = vector.load %arg4[%c0_1, %c0_2] : memref<128x128xbf16, #tpu.memory_space<vmem>>, vector<128x128xbf16>
    %cst = arith.constant dense<0.000000e+00> : vector<256x128xf32>
    %2 = tpu.matmul %0, %1, %cst {dimension_numbers = #tpu.dot_dimension_numbers<[1], [0], [0], [1], [0, 0, 1, 1], [], []>} : vector<256x128xbf16>, vector<128x128xbf16>, vector<256x128xf32> -> vector<256x128xf32>
    %c0_i32 = arith.constant 0 : i32
    %3 = arith.cmpi eq, %arg2, %c0_i32 : i32
    %4 = arith.extui %3 : i1 to i32
    %c0_i32_3 = arith.constant 0 : i32
    %5 = arith.cmpi ne, %4, %c0_i32_3 : i32
    scf.if %5 {
      %cst_14 = arith.constant 0.000000e+00 : f32
      %18 = vector.broadcast %cst_14 : f32 to vector<1x2x128xf32>
      %c0_15 = arith.constant 0 : index
      %c0_16 = arith.constant 0 : index
      %c0_17 = arith.constant 0 : index
      %19 = vector.load %arg6[%c0_15, %c0_16, %c0_17] : memref<1x2x128xf32, #tpu.memory_space<vmem>>, vector<1x2x128xf32>
      tpu.vector_store %arg6[%c0_15, %c0_16, %c0_17], %18 {strides = array<i32>} : memref<1x2x128xf32, #tpu.memory_space<vmem>>, vector<1x2x128xf32>,
    } else {
    }
    %c0_4 = arith.constant 0 : index
    %c0_5 = arith.constant 0 : index
    %c0_6 = arith.constant 0 : index
    %6 = vector.load %arg6[%c0_4, %c0_5, %c0_6] : memref<1x2x128xf32, #tpu.memory_space<vmem>>, vector<1x2x128xf32>
    %cst_7 = arith.constant dense<0.000000e+00> : vector<128xf32>
    %7 = vector.multi_reduction <add>, %2, %cst_7 [0] : vector<256x128xf32> to vector<128xf32>
    %8 = vector.shape_cast %7 : vector<128xf32> to vector<1x128xf32>
    %9 = arith.mulf %2, %2 : vector<256x128xf32>
    %cst_8 = arith.constant dense<0.000000e+00> : vector<128xf32>
    %10 = vector.multi_reduction <add>, %9, %cst_8 [0] : vector<256x128xf32> to vector<128xf32>
    %11 = vector.shape_cast %10 : vector<128xf32> to vector<1x128xf32>
    %12 = tpu.concatenate %8, %11 in 0 : vector<1x128xf32>, vector<1x128xf32> -> vector<2x128xf32>
    %13 = vector.shape_cast %12 : vector<2x128xf32> to vector<1x2x128xf32>
    %14 = arith.addf %6, %13 : vector<1x2x128xf32>
    %c0_9 = arith.constant 0 : index
    %c0_10 = arith.constant 0 : index
    %c0_11 = arith.constant 0 : index
    %15 = vector.load %arg6[%c0_9, %c0_10, %c0_11] : memref<1x2x128xf32, #tpu.memory_space<vmem>>, vector<1x2x128xf32>
    tpu.vector_store %arg6[%c0_9, %c0_10, %c0_11], %14 {strides = array<i32>} : memref<1x2x128xf32, #tpu.memory_space<vmem>>, vector<1x2x128xf32>,
    %16 = arith.truncf %2 : vector<256x128xf32> to vector<256x128xbf16>
    %c0_12 = arith.constant 0 : index
    %c0_13 = arith.constant 0 : index
    %17 = vector.load %arg5[%c0_12, %c0_13] : memref<256x128xbf16, #tpu.memory_space<vmem>>, vector<256x128xbf16>
    tpu.vector_store %arg5[%c0_12, %c0_13], %16 {strides = array<i32>} : memref<256x128xbf16, #tpu.memory_space<vmem>>, vector<256x128xbf16>,
    return
  }
  func.func @transform_0(%arg0: i32, %arg1: i32, %arg2: i32) -> (i32, i32) {
    %c1_i32 = arith.constant 1 : i32
    %0 = arith.muli %arg0, %c1_i32 : i32
    %1 = arith.addi %0, %arg2 : i32
    %c0_i32 = arith.constant 0 : i32
    %c0_i32_0 = arith.constant 0 : i32
    return %1, %c0_i32 : i32, i32
  }
  func.func @transform_1(%arg0: i32, %arg1: i32, %arg2: i32) -> (i32, i32) {
    %c0_i32 = arith.constant 0 : i32
    %c0_i32_0 = arith.constant 0 : i32
    return %c0_i32, %arg1 : i32, i32
  }
  func.func @transform_2(%arg0: i32, %arg1: i32, %arg2: i32) -> (i32, i32) {
    %c1_i32 = arith.constant 1 : i32
    %0 = arith.muli %arg0, %c1_i32 : i32
    %1 = arith.addi %0, %arg2 : i32
    %c0_i32 = arith.constant 0 : i32
    return %1, %arg1 : i32, i32
  }
  func.func @transform_3(%arg0: i32, %arg1: i32, %arg2: i32) -> (i32, i32, i32) {
    %c0_i32 = arith.constant 0 : i32
    %c0_i32_0 = arith.constant 0 : i32
    return %arg0, %c0_i32, %arg1 : i32, i32, i32
  }
}

module attributes {stable_mosaic.version = 11 : i64} {
  func.func @_conv3x3_stats_kernel(%arg0: i32, %arg1: i32, %arg2: i32, %arg3: memref<256x128xbf16, #tpu.memory_space<vmem>>, %arg4: memref<64x128xbf16, #tpu.memory_space<vmem>>, %arg5: memref<1152x128xbf16, #tpu.memory_space<vmem>>, %arg6: memref<256x1xf32, #tpu.memory_space<vmem>>, %arg7: memref<256x128xbf16, #tpu.memory_space<vmem>>, %arg8: memref<1x2x128xf32, #tpu.memory_space<vmem>>) attributes {dimension_semantics = [#tpu.dimension_semantics<parallel>, #tpu.dimension_semantics<parallel>, #tpu.dimension_semantics<arbitrary>], iteration_bounds = array<i64: 2, 1, 2>, scalar_prefetch = 0 : i64, scratch_operands = 0 : i64, tpu.core_type = #tpu.core_type<tc>, window_params = [{transform_indices = @transform_0, window_bounds = array<i64: 256, 128>}, {transform_indices = @transform_1, window_bounds = array<i64: 64, 128>}, {transform_indices = @transform_2, window_bounds = array<i64: 1152, 128>}, {transform_indices = @transform_3, window_bounds = array<i64: 256, 1>}, {transform_indices = @transform_4, window_bounds = array<i64: 256, 128>}, {transform_indices = @transform_5, window_bounds = array<i64: 1, 2, 128>}]} {
    %c0 = arith.constant 0 : index
    %c0_0 = arith.constant 0 : index
    %0 = vector.load %arg3[%c0, %c0_0] : memref<256x128xbf16, #tpu.memory_space<vmem>>, vector<256x128xbf16>
    %c0_1 = arith.constant 0 : index
    %c0_2 = arith.constant 0 : index
    %1 = vector.load %arg4[%c0_1, %c0_2] : memref<64x128xbf16, #tpu.memory_space<vmem>>, vector<64x128xbf16>
    %2 = tpu.concatenate %0, %1 in 0 : vector<256x128xbf16>, vector<64x128xbf16> -> vector<320x128xbf16>
    %cst = arith.constant 0.000000e+00 : f32
    %3 = vector.broadcast %cst : f32 to vector<256x128xf32>
    %4 = vector.extract_strided_slice %2 {offsets = [0, 0], sizes = [256, 128], strides = [1, 1]} : vector<320x128xbf16> to vector<256x128xbf16>
    %c0_3 = arith.constant 0 : index
    %c0_4 = arith.constant 0 : index
    %5 = vector.load %arg5[%c0_3, %c0_4] : memref<1152x128xbf16, #tpu.memory_space<vmem>>, vector<128x128xbf16>
    %cst_5 = arith.constant dense<0.000000e+00> : vector<256x128xf32>
    %6 = tpu.matmul %4, %5, %cst_5 {dimension_numbers = #tpu.dot_dimension_numbers<[1], [0], [0], [1], [0, 0, 1, 1], [], []>} : vector<256x128xbf16>, vector<128x128xbf16>, vector<256x128xf32> -> vector<256x128xf32>
    %7 = arith.addf %3, %6 : vector<256x128xf32>
    %8 = vector.extract_strided_slice %2 {offsets = [1, 0], sizes = [256, 128], strides = [1, 1]} : vector<320x128xbf16> to vector<256x128xbf16>
    %c128 = arith.constant 128 : index
    %c0_6 = arith.constant 0 : index
    %9 = vector.load %arg5[%c128, %c0_6] : memref<1152x128xbf16, #tpu.memory_space<vmem>>, vector<128x128xbf16>
    %cst_7 = arith.constant dense<0.000000e+00> : vector<256x128xf32>
    %10 = tpu.matmul %8, %9, %cst_7 {dimension_numbers = #tpu.dot_dimension_numbers<[1], [0], [0], [1], [0, 0, 1, 1], [], []>} : vector<256x128xbf16>, vector<128x128xbf16>, vector<256x128xf32> -> vector<256x128xf32>
    %11 = arith.addf %7, %10 : vector<256x128xf32>
    %12 = vector.extract_strided_slice %2 {offsets = [2, 0], sizes = [256, 128], strides = [1, 1]} : vector<320x128xbf16> to vector<256x128xbf16>
    %c256 = arith.constant 256 : index
    %c0_8 = arith.constant 0 : index
    %13 = vector.load %arg5[%c256, %c0_8] : memref<1152x128xbf16, #tpu.memory_space<vmem>>, vector<128x128xbf16>
    %cst_9 = arith.constant dense<0.000000e+00> : vector<256x128xf32>
    %14 = tpu.matmul %12, %13, %cst_9 {dimension_numbers = #tpu.dot_dimension_numbers<[1], [0], [0], [1], [0, 0, 1, 1], [], []>} : vector<256x128xbf16>, vector<128x128xbf16>, vector<256x128xf32> -> vector<256x128xf32>
    %15 = arith.addf %11, %14 : vector<256x128xf32>
    %16 = vector.extract_strided_slice %2 {offsets = [18, 0], sizes = [256, 128], strides = [1, 1]} : vector<320x128xbf16> to vector<256x128xbf16>
    %c384 = arith.constant 384 : index
    %c0_10 = arith.constant 0 : index
    %17 = vector.load %arg5[%c384, %c0_10] : memref<1152x128xbf16, #tpu.memory_space<vmem>>, vector<128x128xbf16>
    %cst_11 = arith.constant dense<0.000000e+00> : vector<256x128xf32>
    %18 = tpu.matmul %16, %17, %cst_11 {dimension_numbers = #tpu.dot_dimension_numbers<[1], [0], [0], [1], [0, 0, 1, 1], [], []>} : vector<256x128xbf16>, vector<128x128xbf16>, vector<256x128xf32> -> vector<256x128xf32>
    %19 = arith.addf %15, %18 : vector<256x128xf32>
    %20 = vector.extract_strided_slice %2 {offsets = [19, 0], sizes = [256, 128], strides = [1, 1]} : vector<320x128xbf16> to vector<256x128xbf16>
    %c512 = arith.constant 512 : index
    %c0_12 = arith.constant 0 : index
    %21 = vector.load %arg5[%c512, %c0_12] : memref<1152x128xbf16, #tpu.memory_space<vmem>>, vector<128x128xbf16>
    %cst_13 = arith.constant dense<0.000000e+00> : vector<256x128xf32>
    %22 = tpu.matmul %20, %21, %cst_13 {dimension_numbers = #tpu.dot_dimension_numbers<[1], [0], [0], [1], [0, 0, 1, 1], [], []>} : vector<256x128xbf16>, vector<128x128xbf16>, vector<256x128xf32> -> vector<256x128xf32>
    %23 = arith.addf %19, %22 : vector<256x128xf32>
    %24 = vector.extract_strided_slice %2 {offsets = [20, 0], sizes = [256, 128], strides = [1, 1]} : vector<320x128xbf16> to vector<256x128xbf16>
    %c640 = arith.constant 640 : index
    %c0_14 = arith.constant 0 : index
    %25 = vector.load %arg5[%c640, %c0_14] : memref<1152x128xbf16, #tpu.memory_space<vmem>>, vector<128x128xbf16>
    %cst_15 = arith.constant dense<0.000000e+00> : vector<256x128xf32>
    %26 = tpu.matmul %24, %25, %cst_15 {dimension_numbers = #tpu.dot_dimension_numbers<[1], [0], [0], [1], [0, 0, 1, 1], [], []>} : vector<256x128xbf16>, vector<128x128xbf16>, vector<256x128xf32> -> vector<256x128xf32>
    %27 = arith.addf %23, %26 : vector<256x128xf32>
    %28 = vector.extract_strided_slice %2 {offsets = [36, 0], sizes = [256, 128], strides = [1, 1]} : vector<320x128xbf16> to vector<256x128xbf16>
    %c768 = arith.constant 768 : index
    %c0_16 = arith.constant 0 : index
    %29 = vector.load %arg5[%c768, %c0_16] : memref<1152x128xbf16, #tpu.memory_space<vmem>>, vector<128x128xbf16>
    %cst_17 = arith.constant dense<0.000000e+00> : vector<256x128xf32>
    %30 = tpu.matmul %28, %29, %cst_17 {dimension_numbers = #tpu.dot_dimension_numbers<[1], [0], [0], [1], [0, 0, 1, 1], [], []>} : vector<256x128xbf16>, vector<128x128xbf16>, vector<256x128xf32> -> vector<256x128xf32>
    %31 = arith.addf %27, %30 : vector<256x128xf32>
    %32 = vector.extract_strided_slice %2 {offsets = [37, 0], sizes = [256, 128], strides = [1, 1]} : vector<320x128xbf16> to vector<256x128xbf16>
    %c896 = arith.constant 896 : index
    %c0_18 = arith.constant 0 : index
    %33 = vector.load %arg5[%c896, %c0_18] : memref<1152x128xbf16, #tpu.memory_space<vmem>>, vector<128x128xbf16>
    %cst_19 = arith.constant dense<0.000000e+00> : vector<256x128xf32>
    %34 = tpu.matmul %32, %33, %cst_19 {dimension_numbers = #tpu.dot_dimension_numbers<[1], [0], [0], [1], [0, 0, 1, 1], [], []>} : vector<256x128xbf16>, vector<128x128xbf16>, vector<256x128xf32> -> vector<256x128xf32>
    %35 = arith.addf %31, %34 : vector<256x128xf32>
    %36 = vector.extract_strided_slice %2 {offsets = [38, 0], sizes = [256, 128], strides = [1, 1]} : vector<320x128xbf16> to vector<256x128xbf16>
    %c1024 = arith.constant 1024 : index
    %c0_20 = arith.constant 0 : index
    %37 = vector.load %arg5[%c1024, %c0_20] : memref<1152x128xbf16, #tpu.memory_space<vmem>>, vector<128x128xbf16>
    %cst_21 = arith.constant dense<0.000000e+00> : vector<256x128xf32>
    %38 = tpu.matmul %36, %37, %cst_21 {dimension_numbers = #tpu.dot_dimension_numbers<[1], [0], [0], [1], [0, 0, 1, 1], [], []>} : vector<256x128xbf16>, vector<128x128xbf16>, vector<256x128xf32> -> vector<256x128xf32>
    %39 = arith.addf %35, %38 : vector<256x128xf32>
    %c0_22 = arith.constant 0 : index
    %c0_23 = arith.constant 0 : index
    %40 = vector.load %arg6[%c0_22, %c0_23] : memref<256x1xf32, #tpu.memory_space<vmem>>, vector<256x1xf32>
    %41 = vector.broadcast %40 : vector<256x1xf32> to vector<256x128xf32>
    %42 = arith.mulf %39, %41 : vector<256x128xf32>
    %c0_i32 = arith.constant 0 : i32
    %43 = arith.cmpi eq, %arg2, %c0_i32 : i32
    %44 = arith.extui %43 : i1 to i32
    %c0_i32_24 = arith.constant 0 : i32
    %45 = arith.cmpi ne, %44, %c0_i32_24 : i32
    scf.if %45 {
      %cst_35 = arith.constant 0.000000e+00 : f32
      %58 = vector.broadcast %cst_35 : f32 to vector<1x2x128xf32>
      %c0_36 = arith.constant 0 : index
      %c0_37 = arith.constant 0 : index
      %c0_38 = arith.constant 0 : index
      %59 = vector.load %arg8[%c0_36, %c0_37, %c0_38] : memref<1x2x128xf32, #tpu.memory_space<vmem>>, vector<1x2x128xf32>
      tpu.vector_store %arg8[%c0_36, %c0_37, %c0_38], %58 {strides = array<i32>} : memref<1x2x128xf32, #tpu.memory_space<vmem>>, vector<1x2x128xf32>,
    } else {
    }
    %c0_25 = arith.constant 0 : index
    %c0_26 = arith.constant 0 : index
    %c0_27 = arith.constant 0 : index
    %46 = vector.load %arg8[%c0_25, %c0_26, %c0_27] : memref<1x2x128xf32, #tpu.memory_space<vmem>>, vector<1x2x128xf32>
    %cst_28 = arith.constant dense<0.000000e+00> : vector<128xf32>
    %47 = vector.multi_reduction <add>, %42, %cst_28 [0] : vector<256x128xf32> to vector<128xf32>
    %48 = vector.shape_cast %47 : vector<128xf32> to vector<1x128xf32>
    %49 = arith.mulf %42, %42 : vector<256x128xf32>
    %cst_29 = arith.constant dense<0.000000e+00> : vector<128xf32>
    %50 = vector.multi_reduction <add>, %49, %cst_29 [0] : vector<256x128xf32> to vector<128xf32>
    %51 = vector.shape_cast %50 : vector<128xf32> to vector<1x128xf32>
    %52 = tpu.concatenate %48, %51 in 0 : vector<1x128xf32>, vector<1x128xf32> -> vector<2x128xf32>
    %53 = vector.shape_cast %52 : vector<2x128xf32> to vector<1x2x128xf32>
    %54 = arith.addf %46, %53 : vector<1x2x128xf32>
    %c0_30 = arith.constant 0 : index
    %c0_31 = arith.constant 0 : index
    %c0_32 = arith.constant 0 : index
    %55 = vector.load %arg8[%c0_30, %c0_31, %c0_32] : memref<1x2x128xf32, #tpu.memory_space<vmem>>, vector<1x2x128xf32>
    tpu.vector_store %arg8[%c0_30, %c0_31, %c0_32], %54 {strides = array<i32>} : memref<1x2x128xf32, #tpu.memory_space<vmem>>, vector<1x2x128xf32>,
    %56 = arith.truncf %42 : vector<256x128xf32> to vector<256x128xbf16>
    %c0_33 = arith.constant 0 : index
    %c0_34 = arith.constant 0 : index
    %57 = vector.load %arg7[%c0_33, %c0_34] : memref<256x128xbf16, #tpu.memory_space<vmem>>, vector<256x128xbf16>
    tpu.vector_store %arg7[%c0_33, %c0_34], %56 {strides = array<i32>} : memref<256x128xbf16, #tpu.memory_space<vmem>>, vector<256x128xbf16>,
    return
  }
  func.func @transform_0(%arg0: i32, %arg1: i32, %arg2: i32) -> (i32, i32) {
    %c2_i32 = arith.constant 2 : i32
    %0 = arith.muli %arg0, %c2_i32 : i32
    %1 = arith.addi %0, %arg2 : i32
    %c0_i32 = arith.constant 0 : i32
    %c0_i32_0 = arith.constant 0 : i32
    return %1, %c0_i32 : i32, i32
  }
  func.func @transform_1(%arg0: i32, %arg1: i32, %arg2: i32) -> (i32, i32) {
    %c2_i32 = arith.constant 2 : i32
    %0 = arith.muli %arg0, %c2_i32 : i32
    %1 = arith.addi %0, %arg2 : i32
    %c1_i32 = arith.constant 1 : i32
    %2 = arith.addi %1, %c1_i32 : i32
    %c4_i32 = arith.constant 4 : i32
    %3 = arith.muli %2, %c4_i32 : i32
    %c0_i32 = arith.constant 0 : i32
    %c0_i32_0 = arith.constant 0 : i32
    return %3, %c0_i32 : i32, i32
  }
  func.func @transform_2(%arg0: i32, %arg1: i32, %arg2: i32) -> (i32, i32) {
    %c0_i32 = arith.constant 0 : i32
    %c0_i32_0 = arith.constant 0 : i32
    return %c0_i32, %arg1 : i32, i32
  }
  func.func @transform_3(%arg0: i32, %arg1: i32, %arg2: i32) -> (i32, i32) {
    %c2_i32 = arith.constant 2 : i32
    %0 = arith.muli %arg0, %c2_i32 : i32
    %1 = arith.addi %0, %arg2 : i32
    %c0_i32 = arith.constant 0 : i32
    %c0_i32_0 = arith.constant 0 : i32
    return %1, %c0_i32 : i32, i32
  }
  func.func @transform_4(%arg0: i32, %arg1: i32, %arg2: i32) -> (i32, i32) {
    %c2_i32 = arith.constant 2 : i32
    %0 = arith.muli %arg0, %c2_i32 : i32
    %1 = arith.addi %0, %arg2 : i32
    %c0_i32 = arith.constant 0 : i32
    return %1, %arg1 : i32, i32
  }
  func.func @transform_5(%arg0: i32, %arg1: i32, %arg2: i32) -> (i32, i32, i32) {
    %c0_i32 = arith.constant 0 : i32
    %c0_i32_0 = arith.constant 0 : i32
    return %arg0, %c0_i32, %arg1 : i32, i32, i32
  }
}

module attributes {stable_mosaic.version = 11 : i64} {
  func.func @_mm_stats_kernel(%arg0: i32, %arg1: i32, %arg2: i32, %arg3: memref<256x128xbf16, #tpu.memory_space<vmem>>, %arg4: memref<128x256xbf16, #tpu.memory_space<vmem>>, %arg5: memref<256x256xbf16, #tpu.memory_space<vmem>>, %arg6: memref<1x2x256xf32, #tpu.memory_space<vmem>>) attributes {dimension_semantics = [#tpu.dimension_semantics<parallel>, #tpu.dimension_semantics<parallel>, #tpu.dimension_semantics<arbitrary>], iteration_bounds = array<i64: 2, 1, 1>, scalar_prefetch = 0 : i64, scratch_operands = 0 : i64, tpu.core_type = #tpu.core_type<tc>, window_params = [{transform_indices = @transform_0, window_bounds = array<i64: 256, 128>}, {transform_indices = @transform_1, window_bounds = array<i64: 128, 256>}, {transform_indices = @transform_2, window_bounds = array<i64: 256, 256>}, {transform_indices = @transform_3, window_bounds = array<i64: 1, 2, 256>}]} {
    %c0 = arith.constant 0 : index
    %c0_0 = arith.constant 0 : index
    %0 = vector.load %arg3[%c0, %c0_0] : memref<256x128xbf16, #tpu.memory_space<vmem>>, vector<256x128xbf16>
    %c0_1 = arith.constant 0 : index
    %c0_2 = arith.constant 0 : index
    %1 = vector.load %arg4[%c0_1, %c0_2] : memref<128x256xbf16, #tpu.memory_space<vmem>>, vector<128x256xbf16>
    %cst = arith.constant dense<0.000000e+00> : vector<256x256xf32>
    %2 = tpu.matmul %0, %1, %cst {dimension_numbers = #tpu.dot_dimension_numbers<[1], [0], [0], [1], [0, 0, 1, 1], [], []>} : vector<256x128xbf16>, vector<128x256xbf16>, vector<256x256xf32> -> vector<256x256xf32>
    %c0_i32 = arith.constant 0 : i32
    %3 = arith.cmpi eq, %arg2, %c0_i32 : i32
    %4 = arith.extui %3 : i1 to i32
    %c0_i32_3 = arith.constant 0 : i32
    %5 = arith.cmpi ne, %4, %c0_i32_3 : i32
    scf.if %5 {
      %cst_14 = arith.constant 0.000000e+00 : f32
      %18 = vector.broadcast %cst_14 : f32 to vector<1x2x256xf32>
      %c0_15 = arith.constant 0 : index
      %c0_16 = arith.constant 0 : index
      %c0_17 = arith.constant 0 : index
      %19 = vector.load %arg6[%c0_15, %c0_16, %c0_17] : memref<1x2x256xf32, #tpu.memory_space<vmem>>, vector<1x2x256xf32>
      tpu.vector_store %arg6[%c0_15, %c0_16, %c0_17], %18 {strides = array<i32>} : memref<1x2x256xf32, #tpu.memory_space<vmem>>, vector<1x2x256xf32>,
    } else {
    }
    %c0_4 = arith.constant 0 : index
    %c0_5 = arith.constant 0 : index
    %c0_6 = arith.constant 0 : index
    %6 = vector.load %arg6[%c0_4, %c0_5, %c0_6] : memref<1x2x256xf32, #tpu.memory_space<vmem>>, vector<1x2x256xf32>
    %cst_7 = arith.constant dense<0.000000e+00> : vector<256xf32>
    %7 = vector.multi_reduction <add>, %2, %cst_7 [0] : vector<256x256xf32> to vector<256xf32>
    %8 = vector.shape_cast %7 : vector<256xf32> to vector<1x256xf32>
    %9 = arith.mulf %2, %2 : vector<256x256xf32>
    %cst_8 = arith.constant dense<0.000000e+00> : vector<256xf32>
    %10 = vector.multi_reduction <add>, %9, %cst_8 [0] : vector<256x256xf32> to vector<256xf32>
    %11 = vector.shape_cast %10 : vector<256xf32> to vector<1x256xf32>
    %12 = tpu.concatenate %8, %11 in 0 : vector<1x256xf32>, vector<1x256xf32> -> vector<2x256xf32>
    %13 = vector.shape_cast %12 : vector<2x256xf32> to vector<1x2x256xf32>
    %14 = arith.addf %6, %13 : vector<1x2x256xf32>
    %c0_9 = arith.constant 0 : index
    %c0_10 = arith.constant 0 : index
    %c0_11 = arith.constant 0 : index
    %15 = vector.load %arg6[%c0_9, %c0_10, %c0_11] : memref<1x2x256xf32, #tpu.memory_space<vmem>>, vector<1x2x256xf32>
    tpu.vector_store %arg6[%c0_9, %c0_10, %c0_11], %14 {strides = array<i32>} : memref<1x2x256xf32, #tpu.memory_space<vmem>>, vector<1x2x256xf32>,
    %16 = arith.truncf %2 : vector<256x256xf32> to vector<256x256xbf16>
    %c0_12 = arith.constant 0 : index
    %c0_13 = arith.constant 0 : index
    %17 = vector.load %arg5[%c0_12, %c0_13] : memref<256x256xbf16, #tpu.memory_space<vmem>>, vector<256x256xbf16>
    tpu.vector_store %arg5[%c0_12, %c0_13], %16 {strides = array<i32>} : memref<256x256xbf16, #tpu.memory_space<vmem>>, vector<256x256xbf16>,
    return
  }
  func.func @transform_0(%arg0: i32, %arg1: i32, %arg2: i32) -> (i32, i32) {
    %c1_i32 = arith.constant 1 : i32
    %0 = arith.muli %arg0, %c1_i32 : i32
    %1 = arith.addi %0, %arg2 : i32
    %c0_i32 = arith.constant 0 : i32
    %c0_i32_0 = arith.constant 0 : i32
    return %1, %c0_i32 : i32, i32
  }
  func.func @transform_1(%arg0: i32, %arg1: i32, %arg2: i32) -> (i32, i32) {
    %c0_i32 = arith.constant 0 : i32
    %c0_i32_0 = arith.constant 0 : i32
    return %c0_i32, %arg1 : i32, i32
  }
  func.func @transform_2(%arg0: i32, %arg1: i32, %arg2: i32) -> (i32, i32) {
    %c1_i32 = arith.constant 1 : i32
    %0 = arith.muli %arg0, %c1_i32 : i32
    %1 = arith.addi %0, %arg2 : i32
    %c0_i32 = arith.constant 0 : i32
    return %1, %arg1 : i32, i32
  }
  func.func @transform_3(%arg0: i32, %arg1: i32, %arg2: i32) -> (i32, i32, i32) {
    %c0_i32 = arith.constant 0 : i32
    %c0_i32_0 = arith.constant 0 : i32
    return %arg0, %c0_i32, %arg1 : i32, i32, i32
  }
}

module attributes {stable_mosaic.version = 11 : i64} {
  func.func @_bn_res_relu_kernel(%arg0: i32, %arg1: memref<512x256xbf16, #tpu.memory_space<vmem>>, %arg2: memref<1x256xf32, #tpu.memory_space<vmem>>, %arg3: memref<1x256xf32, #tpu.memory_space<vmem>>, %arg4: memref<512x256xbf16, #tpu.memory_space<vmem>>, %arg5: memref<1x256xf32, #tpu.memory_space<vmem>>, %arg6: memref<1x256xf32, #tpu.memory_space<vmem>>, %arg7: memref<512x256xf32, #tpu.memory_space<vmem>>) attributes {dimension_semantics = [#tpu.dimension_semantics<parallel>], iteration_bounds = array<i64: 1>, scalar_prefetch = 0 : i64, scratch_operands = 0 : i64, tpu.core_type = #tpu.core_type<tc>, window_params = [{transform_indices = @transform_0, window_bounds = array<i64: 512, 256>}, {pipeline_mode = #tpu.pipeline_mode<synchronous>, transform_indices = @transform_1, window_bounds = array<i64: 1, 256>}, {pipeline_mode = #tpu.pipeline_mode<synchronous>, transform_indices = @transform_2, window_bounds = array<i64: 1, 256>}, {transform_indices = @transform_3, window_bounds = array<i64: 512, 256>}, {pipeline_mode = #tpu.pipeline_mode<synchronous>, transform_indices = @transform_4, window_bounds = array<i64: 1, 256>}, {pipeline_mode = #tpu.pipeline_mode<synchronous>, transform_indices = @transform_5, window_bounds = array<i64: 1, 256>}, {transform_indices = @transform_6, window_bounds = array<i64: 512, 256>}]} {
    %c0 = arith.constant 0 : index
    %c0_0 = arith.constant 0 : index
    %0 = vector.load %arg1[%c0, %c0_0] : memref<512x256xbf16, #tpu.memory_space<vmem>>, vector<512x256xbf16>
    %1 = arith.extf %0 : vector<512x256xbf16> to vector<512x256xf32>
    %c0_1 = arith.constant 0 : index
    %c0_2 = arith.constant 0 : index
    %2 = vector.load %arg2[%c0_1, %c0_2] : memref<1x256xf32, #tpu.memory_space<vmem>>, vector<1x256xf32>
    %3 = vector.broadcast %2 : vector<1x256xf32> to vector<512x256xf32>
    %4 = arith.mulf %1, %3 : vector<512x256xf32>
    %c0_3 = arith.constant 0 : index
    %c0_4 = arith.constant 0 : index
    %5 = vector.load %arg3[%c0_3, %c0_4] : memref<1x256xf32, #tpu.memory_space<vmem>>, vector<1x256xf32>
    %6 = vector.broadcast %5 : vector<1x256xf32> to vector<512x256xf32>
    %7 = arith.addf %4, %6 : vector<512x256xf32>
    %c0_5 = arith.constant 0 : index
    %c0_6 = arith.constant 0 : index
    %8 = vector.load %arg4[%c0_5, %c0_6] : memref<512x256xbf16, #tpu.memory_space<vmem>>, vector<512x256xbf16>
    %9 = arith.extf %8 : vector<512x256xbf16> to vector<512x256xf32>
    %c0_7 = arith.constant 0 : index
    %c0_8 = arith.constant 0 : index
    %10 = vector.load %arg5[%c0_7, %c0_8] : memref<1x256xf32, #tpu.memory_space<vmem>>, vector<1x256xf32>
    %11 = vector.broadcast %10 : vector<1x256xf32> to vector<512x256xf32>
    %12 = arith.mulf %9, %11 : vector<512x256xf32>
    %c0_9 = arith.constant 0 : index
    %c0_10 = arith.constant 0 : index
    %13 = vector.load %arg6[%c0_9, %c0_10] : memref<1x256xf32, #tpu.memory_space<vmem>>, vector<1x256xf32>
    %14 = vector.broadcast %13 : vector<1x256xf32> to vector<512x256xf32>
    %15 = arith.addf %12, %14 : vector<512x256xf32>
    %16 = arith.addf %7, %15 : vector<512x256xf32>
    %cst = arith.constant 0.000000e+00 : f32
    %17 = vector.broadcast %cst : f32 to vector<512x256xf32>
    %18 = arith.maximumf %16, %17 : vector<512x256xf32>
    %c0_11 = arith.constant 0 : index
    %c0_12 = arith.constant 0 : index
    %19 = vector.load %arg7[%c0_11, %c0_12] : memref<512x256xf32, #tpu.memory_space<vmem>>, vector<512x256xf32>
    tpu.vector_store %arg7[%c0_11, %c0_12], %18 {strides = array<i32>} : memref<512x256xf32, #tpu.memory_space<vmem>>, vector<512x256xf32>,
    return
  }
  func.func @transform_0(%arg0: i32) -> (i32, i32) {
    %c0_i32 = arith.constant 0 : i32
    %c0_i32_0 = arith.constant 0 : i32
    return %arg0, %c0_i32 : i32, i32
  }
  func.func @transform_1(%arg0: i32) -> (i32, i32) {
    %c0_i32 = arith.constant 0 : i32
    %c0_i32_0 = arith.constant 0 : i32
    %c0_i32_1 = arith.constant 0 : i32
    return %c0_i32, %c0_i32_0 : i32, i32
  }
  func.func @transform_2(%arg0: i32) -> (i32, i32) {
    %c0_i32 = arith.constant 0 : i32
    %c0_i32_0 = arith.constant 0 : i32
    %c0_i32_1 = arith.constant 0 : i32
    return %c0_i32, %c0_i32_0 : i32, i32
  }
  func.func @transform_3(%arg0: i32) -> (i32, i32) {
    %c0_i32 = arith.constant 0 : i32
    %c0_i32_0 = arith.constant 0 : i32
    return %arg0, %c0_i32 : i32, i32
  }
  func.func @transform_4(%arg0: i32) -> (i32, i32) {
    %c0_i32 = arith.constant 0 : i32
    %c0_i32_0 = arith.constant 0 : i32
    %c0_i32_1 = arith.constant 0 : i32
    return %c0_i32, %c0_i32_0 : i32, i32
  }
  func.func @transform_5(%arg0: i32) -> (i32, i32) {
    %c0_i32 = arith.constant 0 : i32
    %c0_i32_0 = arith.constant 0 : i32
    %c0_i32_1 = arith.constant 0 : i32
    return %c0_i32, %c0_i32_0 : i32, i32
  }
  func.func @transform_6(%arg0: i32) -> (i32, i32) {
    %c0_i32 = arith.constant 0 : i32
    %c0_i32_0 = arith.constant 0 : i32
    return %arg0, %c0_i32 : i32, i32
  }
}

</mosaic_0001>

<llo_original>
// kernel: bottleneck_forward.5
$region0: #{bottleneck_forward.5}
  #allocation0 [shape = 'u32[]', space=smem, size = 0x4, offset = 0x4, fixed_abs, tag = 'smem constant byte address 0x4 - core index']
  #allocation1 [shape = 'u32[144,128]{1,0:T(1,128)}', space=vmem, size = 0x12000, scoped, tag = 'internal scratch']
  %s0 = inlined_call_operand.vmem [shape: bf16[512,128], index: 0, kind: input, shape index: {}]
  %s1 = inlined_call_operand.vmem [shape: bf16[128,128], index: 1, kind: input, shape index: {}]
  %s2 = inlined_call_operand.vmem [shape: bf16[512,128], index: 2, kind: output, shape index: {0}]
  %s3 = inlined_call_operand.vmem [shape: f32[2,2,128], index: 3, kind: output, shape index: {1}]
  %4 = xla_tuple %s2, %s3
  %s5 = sld [smem:[#allocation0]]
  $region53: #{bottleneck_forward.5} parent=0
    _
  %s7 = ssub.s32 1, %s5
  %s8 = scalar_select 0, %s7, %s5
  loop: start=0, step=1, limit=4
  $region2: #{bottleneck_forward.5} parent=0 // loop_pre_header
    _
  $region3: #{bottleneck_forward.5} parent=0 // loop_header
    %s10 = sphi 0, %s14
    %p11 = scmp.ge.s32.totalorder %s10, 4
    %s17 = sphi 0, %s36
    %s18 = sphi 0, %s32
    %s19 = sphi 0, %s28
    %s20 = sphi 0, %s17
    %s21 = sphi 0, %s18
    %s22 = sphi 0, %s19
    %s23 = sphi 0, %s20
    %s24 = sphi 0, %s21
    %s25 = sphi 0, %s22
    %s41 = sphi 0, %s43
    %s44 = sphi 0, %s41
    %s45 = sphi 0, %s44
    %s61 = sphi 0, %s45
    %s67 = sphi 0, %s69
    %s70 = sphi 0, %s67
    %s71 = sphi 0, %s70
    %s87 = sphi 0, %s71
    %s97 = sphi 0, %s99
    %s100 = sphi 0, %s97
    %s101 = sphi 0, %s100
    %s117 = sphi 0, %s101
    %s125 = sphi 0, %s127
    %s128 = sphi 0, %s125
    %s129 = sphi 0, %s128
    %s145 = sphi 0, %s129
  $region4: #{bottleneck_forward.5} parent=0 // loop_header_branch
    %13 = sbr.rel (%p11) target = $region8
  $region5: #{bottleneck_forward.5} parent=0 // loop_body
    %s15 = ssub.s32 %s10, 1
    %s16 = ssub.s32 %s10, 2
    %s26 = sadd.s32 1, %s19
    %p27 = scmp.ge.s32.totalorder %s26, 1
    %s28 = scalar_select %p27, 0, %s26
    %s29 = sadd.s32 1, %s18
    %s30 = scalar_select %p27, %s29, %s18
    %p31 = scmp.ge.s32.totalorder %s30, 1
    %s32 = scalar_select %p31, 0, %s30
    %s33 = sadd.s32 1, %s17
    %s34 = scalar_select %p31, %s33, %s17
    %p35 = scmp.ge.s32.totalorder %s34, 2
    %s36 = scalar_select %p35, 0, %s34
    %s37 = sadd.s32 %s17, %s19
    %s38 = sadd.s32 %s36, %s28
    %s39 = ssub.s32 %s37, %s38
    %p40 = scmp.eq.s32.totalorder %s39, 0
    %s42 = sadd.s32 %s41, 1
    %s43 = scalar_select %p40, %s41, %s42
    %p46 = pneg %p40
    %p47 = scmp.eq.s32.totalorder %s10, 1
    %p48 = por %p46, %p47
    %p49 = scmp.ne.s32.totalorder %s41, %s44
    %p50 = scmp.eq.s32.totalorder %s10, 0
    %p51 = por %p49, %p50
    %p52 = scmp.ne.s32.totalorder %s41, %s44
    %p53 = scmp.eq.s32.totalorder %s15, 1
    %p54 = por %p52, %p53
    %p55 = scmp.ne.s32.totalorder %s44, %s45
    %p56 = scmp.eq.s32.totalorder %s15, 0
    %p57 = por %p55, %p56
    %p58 = scmp.ne.s32.totalorder %s44, %s45
    %p59 = scmp.eq.s32.totalorder %s16, 1
    %p60 = por %p58, %p59
    %p62 = scmp.ne.s32.totalorder %s45, %s61
    %p63 = scmp.eq.s32.totalorder %s16, 0
    %p64 = por %p62, %p63
    %s65 = ssub.s32 %s18, %s32
    %p66 = scmp.eq.s32.totalorder %s65, 0
    %s68 = sadd.s32 %s67, 1
    %s69 = scalar_select %p66, %s67, %s68
    %p72 = pneg %p66
    %p73 = scmp.eq.s32.totalorder %s10, 1
    %p74 = por %p72, %p73
    %p75 = scmp.ne.s32.totalorder %s67, %s70
    %p76 = scmp.eq.s32.totalorder %s10, 0
    %p77 = por %p75, %p76
    %p78 = scmp.ne.s32.totalorder %s67, %s70
    %p79 = scmp.eq.s32.totalorder %s15, 1
    %p80 = por %p78, %p79
    %p81 = scmp.ne.s32.totalorder %s70, %s71
    %p82 = scmp.eq.s32.totalorder %s15, 0
    %p83 = por %p81, %p82
    %p84 = scmp.ne.s32.totalorder %s70, %s71
    %p85 = scmp.eq.s32.totalorder %s16, 1
    %p86 = por %p84, %p85
    %p88 = scmp.ne.s32.totalorder %s71, %s87
    %p89 = scmp.eq.s32.totalorder %s16, 0
    %p90 = por %p88, %p89
    %s91 = sadd.s32 %s17, %s19
    %s92 = sadd.s32 %s36, %s28
    %s93 = ssub.s32 %s91, %s92
    %s94 = ssub.s32 %s18, %s32
    %s95 = sor.u32 %s93, %s94
    %p96 = scmp.eq.s32.totalorder %s95, 0
    %s98 = sadd.s32 %s97, 1
    %s99 = scalar_select %p96, %s97, %s98
    %p102 = pneg %p96
    %p103 = scmp.eq.s32.totalorder %s10, 1
    %p104 = por %p102, %p103
    %p105 = scmp.ne.s32.totalorder %s97, %s100
    %p106 = scmp.eq.s32.totalorder %s10, 0
    %p107 = por %p105, %p106
    %p108 = scmp.ne.s32.totalorder %s97, %s100
    %p109 = scmp.eq.s32.totalorder %s15, 1
    %p110 = por %p108, %p109
    %p111 = scmp.ne.s32.totalorder %s100, %s101
    %p112 = scmp.eq.s32.totalorder %s15, 0
    %p113 = por %p111, %p112
    %p114 = scmp.ne.s32.totalorder %s100, %s101
    %p115 = scmp.eq.s32.totalorder %s16, 1
    %p116 = por %p114, %p115
    %p118 = scmp.ne.s32.totalorder %s101, %s117
    %p119 = scmp.eq.s32.totalorder %s16, 0
    %p120 = por %p118, %p119
    %s121 = ssub.s32 %s17, %s36
    %s122 = ssub.s32 %s18, %s32
    %s123 = sor.u32 %s121, %s122
    %p124 = scmp.eq.s32.totalorder %s123, 0
    %s126 = sadd.s32 %s125, 1
    %s127 = scalar_select %p124, %s125, %s126
    %p130 = pneg %p124
    %p131 = scmp.eq.s32.totalorder %s10, 1
    %p132 = por %p130, %p131
    %p133 = scmp.ne.s32.totalorder %s125, %s128
    %p134 = scmp.eq.s32.totalorder %s10, 0
    %p135 = por %p133, %p134
    %p136 = scmp.ne.s32.totalorder %s125, %s128
    %p137 = scmp.eq.s32.totalorder %s15, 1
    %p138 = por %p136, %p137
    %p139 = scmp.ne.s32.totalorder %s128, %s129
    %p140 = scmp.eq.s32.totalorder %s15, 0
    %p141 = por %p139, %p140
    %p142 = scmp.ne.s32.totalorder %s128, %s129
    %p143 = scmp.eq.s32.totalorder %s16, 1
    %p144 = por %p142, %p143
    %p146 = scmp.ne.s32.totalorder %s129, %s145
    %p147 = scmp.eq.s32.totalorder %s16, 0
    %p148 = por %p146, %p147
    %p149 = scmp.le.s32.totalorder 1, %s10
    %p150 = scmp.lt.s32.totalorder %s10, 3
    %p151 = pnand %p149, %p150
    %p152 = pneg %p151
    // Predicated region
    $region9: #{bottleneck_forward.5} parent=5 // pred_check
      _
    $region10: #{bottleneck_forward.5} parent=5 // pred_check_branch
      %154 = sbr.rel (%p151) target = $region12
    $region11: #{bottleneck_forward.5} parent=5 // pred_region
      %s155 = ssub.s32 %s10, 1
      // Predicated region
      $region13: #{bottleneck_forward.5} parent=11 // pred_check
        %p156 = pneg %p83
      $region14: #{bottleneck_forward.5} parent=11 // pred_check_branch
        %158 = sbr.rel (%p156) target = $region16
      $region15: #{bottleneck_forward.5} parent=11 // pred_region
        %p159 = scmp.lt.s32.totalorder %s21, 0
        %s160 = scalar_select %p159, %s21, 0
        %s161 = smul.addr %s160, 4
        %s162 = scalar_lea.vmem %s1, %s161
      $region16: #{bottleneck_forward.5} parent=11 // pred_fallthru
        _
    $region12: #{bottleneck_forward.5} parent=5 // pred_fallthru
      _
    %p163 = scmp.lt.s32.totalorder %s10, 2
    // Predicated region
    $region17: #{bottleneck_forward.5} parent=5 // pred_check
      %p164 = pneg %p163
    $region18: #{bottleneck_forward.5} parent=5 // pred_check_branch
      %166 = sbr.rel (%p164) target = $region20
    $region19: #{bottleneck_forward.5} parent=5 // pred_region
      // Predicated region
      $region21: #{bottleneck_forward.5} parent=19 // pred_check
        %p167 = pneg %p51
      $region22: #{bottleneck_forward.5} parent=19 // pred_check_branch
        %169 = sbr.rel (%p167) target = $region24
      $region23: #{bottleneck_forward.5} parent=19 // pred_region
        %s170 = sadd.s32 %s17, %s19
        %s171 = smul.u32 32, %s170
        %p172 = scmp.lt.s32.totalorder %s171, 63
        %s173 = scalar_select %p172, %s171, 63
        %s174 = smul.addr %s173, 4
        %s175 = scalar_lea.vmem %s0, %s174
        %s176 = sadd.s32 %s17, %s19
        %s177 = smul.u32 32, %s176
      $region24: #{bottleneck_forward.5} parent=19 // pred_fallthru
        _
    $region20: #{bottleneck_forward.5} parent=5 // pred_fallthru
      _
    %p178 = scmp.le.s32.totalorder 1, %s10
    %p179 = scmp.lt.s32.totalorder %s10, 3
    %p180 = pnand %p178, %p179
    %p181 = pneg %p180
    // Predicated region
    $region25: #{bottleneck_forward.5} parent=5 // pred_check
      _
    $region26: #{bottleneck_forward.5} parent=5 // pred_check_branch
      %183 = sbr.rel (%p180) target = $region28
    $region27: #{bottleneck_forward.5} parent=5 // pred_region
      %s184 = ssub.s32 %s10, 1
      %s185 = sadd.s32 %s20, %s22
      %s186 = smul.u32 32, %s185
      %p187 = scmp.lt.s32.totalorder %s186, 63
      %s188 = scalar_select %p187, %s186, 63
      %s189 = smul.addr %s188, 4
      %s190 = scalar_lea.vmem %s0, %s189
      %p191 = pneg %p57
      %p192 = pneg %p54
      %p193 = scmp.lt.s32.totalorder %s21, 0
      %s194 = scalar_select %p193, %s21, 0
      %s195 = smul.addr %s194, 4
      %s196 = scalar_lea.vmem %s1, %s195
      %p197 = pneg %p83
      %p198 = pneg %p80
      %p199 = pneg %p113
      %p200 = pneg %p110
      %s201 = sadd.s32 %s20, %s22
      %s202 = smul.u32 32, %s201
      %p203 = scmp.lt.s32.totalorder %s202, 63
      %s204 = scalar_select %p203, %s202, 63
      %p205 = scmp.lt.s32.totalorder %s21, 0
      %s206 = scalar_select %p205, %s21, 0
      %s207 = sadd.s32 %s206, %s204
      %s208 = smul.addr %s207, 4
      %s209 = scalar_lea.vmem %s2, %s208
      %p210 = pneg %p141
      %p211 = pneg %p138
      %p212 = scmp.lt.s32.totalorder %s20, 1
      %s213 = scalar_select %p212, %s20, 1
      %p214 = scmp.lt.s32.totalorder %s21, 0
      %s215 = scalar_select %p214, %s21, 0
      %s216 = sadd.s32 %s215, %s213
      %s217 = smul.addr %s216, 2
      %s218 = scalar_lea.vmem %s3, %s217
      %s219 = sadd.s32 %s20, %s22
      %s220 = smul.u32 32, %s219
      %p221 = scmp.lt.s32.totalorder %s220, 63
      %s222 = scalar_select %p221, %s220, 63
      %s223 = smul.addr %s222, 4
      %s224 = scalar_lea.vmem %s0, %s223
      %s225 = sadd.s32 %s20, %s22
      %s226 = smul.u32 32, %s225
      %p227 = scmp.lt.s32.totalorder %s21, 0
      %s228 = scalar_select %p227, %s21, 0
      %s229 = smul.addr %s228, 4
      %s230 = scalar_lea.vmem %s1, %s229
      %s231 = sadd.s32 %s20, %s22
      %s232 = smul.u32 32, %s231
      %p233 = scmp.lt.s32.totalorder %s232, 63
      %s234 = scalar_select %p233, %s232, 63
      %p235 = scmp.lt.s32.totalorder %s21, 0
      %s236 = scalar_select %p235, %s21, 0
      %s237 = sadd.s32 %s236, %s234
      %s238 = smul.addr %s237, 4
      %s239 = scalar_lea.vmem %s2, %s238
      %s240 = sadd.s32 %s20, %s22
      %s241 = smul.u32 32, %s240
      %p242 = scmp.lt.s32.totalorder %s20, 1
      %s243 = scalar_select %p242, %s20, 1
      %p244 = scmp.lt.s32.totalorder %s21, 0
      %s245 = scalar_select %p244, %s21, 0
      %s246 = sadd.s32 %s245, %s243
      %s247 = smul.addr %s246, 2
      %s248 = scalar_lea.vmem %s3, %s247
      %v250 = vld [vmem:[%s224] sm:$0xf]
      %v251 = vld [vmem:[%s224 + $0x4] sm:$0xf]
      %v252 = vld [vmem:[%s224 + $0x8] sm:$0xf]
      %v253 = vld [vmem:[%s224 + $0xc] sm:$0xf]
      %v254 = vld [vmem:[%s224 + $0x10] sm:$0xf]
      %v255 = vld [vmem:[%s224 + $0x14] sm:$0xf]
      %v256 = vld [vmem:[%s224 + $0x18] sm:$0xf]
      %v257 = vld [vmem:[%s224 + $0x1c] sm:$0xf]
      %v258 = vld [vmem:[%s224 + $0x20] sm:$0xf]
      %v259 = vld [vmem:[%s224 + $0x24] sm:$0xf]
      %v260 = vld [vmem:[%s224 + $0x28] sm:$0xf]
      %v261 = vld [vmem:[%s224 + $0x2c] sm:$0xf]
      %v262 = vld [vmem:[%s224 + $0x30] sm:$0xf]
      %v263 = vld [vmem:[%s224 + $0x34] sm:$0xf]
      %v264 = vld [vmem:[%s224 + $0x38] sm:$0xf]
      %v265 = vld [vmem:[%s224 + $0x3c] sm:$0xf]
      %v266 = vld [vmem:[%s224 + $0x40] sm:$0xf]
      %v267 = vld [vmem:[%s224 + $0x44] sm:$0xf]
      %v268 = vld [vmem:[%s224 + $0x48] sm:$0xf]
      %v269 = vld [vmem:[%s224 + $0x4c] sm:$0xf]
      %v270 = vld [vmem:[%s224 + $0x50] sm:$0xf]
      %v271 = vld [vmem:[%s224 + $0x54] sm:$0xf]
      %v272 = vld [vmem:[%s224 + $0x58] sm:$0xf]
      %v273 = vld [vmem:[%s224 + $0x5c] sm:$0xf]
      %v274 = vld [vmem:[%s224 + $0x60] sm:$0xf]
      %v275 = vld [vmem:[%s224 + $0x64] sm:$0xf]
      %v276 = vld [vmem:[%s224 + $0x68] sm:$0xf]
      %v277 = vld [vmem:[%s224 + $0x6c] sm:$0xf]
      %v278 = vld [vmem:[%s224 + $0x70] sm:$0xf]
      %v279 = vld [vmem:[%s224 + $0x74] sm:$0xf]
      %v280 = vld [vmem:[%s224 + $0x78] sm:$0xf]
      %v281 = vld [vmem:[%s224 + $0x7c] sm:$0xf]
      %v282 = vld [vmem:[%s230] sm:$0xf]
      %v283 = vld [vmem:[%s230 + $0x4] sm:$0xf]
      %v284 = vld [vmem:[%s230 + $0x8] sm:$0xf]
      %v285 = vld [vmem:[%s230 + $0xc] sm:$0xf]
      %v286 = vld [vmem:[%s230 + $0x10] sm:$0xf]
      %v287 = vld [vmem:[%s230 + $0x14] sm:$0xf]
      %v288 = vld [vmem:[%s230 + $0x18] sm:$0xf]
      %v289 = vld [vmem:[%s230 + $0x1c] sm:$0xf]
      %v290 = vld [vmem:[%s230 + $0x20] sm:$0xf]
      %v291 = vld [vmem:[%s230 + $0x24] sm:$0xf]
      %v292 = vld [vmem:[%s230 + $0x28] sm:$0xf]
      %v293 = vld [vmem:[%s230 + $0x2c] sm:$0xf]
      %v294 = vld [vmem:[%s230 + $0x30] sm:$0xf]
      %v295 = vld [vmem:[%s230 + $0x34] sm:$0xf]
      %v296 = vld [vmem:[%s230 + $0x38] sm:$0xf]
      %v297 = vld [vmem:[%s230 + $0x3c] sm:$0xf]
      %v330 = vunpack.c.l.b16 %v250
      %v331 = vunpack.c.l.b16 %v251
      %v332 = vunpack.c.l.b16 %v252
      %v333 = vunpack.c.l.b16 %v253
      %v334 = vunpack.c.l.b16 %v254
      %v335 = vunpack.c.l.b16 %v255
      %v336 = vunpack.c.l.b16 %v256
      %v337 = vunpack.c.l.b16 %v257
      %v338 = vunpack.c.l.b16 %v258
      %v339 = vunpack.c.l.b16 %v259
      %v340 = vunpack.c.l.b16 %v260
      %v341 = vunpack.c.l.b16 %v261
      %v342 = vunpack.c.l.b16 %v262
      %v343 = vunpack.c.l.b16 %v263
      %v344 = vunpack.c.l.b16 %v264
      %v345 = vunpack.c.l.b16 %v265
      %v346 = vunpack.c.l.b16 %v266
      %v347 = vunpack.c.l.b16 %v267
      %v348 = vunpack.c.l.b16 %v268
      %v349 = vunpack.c.l.b16 %v269
      %v350 = vunpack.c.l.b16 %v270
      %v351 = vunpack.c.l.b16 %v271
      %v352 = vunpack.c.l.b16 %v272
      %v353 = vunpack.c.l.b16 %v273
      %v354 = vunpack.c.l.b16 %v274
      %v355 = vunpack.c.l.b16 %v275
      %v356 = vunpack.c.l.b16 %v276
      %v357 = vunpack.c.l.b16 %v277
      %v358 = vunpack.c.l.b16 %v278
      %v359 = vunpack.c.l.b16 %v279
      %v360 = vunpack.c.l.b16 %v280
      %v361 = vunpack.c.l.b16 %v281
      %v362 = vpack.c.b16 %v331, %v330
      %v363 = vpack.c.b16 %v333, %v332
      %v364 = vpack.c.b16 %v335, %v334
      %v365 = vpack.c.b16 %v337, %v336
      %v366 = vpack.c.b16 %v339, %v338
      %v367 = vpack.c.b16 %v341, %v340
      %v368 = vpack.c.b16 %v343, %v342
      %v369 = vpack.c.b16 %v345, %v344
      %v370 = vpack.c.b16 %v347, %v346
      %v371 = vpack.c.b16 %v349, %v348
      %v372 = vpack.c.b16 %v351, %v350
      %v373 = vpack.c.b16 %v353, %v352
      %v374 = vpack.c.b16 %v355, %v354
      %v375 = vpack.c.b16 %v357, %v356
      %v376 = vpack.c.b16 %v359, %v358
      %v377 = vpack.c.b16 %v361, %v360
      %v410 = vunpack.c.l.b16 %v282
      %v411 = vunpack.c.l.b16 %v283
      %v412 = vunpack.c.l.b16 %v284
      %v413 = vunpack.c.l.b16 %v285
      %v414 = vunpack.c.l.b16 %v286
      %v415 = vunpack.c.l.b16 %v287
      %v416 = vunpack.c.l.b16 %v288
      %v417 = vunpack.c.l.b16 %v289
      %v418 = vunpack.c.l.b16 %v290
      %v419 = vunpack.c.l.b16 %v291
      %v420 = vunpack.c.l.b16 %v292
      %v421 = vunpack.c.l.b16 %v293
      %v422 = vunpack.c.l.b16 %v294
      %v423 = vunpack.c.l.b16 %v295
      %v424 = vunpack.c.l.b16 %v296
      %v425 = vunpack.c.l.b16 %v297
      %v426 = vpack.c.b16 %v411, %v410
      %v427 = vpack.c.b16 %v413, %v412
      %v428 = vpack.c.b16 %v415, %v414
      %v429 = vpack.c.b16 %v417, %v416
      %v430 = vpack.c.b16 %v419, %v418
      %v431 = vpack.c.b16 %v421, %v420
      %v432 = vpack.c.b16 %v423, %v422
      %v433 = vpack.c.b16 %v425, %v424
      %442 = vmatprep.subr.bf16.mxu0 0
      %443 = vmatpush1.bf16.msra.mxu0 %v433
      %444 = vmatprep.subr.bf16.mxu0 0
      %445 = vmatpush1.bf16.msra.mxu0 %v432
      %446 = vmatprep.subr.bf16.mxu0 0
      %447 = vmatpush1.bf16.msra.mxu0 %v431
      %448 = vmatprep.subr.bf16.mxu0 0
      %449 = vmatpush1.bf16.msra.mxu0 %v430
      %450 = vmatprep.subr.bf16.mxu0 0
      %451 = vmatpush1.bf16.msra.mxu0 %v429
      %452 = vmatprep.subr.bf16.mxu0 0
      %453 = vmatpush1.bf16.msra.mxu0 %v428
      %454 = vmatprep.subr.bf16.mxu0 0
      %455 = vmatpush1.bf16.msra.mxu0 %v427
      %456 = vmatprep.subr.bf16.mxu0 0
      %457 = vmatpush1.bf16.msra.mxu0 %v426
      %458 = vmatprep.subr.bf16.mxu0 0
      %459 = vmatpush2.bf16.msra.mxu0 0
      %460 = vmatprep.subr.bf16.mxu0 0
      %461 = vmatpush2.bf16.msra.mxu0 0
      %462 = vmatprep.subr.bf16.mxu0 0
      %463 = vmatpush2.bf16.msra.mxu0 0
      %464 = vmatprep.subr.bf16.mxu0 0
      %465 = vmatpush2.bf16.msra.mxu0 0
      %466 = vmatprep.subr.bf16.mxu0 0
      %467 = vmatpush2.bf16.msra.mxu0 0
      %468 = vmatprep.subr.bf16.mxu0 0
      %469 = vmatpush2.bf16.msra.mxu0 0
      %470 = vmatprep.subr.bf16.mxu0 0
      %471 = vmatpush2.bf16.msra.mxu0 0
      %472 = vmatprep.subr.bf16.mxu0 0
      %473 = vmatpush2.bf16.msra.mxu0 0
      %474 = vmatprep.mubr.bf16.mxu0 0
      %475 = vmatmul.mubr.bf16.gmra.mxu0 %v362
      %v476 = vpop.f32.mrf.mxu0
      %v477 = vadd.f32 0.0, %v476
      %v478 = vpop.f32.mrf.mxu0
      %v479 = vpop.f32.mrf.mxu0
      %v480 = vadd.f32 0.0, %v479
      %v481 = vpop.f32.mrf.mxu0
      %482 = vmatprep.mubr.bf16.mxu0 0
      %483 = vmatmul.mubr.bf16.gmra.mxu0 %v363
      %v484 = vpop.f32.mrf.mxu0
      %v485 = vadd.f32 0.0, %v484
      %v486 = vpop.f32.mrf.mxu0
      %v487 = vpop.f32.mrf.mxu0
      %v488 = vadd.f32 0.0, %v487
      %v489 = vpop.f32.mrf.mxu0
      %490 = vmatprep.mubr.bf16.mxu0 0
      %491 = vmatmul.mubr.bf16.gmra.mxu0 %v364
      %v492 = vpop.f32.mrf.mxu0
      %v493 = vadd.f32 0.0, %v492
      %v494 = vpop.f32.mrf.mxu0
      %v495 = vpop.f32.mrf.mxu0
      %v496 = vadd.f32 0.0, %v495
      %v497 = vpop.f32.mrf.mxu0
      %498 = vmatprep.mubr.bf16.mxu0 0
      %499 = vmatmul.mubr.bf16.gmra.mxu0 %v365
      %v500 = vpop.f32.mrf.mxu0
      %v501 = vadd.f32 0.0, %v500
      %v502 = vpop.f32.mrf.mxu0
      %v503 = vpop.f32.mrf.mxu0
      %v504 = vadd.f32 0.0, %v503
      %v505 = vpop.f32.mrf.mxu0
      %506 = vmatprep.mubr.bf16.mxu0 0
      %507 = vmatmul.mubr.bf16.gmra.mxu0 %v366
      %v508 = vpop.f32.mrf.mxu0
      %v509 = vadd.f32 0.0, %v508
      %v510 = vpop.f32.mrf.mxu0
      %v511 = vpop.f32.mrf.mxu0
      %v512 = vadd.f32 0.0, %v511
      %v513 = vpop.f32.mrf.mxu0
      %514 = vmatprep.mubr.bf16.mxu0 0
      %515 = vmatmul.mubr.bf16.gmra.mxu0 %v367
      %v516 = vpop.f32.mrf.mxu0
      %v517 = vadd.f32 0.0, %v516
      %v518 = vpop.f32.mrf.mxu0
      %v519 = vpop.f32.mrf.mxu0
      %v520 = vadd.f32 0.0, %v519
      %v521 = vpop.f32.mrf.mxu0
      %522 = vmatprep.mubr.bf16.mxu0 0
      %523 = vmatmul.mubr.bf16.gmra.mxu0 %v368
      %v524 = vpop.f32.mrf.mxu0
      %v525 = vadd.f32 0.0, %v524
      %v526 = vpop.f32.mrf.mxu0
      %v527 = vpop.f32.mrf.mxu0
      %v528 = vadd.f32 0.0, %v527
      %v529 = vpop.f32.mrf.mxu0
      %530 = vmatprep.mubr.bf16.mxu0 0
      %531 = vmatmul.mubr.bf16.gmra.mxu0 %v369
      %v532 = vpop.f32.mrf.mxu0
      %v533 = vadd.f32 0.0, %v532
      %v534 = vpop.f32.mrf.mxu0
      %v535 = vpop.f32.mrf.mxu0
      %v536 = vadd.f32 0.0, %v535
      %v537 = vpop.f32.mrf.mxu0
      %538 = vmatprep.mubr.bf16.mxu0 0
      %539 = vmatmul.mubr.bf16.gmra.mxu0 %v370
      %v540 = vpop.f32.mrf.mxu0
      %v541 = vadd.f32 0.0, %v540
      %v542 = vpop.f32.mrf.mxu0
      %v543 = vpop.f32.mrf.mxu0
      %v544 = vadd.f32 0.0, %v543
      %v545 = vpop.f32.mrf.mxu0
      %546 = vmatprep.mubr.bf16.mxu0 0
      %547 = vmatmul.mubr.bf16.gmra.mxu0 %v371
      %v548 = vpop.f32.mrf.mxu0
      %v549 = vadd.f32 0.0, %v548
      %v550 = vpop.f32.mrf.mxu0
      %v551 = vpop.f32.mrf.mxu0
      %v552 = vadd.f32 0.0, %v551
      %v553 = vpop.f32.mrf.mxu0
      %554 = vmatprep.mubr.bf16.mxu0 0
      %555 = vmatmul.mubr.bf16.gmra.mxu0 %v372
      %v556 = vpop.f32.mrf.mxu0
      %v557 = vadd.f32 0.0, %v556
      %v558 = vpop.f32.mrf.mxu0
      %v559 = vpop.f32.mrf.mxu0
      %v560 = vadd.f32 0.0, %v559
      %v561 = vpop.f32.mrf.mxu0
      %562 = vmatprep.mubr.bf16.mxu0 0
      %563 = vmatmul.mubr.bf16.gmra.mxu0 %v373
      %v564 = vpop.f32.mrf.mxu0
      %v565 = vadd.f32 0.0, %v564
      %v566 = vpop.f32.mrf.mxu0
      %v567 = vpop.f32.mrf.mxu0
      %v568 = vadd.f32 0.0, %v567
      %v569 = vpop.f32.mrf.mxu0
      %570 = vmatprep.mubr.bf16.mxu0 0
      %571 = vmatmul.mubr.bf16.gmra.mxu0 %v374
      %v572 = vpop.f32.mrf.mxu0
      %v573 = vadd.f32 0.0, %v572
      %v574 = vpop.f32.mrf.mxu0
      %v575 = vpop.f32.mrf.mxu0
      %v576 = vadd.f32 0.0, %v575
      %v577 = vpop.f32.mrf.mxu0
      %578 = vmatprep.mubr.bf16.mxu0 0
      %579 = vmatmul.mubr.bf16.gmra.mxu0 %v375
      %v580 = vpop.f32.mrf.mxu0
      %v581 = vadd.f32 0.0, %v580
      %v582 = vpop.f32.mrf.mxu0
      %v583 = vpop.f32.mrf.mxu0
      %v584 = vadd.f32 0.0, %v583
      %v585 = vpop.f32.mrf.mxu0
      %586 = vmatprep.mubr.bf16.mxu0 0
      %587 = vmatmul.mubr.bf16.gmra.mxu0 %v376
      %v588 = vpop.f32.mrf.mxu0
      %v589 = vadd.f32 0.0, %v588
      %v590 = vpop.f32.mrf.mxu0
      %v591 = vpop.f32.mrf.mxu0
      %v592 = vadd.f32 0.0, %v591
      %v593 = vpop.f32.mrf.mxu0
      %594 = vmatprep.mubr.bf16.mxu0 0
      %595 = vmatmul.mubr.bf16.gmra.mxu0 %v377
      %v596 = vpop.f32.mrf.mxu0
      %v597 = vadd.f32 0.0, %v596
      %v598 = vpop.f32.mrf.mxu0
      %v599 = vpop.f32.mrf.mxu0
      %v600 = vadd.f32 0.0, %v599
      %v601 = vpop.f32.mrf.mxu0
      %602 = vdwg.mxu0
      %p603 = scmp.eq.s32.totalorder %s22, 0
      // Predicated region
      $region29: #{bottleneck_forward.5} parent=27 // pred_check
        %p604 = pneg %p603
      $region30: #{bottleneck_forward.5} parent=27 // pred_check_branch
        %606 = sbr.rel (%p604) target = $region32
      $region31: #{bottleneck_forward.5} parent=27 // pred_region
        %607 = vst [vmem:[%s248] sm:$0x3] 0.0
      $region32: #{bottleneck_forward.5} parent=27 // pred_fallthru
        _
      %v608 = vld [vmem:[%s248] sm:$0x3]
      %v609 = vadd.f32 %v477, %v480
      %v610 = vadd.f32 %v609, %v485
      %v611 = vadd.f32 %v610, %v488
      %v612 = vadd.f32 %v611, %v493
      %v613 = vadd.f32 %v612, %v496
      %v614 = vadd.f32 %v613, %v501
      %v615 = vadd.f32 %v614, %v504
      %v616 = vadd.f32 %v615, %v509
      %v617 = vadd.f32 %v616, %v512
      %v618 = vadd.f32 %v617, %v517
      %v619 = vadd.f32 %v618, %v520
      %v620 = vadd.f32 %v619, %v525
      %v621 = vadd.f32 %v620, %v528
      %v622 = vadd.f32 %v621, %v533
      %v623 = vadd.f32 %v622, %v536
      %v624 = vadd.f32 %v623, %v541
      %v625 = vadd.f32 %v624, %v544
      %v626 = vadd.f32 %v625, %v549
      %v627 = vadd.f32 %v626, %v552
      %v628 = vadd.f32 %v627, %v557
      %v629 = vadd.f32 %v628, %v560
      %v630 = vadd.f32 %v629, %v565
      %v631 = vadd.f32 %v630, %v568
      %v632 = vadd.f32 %v631, %v573
      %v633 = vadd.f32 %v632, %v576
      %v634 = vadd.f32 %v633, %v581
      %v635 = vadd.f32 %v634, %v584
      %v636 = vadd.f32 %v635, %v589
      %v637 = vadd.f32 %v636, %v592
      %v638 = vadd.f32 %v637, %v597
      %v639 = vadd.f32 %v638, %v600
      %v640 = vrot.slane %v639, 4
      %v641 = vadd.f32 %v639, %v640
      %v642 = vrot.slane %v641, 2
      %v643 = vadd.f32 %v641, %v642
      %v644 = vrot.slane %v643, 1
      %v645 = vadd.f32 %v643, %v644
      %v646 = vmul.f32 %v477, %v477
      %v647 = vmul.f32 %v480, %v480
      %v648 = vmul.f32 %v485, %v485
      %v649 = vmul.f32 %v488, %v488
      %v650 = vmul.f32 %v493, %v493
      %v651 = vmul.f32 %v496, %v496
      %v652 = vmul.f32 %v501, %v501
      %v653 = vmul.f32 %v504, %v504
      %v654 = vmul.f32 %v509, %v509
      %v655 = vmul.f32 %v512, %v512
      %v656 = vmul.f32 %v517, %v517
      %v657 = vmul.f32 %v520, %v520
      %v658 = vmul.f32 %v525, %v525
      %v659 = vmul.f32 %v528, %v528
      %v660 = vmul.f32 %v533, %v533
      %v661 = vmul.f32 %v536, %v536
      %v662 = vmul.f32 %v541, %v541
      %v663 = vmul.f32 %v544, %v544
      %v664 = vmul.f32 %v549, %v549
      %v665 = vmul.f32 %v552, %v552
      %v666 = vmul.f32 %v557, %v557
      %v667 = vmul.f32 %v560, %v560
      %v668 = vmul.f32 %v565, %v565
      %v669 = vmul.f32 %v568, %v568
      %v670 = vmul.f32 %v573, %v573
      %v671 = vmul.f32 %v576, %v576
      %v672 = vmul.f32 %v581, %v581
      %v673 = vmul.f32 %v584, %v584
      %v674 = vmul.f32 %v589, %v589
      %v675 = vmul.f32 %v592, %v592
      %v676 = vmul.f32 %v597, %v597
      %v677 = vmul.f32 %v600, %v600
      %v678 = vadd.f32 %v646, %v647
      %v679 = vadd.f32 %v678, %v648
      %v680 = vadd.f32 %v679, %v649
      %v681 = vadd.f32 %v680, %v650
      %v682 = vadd.f32 %v681, %v651
      %v683 = vadd.f32 %v682, %v652
      %v684 = vadd.f32 %v683, %v653
      %v685 = vadd.f32 %v684, %v654
      %v686 = vadd.f32 %v685, %v655
      %v687 = vadd.f32 %v686, %v656
      %v688 = vadd.f32 %v687, %v657
      %v689 = vadd.f32 %v688, %v658
      %v690 = vadd.f32 %v689, %v659
      %v691 = vadd.f32 %v690, %v660
      %v692 = vadd.f32 %v691, %v661
      %v693 = vadd.f32 %v692, %v662
      %v694 = vadd.f32 %v693, %v663
      %v695 = vadd.f32 %v694, %v664
      %v696 = vadd.f32 %v695, %v665
      %v697 = vadd.f32 %v696, %v666
      %v698 = vadd.f32 %v697, %v667
      %v699 = vadd.f32 %v698, %v668
      %v700 = vadd.f32 %v699, %v669
      %v701 = vadd.f32 %v700, %v670
      %v702 = vadd.f32 %v701, %v671
      %v703 = vadd.f32 %v702, %v672
      %v704 = vadd.f32 %v703, %v673
      %v705 = vadd.f32 %v704, %v674
      %v706 = vadd.f32 %v705, %v675
      %v707 = vadd.f32 %v706, %v676
      %v708 = vadd.f32 %v707, %v677
      %v709 = vrot.slane %v708, 4
      %v710 = vadd.f32 %v708, %v709
      %v711 = vrot.slane %v710, 2
      %v712 = vadd.f32 %v710, %v711
      %v713 = vrot.slane %v712, 1
      %v714 = vadd.f32 %v712, %v713
      %vm715 = vcmask 1040384
      %v716 = vsel %vm715, %v645, %v714
      %v717 = vadd.f32 %v608, %v716
      %718 = vst [vmem:[%s248] sm:$0x3] %v717
      %v719 = vpack.c.bf16 %v480, %v477
      %v720 = vpack.c.bf16 %v488, %v485
      %v721 = vpack.c.bf16 %v496, %v493
      %v722 = vpack.c.bf16 %v504, %v501
      %v723 = vpack.c.bf16 %v512, %v509
      %v724 = vpack.c.bf16 %v520, %v517
      %v725 = vpack.c.bf16 %v528, %v525
      %v726 = vpack.c.bf16 %v536, %v533
      %v727 = vpack.c.bf16 %v544, %v541
      %v728 = vpack.c.bf16 %v552, %v549
      %v729 = vpack.c.bf16 %v560, %v557
      %v730 = vpack.c.bf16 %v568, %v565
      %v731 = vpack.c.bf16 %v576, %v573
      %v732 = vpack.c.bf16 %v584, %v581
      %v733 = vpack.c.bf16 %v592, %v589
      %v734 = vpack.c.bf16 %v600, %v597
      %v751 = vunpack.c.l.b16 %v719
      %v752 = vunpack.c.h.b16 %v719
      %v753 = vunpack.c.l.b16 %v720
      %v754 = vunpack.c.h.b16 %v720
      %v755 = vunpack.c.l.b16 %v721
      %v756 = vunpack.c.h.b16 %v721
      %v757 = vunpack.c.l.b16 %v722
      %v758 = vunpack.c.h.b16 %v722
      %v759 = vunpack.c.l.b16 %v723
      %v760 = vunpack.c.h.b16 %v723
      %v761 = vunpack.c.l.b16 %v724
      %v762 = vunpack.c.h.b16 %v724
      %v763 = vunpack.c.l.b16 %v725
      %v764 = vunpack.c.h.b16 %v725
      %v765 = vunpack.c.l.b16 %v726
      %v766 = vunpack.c.h.b16 %v726
      %v767 = vunpack.c.l.b16 %v727
      %v768 = vunpack.c.h.b16 %v727
      %v769 = vunpack.c.l.b16 %v728
      %v770 = vunpack.c.h.b16 %v728
      %v771 = vunpack.c.l.b16 %v729
      %v772 = vunpack.c.h.b16 %v729
      %v773 = vunpack.c.l.b16 %v730
      %v774 = vunpack.c.h.b16 %v730
      %v775 = vunpack.c.l.b16 %v731
      %v776 = vunpack.c.h.b16 %v731
      %v777 = vunpack.c.l.b16 %v732
      %v778 = vunpack.c.h.b16 %v732
      %v779 = vunpack.c.l.b16 %v733
      %v780 = vunpack.c.h.b16 %v733
      %v781 = vunpack.c.l.b16 %v734
      %v782 = vunpack.c.h.b16 %v734
      %v783 = vpack.c.b16 %v751, %v751
      %v784 = vpack.c.b16 %v752, %v752
      %v785 = vpack.c.b16 %v753, %v753
      %v786 = vpack.c.b16 %v754, %v754
      %v787 = vpack.c.b16 %v755, %v755
      %v788 = vpack.c.b16 %v756, %v756
      %v789 = vpack.c.b16 %v757, %v757
      %v790 = vpack.c.b16 %v758, %v758
      %v791 = vpack.c.b16 %v759, %v759
      %v792 = vpack.c.b16 %v760, %v760
      %v793 = vpack.c.b16 %v761, %v761
      %v794 = vpack.c.b16 %v762, %v762
      %v795 = vpack.c.b16 %v763, %v763
      %v796 = vpack.c.b16 %v764, %v764
      %v797 = vpack.c.b16 %v765, %v765
      %v798 = vpack.c.b16 %v766, %v766
      %v799 = vpack.c.b16 %v767, %v767
      %v800 = vpack.c.b16 %v768, %v768
      %v801 = vpack.c.b16 %v769, %v769
      %v802 = vpack.c.b16 %v770, %v770
      %v803 = vpack.c.b16 %v771, %v771
      %v804 = vpack.c.b16 %v772, %v772
      %v805 = vpack.c.b16 %v773, %v773
      %v806 = vpack.c.b16 %v774, %v774
      %v807 = vpack.c.b16 %v775, %v775
      %v808 = vpack.c.b16 %v776, %v776
      %v809 = vpack.c.b16 %v777, %v777
      %v810 = vpack.c.b16 %v778, %v778
      %v811 = vpack.c.b16 %v779, %v779
      %v812 = vpack.c.b16 %v780, %v780
      %v813 = vpack.c.b16 %v781, %v781
      %v814 = vpack.c.b16 %v782, %v782
      %847 = vst [vmem:[%s239] sm:$0xf] %v783
      %848 = vst [vmem:[%s239 + $0x4] sm:$0xf] %v784
      %849 = vst [vmem:[%s239 + $0x8] sm:$0xf] %v785
      %850 = vst [vmem:[%s239 + $0xc] sm:$0xf] %v786
      %851 = vst [vmem:[%s239 + $0x10] sm:$0xf] %v787
      %852 = vst [vmem:[%s239 + $0x14] sm:$0xf] %v788
      %853 = vst [vmem:[%s239 + $0x18] sm:$0xf] %v789
      %854 = vst [vmem:[%s239 + $0x1c] sm:$0xf] %v790
      %855 = vst [vmem:[%s239 + $0x20] sm:$0xf] %v791
      %856 = vst [vmem:[%s239 + $0x24] sm:$0xf] %v792
      %857 = vst [vmem:[%s239 + $0x28] sm:$0xf] %v793
      %858 = vst [vmem:[%s239 + $0x2c] sm:$0xf] %v794
      %859 = vst [vmem:[%s239 + $0x30] sm:$0xf] %v795
      %860 = vst [vmem:[%s239 + $0x34] sm:$0xf] %v796
      %861 = vst [vmem:[%s239 + $0x38] sm:$0xf] %v797
      %862 = vst [vmem:[%s239 + $0x3c] sm:$0xf] %v798
      %863 = vst [vmem:[%s239 + $0x40] sm:$0xf] %v799
      %864 = vst [vmem:[%s239 + $0x44] sm:$0xf] %v800
      %865 = vst [vmem:[%s239 + $0x48] sm:$0xf] %v801
      %866 = vst [vmem:[%s239 + $0x4c] sm:$0xf] %v802
      %867 = vst [vmem:[%s239 + $0x50] sm:$0xf] %v803
      %868 = vst [vmem:[%s239 + $0x54] sm:$0xf] %v804
      %869 = vst [vmem:[%s239 + $0x58] sm:$0xf] %v805
      %870 = vst [vmem:[%s239 + $0x5c] sm:$0xf] %v806
      %871 = vst [vmem:[%s239 + $0x60] sm:$0xf] %v807
      %872 = vst [vmem:[%s239 + $0x64] sm:$0xf] %v808
      %873 = vst [vmem:[%s239 + $0x68] sm:$0xf] %v809
      %874 = vst [vmem:[%s239 + $0x6c] sm:$0xf] %v810
      %875 = vst [vmem:[%s239 + $0x70] sm:$0xf] %v811
      %876 = vst [vmem:[%s239 + $0x74] sm:$0xf] %v812
      %877 = vst [vmem:[%s239 + $0x78] sm:$0xf] %v813
      %878 = vst [vmem:[%s239 + $0x7c] sm:$0xf] %v814
      %s879 = sadd.s32 %s20, %s22
      %s880 = smul.u32 32, %s879
      %p881 = scmp.lt.s32.totalorder %s880, 63
      %s882 = scalar_select %p881, %s880, 63
      %p883 = scmp.lt.s32.totalorder %s21, 0
      %s884 = scalar_select %p883, %s21, 0
      %s885 = sadd.s32 %s884, %s882
      %s886 = smul.addr %s885, 4
      %s887 = scalar_lea.vmem %s2, %s886
      %p888 = scmp.lt.s32.totalorder %s20, 1
      %s889 = scalar_select %p888, %s20, 1
      %p890 = scmp.lt.s32.totalorder %s21, 0
      %s891 = scalar_select %p890, %s21, 0
      %s892 = sadd.s32 %s891, %s889
      %s893 = smul.addr %s892, 2
      %s894 = scalar_lea.vmem %s3, %s893
      // Predicated region
      $region33: #{bottleneck_forward.5} parent=27 // pred_check
        %p895 = pneg %p110
      $region34: #{bottleneck_forward.5} parent=27 // pred_check_branch
        %897 = sbr.rel (%p895) target = $region36
      $region35: #{bottleneck_forward.5} parent=27 // pred_region
        %s898 = sadd.s32 %s20, %s22
        %s899 = smul.u32 32, %s898
      $region36: #{bottleneck_forward.5} parent=27 // pred_fallthru
        _
      // Predicated region
      $region37: #{bottleneck_forward.5} parent=27 // pred_check
        %p900 = pneg %p138
      $region38: #{bottleneck_forward.5} parent=27 // pred_check_branch
        %902 = sbr.rel (%p900) target = $region40
      $region39: #{bottleneck_forward.5} parent=27 // pred_region
        _
      $region40: #{bottleneck_forward.5} parent=27 // pred_fallthru
        _
    $region28: #{bottleneck_forward.5} parent=5 // pred_fallthru
      _
    %p903 = scmp.le.s32.totalorder 2, %s10
    // Predicated region
    $region41: #{bottleneck_forward.5} parent=5 // pred_check
      %p904 = pneg %p903
    $region42: #{bottleneck_forward.5} parent=5 // pred_check_branch
      %906 = sbr.rel (%p904) target = $region44
    $region43: #{bottleneck_forward.5} parent=5 // pred_region
      %s907 = ssub.s32 %s10, 2
      // Predicated region
      $region45: #{bottleneck_forward.5} parent=43 // pred_check
        %p908 = pneg %p116
      $region46: #{bottleneck_forward.5} parent=43 // pred_check_branch
        %910 = sbr.rel (%p908) target = $region48
      $region47: #{bottleneck_forward.5} parent=43 // pred_region
        %s911 = sadd.s32 %s23, %s25
        %s912 = smul.u32 32, %s911
        %p913 = scmp.lt.s32.totalorder %s912, 63
        %s914 = scalar_select %p913, %s912, 63
        %p915 = scmp.lt.s32.totalorder %s24, 0
        %s916 = scalar_select %p915, %s24, 0
        %s917 = sadd.s32 %s916, %s914
        %s918 = smul.addr %s917, 4
        %s919 = scalar_lea.vmem %s2, %s918
      $region48: #{bottleneck_forward.5} parent=43 // pred_fallthru
        _
      // Predicated region
      $region49: #{bottleneck_forward.5} parent=43 // pred_check
        %p920 = pneg %p144
      $region50: #{bottleneck_forward.5} parent=43 // pred_check_branch
        %922 = sbr.rel (%p920) target = $region52
      $region51: #{bottleneck_forward.5} parent=43 // pred_region
        %p923 = scmp.lt.s32.totalorder %s23, 1
        %s924 = scalar_select %p923, %s23, 1
        %p925 = scmp.lt.s32.totalorder %s24, 0
        %s926 = scalar_select %p925, %s24, 0
        %s927 = sadd.s32 %s926, %s924
        %s928 = smul.addr %s927, 2
        %s929 = scalar_lea.vmem %s3, %s928
      $region52: #{bottleneck_forward.5} parent=43 // pred_fallthru
        _
    $region44: #{bottleneck_forward.5} parent=5 // pred_fallthru
      _
  $region6: #{bottleneck_forward.5} parent=0 // loop_footer
    %s14 = sadd.s32 1, %s10
  $region7: #{bottleneck_forward.5} parent=0 // loop_footer_branch
    %9 = sbr.rel target = $region3
  $region8: #{bottleneck_forward.5} parent=0 // loop_exit
    _

// kernel: bottleneck_forward.7
$region0: #{bottleneck_forward.7}
  #allocation0 [shape = 'u32[]', space=smem, size = 0x4, offset = 0x4, fixed_abs, tag = 'smem constant byte address 0x4 - core index']
  #allocation1 [shape = 'u32[144,128]{1,0:T(1,128)}', space=vmem, size = 0x12000, scoped, tag = 'internal scratch']
  %s0 = inlined_call_operand.vmem [shape: bf16[512,128], index: 0, kind: input, shape index: {}]
  %s1 = inlined_call_operand.vmem [shape: bf16[128,256], index: 1, kind: input, shape index: {}]
  %s2 = inlined_call_operand.vmem [shape: bf16[512,256], index: 2, kind: output, shape index: {0}]
  %s3 = inlined_call_operand.vmem [shape: f32[2,2,256], index: 3, kind: output, shape index: {1}]
  %4 = xla_tuple %s2, %s3
  %s5 = sld [smem:[#allocation0]]
  $region53: #{bottleneck_forward.7} parent=0
    _
  %s7 = ssub.s32 1, %s5
  %s8 = scalar_select 0, %s7, %s5
  loop: start=0, step=1, limit=4
  $region2: #{bottleneck_forward.7} parent=0 // loop_pre_header
    _
  $region3: #{bottleneck_forward.7} parent=0 // loop_header
    %s10 = sphi 0, %s14
    %p11 = scmp.ge.s32.totalorder %s10, 4
    %s17 = sphi 0, %s36
    %s18 = sphi 0, %s32
    %s19 = sphi 0, %s28
    %s20 = sphi 0, %s17
    %s21 = sphi 0, %s18
    %s22 = sphi 0, %s19
    %s23 = sphi 0, %s20
    %s24 = sphi 0, %s21
    %s25 = sphi 0, %s22
    %s41 = sphi 0, %s43
    %s44 = sphi 0, %s41
    %s45 = sphi 0, %s44
    %s61 = sphi 0, %s45
    %s67 = sphi 0, %s69
    %s70 = sphi 0, %s67
    %s71 = sphi 0, %s70
    %s87 = sphi 0, %s71
    %s97 = sphi 0, %s99
    %s100 = sphi 0, %s97
    %s101 = sphi 0, %s100
    %s117 = sphi 0, %s101
    %s125 = sphi 0, %s127
    %s128 = sphi 0, %s125
    %s129 = sphi 0, %s128
    %s145 = sphi 0, %s129
  $region4: #{bottleneck_forward.7} parent=0 // loop_header_branch
    %13 = sbr.rel (%p11) target = $region8
  $region5: #{bottleneck_forward.7} parent=0 // loop_body
    %s15 = ssub.s32 %s10, 1
    %s16 = ssub.s32 %s10, 2
    %s26 = sadd.s32 1, %s19
    %p27 = scmp.ge.s32.totalorder %s26, 1
    %s28 = scalar_select %p27, 0, %s26
    %s29 = sadd.s32 1, %s18
    %s30 = scalar_select %p27, %s29, %s18
    %p31 = scmp.ge.s32.totalorder %s30, 1
    %s32 = scalar_select %p31, 0, %s30
    %s33 = sadd.s32 1, %s17
    %s34 = scalar_select %p31, %s33, %s17
    %p35 = scmp.ge.s32.totalorder %s34, 2
    %s36 = scalar_select %p35, 0, %s34
    %s37 = sadd.s32 %s17, %s19
    %s38 = sadd.s32 %s36, %s28
    %s39 = ssub.s32 %s37, %s38
    %p40 = scmp.eq.s32.totalorder %s39, 0
    %s42 = sadd.s32 %s41, 1
    %s43 = scalar_select %p40, %s41, %s42
    %p46 = pneg %p40
    %p47 = scmp.eq.s32.totalorder %s10, 1
    %p48 = por %p46, %p47
    %p49 = scmp.ne.s32.totalorder %s41, %s44
    %p50 = scmp.eq.s32.totalorder %s10, 0
    %p51 = por %p49, %p50
    %p52 = scmp.ne.s32.totalorder %s41, %s44
    %p53 = scmp.eq.s32.totalorder %s15, 1
    %p54 = por %p52, %p53
    %p55 = scmp.ne.s32.totalorder %s44, %s45
    %p56 = scmp.eq.s32.totalorder %s15, 0
    %p57 = por %p55, %p56
    %p58 = scmp.ne.s32.totalorder %s44, %s45
    %p59 = scmp.eq.s32.totalorder %s16, 1
    %p60 = por %p58, %p59
    %p62 = scmp.ne.s32.totalorder %s45, %s61
    %p63 = scmp.eq.s32.totalorder %s16, 0
    %p64 = por %p62, %p63
    %s65 = ssub.s32 %s18, %s32
    %p66 = scmp.eq.s32.totalorder %s65, 0
    %s68 = sadd.s32 %s67, 1
    %s69 = scalar_select %p66, %s67, %s68
    %p72 = pneg %p66
    %p73 = scmp.eq.s32.totalorder %s10, 1
    %p74 = por %p72, %p73
    %p75 = scmp.ne.s32.totalorder %s67, %s70
    %p76 = scmp.eq.s32.totalorder %s10, 0
    %p77 = por %p75, %p76
    %p78 = scmp.ne.s32.totalorder %s67, %s70
    %p79 = scmp.eq.s32.totalorder %s15, 1
    %p80 = por %p78, %p79
    %p81 = scmp.ne.s32.totalorder %s70, %s71
    %p82 = scmp.eq.s32.totalorder %s15, 0
    %p83 = por %p81, %p82
    %p84 = scmp.ne.s32.totalorder %s70, %s71
    %p85 = scmp.eq.s32.totalorder %s16, 1
    %p86 = por %p84, %p85
    %p88 = scmp.ne.s32.totalorder %s71, %s87
    %p89 = scmp.eq.s32.totalorder %s16, 0
    %p90 = por %p88, %p89
    %s91 = sadd.s32 %s17, %s19
    %s92 = sadd.s32 %s36, %s28
    %s93 = ssub.s32 %s91, %s92
    %s94 = ssub.s32 %s18, %s32
    %s95 = sor.u32 %s93, %s94
    %p96 = scmp.eq.s32.totalorder %s95, 0
    %s98 = sadd.s32 %s97, 1
    %s99 = scalar_select %p96, %s97, %s98
    %p102 = pneg %p96
    %p103 = scmp.eq.s32.totalorder %s10, 1
    %p104 = por %p102, %p103
    %p105 = scmp.ne.s32.totalorder %s97, %s100
    %p106 = scmp.eq.s32.totalorder %s10, 0
    %p107 = por %p105, %p106
    %p108 = scmp.ne.s32.totalorder %s97, %s100
    %p109 = scmp.eq.s32.totalorder %s15, 1
    %p110 = por %p108, %p109
    %p111 = scmp.ne.s32.totalorder %s100, %s101
    %p112 = scmp.eq.s32.totalorder %s15, 0
    %p113 = por %p111, %p112
    %p114 = scmp.ne.s32.totalorder %s100, %s101
    %p115 = scmp.eq.s32.totalorder %s16, 1
    %p116 = por %p114, %p115
    %p118 = scmp.ne.s32.totalorder %s101, %s117
    %p119 = scmp.eq.s32.totalorder %s16, 0
    %p120 = por %p118, %p119
    %s121 = ssub.s32 %s17, %s36
    %s122 = ssub.s32 %s18, %s32
    %s123 = sor.u32 %s121, %s122
    %p124 = scmp.eq.s32.totalorder %s123, 0
    %s126 = sadd.s32 %s125, 1
    %s127 = scalar_select %p124, %s125, %s126
    %p130 = pneg %p124
    %p131 = scmp.eq.s32.totalorder %s10, 1
    %p132 = por %p130, %p131
    %p133 = scmp.ne.s32.totalorder %s125, %s128
    %p134 = scmp.eq.s32.totalorder %s10, 0
    %p135 = por %p133, %p134
    %p136 = scmp.ne.s32.totalorder %s125, %s128
    %p137 = scmp.eq.s32.totalorder %s15, 1
    %p138 = por %p136, %p137
    %p139 = scmp.ne.s32.totalorder %s128, %s129
    %p140 = scmp.eq.s32.totalorder %s15, 0
    %p141 = por %p139, %p140
    %p142 = scmp.ne.s32.totalorder %s128, %s129
    %p143 = scmp.eq.s32.totalorder %s16, 1
    %p144 = por %p142, %p143
    %p146 = scmp.ne.s32.totalorder %s129, %s145
    %p147 = scmp.eq.s32.totalorder %s16, 0
    %p148 = por %p146, %p147
    %p149 = scmp.le.s32.totalorder 1, %s10
    %p150 = scmp.lt.s32.totalorder %s10, 3
    %p151 = pnand %p149, %p150
    %p152 = pneg %p151
    // Predicated region
    $region9: #{bottleneck_forward.7} parent=5 // pred_check
      _
    $region10: #{bottleneck_forward.7} parent=5 // pred_check_branch
      %154 = sbr.rel (%p151) target = $region12
    $region11: #{bottleneck_forward.7} parent=5 // pred_region
      %s155 = ssub.s32 %s10, 1
      // Predicated region
      $region13: #{bottleneck_forward.7} parent=11 // pred_check
        %p156 = pneg %p83
      $region14: #{bottleneck_forward.7} parent=11 // pred_check_branch
        %158 = sbr.rel (%p156) target = $region16
      $region15: #{bottleneck_forward.7} parent=11 // pred_region
        %s159 = smul.u32 2, %s21
        %p160 = scmp.lt.s32.totalorder %s159, 1
        %s161 = scalar_select %p160, %s159, 1
        %s162 = smul.addr %s161, 4
        %s163 = scalar_lea.vmem %s1, %s162
        %s164 = smul.u32 2, %s21
      $region16: #{bottleneck_forward.7} parent=11 // pred_fallthru
        _
    $region12: #{bottleneck_forward.7} parent=5 // pred_fallthru
      _
    %p165 = scmp.lt.s32.totalorder %s10, 2
    // Predicated region
    $region17: #{bottleneck_forward.7} parent=5 // pred_check
      %p166 = pneg %p165
    $region18: #{bottleneck_forward.7} parent=5 // pred_check_branch
      %168 = sbr.rel (%p166) target = $region20
    $region19: #{bottleneck_forward.7} parent=5 // pred_region
      // Predicated region
      $region21: #{bottleneck_forward.7} parent=19 // pred_check
        %p169 = pneg %p51
      $region22: #{bottleneck_forward.7} parent=19 // pred_check_branch
        %171 = sbr.rel (%p169) target = $region24
      $region23: #{bottleneck_forward.7} parent=19 // pred_region
        %s172 = sadd.s32 %s17, %s19
        %s173 = smul.u32 32, %s172
        %p174 = scmp.lt.s32.totalorder %s173, 63
        %s175 = scalar_select %p174, %s173, 63
        %s176 = smul.addr %s175, 4
        %s177 = scalar_lea.vmem %s0, %s176
        %s178 = sadd.s32 %s17, %s19
        %s179 = smul.u32 32, %s178
      $region24: #{bottleneck_forward.7} parent=19 // pred_fallthru
        _
    $region20: #{bottleneck_forward.7} parent=5 // pred_fallthru
      _
    %p180 = scmp.le.s32.totalorder 1, %s10
    %p181 = scmp.lt.s32.totalorder %s10, 3
    %p182 = pnand %p180, %p181
    %p183 = pneg %p182
    // Predicated region
    $region25: #{bottleneck_forward.7} parent=5 // pred_check
      _
    $region26: #{bottleneck_forward.7} parent=5 // pred_check_branch
      %185 = sbr.rel (%p182) target = $region28
    $region27: #{bottleneck_forward.7} parent=5 // pred_region
      %s186 = ssub.s32 %s10, 1
      %s187 = sadd.s32 %s20, %s22
      %s188 = smul.u32 32, %s187
      %p189 = scmp.lt.s32.totalorder %s188, 63
      %s190 = scalar_select %p189, %s188, 63
      %s191 = smul.addr %s190, 4
      %s192 = scalar_lea.vmem %s0, %s191
      %p193 = pneg %p57
      %p194 = pneg %p54
      %s195 = smul.u32 2, %s21
      %p196 = scmp.lt.s32.totalorder %s195, 1
      %s197 = scalar_select %p196, %s195, 1
      %s198 = smul.addr %s197, 4
      %s199 = scalar_lea.vmem %s1, %s198
      %p200 = pneg %p83
      %p201 = pneg %p80
      %p202 = pneg %p113
      %p203 = pneg %p110
      %s204 = sadd.s32 %s20, %s22
      %s205 = smul.u32 32, %s204
      %s206 = smul.u32 2, %s21
      %p207 = scmp.lt.s32.totalorder %s205, 63
      %s208 = scalar_select %p207, %s205, 63
      %p209 = scmp.lt.s32.totalorder %s206, 1
      %s210 = scalar_select %p209, %s206, 1
      %s211 = smul.addr %s208, 2
      %s212 = sadd.s32 %s210, %s211
      %s213 = smul.addr %s212, 4
      %s214 = scalar_lea.vmem %s2, %s213
      %p215 = pneg %p141
      %p216 = pneg %p138
      %s217 = smul.u32 2, %s21
      %p218 = scmp.lt.s32.totalorder %s20, 1
      %s219 = scalar_select %p218, %s20, 1
      %p220 = scmp.lt.s32.totalorder %s217, 1
      %s221 = scalar_select %p220, %s217, 1
      %s222 = smul.addr %s219, 2
      %s223 = sadd.s32 %s221, %s222
      %s224 = smul.addr %s223, 2
      %s225 = scalar_lea.vmem %s3, %s224
      %s226 = sadd.s32 %s20, %s22
      %s227 = smul.u32 32, %s226
      %p228 = scmp.lt.s32.totalorder %s227, 63
      %s229 = scalar_select %p228, %s227, 63
      %s230 = smul.addr %s229, 4
      %s231 = scalar_lea.vmem %s0, %s230
      %s232 = sadd.s32 %s20, %s22
      %s233 = smul.u32 32, %s232
      %s234 = smul.u32 2, %s21
      %p235 = scmp.lt.s32.totalorder %s234, 1
      %s236 = scalar_select %p235, %s234, 1
      %s237 = smul.addr %s236, 4
      %s238 = scalar_lea.vmem %s1, %s237
      %s239 = smul.u32 2, %s21
      %s240 = sadd.s32 %s20, %s22
      %s241 = smul.u32 32, %s240
      %s242 = smul.u32 2, %s21
      %p243 = scmp.lt.s32.totalorder %s241, 63
      %s244 = scalar_select %p243, %s241, 63
      %p245 = scmp.lt.s32.totalorder %s242, 1
      %s246 = scalar_select %p245, %s242, 1
      %s247 = smul.addr %s244, 2
      %s248 = sadd.s32 %s246, %s247
      %s249 = smul.addr %s248, 4
      %s250 = scalar_lea.vmem %s2, %s249
      %s251 = sadd.s32 %s20, %s22
      %s252 = smul.u32 32, %s251
      %s253 = smul.u32 2, %s21
      %s254 = smul.u32 2, %s21
      %p255 = scmp.lt.s32.totalorder %s20, 1
      %s256 = scalar_select %p255, %s20, 1
      %p257 = scmp.lt.s32.totalorder %s254, 1
      %s258 = scalar_select %p257, %s254, 1
      %s259 = smul.addr %s256, 2
      %s260 = sadd.s32 %s258, %s259
      %s261 = smul.addr %s260, 2
      %s262 = scalar_lea.vmem %s3, %s261
      %s263 = smul.u32 2, %s21
      %v265 = vld [vmem:[%s231] sm:$0xf]
      %v266 = vld [vmem:[%s231 + $0x4] sm:$0xf]
      %v267 = vld [vmem:[%s231 + $0x8] sm:$0xf]
      %v268 = vld [vmem:[%s231 + $0xc] sm:$0xf]
      %v269 = vld [vmem:[%s231 + $0x10] sm:$0xf]
      %v270 = vld [vmem:[%s231 + $0x14] sm:$0xf]
      %v271 = vld [vmem:[%s231 + $0x18] sm:$0xf]
      %v272 = vld [vmem:[%s231 + $0x1c] sm:$0xf]
      %v273 = vld [vmem:[%s231 + $0x20] sm:$0xf]
      %v274 = vld [vmem:[%s231 + $0x24] sm:$0xf]
      %v275 = vld [vmem:[%s231 + $0x28] sm:$0xf]
      %v276 = vld [vmem:[%s231 + $0x2c] sm:$0xf]
      %v277 = vld [vmem:[%s231 + $0x30] sm:$0xf]
      %v278 = vld [vmem:[%s231 + $0x34] sm:$0xf]
      %v279 = vld [vmem:[%s231 + $0x38] sm:$0xf]
      %v280 = vld [vmem:[%s231 + $0x3c] sm:$0xf]
      %v281 = vld [vmem:[%s231 + $0x40] sm:$0xf]
      %v282 = vld [vmem:[%s231 + $0x44] sm:$0xf]
      %v283 = vld [vmem:[%s231 + $0x48] sm:$0xf]
      %v284 = vld [vmem:[%s231 + $0x4c] sm:$0xf]
      %v285 = vld [vmem:[%s231 + $0x50] sm:$0xf]
      %v286 = vld [vmem:[%s231 + $0x54] sm:$0xf]
      %v287 = vld [vmem:[%s231 + $0x58] sm:$0xf]
      %v288 = vld [vmem:[%s231 + $0x5c] sm:$0xf]
      %v289 = vld [vmem:[%s231 + $0x60] sm:$0xf]
      %v290 = vld [vmem:[%s231 + $0x64] sm:$0xf]
      %v291 = vld [vmem:[%s231 + $0x68] sm:$0xf]
      %v292 = vld [vmem:[%s231 + $0x6c] sm:$0xf]
      %v293 = vld [vmem:[%s231 + $0x70] sm:$0xf]
      %v294 = vld [vmem:[%s231 + $0x74] sm:$0xf]
      %v295 = vld [vmem:[%s231 + $0x78] sm:$0xf]
      %v296 = vld [vmem:[%s231 + $0x7c] sm:$0xf]
      %v297 = vld [vmem:[%s238] sm:$0xff]
      %v298 = vld [vmem:[%s238 + $0x8] sm:$0xff]
      %v299 = vld [vmem:[%s238 + $0x10] sm:$0xff]
      %v300 = vld [vmem:[%s238 + $0x18] sm:$0xff]
      %v301 = vld [vmem:[%s238 + $0x20] sm:$0xff]
      %v302 = vld [vmem:[%s238 + $0x28] sm:$0xff]
      %v303 = vld [vmem:[%s238 + $0x30] sm:$0xff]
      %v304 = vld [vmem:[%s238 + $0x38] sm:$0xff]
      %v305 = vld [vmem:[%s238 + $0x40] sm:$0xff]
      %v306 = vld [vmem:[%s238 + $0x48] sm:$0xff]
      %v307 = vld [vmem:[%s238 + $0x50] sm:$0xff]
      %v308 = vld [vmem:[%s238 + $0x58] sm:$0xff]
      %v309 = vld [vmem:[%s238 + $0x60] sm:$0xff]
      %v310 = vld [vmem:[%s238 + $0x68] sm:$0xff]
      %v311 = vld [vmem:[%s238 + $0x70] sm:$0xff]
      %v312 = vld [vmem:[%s238 + $0x78] sm:$0xff]
      %v345 = vunpack.c.l.b16 %v265
      %v346 = vunpack.c.l.b16 %v266
      %v347 = vunpack.c.l.b16 %v267
      %v348 = vunpack.c.l.b16 %v268
      %v349 = vunpack.c.l.b16 %v269
      %v350 = vunpack.c.l.b16 %v270
      %v351 = vunpack.c.l.b16 %v271
      %v352 = vunpack.c.l.b16 %v272
      %v353 = vunpack.c.l.b16 %v273
      %v354 = vunpack.c.l.b16 %v274
      %v355 = vunpack.c.l.b16 %v275
      %v356 = vunpack.c.l.b16 %v276
      %v357 = vunpack.c.l.b16 %v277
      %v358 = vunpack.c.l.b16 %v278
      %v359 = vunpack.c.l.b16 %v279
      %v360 = vunpack.c.l.b16 %v280
      %v361 = vunpack.c.l.b16 %v281
      %v362 = vunpack.c.l.b16 %v282
      %v363 = vunpack.c.l.b16 %v283
      %v364 = vunpack.c.l.b16 %v284
      %v365 = vunpack.c.l.b16 %v285
      %v366 = vunpack.c.l.b16 %v286
      %v367 = vunpack.c.l.b16 %v287
      %v368 = vunpack.c.l.b16 %v288
      %v369 = vunpack.c.l.b16 %v289
      %v370 = vunpack.c.l.b16 %v290
      %v371 = vunpack.c.l.b16 %v291
      %v372 = vunpack.c.l.b16 %v292
      %v373 = vunpack.c.l.b16 %v293
      %v374 = vunpack.c.l.b16 %v294
      %v375 = vunpack.c.l.b16 %v295
      %v376 = vunpack.c.l.b16 %v296
      %v377 = vpack.c.b16 %v346, %v345
      %v378 = vpack.c.b16 %v348, %v347
      %v379 = vpack.c.b16 %v350, %v349
      %v380 = vpack.c.b16 %v352, %v351
      %v381 = vpack.c.b16 %v354, %v353
      %v382 = vpack.c.b16 %v356, %v355
      %v383 = vpack.c.b16 %v358, %v357
      %v384 = vpack.c.b16 %v360, %v359
      %v385 = vpack.c.b16 %v362, %v361
      %v386 = vpack.c.b16 %v364, %v363
      %v387 = vpack.c.b16 %v366, %v365
      %v388 = vpack.c.b16 %v368, %v367
      %v389 = vpack.c.b16 %v370, %v369
      %v390 = vpack.c.b16 %v372, %v371
      %v391 = vpack.c.b16 %v374, %v373
      %v392 = vpack.c.b16 %v376, %v375
      %v425 = vunpack.c.l.b16 %v297
      %v426 = vunpack.c.h.b16 %v297
      %v427 = vunpack.c.l.b16 %v298
      %v428 = vunpack.c.h.b16 %v298
      %v429 = vunpack.c.l.b16 %v299
      %v430 = vunpack.c.h.b16 %v299
      %v431 = vunpack.c.l.b16 %v300
      %v432 = vunpack.c.h.b16 %v300
      %v433 = vunpack.c.l.b16 %v301
      %v434 = vunpack.c.h.b16 %v301
      %v435 = vunpack.c.l.b16 %v302
      %v436 = vunpack.c.h.b16 %v302
      %v437 = vunpack.c.l.b16 %v303
      %v438 = vunpack.c.h.b16 %v303
      %v439 = vunpack.c.l.b16 %v304
      %v440 = vunpack.c.h.b16 %v304
      %v441 = vunpack.c.l.b16 %v305
      %v442 = vunpack.c.h.b16 %v305
      %v443 = vunpack.c.l.b16 %v306
      %v444 = vunpack.c.h.b16 %v306
      %v445 = vunpack.c.l.b16 %v307
      %v446 = vunpack.c.h.b16 %v307
      %v447 = vunpack.c.l.b16 %v308
      %v448 = vunpack.c.h.b16 %v308
      %v449 = vunpack.c.l.b16 %v309
      %v450 = vunpack.c.h.b16 %v309
      %v451 = vunpack.c.l.b16 %v310
      %v452 = vunpack.c.h.b16 %v310
      %v453 = vunpack.c.l.b16 %v311
      %v454 = vunpack.c.h.b16 %v311
      %v455 = vunpack.c.l.b16 %v312
      %v456 = vunpack.c.h.b16 %v312
      %v457 = vpack.c.b16 %v427, %v425
      %v458 = vpack.c.b16 %v428, %v426
      %v459 = vpack.c.b16 %v431, %v429
      %v460 = vpack.c.b16 %v432, %v430
      %v461 = vpack.c.b16 %v435, %v433
      %v462 = vpack.c.b16 %v436, %v434
      %v463 = vpack.c.b16 %v439, %v437
      %v464 = vpack.c.b16 %v440, %v438
      %v465 = vpack.c.b16 %v443, %v441
      %v466 = vpack.c.b16 %v444, %v442
      %v467 = vpack.c.b16 %v447, %v445
      %v468 = vpack.c.b16 %v448, %v446
      %v469 = vpack.c.b16 %v451, %v449
      %v470 = vpack.c.b16 %v452, %v450
      %v471 = vpack.c.b16 %v455, %v453
      %v472 = vpack.c.b16 %v456, %v454
      %489 = vmatprep.subr.bf16.mxu0 %v472
      %490 = vmatpush1.bf16.msra.mxu0 %v471
      %491 = vmatprep.subr.bf16.mxu0 %v470
      %492 = vmatpush1.bf16.msra.mxu0 %v469
      %493 = vmatprep.subr.bf16.mxu0 %v468
      %494 = vmatpush1.bf16.msra.mxu0 %v467
      %495 = vmatprep.subr.bf16.mxu0 %v466
      %496 = vmatpush1.bf16.msra.mxu0 %v465
      %497 = vmatprep.subr.bf16.mxu0 %v464
      %498 = vmatpush1.bf16.msra.mxu0 %v463
      %499 = vmatprep.subr.bf16.mxu0 %v462
      %500 = vmatpush1.bf16.msra.mxu0 %v461
      %501 = vmatprep.subr.bf16.mxu0 %v460
      %502 = vmatpush1.bf16.msra.mxu0 %v459
      %503 = vmatprep.subr.bf16.mxu0 %v458
      %504 = vmatpush1.bf16.msra.mxu0 %v457
      %505 = vmatprep.subr.bf16.mxu0 0
      %506 = vmatpush2.bf16.msra.mxu0 0
      %507 = vmatprep.subr.bf16.mxu0 0
      %508 = vmatpush2.bf16.msra.mxu0 0
      %509 = vmatprep.subr.bf16.mxu0 0
      %510 = vmatpush2.bf16.msra.mxu0 0
      %511 = vmatprep.subr.bf16.mxu0 0
      %512 = vmatpush2.bf16.msra.mxu0 0
      %513 = vmatprep.subr.bf16.mxu0 0
      %514 = vmatpush2.bf16.msra.mxu0 0
      %515 = vmatprep.subr.bf16.mxu0 0
      %516 = vmatpush2.bf16.msra.mxu0 0
      %517 = vmatprep.subr.bf16.mxu0 0
      %518 = vmatpush2.bf16.msra.mxu0 0
      %519 = vmatprep.subr.bf16.mxu0 0
      %520 = vmatpush2.bf16.msra.mxu0 0
      %521 = vmatprep.mubr.bf16.mxu0 0
      %522 = vmatmul.mubr.bf16.gmra.mxu0 %v377
      %v523 = vpop.f32.mrf.mxu0
      %v524 = vadd.f32 0.0, %v523
      %v525 = vpop.f32.mrf.mxu0
      %v526 = vadd.f32 0.0, %v525
      %v527 = vpop.f32.mrf.mxu0
      %v528 = vadd.f32 0.0, %v527
      %v529 = vpop.f32.mrf.mxu0
      %v530 = vadd.f32 0.0, %v529
      %531 = vmatprep.mubr.bf16.mxu0 0
      %532 = vmatmul.mubr.bf16.gmra.mxu0 %v378
      %v533 = vpop.f32.mrf.mxu0
      %v534 = vadd.f32 0.0, %v533
      %v535 = vpop.f32.mrf.mxu0
      %v536 = vadd.f32 0.0, %v535
      %v537 = vpop.f32.mrf.mxu0
      %v538 = vadd.f32 0.0, %v537
      %v539 = vpop.f32.mrf.mxu0
      %v540 = vadd.f32 0.0, %v539
      %541 = vmatprep.mubr.bf16.mxu0 0
      %542 = vmatmul.mubr.bf16.gmra.mxu0 %v379
      %v543 = vpop.f32.mrf.mxu0
      %v544 = vadd.f32 0.0, %v543
      %v545 = vpop.f32.mrf.mxu0
      %v546 = vadd.f32 0.0, %v545
      %v547 = vpop.f32.mrf.mxu0
      %v548 = vadd.f32 0.0, %v547
      %v549 = vpop.f32.mrf.mxu0
      %v550 = vadd.f32 0.0, %v549
      %551 = vmatprep.mubr.bf16.mxu0 0
      %552 = vmatmul.mubr.bf16.gmra.mxu0 %v380
      %v553 = vpop.f32.mrf.mxu0
      %v554 = vadd.f32 0.0, %v553
      %v555 = vpop.f32.mrf.mxu0
      %v556 = vadd.f32 0.0, %v555
      %v557 = vpop.f32.mrf.mxu0
      %v558 = vadd.f32 0.0, %v557
      %v559 = vpop.f32.mrf.mxu0
      %v560 = vadd.f32 0.0, %v559
      %561 = vmatprep.mubr.bf16.mxu0 0
      %562 = vmatmul.mubr.bf16.gmra.mxu0 %v381
      %v563 = vpop.f32.mrf.mxu0
      %v564 = vadd.f32 0.0, %v563
      %v565 = vpop.f32.mrf.mxu0
      %v566 = vadd.f32 0.0, %v565
      %v567 = vpop.f32.mrf.mxu0
      %v568 = vadd.f32 0.0, %v567
      %v569 = vpop.f32.mrf.mxu0
      %v570 = vadd.f32 0.0, %v569
      %571 = vmatprep.mubr.bf16.mxu0 0
      %572 = vmatmul.mubr.bf16.gmra.mxu0 %v382
      %v573 = vpop.f32.mrf.mxu0
      %v574 = vadd.f32 0.0, %v573
      %v575 = vpop.f32.mrf.mxu0
      %v576 = vadd.f32 0.0, %v575
      %v577 = vpop.f32.mrf.mxu0
      %v578 = vadd.f32 0.0, %v577
      %v579 = vpop.f32.mrf.mxu0
      %v580 = vadd.f32 0.0, %v579
      %581 = vmatprep.mubr.bf16.mxu0 0
      %582 = vmatmul.mubr.bf16.gmra.mxu0 %v383
      %v583 = vpop.f32.mrf.mxu0
      %v584 = vadd.f32 0.0, %v583
      %v585 = vpop.f32.mrf.mxu0
      %v586 = vadd.f32 0.0, %v585
      %v587 = vpop.f32.mrf.mxu0
      %v588 = vadd.f32 0.0, %v587
      %v589 = vpop.f32.mrf.mxu0
      %v590 = vadd.f32 0.0, %v589
      %591 = vmatprep.mubr.bf16.mxu0 0
      %592 = vmatmul.mubr.bf16.gmra.mxu0 %v384
      %v593 = vpop.f32.mrf.mxu0
      %v594 = vadd.f32 0.0, %v593
      %v595 = vpop.f32.mrf.mxu0
      %v596 = vadd.f32 0.0, %v595
      %v597 = vpop.f32.mrf.mxu0
      %v598 = vadd.f32 0.0, %v597
      %v599 = vpop.f32.mrf.mxu0
      %v600 = vadd.f32 0.0, %v599
      %601 = vmatprep.mubr.bf16.mxu0 0
      %602 = vmatmul.mubr.bf16.gmra.mxu0 %v385
      %v603 = vpop.f32.mrf.mxu0
      %v604 = vadd.f32 0.0, %v603
      %v605 = vpop.f32.mrf.mxu0
      %v606 = vadd.f32 0.0, %v605
      %v607 = vpop.f32.mrf.mxu0
      %v608 = vadd.f32 0.0, %v607
      %v609 = vpop.f32.mrf.mxu0
      %v610 = vadd.f32 0.0, %v609
      %611 = vmatprep.mubr.bf16.mxu0 0
      %612 = vmatmul.mubr.bf16.gmra.mxu0 %v386
      %v613 = vpop.f32.mrf.mxu0
      %v614 = vadd.f32 0.0, %v613
      %v615 = vpop.f32.mrf.mxu0
      %v616 = vadd.f32 0.0, %v615
      %v617 = vpop.f32.mrf.mxu0
      %v618 = vadd.f32 0.0, %v617
      %v619 = vpop.f32.mrf.mxu0
      %v620 = vadd.f32 0.0, %v619
      %621 = vmatprep.mubr.bf16.mxu0 0
      %622 = vmatmul.mubr.bf16.gmra.mxu0 %v387
      %v623 = vpop.f32.mrf.mxu0
      %v624 = vadd.f32 0.0, %v623
      %v625 = vpop.f32.mrf.mxu0
      %v626 = vadd.f32 0.0, %v625
      %v627 = vpop.f32.mrf.mxu0
      %v628 = vadd.f32 0.0, %v627
      %v629 = vpop.f32.mrf.mxu0
      %v630 = vadd.f32 0.0, %v629
      %631 = vmatprep.mubr.bf16.mxu0 0
      %632 = vmatmul.mubr.bf16.gmra.mxu0 %v388
      %v633 = vpop.f32.mrf.mxu0
      %v634 = vadd.f32 0.0, %v633
      %v635 = vpop.f32.mrf.mxu0
      %v636 = vadd.f32 0.0, %v635
      %v637 = vpop.f32.mrf.mxu0
      %v638 = vadd.f32 0.0, %v637
      %v639 = vpop.f32.mrf.mxu0
      %v640 = vadd.f32 0.0, %v639
      %641 = vmatprep.mubr.bf16.mxu0 0
      %642 = vmatmul.mubr.bf16.gmra.mxu0 %v389
      %v643 = vpop.f32.mrf.mxu0
      %v644 = vadd.f32 0.0, %v643
      %v645 = vpop.f32.mrf.mxu0
      %v646 = vadd.f32 0.0, %v645
      %v647 = vpop.f32.mrf.mxu0
      %v648 = vadd.f32 0.0, %v647
      %v649 = vpop.f32.mrf.mxu0
      %v650 = vadd.f32 0.0, %v649
      %651 = vmatprep.mubr.bf16.mxu0 0
      %652 = vmatmul.mubr.bf16.gmra.mxu0 %v390
      %v653 = vpop.f32.mrf.mxu0
      %v654 = vadd.f32 0.0, %v653
      %v655 = vpop.f32.mrf.mxu0
      %v656 = vadd.f32 0.0, %v655
      %v657 = vpop.f32.mrf.mxu0
      %v658 = vadd.f32 0.0, %v657
      %v659 = vpop.f32.mrf.mxu0
      %v660 = vadd.f32 0.0, %v659
      %661 = vmatprep.mubr.bf16.mxu0 0
      %662 = vmatmul.mubr.bf16.gmra.mxu0 %v391
      %v663 = vpop.f32.mrf.mxu0
      %v664 = vadd.f32 0.0, %v663
      %v665 = vpop.f32.mrf.mxu0
      %v666 = vadd.f32 0.0, %v665
      %v667 = vpop.f32.mrf.mxu0
      %v668 = vadd.f32 0.0, %v667
      %v669 = vpop.f32.mrf.mxu0
      %v670 = vadd.f32 0.0, %v669
      %671 = vmatprep.mubr.bf16.mxu0 0
      %672 = vmatmul.mubr.bf16.gmra.mxu0 %v392
      %v673 = vpop.f32.mrf.mxu0
      %v674 = vadd.f32 0.0, %v673
      %v675 = vpop.f32.mrf.mxu0
      %v676 = vadd.f32 0.0, %v675
      %v677 = vpop.f32.mrf.mxu0
      %v678 = vadd.f32 0.0, %v677
      %v679 = vpop.f32.mrf.mxu0
      %v680 = vadd.f32 0.0, %v679
      %681 = vdwg.mxu0
      %p682 = scmp.eq.s32.totalorder %s22, 0
      // Predicated region
      $region29: #{bottleneck_forward.7} parent=27 // pred_check
        %p683 = pneg %p682
      $region30: #{bottleneck_forward.7} parent=27 // pred_check_branch
        %685 = sbr.rel (%p683) target = $region32
      $region31: #{bottleneck_forward.7} parent=27 // pred_region
        %686 = vst [vmem:[%s262] sm:$0xf] 0.0
      $region32: #{bottleneck_forward.7} parent=27 // pred_fallthru
        _
      %v687 = vld [vmem:[%s262] sm:$0xf]
      %v688 = vadd.f32 %v524, %v528
      %v689 = vadd.f32 %v688, %v534
      %v690 = vadd.f32 %v689, %v538
      %v691 = vadd.f32 %v690, %v544
      %v692 = vadd.f32 %v691, %v548
      %v693 = vadd.f32 %v692, %v554
      %v694 = vadd.f32 %v693, %v558
      %v695 = vadd.f32 %v694, %v564
      %v696 = vadd.f32 %v695, %v568
      %v697 = vadd.f32 %v696, %v574
      %v698 = vadd.f32 %v697, %v578
      %v699 = vadd.f32 %v698, %v584
      %v700 = vadd.f32 %v699, %v588
      %v701 = vadd.f32 %v700, %v594
      %v702 = vadd.f32 %v701, %v598
      %v703 = vadd.f32 %v702, %v604
      %v704 = vadd.f32 %v703, %v608
      %v705 = vadd.f32 %v704, %v614
      %v706 = vadd.f32 %v705, %v618
      %v707 = vadd.f32 %v706, %v624
      %v708 = vadd.f32 %v707, %v628
      %v709 = vadd.f32 %v708, %v634
      %v710 = vadd.f32 %v709, %v638
      %v711 = vadd.f32 %v710, %v644
      %v712 = vadd.f32 %v711, %v648
      %v713 = vadd.f32 %v712, %v654
      %v714 = vadd.f32 %v713, %v658
      %v715 = vadd.f32 %v714, %v664
      %v716 = vadd.f32 %v715, %v668
      %v717 = vadd.f32 %v716, %v674
      %v718 = vadd.f32 %v717, %v678
      %v719 = vrot.slane %v718, 4
      %v720 = vadd.f32 %v718, %v719
      %v721 = vrot.slane %v720, 2
      %v722 = vadd.f32 %v720, %v721
      %v723 = vrot.slane %v722, 1
      %v724 = vadd.f32 %v722, %v723
      %v725 = vadd.f32 %v526, %v530
      %v726 = vadd.f32 %v725, %v536
      %v727 = vadd.f32 %v726, %v540
      %v728 = vadd.f32 %v727, %v546
      %v729 = vadd.f32 %v728, %v550
      %v730 = vadd.f32 %v729, %v556
      %v731 = vadd.f32 %v730, %v560
      %v732 = vadd.f32 %v731, %v566
      %v733 = vadd.f32 %v732, %v570
      %v734 = vadd.f32 %v733, %v576
      %v735 = vadd.f32 %v734, %v580
      %v736 = vadd.f32 %v735, %v586
      %v737 = vadd.f32 %v736, %v590
      %v738 = vadd.f32 %v737, %v596
      %v739 = vadd.f32 %v738, %v600
      %v740 = vadd.f32 %v739, %v606
      %v741 = vadd.f32 %v740, %v610
      %v742 = vadd.f32 %v741, %v616
      %v743 = vadd.f32 %v742, %v620
      %v744 = vadd.f32 %v743, %v626
      %v745 = vadd.f32 %v744, %v630
      %v746 = vadd.f32 %v745, %v636
      %v747 = vadd.f32 %v746, %v640
      %v748 = vadd.f32 %v747, %v646
      %v749 = vadd.f32 %v748, %v650
      %v750 = vadd.f32 %v749, %v656
      %v751 = vadd.f32 %v750, %v660
      %v752 = vadd.f32 %v751, %v666
      %v753 = vadd.f32 %v752, %v670
      %v754 = vadd.f32 %v753, %v676
      %v755 = vadd.f32 %v754, %v680
      %v756 = vrot.slane %v755, 4
      %v757 = vadd.f32 %v755, %v756
      %v758 = vrot.slane %v757, 2
      %v759 = vadd.f32 %v757, %v758
      %v760 = vrot.slane %v759, 1
      %v761 = vadd.f32 %v759, %v760
      %v762 = vmul.f32 %v524, %v524
      %v763 = vmul.f32 %v526, %v526
      %v764 = vmul.f32 %v528, %v528
      %v765 = vmul.f32 %v530, %v530
      %v766 = vmul.f32 %v534, %v534
      %v767 = vmul.f32 %v536, %v536
      %v768 = vmul.f32 %v538, %v538
      %v769 = vmul.f32 %v540, %v540
      %v770 = vmul.f32 %v544, %v544
      %v771 = vmul.f32 %v546, %v546
      %v772 = vmul.f32 %v548, %v548
      %v773 = vmul.f32 %v550, %v550
      %v774 = vmul.f32 %v554, %v554
      %v775 = vmul.f32 %v556, %v556
      %v776 = vmul.f32 %v558, %v558
      %v777 = vmul.f32 %v560, %v560
      %v778 = vmul.f32 %v564, %v564
      %v779 = vmul.f32 %v566, %v566
      %v780 = vmul.f32 %v568, %v568
      %v781 = vmul.f32 %v570, %v570
      %v782 = vmul.f32 %v574, %v574
      %v783 = vmul.f32 %v576, %v576
      %v784 = vmul.f32 %v578, %v578
      %v785 = vmul.f32 %v580, %v580
      %v786 = vmul.f32 %v584, %v584
      %v787 = vmul.f32 %v586, %v586
      %v788 = vmul.f32 %v588, %v588
      %v789 = vmul.f32 %v590, %v590
      %v790 = vmul.f32 %v594, %v594
      %v791 = vmul.f32 %v596, %v596
      %v792 = vmul.f32 %v598, %v598
      %v793 = vmul.f32 %v600, %v600
      %v794 = vmul.f32 %v604, %v604
      %v795 = vmul.f32 %v606, %v606
      %v796 = vmul.f32 %v608, %v608
      %v797 = vmul.f32 %v610, %v610
      %v798 = vmul.f32 %v614, %v614
      %v799 = vmul.f32 %v616, %v616
      %v800 = vmul.f32 %v618, %v618
      %v801 = vmul.f32 %v620, %v620
      %v802 = vmul.f32 %v624, %v624
      %v803 = vmul.f32 %v626, %v626
      %v804 = vmul.f32 %v628, %v628
      %v805 = vmul.f32 %v630, %v630
      %v806 = vmul.f32 %v634, %v634
      %v807 = vmul.f32 %v636, %v636
      %v808 = vmul.f32 %v638, %v638
      %v809 = vmul.f32 %v640, %v640
      %v810 = vmul.f32 %v644, %v644
      %v811 = vmul.f32 %v646, %v646
      %v812 = vmul.f32 %v648, %v648
      %v813 = vmul.f32 %v650, %v650
      %v814 = vmul.f32 %v654, %v654
      %v815 = vmul.f32 %v656, %v656
      %v816 = vmul.f32 %v658, %v658
      %v817 = vmul.f32 %v660, %v660
      %v818 = vmul.f32 %v664, %v664
      %v819 = vmul.f32 %v666, %v666
      %v820 = vmul.f32 %v668, %v668
      %v821 = vmul.f32 %v670, %v670
      %v822 = vmul.f32 %v674, %v674
      %v823 = vmul.f32 %v676, %v676
      %v824 = vmul.f32 %v678, %v678
      %v825 = vmul.f32 %v680, %v680
      %v826 = vadd.f32 %v762, %v764
      %v827 = vadd.f32 %v826, %v766
      %v828 = vadd.f32 %v827, %v768
      %v829 = vadd.f32 %v828, %v770
      %v830 = vadd.f32 %v829, %v772
      %v831 = vadd.f32 %v830, %v774
      %v832 = vadd.f32 %v831, %v776
      %v833 = vadd.f32 %v832, %v778
      %v834 = vadd.f32 %v833, %v780
      %v835 = vadd.f32 %v834, %v782
      %v836 = vadd.f32 %v835, %v784
      %v837 = vadd.f32 %v836, %v786
      %v838 = vadd.f32 %v837, %v788
      %v839 = vadd.f32 %v838, %v790
      %v840 = vadd.f32 %v839, %v792
      %v841 = vadd.f32 %v840, %v794
      %v842 = vadd.f32 %v841, %v796
      %v843 = vadd.f32 %v842, %v798
      %v844 = vadd.f32 %v843, %v800
      %v845 = vadd.f32 %v844, %v802
      %v846 = vadd.f32 %v845, %v804
      %v847 = vadd.f32 %v846, %v806
      %v848 = vadd.f32 %v847, %v808
      %v849 = vadd.f32 %v848, %v810
      %v850 = vadd.f32 %v849, %v812
      %v851 = vadd.f32 %v850, %v814
      %v852 = vadd.f32 %v851, %v816
      %v853 = vadd.f32 %v852, %v818
      %v854 = vadd.f32 %v853, %v820
      %v855 = vadd.f32 %v854, %v822
      %v856 = vadd.f32 %v855, %v824
      %v857 = vrot.slane %v856, 4
      %v858 = vadd.f32 %v856, %v857
      %v859 = vrot.slane %v858, 2
      %v860 = vadd.f32 %v858, %v859
      %v861 = vrot.slane %v860, 1
      %v862 = vadd.f32 %v860, %v861
      %v863 = vadd.f32 %v763, %v765
      %v864 = vadd.f32 %v863, %v767
      %v865 = vadd.f32 %v864, %v769
      %v866 = vadd.f32 %v865, %v771
      %v867 = vadd.f32 %v866, %v773
      %v868 = vadd.f32 %v867, %v775
      %v869 = vadd.f32 %v868, %v777
      %v870 = vadd.f32 %v869, %v779
      %v871 = vadd.f32 %v870, %v781
      %v872 = vadd.f32 %v871, %v783
      %v873 = vadd.f32 %v872, %v785
      %v874 = vadd.f32 %v873, %v787
      %v875 = vadd.f32 %v874, %v789
      %v876 = vadd.f32 %v875, %v791
      %v877 = vadd.f32 %v876, %v793
      %v878 = vadd.f32 %v877, %v795
      %v879 = vadd.f32 %v878, %v797
      %v880 = vadd.f32 %v879, %v799
      %v881 = vadd.f32 %v880, %v801
      %v882 = vadd.f32 %v881, %v803
      %v883 = vadd.f32 %v882, %v805
      %v884 = vadd.f32 %v883, %v807
      %v885 = vadd.f32 %v884, %v809
      %v886 = vadd.f32 %v885, %v811
      %v887 = vadd.f32 %v886, %v813
      %v888 = vadd.f32 %v887, %v815
      %v889 = vadd.f32 %v888, %v817
      %v890 = vadd.f32 %v889, %v819
      %v891 = vadd.f32 %v890, %v821
      %v892 = vadd.f32 %v891, %v823
      %v893 = vadd.f32 %v892, %v825
      %v894 = vrot.slane %v893, 4
      %v895 = vadd.f32 %v893, %v894
      %v896 = vrot.slane %v895, 2
      %v897 = vadd.f32 %v895, %v896
      %v898 = vrot.slane %v897, 1
      %v899 = vadd.f32 %v897, %v898
      %vm900 = vcmask 1040384
      %v901 = vsel %vm900, %v724, %v862
      %v902 = vsel %vm900, %v761, %v899
      %v905 = vcombine.low %v901, %v902
      %v907 = vunpack.c.l.s4 1983009808
      %v908 = vunpack.c.0.s8 %v907
      %v909 = vlaneseq
      %v910 = vshrl.u32 %v909, 7
      %v911 = vsub.s32 %v908, %v910
      %v912 = vrot.slane %v905, %v911
      %v914 = vadd.f32 %v687, %v912
      %915 = vst [vmem:[%s262] sm:$0xf] %v914
      %v916 = vpack.c.bf16 %v528, %v524
      %v917 = vpack.c.bf16 %v530, %v526
      %v918 = vpack.c.bf16 %v538, %v534
      %v919 = vpack.c.bf16 %v540, %v536
      %v920 = vpack.c.bf16 %v548, %v544
      %v921 = vpack.c.bf16 %v550, %v546
      %v922 = vpack.c.bf16 %v558, %v554
      %v923 = vpack.c.bf16 %v560, %v556
      %v924 = vpack.c.bf16 %v568, %v564
      %v925 = vpack.c.bf16 %v570, %v566
      %v926 = vpack.c.bf16 %v578, %v574
      %v927 = vpack.c.bf16 %v580, %v576
      %v928 = vpack.c.bf16 %v588, %v584
      %v929 = vpack.c.bf16 %v590, %v586
      %v930 = vpack.c.bf16 %v598, %v594
      %v931 = vpack.c.bf16 %v600, %v596
      %v932 = vpack.c.bf16 %v608, %v604
      %v933 = vpack.c.bf16 %v610, %v606
      %v934 = vpack.c.bf16 %v618, %v614
      %v935 = vpack.c.bf16 %v620, %v616
      %v936 = vpack.c.bf16 %v628, %v624
      %v937 = vpack.c.bf16 %v630, %v626
      %v938 = vpack.c.bf16 %v638, %v634
      %v939 = vpack.c.bf16 %v640, %v636
      %v940 = vpack.c.bf16 %v648, %v644
      %v941 = vpack.c.bf16 %v650, %v646
      %v942 = vpack.c.bf16 %v658, %v654
      %v943 = vpack.c.bf16 %v660, %v656
      %v944 = vpack.c.bf16 %v668, %v664
      %v945 = vpack.c.bf16 %v670, %v666
      %v946 = vpack.c.bf16 %v678, %v674
      %v947 = vpack.c.bf16 %v680, %v676
      %v980 = vunpack.c.l.b16 %v916
      %v981 = vunpack.c.l.b16 %v917
      %v982 = vunpack.c.h.b16 %v916
      %v983 = vunpack.c.h.b16 %v917
      %v984 = vunpack.c.l.b16 %v918
      %v985 = vunpack.c.l.b16 %v919
      %v986 = vunpack.c.h.b16 %v918
      %v987 = vunpack.c.h.b16 %v919
      %v988 = vunpack.c.l.b16 %v920
      %v989 = vunpack.c.l.b16 %v921
      %v990 = vunpack.c.h.b16 %v920
      %v991 = vunpack.c.h.b16 %v921
      %v992 = vunpack.c.l.b16 %v922
      %v993 = vunpack.c.l.b16 %v923
      %v994 = vunpack.c.h.b16 %v922
      %v995 = vunpack.c.h.b16 %v923
      %v996 = vunpack.c.l.b16 %v924
      %v997 = vunpack.c.l.b16 %v925
      %v998 = vunpack.c.h.b16 %v924
      %v999 = vunpack.c.h.b16 %v925
      %v1000 = vunpack.c.l.b16 %v926
      %v1001 = vunpack.c.l.b16 %v927
      %v1002 = vunpack.c.h.b16 %v926
      %v1003 = vunpack.c.h.b16 %v927
      %v1004 = vunpack.c.l.b16 %v928
      %v1005 = vunpack.c.l.b16 %v929
      %v1006 = vunpack.c.h.b16 %v928
      %v1007 = vunpack.c.h.b16 %v929
      %v1008 = vunpack.c.l.b16 %v930
      %v1009 = vunpack.c.l.b16 %v931
      %v1010 = vunpack.c.h.b16 %v930
      %v1011 = vunpack.c.h.b16 %v931
      %v1012 = vunpack.c.l.b16 %v932
      %v1013 = vunpack.c.l.b16 %v933
      %v1014 = vunpack.c.h.b16 %v932
      %v1015 = vunpack.c.h.b16 %v933
      %v1016 = vunpack.c.l.b16 %v934
      %v1017 = vunpack.c.l.b16 %v935
      %v1018 = vunpack.c.h.b16 %v934
      %v1019 = vunpack.c.h.b16 %v935
      %v1020 = vunpack.c.l.b16 %v936
      %v1021 = vunpack.c.l.b16 %v937
      %v1022 = vunpack.c.h.b16 %v936
      %v1023 = vunpack.c.h.b16 %v937
      %v1024 = vunpack.c.l.b16 %v938
      %v1025 = vunpack.c.l.b16 %v939
      %v1026 = vunpack.c.h.b16 %v938
      %v1027 = vunpack.c.h.b16 %v939
      %v1028 = vunpack.c.l.b16 %v940
      %v1029 = vunpack.c.l.b16 %v941
      %v1030 = vunpack.c.h.b16 %v940
      %v1031 = vunpack.c.h.b16 %v941
      %v1032 = vunpack.c.l.b16 %v942
      %v1033 = vunpack.c.l.b16 %v943
      %v1034 = vunpack.c.h.b16 %v942
      %v1035 = vunpack.c.h.b16 %v943
      %v1036 = vunpack.c.l.b16 %v944
      %v1037 = vunpack.c.l.b16 %v945
      %v1038 = vunpack.c.h.b16 %v944
      %v1039 = vunpack.c.h.b16 %v945
      %v1040 = vunpack.c.l.b16 %v946
      %v1041 = vunpack.c.l.b16 %v947
      %v1042 = vunpack.c.h.b16 %v946
      %v1043 = vunpack.c.h.b16 %v947
      %v1044 = vpack.c.b16 %v981, %v980
      %v1045 = vpack.c.b16 %v983, %v982
      %v1046 = vpack.c.b16 %v985, %v984
      %v1047 = vpack.c.b16 %v987, %v986
      %v1048 = vpack.c.b16 %v989, %v988
      %v1049 = vpack.c.b16 %v991, %v990
      %v1050 = vpack.c.b16 %v993, %v992
      %v1051 = vpack.c.b16 %v995, %v994
      %v1052 = vpack.c.b16 %v997, %v996
      %v1053 = vpack.c.b16 %v999, %v998
      %v1054 = vpack.c.b16 %v1001, %v1000
      %v1055 = vpack.c.b16 %v1003, %v1002
      %v1056 = vpack.c.b16 %v1005, %v1004
      %v1057 = vpack.c.b16 %v1007, %v1006
      %v1058 = vpack.c.b16 %v1009, %v1008
      %v1059 = vpack.c.b16 %v1011, %v1010
      %v1060 = vpack.c.b16 %v1013, %v1012
      %v1061 = vpack.c.b16 %v1015, %v1014
      %v1062 = vpack.c.b16 %v1017, %v1016
      %v1063 = vpack.c.b16 %v1019, %v1018
      %v1064 = vpack.c.b16 %v1021, %v1020
      %v1065 = vpack.c.b16 %v1023, %v1022
      %v1066 = vpack.c.b16 %v1025, %v1024
      %v1067 = vpack.c.b16 %v1027, %v1026
      %v1068 = vpack.c.b16 %v1029, %v1028
      %v1069 = vpack.c.b16 %v1031, %v1030
      %v1070 = vpack.c.b16 %v1033, %v1032
      %v1071 = vpack.c.b16 %v1035, %v1034
      %v1072 = vpack.c.b16 %v1037, %v1036
      %v1073 = vpack.c.b16 %v1039, %v1038
      %v1074 = vpack.c.b16 %v1041, %v1040
      %v1075 = vpack.c.b16 %v1043, %v1042
      %1108 = vst [vmem:[%s250] sm:$0xff] %v1044
      %1109 = vst [vmem:[%s250 + $0x8] sm:$0xff] %v1045
      %1110 = vst [vmem:[%s250 + $0x10] sm:$0xff] %v1046
      %1111 = vst [vmem:[%s250 + $0x18] sm:$0xff] %v1047
      %1112 = vst [vmem:[%s250 + $0x20] sm:$0xff] %v1048
      %1113 = vst [vmem:[%s250 + $0x28] sm:$0xff] %v1049
      %1114 = vst [vmem:[%s250 + $0x30] sm:$0xff] %v1050
      %1115 = vst [vmem:[%s250 + $0x38] sm:$0xff] %v1051
      %1116 = vst [vmem:[%s250 + $0x40] sm:$0xff] %v1052
      %1117 = vst [vmem:[%s250 + $0x48] sm:$0xff] %v1053
      %1118 = vst [vmem:[%s250 + $0x50] sm:$0xff] %v1054
      %1119 = vst [vmem:[%s250 + $0x58] sm:$0xff] %v1055
      %1120 = vst [vmem:[%s250 + $0x60] sm:$0xff] %v1056
      %1121 = vst [vmem:[%s250 + $0x68] sm:$0xff] %v1057
      %1122 = vst [vmem:[%s250 + $0x70] sm:$0xff] %v1058
      %1123 = vst [vmem:[%s250 + $0x78] sm:$0xff] %v1059
      %1124 = vst [vmem:[%s250 + $0x80] sm:$0xff] %v1060
      %1125 = vst [vmem:[%s250 + $0x88] sm:$0xff] %v1061
      %1126 = vst [vmem:[%s250 + $0x90] sm:$0xff] %v1062
      %1127 = vst [vmem:[%s250 + $0x98] sm:$0xff] %v1063
      %1128 = vst [vmem:[%s250 + $0xa0] sm:$0xff] %v1064
      %1129 = vst [vmem:[%s250 + $0xa8] sm:$0xff] %v1065
      %1130 = vst [vmem:[%s250 + $0xb0] sm:$0xff] %v1066
      %1131 = vst [vmem:[%s250 + $0xb8] sm:$0xff] %v1067
      %1132 = vst [vmem:[%s250 + $0xc0] sm:$0xff] %v1068
      %1133 = vst [vmem:[%s250 + $0xc8] sm:$0xff] %v1069
      %1134 = vst [vmem:[%s250 + $0xd0] sm:$0xff] %v1070
      %1135 = vst [vmem:[%s250 + $0xd8] sm:$0xff] %v1071
      %1136 = vst [vmem:[%s250 + $0xe0] sm:$0xff] %v1072
      %1137 = vst [vmem:[%s250 + $0xe8] sm:$0xff] %v1073
      %1138 = vst [vmem:[%s250 + $0xf0] sm:$0xff] %v1074
      %1139 = vst [vmem:[%s250 + $0xf8] sm:$0xff] %v1075
      %s1140 = sadd.s32 %s20, %s22
      %s1141 = smul.u32 32, %s1140
      %s1142 = smul.u32 2, %s21
      %p1143 = scmp.lt.s32.totalorder %s1141, 63
      %s1144 = scalar_select %p1143, %s1141, 63
      %p1145 = scmp.lt.s32.totalorder %s1142, 1
      %s1146 = scalar_select %p1145, %s1142, 1
      %s1147 = smul.addr %s1144, 2
      %s1148 = sadd.s32 %s1146, %s1147
      %s1149 = smul.addr %s1148, 4
      %s1150 = scalar_lea.vmem %s2, %s1149
      %s1151 = smul.u32 2, %s21
      %p1152 = scmp.lt.s32.totalorder %s20, 1
      %s1153 = scalar_select %p1152, %s20, 1
      %p1154 = scmp.lt.s32.totalorder %s1151, 1
      %s1155 = scalar_select %p1154, %s1151, 1
      %s1156 = smul.addr %s1153, 2
      %s1157 = sadd.s32 %s1155, %s1156
      %s1158 = smul.addr %s1157, 2
      %s1159 = scalar_lea.vmem %s3, %s1158
      // Predicated region
      $region33: #{bottleneck_forward.7} parent=27 // pred_check
        %p1160 = pneg %p110
      $region34: #{bottleneck_forward.7} parent=27 // pred_check_branch
        %1162 = sbr.rel (%p1160) target = $region36
      $region35: #{bottleneck_forward.7} parent=27 // pred_region
        %s1163 = sadd.s32 %s20, %s22
        %s1164 = smul.u32 32, %s1163
        %s1165 = smul.u32 2, %s21
      $region36: #{bottleneck_forward.7} parent=27 // pred_fallthru
        _
      // Predicated region
      $region37: #{bottleneck_forward.7} parent=27 // pred_check
        %p1166 = pneg %p138
      $region38: #{bottleneck_forward.7} parent=27 // pred_check_branch
        %1168 = sbr.rel (%p1166) target = $region40
      $region39: #{bottleneck_forward.7} parent=27 // pred_region
        %s1169 = smul.u32 2, %s21
      $region40: #{bottleneck_forward.7} parent=27 // pred_fallthru
        _
    $region28: #{bottleneck_forward.7} parent=5 // pred_fallthru
      _
    %p1170 = scmp.le.s32.totalorder 2, %s10
    // Predicated region
    $region41: #{bottleneck_forward.7} parent=5 // pred_check
      %p1171 = pneg %p1170
    $region42: #{bottleneck_forward.7} parent=5 // pred_check_branch
      %1173 = sbr.rel (%p1171) target = $region44
    $region43: #{bottleneck_forward.7} parent=5 // pred_region
      %s1174 = ssub.s32 %s10, 2
      // Predicated region
      $region45: #{bottleneck_forward.7} parent=43 // pred_check
        %p1175 = pneg %p116
      $region46: #{bottleneck_forward.7} parent=43 // pred_check_branch
        %1177 = sbr.rel (%p1175) target = $region48
      $region47: #{bottleneck_forward.7} parent=43 // pred_region
        %s1178 = sadd.s32 %s23, %s25
        %s1179 = smul.u32 32, %s1178
        %s1180 = smul.u32 2, %s24
        %p1181 = scmp.lt.s32.totalorder %s1179, 63
        %s1182 = scalar_select %p1181, %s1179, 63
        %p1183 = scmp.lt.s32.totalorder %s1180, 1
        %s1184 = scalar_select %p1183, %s1180, 1
        %s1185 = smul.addr %s1182, 2
        %s1186 = sadd.s32 %s1184, %s1185
        %s1187 = smul.addr %s1186, 4
        %s1188 = scalar_lea.vmem %s2, %s1187
      $region48: #{bottleneck_forward.7} parent=43 // pred_fallthru
        _
      // Predicated region
      $region49: #{bottleneck_forward.7} parent=43 // pred_check
        %p1189 = pneg %p144
      $region50: #{bottleneck_forward.7} parent=43 // pred_check_branch
        %1191 = sbr.rel (%p1189) target = $region52
      $region51: #{bottleneck_forward.7} parent=43 // pred_region
        %s1192 = smul.u32 2, %s24
        %p1193 = scmp.lt.s32.totalorder %s23, 1
        %s1194 = scalar_select %p1193, %s23, 1
        %p1195 = scmp.lt.s32.totalorder %s1192, 1
        %s1196 = scalar_select %p1195, %s1192, 1
        %s1197 = smul.addr %s1194, 2
        %s1198 = sadd.s32 %s1196, %s1197
        %s1199 = smul.addr %s1198, 2
        %s1200 = scalar_lea.vmem %s3, %s1199
      $region52: #{bottleneck_forward.7} parent=43 // pred_fallthru
        _
    $region44: #{bottleneck_forward.7} parent=5 // pred_fallthru
      _
  $region6: #{bottleneck_forward.7} parent=0 // loop_footer
    %s14 = sadd.s32 1, %s10
  $region7: #{bottleneck_forward.7} parent=0 // loop_footer_branch
    %9 = sbr.rel target = $region3
  $region8: #{bottleneck_forward.7} parent=0 // loop_exit
    _

// kernel: bottleneck_forward.9
$region0: #{bottleneck_forward.9}
  #allocation0 [shape = 'u32[]', space=smem, size = 0x4, offset = 0x4, fixed_abs, tag = 'smem constant byte address 0x4 - core index']
  #allocation1 [shape = 'u32[144,128]{1,0:T(1,128)}', space=vmem, size = 0x12000, scoped, tag = 'internal scratch']
  %s0 = inlined_call_operand.vmem [shape: bf16[512,256], index: 0, kind: input, shape index: {}]
  %s1 = inlined_call_operand.vmem [shape: f32[1,256], index: 1, kind: input, shape index: {}]
  %s2 = inlined_call_operand.vmem [shape: f32[1,256], index: 2, kind: input, shape index: {}]
  %s3 = inlined_call_operand.vmem [shape: bf16[512,256], index: 3, kind: input, shape index: {}]
  %s4 = inlined_call_operand.vmem [shape: f32[1,256], index: 4, kind: input, shape index: {}]
  %s5 = inlined_call_operand.vmem [shape: f32[1,256], index: 5, kind: input, shape index: {}]
  %s6 = inlined_call_operand.hbm [shape: f32[512,256], index: 6, kind: output, shape index: {}]
  %s7 = sld [smem:[#allocation0]]
  $region34: #{bottleneck_forward.9} parent=0
    _
  %s9 = ssub.s32 1, %s7
  %s10 = scalar_select 0, %s9, %s7
  $region1: #{bottleneck_forward.9} parent=0
    #allocation2 [shape = 'u8[524288]{0}', space=vmem, size = 0x80000, scoped, tag = 'output window, operand 0, single buffered']
    #allocation3 [shape = 's32[1]{0}', space=sflag, size = 0x4, scoped, tag = 'scoped memory for bottleneck_forward.9']
    %11 = vsyncpa [#allocation3], 0
    // Predicated region
    $region2: #{bottleneck_forward.9} parent=1 // pred_check
      _
    $region3: #{bottleneck_forward.9} parent=1 // pred_check_branch
      %13 = sbr.rel (0) target = $region5
    $region4: #{bottleneck_forward.9} parent=1 // pred_region
      _
    $region5: #{bottleneck_forward.9} parent=1 // pred_fallthru
      _
    // Predicated region
    $region6: #{bottleneck_forward.9} parent=1 // pred_check
      _
    $region7: #{bottleneck_forward.9} parent=1 // pred_check_branch
      %15 = sbr.rel (0) target = $region9
    $region8: #{bottleneck_forward.9} parent=1 // pred_region
      _
    $region9: #{bottleneck_forward.9} parent=1 // pred_fallthru
      _
    // Predicated region
    $region10: #{bottleneck_forward.9} parent=1 // pred_check
      _
    $region11: #{bottleneck_forward.9} parent=1 // pred_check_branch
      %17 = sbr.rel (0) target = $region13
    $region12: #{bottleneck_forward.9} parent=1 // pred_region
      _
    $region13: #{bottleneck_forward.9} parent=1 // pred_fallthru
      _
    // Predicated region
    $region14: #{bottleneck_forward.9} parent=1 // pred_check
      _
    $region15: #{bottleneck_forward.9} parent=1 // pred_check_branch
      %19 = sbr.rel (0) target = $region17
    $region16: #{bottleneck_forward.9} parent=1 // pred_region
      _
    $region17: #{bottleneck_forward.9} parent=1 // pred_fallthru
      _
    // Predicated region
    $region18: #{bottleneck_forward.9} parent=1 // pred_check
      _
    $region19: #{bottleneck_forward.9} parent=1 // pred_check_branch
      %21 = sbr.rel (0) target = $region21
    $region20: #{bottleneck_forward.9} parent=1 // pred_region
      _
    $region21: #{bottleneck_forward.9} parent=1 // pred_fallthru
      _
    // Predicated region
    $region22: #{bottleneck_forward.9} parent=1 // pred_check
      _
    $region23: #{bottleneck_forward.9} parent=1 // pred_check_branch
      %23 = sbr.rel (0) target = $region25
    $region24: #{bottleneck_forward.9} parent=1 // pred_region
      _
    $region25: #{bottleneck_forward.9} parent=1 // pred_fallthru
      _
    %v24 = vld [vmem:[%s0] sm:$0xff]
    %v25 = vld [vmem:[%s0 + $0x8] sm:$0xff]
    %v26 = vld [vmem:[%s0 + $0x10] sm:$0xff]
    %v27 = vld [vmem:[%s0 + $0x18] sm:$0xff]
    %v28 = vld [vmem:[%s0 + $0x20] sm:$0xff]
    %v29 = vld [vmem:[%s0 + $0x28] sm:$0xff]
    %v30 = vld [vmem:[%s0 + $0x30] sm:$0xff]
    %v31 = vld [vmem:[%s0 + $0x38] sm:$0xff]
    %v32 = vld [vmem:[%s0 + $0x40] sm:$0xff]
    %v33 = vld [vmem:[%s0 + $0x48] sm:$0xff]
    %v34 = vld [vmem:[%s0 + $0x50] sm:$0xff]
    %v35 = vld [vmem:[%s0 + $0x58] sm:$0xff]
    %v36 = vld [vmem:[%s0 + $0x60] sm:$0xff]
    %v37 = vld [vmem:[%s0 + $0x68] sm:$0xff]
    %v38 = vld [vmem:[%s0 + $0x70] sm:$0xff]
    %v39 = vld [vmem:[%s0 + $0x78] sm:$0xff]
    %v40 = vld [vmem:[%s0 + $0x80] sm:$0xff]
    %v41 = vld [vmem:[%s0 + $0x88] sm:$0xff]
    %v42 = vld [vmem:[%s0 + $0x90] sm:$0xff]
    %v43 = vld [vmem:[%s0 + $0x98] sm:$0xff]
    %v44 = vld [vmem:[%s0 + $0xa0] sm:$0xff]
    %v45 = vld [vmem:[%s0 + $0xa8] sm:$0xff]
    %v46 = vld [vmem:[%s0 + $0xb0] sm:$0xff]
    %v47 = vld [vmem:[%s0 + $0xb8] sm:$0xff]
    %v48 = vld [vmem:[%s0 + $0xc0] sm:$0xff]
    %v49 = vld [vmem:[%s0 + $0xc8] sm:$0xff]
    %v50 = vld [vmem:[%s0 + $0xd0] sm:$0xff]
    %v51 = vld [vmem:[%s0 + $0xd8] sm:$0xff]
    %v52 = vld [vmem:[%s0 + $0xe0] sm:$0xff]
    %v53 = vld [vmem:[%s0 + $0xe8] sm:$0xff]
    %v54 = vld [vmem:[%s0 + $0xf0] sm:$0xff]
    %v55 = vld [vmem:[%s0 + $0xf8] sm:$0xff]
    %v56 = vld [vmem:[%s0 + $0x100] sm:$0xff]
    %v57 = vld [vmem:[%s0 + $0x108] sm:$0xff]
    %v58 = vld [vmem:[%s0 + $0x110] sm:$0xff]
    %v59 = vld [vmem:[%s0 + $0x118] sm:$0xff]
    %v60 = vld [vmem:[%s0 + $0x120] sm:$0xff]
    %v61 = vld [vmem:[%s0 + $0x128] sm:$0xff]
    %v62 = vld [vmem:[%s0 + $0x130] sm:$0xff]
    %v63 = vld [vmem:[%s0 + $0x138] sm:$0xff]
    %v64 = vld [vmem:[%s0 + $0x140] sm:$0xff]
    %v65 = vld [vmem:[%s0 + $0x148] sm:$0xff]
    %v66 = vld [vmem:[%s0 + $0x150] sm:$0xff]
    %v67 = vld [vmem:[%s0 + $0x158] sm:$0xff]
    %v68 = vld [vmem:[%s0 + $0x160] sm:$0xff]
    %v69 = vld [vmem:[%s0 + $0x168] sm:$0xff]
    %v70 = vld [vmem:[%s0 + $0x170] sm:$0xff]
    %v71 = vld [vmem:[%s0 + $0x178] sm:$0xff]
    %v72 = vld [vmem:[%s0 + $0x180] sm:$0xff]
    %v73 = vld [vmem:[%s0 + $0x188] sm:$0xff]
    %v74 = vld [vmem:[%s0 + $0x190] sm:$0xff]
    %v75 = vld [vmem:[%s0 + $0x198] sm:$0xff]
    %v76 = vld [vmem:[%s0 + $0x1a0] sm:$0xff]
    %v77 = vld [vmem:[%s0 + $0x1a8] sm:$0xff]
    %v78 = vld [vmem:[%s0 + $0x1b0] sm:$0xff]
    %v79 = vld [vmem:[%s0 + $0x1b8] sm:$0xff]
    %v80 = vld [vmem:[%s0 + $0x1c0] sm:$0xff]
    %v81 = vld [vmem:[%s0 + $0x1c8] sm:$0xff]
    %v82 = vld [vmem:[%s0 + $0x1d0] sm:$0xff]
    %v83 = vld [vmem:[%s0 + $0x1d8] sm:$0xff]
    %v84 = vld [vmem:[%s0 + $0x1e0] sm:$0xff]
    %v85 = vld [vmem:[%s0 + $0x1e8] sm:$0xff]
    %v86 = vld [vmem:[%s0 + $0x1f0] sm:$0xff]
    %v87 = vld [vmem:[%s0 + $0x1f8] sm:$0xff]
    %v88 = vunpack.c.l.bf16 %v24
    %v89 = vunpack.c.h.bf16 %v24
    %v90 = vunpack.c.l.bf16 %v25
    %v91 = vunpack.c.h.bf16 %v25
    %v92 = vunpack.c.l.bf16 %v26
    %v93 = vunpack.c.h.bf16 %v26
    %v94 = vunpack.c.l.bf16 %v27
    %v95 = vunpack.c.h.bf16 %v27
    %v96 = vunpack.c.l.bf16 %v28
    %v97 = vunpack.c.h.bf16 %v28
    %v98 = vunpack.c.l.bf16 %v29
    %v99 = vunpack.c.h.bf16 %v29
    %v100 = vunpack.c.l.bf16 %v30
    %v101 = vunpack.c.h.bf16 %v30
    %v102 = vunpack.c.l.bf16 %v31
    %v103 = vunpack.c.h.bf16 %v31
    %v104 = vunpack.c.l.bf16 %v32
    %v105 = vunpack.c.h.bf16 %v32
    %v106 = vunpack.c.l.bf16 %v33
    %v107 = vunpack.c.h.bf16 %v33
    %v108 = vunpack.c.l.bf16 %v34
    %v109 = vunpack.c.h.bf16 %v34
    %v110 = vunpack.c.l.bf16 %v35
    %v111 = vunpack.c.h.bf16 %v35
    %v112 = vunpack.c.l.bf16 %v36
    %v113 = vunpack.c.h.bf16 %v36
    %v114 = vunpack.c.l.bf16 %v37
    %v115 = vunpack.c.h.bf16 %v37
    %v116 = vunpack.c.l.bf16 %v38
    %v117 = vunpack.c.h.bf16 %v38
    %v118 = vunpack.c.l.bf16 %v39
    %v119 = vunpack.c.h.bf16 %v39
    %v120 = vunpack.c.l.bf16 %v40
    %v121 = vunpack.c.h.bf16 %v40
    %v122 = vunpack.c.l.bf16 %v41
    %v123 = vunpack.c.h.bf16 %v41
    %v124 = vunpack.c.l.bf16 %v42
    %v125 = vunpack.c.h.bf16 %v42
    %v126 = vunpack.c.l.bf16 %v43
    %v127 = vunpack.c.h.bf16 %v43
    %v128 = vunpack.c.l.bf16 %v44
    %v129 = vunpack.c.h.bf16 %v44
    %v130 = vunpack.c.l.bf16 %v45
    %v131 = vunpack.c.h.bf16 %v45
    %v132 = vunpack.c.l.bf16 %v46
    %v133 = vunpack.c.h.bf16 %v46
    %v134 = vunpack.c.l.bf16 %v47
    %v135 = vunpack.c.h.bf16 %v47
    %v136 = vunpack.c.l.bf16 %v48
    %v137 = vunpack.c.h.bf16 %v48
    %v138 = vunpack.c.l.bf16 %v49
    %v139 = vunpack.c.h.bf16 %v49
    %v140 = vunpack.c.l.bf16 %v50
    %v141 = vunpack.c.h.bf16 %v50
    %v142 = vunpack.c.l.bf16 %v51
    %v143 = vunpack.c.h.bf16 %v51
    %v144 = vunpack.c.l.bf16 %v52
    %v145 = vunpack.c.h.bf16 %v52
    %v146 = vunpack.c.l.bf16 %v53
    %v147 = vunpack.c.h.bf16 %v53
    %v148 = vunpack.c.l.bf16 %v54
    %v149 = vunpack.c.h.bf16 %v54
    %v150 = vunpack.c.l.bf16 %v55
    %v151 = vunpack.c.h.bf16 %v55
    %v152 = vunpack.c.l.bf16 %v56
    %v153 = vunpack.c.h.bf16 %v56
    %v154 = vunpack.c.l.bf16 %v57
    %v155 = vunpack.c.h.bf16 %v57
    %v156 = vunpack.c.l.bf16 %v58
    %v157 = vunpack.c.h.bf16 %v58
    %v158 = vunpack.c.l.bf16 %v59
    %v159 = vunpack.c.h.bf16 %v59
    %v160 = vunpack.c.l.bf16 %v60
    %v161 = vunpack.c.h.bf16 %v60
    %v162 = vunpack.c.l.bf16 %v61
    %v163 = vunpack.c.h.bf16 %v61
    %v164 = vunpack.c.l.bf16 %v62
    %v165 = vunpack.c.h.bf16 %v62
    %v166 = vunpack.c.l.bf16 %v63
    %v167 = vunpack.c.h.bf16 %v63
    %v168 = vunpack.c.l.bf16 %v64
    %v169 = vunpack.c.h.bf16 %v64
    %v170 = vunpack.c.l.bf16 %v65
    %v171 = vunpack.c.h.bf16 %v65
    %v172 = vunpack.c.l.bf16 %v66
    %v173 = vunpack.c.h.bf16 %v66
    %v174 = vunpack.c.l.bf16 %v67
    %v175 = vunpack.c.h.bf16 %v67
    %v176 = vunpack.c.l.bf16 %v68
    %v177 = vunpack.c.h.bf16 %v68
    %v178 = vunpack.c.l.bf16 %v69
    %v179 = vunpack.c.h.bf16 %v69
    %v180 = vunpack.c.l.bf16 %v70
    %v181 = vunpack.c.h.bf16 %v70
    %v182 = vunpack.c.l.bf16 %v71
    %v183 = vunpack.c.h.bf16 %v71
    %v184 = vunpack.c.l.bf16 %v72
    %v185 = vunpack.c.h.bf16 %v72
    %v186 = vunpack.c.l.bf16 %v73
    %v187 = vunpack.c.h.bf16 %v73
    %v188 = vunpack.c.l.bf16 %v74
    %v189 = vunpack.c.h.bf16 %v74
    %v190 = vunpack.c.l.bf16 %v75
    %v191 = vunpack.c.h.bf16 %v75
    %v192 = vunpack.c.l.bf16 %v76
    %v193 = vunpack.c.h.bf16 %v76
    %v194 = vunpack.c.l.bf16 %v77
    %v195 = vunpack.c.h.bf16 %v77
    %v196 = vunpack.c.l.bf16 %v78
    %v197 = vunpack.c.h.bf16 %v78
    %v198 = vunpack.c.l.bf16 %v79
    %v199 = vunpack.c.h.bf16 %v79
    %v200 = vunpack.c.l.bf16 %v80
    %v201 = vunpack.c.h.bf16 %v80
    %v202 = vunpack.c.l.bf16 %v81
    %v203 = vunpack.c.h.bf16 %v81
    %v204 = vunpack.c.l.bf16 %v82
    %v205 = vunpack.c.h.bf16 %v82
    %v206 = vunpack.c.l.bf16 %v83
    %v207 = vunpack.c.h.bf16 %v83
    %v208 = vunpack.c.l.bf16 %v84
    %v209 = vunpack.c.h.bf16 %v84
    %v210 = vunpack.c.l.bf16 %v85
    %v211 = vunpack.c.h.bf16 %v85
    %v212 = vunpack.c.l.bf16 %v86
    %v213 = vunpack.c.h.bf16 %v86
    %v214 = vunpack.c.l.bf16 %v87
    %v215 = vunpack.c.h.bf16 %v87
    %v216 = vld [vmem:[%s1] sm:$0x3]
    %v218 = vlaneseq
    %v219 = vshrl.u32 %v218, 7
    %v220 = vsub.s32 0, %v219
    %v221 = vrot.slane %v216, %v220
    %v222 = vlaneseq
    %v223 = vshrl.u32 %v222, 7
    %v224 = vsub.s32 1, %v223
    %v225 = vrot.slane %v216, %v224
    %v228 = vmul.f32 %v88, %v221
    %v229 = vmul.f32 %v89, %v225
    %v230 = vmul.f32 %v90, %v221
    %v231 = vmul.f32 %v91, %v225
    %v232 = vmul.f32 %v92, %v221
    %v233 = vmul.f32 %v93, %v225
    %v234 = vmul.f32 %v94, %v221
    %v235 = vmul.f32 %v95, %v225
    %v236 = vmul.f32 %v96, %v221
    %v237 = vmul.f32 %v97, %v225
    %v238 = vmul.f32 %v98, %v221
    %v239 = vmul.f32 %v99, %v225
    %v240 = vmul.f32 %v100, %v221
    %v241 = vmul.f32 %v101, %v225
    %v242 = vmul.f32 %v102, %v221
    %v243 = vmul.f32 %v103, %v225
    %v244 = vmul.f32 %v104, %v221
    %v245 = vmul.f32 %v105, %v225
    %v246 = vmul.f32 %v106, %v221
    %v247 = vmul.f32 %v107, %v225
    %v248 = vmul.f32 %v108, %v221
    %v249 = vmul.f32 %v109, %v225
    %v250 = vmul.f32 %v110, %v221
    %v251 = vmul.f32 %v111, %v225
    %v252 = vmul.f32 %v112, %v221
    %v253 = vmul.f32 %v113, %v225
    %v254 = vmul.f32 %v114, %v221
    %v255 = vmul.f32 %v115, %v225
    %v256 = vmul.f32 %v116, %v221
    %v257 = vmul.f32 %v117, %v225
    %v258 = vmul.f32 %v118, %v221
    %v259 = vmul.f32 %v119, %v225
    %v260 = vmul.f32 %v120, %v221
    %v261 = vmul.f32 %v121, %v225
    %v262 = vmul.f32 %v122, %v221
    %v263 = vmul.f32 %v123, %v225
    %v264 = vmul.f32 %v124, %v221
    %v265 = vmul.f32 %v125, %v225
    %v266 = vmul.f32 %v126, %v221
    %v267 = vmul.f32 %v127, %v225
    %v268 = vmul.f32 %v128, %v221
    %v269 = vmul.f32 %v129, %v225
    %v270 = vmul.f32 %v130, %v221
    %v271 = vmul.f32 %v131, %v225
    %v272 = vmul.f32 %v132, %v221
    %v273 = vmul.f32 %v133, %v225
    %v274 = vmul.f32 %v134, %v221
    %v275 = vmul.f32 %v135, %v225
    %v276 = vmul.f32 %v136, %v221
    %v277 = vmul.f32 %v137, %v225
    %v278 = vmul.f32 %v138, %v221
    %v279 = vmul.f32 %v139, %v225
    %v280 = vmul.f32 %v140, %v221
    %v281 = vmul.f32 %v141, %v225
    %v282 = vmul.f32 %v142, %v221
    %v283 = vmul.f32 %v143, %v225
    %v284 = vmul.f32 %v144, %v221
    %v285 = vmul.f32 %v145, %v225
    %v286 = vmul.f32 %v146, %v221
    %v287 = vmul.f32 %v147, %v225
    %v288 = vmul.f32 %v148, %v221
    %v289 = vmul.f32 %v149, %v225
    %v290 = vmul.f32 %v150, %v221
    %v291 = vmul.f32 %v151, %v225
    %v292 = vmul.f32 %v152, %v221
    %v293 = vmul.f32 %v153, %v225
    %v294 = vmul.f32 %v154, %v221
    %v295 = vmul.f32 %v155, %v225
    %v296 = vmul.f32 %v156, %v221
    %v297 = vmul.f32 %v157, %v225
    %v298 = vmul.f32 %v158, %v221
    %v299 = vmul.f32 %v159, %v225
    %v300 = vmul.f32 %v160, %v221
    %v301 = vmul.f32 %v161, %v225
    %v302 = vmul.f32 %v162, %v221
    %v303 = vmul.f32 %v163, %v225
    %v304 = vmul.f32 %v164, %v221
    %v305 = vmul.f32 %v165, %v225
    %v306 = vmul.f32 %v166, %v221
    %v307 = vmul.f32 %v167, %v225
    %v308 = vmul.f32 %v168, %v221
    %v309 = vmul.f32 %v169, %v225
    %v310 = vmul.f32 %v170, %v221
    %v311 = vmul.f32 %v171, %v225
    %v312 = vmul.f32 %v172, %v221
    %v313 = vmul.f32 %v173, %v225
    %v314 = vmul.f32 %v174, %v221
    %v315 = vmul.f32 %v175, %v225
    %v316 = vmul.f32 %v176, %v221
    %v317 = vmul.f32 %v177, %v225
    %v318 = vmul.f32 %v178, %v221
    %v319 = vmul.f32 %v179, %v225
    %v320 = vmul.f32 %v180, %v221
    %v321 = vmul.f32 %v181, %v225
    %v322 = vmul.f32 %v182, %v221
    %v323 = vmul.f32 %v183, %v225
    %v324 = vmul.f32 %v184, %v221
    %v325 = vmul.f32 %v185, %v225
    %v326 = vmul.f32 %v186, %v221
    %v327 = vmul.f32 %v187, %v225
    %v328 = vmul.f32 %v188, %v221
    %v329 = vmul.f32 %v189, %v225
    %v330 = vmul.f32 %v190, %v221
    %v331 = vmul.f32 %v191, %v225
    %v332 = vmul.f32 %v192, %v221
    %v333 = vmul.f32 %v193, %v225
    %v334 = vmul.f32 %v194, %v221
    %v335 = vmul.f32 %v195, %v225
    %v336 = vmul.f32 %v196, %v221
    %v337 = vmul.f32 %v197, %v225
    %v338 = vmul.f32 %v198, %v221
    %v339 = vmul.f32 %v199, %v225
    %v340 = vmul.f32 %v200, %v221
    %v341 = vmul.f32 %v201, %v225
    %v342 = vmul.f32 %v202, %v221
    %v343 = vmul.f32 %v203, %v225
    %v344 = vmul.f32 %v204, %v221
    %v345 = vmul.f32 %v205, %v225
    %v346 = vmul.f32 %v206, %v221
    %v347 = vmul.f32 %v207, %v225
    %v348 = vmul.f32 %v208, %v221
    %v349 = vmul.f32 %v209, %v225
    %v350 = vmul.f32 %v210, %v221
    %v351 = vmul.f32 %v211, %v225
    %v352 = vmul.f32 %v212, %v221
    %v353 = vmul.f32 %v213, %v225
    %v354 = vmul.f32 %v214, %v221
    %v355 = vmul.f32 %v215, %v225
    %v356 = vld [vmem:[%s2] sm:$0x3]
    %v358 = vlaneseq
    %v359 = vshrl.u32 %v358, 7
    %v360 = vsub.s32 0, %v359
    %v361 = vrot.slane %v356, %v360
    %v362 = vlaneseq
    %v363 = vshrl.u32 %v362, 7
    %v364 = vsub.s32 1, %v363
    %v365 = vrot.slane %v356, %v364
    %v368 = vadd.f32 %v228, %v361
    %v369 = vadd.f32 %v229, %v365
    %v370 = vadd.f32 %v230, %v361
    %v371 = vadd.f32 %v231, %v365
    %v372 = vadd.f32 %v232, %v361
    %v373 = vadd.f32 %v233, %v365
    %v374 = vadd.f32 %v234, %v361
    %v375 = vadd.f32 %v235, %v365
    %v376 = vadd.f32 %v236, %v361
    %v377 = vadd.f32 %v237, %v365
    %v378 = vadd.f32 %v238, %v361
    %v379 = vadd.f32 %v239, %v365
    %v380 = vadd.f32 %v240, %v361
    %v381 = vadd.f32 %v241, %v365
    %v382 = vadd.f32 %v242, %v361
    %v383 = vadd.f32 %v243, %v365
    %v384 = vadd.f32 %v244, %v361
    %v385 = vadd.f32 %v245, %v365
    %v386 = vadd.f32 %v246, %v361
    %v387 = vadd.f32 %v247, %v365
    %v388 = vadd.f32 %v248, %v361
    %v389 = vadd.f32 %v249, %v365
    %v390 = vadd.f32 %v250, %v361
    %v391 = vadd.f32 %v251, %v365
    %v392 = vadd.f32 %v252, %v361
    %v393 = vadd.f32 %v253, %v365
    %v394 = vadd.f32 %v254, %v361
    %v395 = vadd.f32 %v255, %v365
    %v396 = vadd.f32 %v256, %v361
    %v397 = vadd.f32 %v257, %v365
    %v398 = vadd.f32 %v258, %v361
    %v399 = vadd.f32 %v259, %v365
    %v400 = vadd.f32 %v260, %v361
    %v401 = vadd.f32 %v261, %v365
    %v402 = vadd.f32 %v262, %v361
    %v403 = vadd.f32 %v263, %v365
    %v404 = vadd.f32 %v264, %v361
    %v405 = vadd.f32 %v265, %v365
    %v406 = vadd.f32 %v266, %v361
    %v407 = vadd.f32 %v267, %v365
    %v408 = vadd.f32 %v268, %v361
    %v409 = vadd.f32 %v269, %v365
    %v410 = vadd.f32 %v270, %v361
    %v411 = vadd.f32 %v271, %v365
    %v412 = vadd.f32 %v272, %v361
    %v413 = vadd.f32 %v273, %v365
    %v414 = vadd.f32 %v274, %v361
    %v415 = vadd.f32 %v275, %v365
    %v416 = vadd.f32 %v276, %v361
    %v417 = vadd.f32 %v277, %v365
    %v418 = vadd.f32 %v278, %v361
    %v419 = vadd.f32 %v279, %v365
    %v420 = vadd.f32 %v280, %v361
    %v421 = vadd.f32 %v281, %v365
    %v422 = vadd.f32 %v282, %v361
    %v423 = vadd.f32 %v283, %v365
    %v424 = vadd.f32 %v284, %v361
    %v425 = vadd.f32 %v285, %v365
    %v426 = vadd.f32 %v286, %v361
    %v427 = vadd.f32 %v287, %v365
    %v428 = vadd.f32 %v288, %v361
    %v429 = vadd.f32 %v289, %v365
    %v430 = vadd.f32 %v290, %v361
    %v431 = vadd.f32 %v291, %v365
    %v432 = vadd.f32 %v292, %v361
    %v433 = vadd.f32 %v293, %v365
    %v434 = vadd.f32 %v294, %v361
    %v435 = vadd.f32 %v295, %v365
    %v436 = vadd.f32 %v296, %v361
    %v437 = vadd.f32 %v297, %v365
    %v438 = vadd.f32 %v298, %v361
    %v439 = vadd.f32 %v299, %v365
    %v440 = vadd.f32 %v300, %v361
    %v441 = vadd.f32 %v301, %v365
    %v442 = vadd.f32 %v302, %v361
    %v443 = vadd.f32 %v303, %v365
    %v444 = vadd.f32 %v304, %v361
    %v445 = vadd.f32 %v305, %v365
    %v446 = vadd.f32 %v306, %v361
    %v447 = vadd.f32 %v307, %v365
    %v448 = vadd.f32 %v308, %v361
    %v449 = vadd.f32 %v309, %v365
    %v450 = vadd.f32 %v310, %v361
    %v451 = vadd.f32 %v311, %v365
    %v452 = vadd.f32 %v312, %v361
    %v453 = vadd.f32 %v313, %v365
    %v454 = vadd.f32 %v314, %v361
    %v455 = vadd.f32 %v315, %v365
    %v456 = vadd.f32 %v316, %v361
    %v457 = vadd.f32 %v317, %v365
    %v458 = vadd.f32 %v318, %v361
    %v459 = vadd.f32 %v319, %v365
    %v460 = vadd.f32 %v320, %v361
    %v461 = vadd.f32 %v321, %v365
    %v462 = vadd.f32 %v322, %v361
    %v463 = vadd.f32 %v323, %v365
    %v464 = vadd.f32 %v324, %v361
    %v465 = vadd.f32 %v325, %v365
    %v466 = vadd.f32 %v326, %v361
    %v467 = vadd.f32 %v327, %v365
    %v468 = vadd.f32 %v328, %v361
    %v469 = vadd.f32 %v329, %v365
    %v470 = vadd.f32 %v330, %v361
    %v471 = vadd.f32 %v331, %v365
    %v472 = vadd.f32 %v332, %v361
    %v473 = vadd.f32 %v333, %v365
    %v474 = vadd.f32 %v334, %v361
    %v475 = vadd.f32 %v335, %v365
    %v476 = vadd.f32 %v336, %v361
    %v477 = vadd.f32 %v337, %v365
    %v478 = vadd.f32 %v338, %v361
    %v479 = vadd.f32 %v339, %v365
    %v480 = vadd.f32 %v340, %v361
    %v481 = vadd.f32 %v341, %v365
    %v482 = vadd.f32 %v342, %v361
    %v483 = vadd.f32 %v343, %v365
    %v484 = vadd.f32 %v344, %v361
    %v485 = vadd.f32 %v345, %v365
    %v486 = vadd.f32 %v346, %v361
    %v487 = vadd.f32 %v347, %v365
    %v488 = vadd.f32 %v348, %v361
    %v489 = vadd.f32 %v349, %v365
    %v490 = vadd.f32 %v350, %v361
    %v491 = vadd.f32 %v351, %v365
    %v492 = vadd.f32 %v352, %v361
    %v493 = vadd.f32 %v353, %v365
    %v494 = vadd.f32 %v354, %v361
    %v495 = vadd.f32 %v355, %v365
    %v496 = vld [vmem:[%s3] sm:$0xff]
    %v497 = vld [vmem:[%s3 + $0x8] sm:$0xff]
    %v498 = vld [vmem:[%s3 + $0x10] sm:$0xff]
    %v499 = vld [vmem:[%s3 + $0x18] sm:$0xff]
    %v500 = vld [vmem:[%s3 + $0x20] sm:$0xff]
    %v501 = vld [vmem:[%s3 + $0x28] sm:$0xff]
    %v502 = vld [vmem:[%s3 + $0x30] sm:$0xff]
    %v503 = vld [vmem:[%s3 + $0x38] sm:$0xff]
    %v504 = vld [vmem:[%s3 + $0x40] sm:$0xff]
    %v505 = vld [vmem:[%s3 + $0x48] sm:$0xff]
    %v506 = vld [vmem:[%s3 + $0x50] sm:$0xff]
    %v507 = vld [vmem:[%s3 + $0x58] sm:$0xff]
    %v508 = vld [vmem:[%s3 + $0x60] sm:$0xff]
    %v509 = vld [vmem:[%s3 + $0x68] sm:$0xff]
    %v510 = vld [vmem:[%s3 + $0x70] sm:$0xff]
    %v511 = vld [vmem:[%s3 + $0x78] sm:$0xff]
    %v512 = vld [vmem:[%s3 + $0x80] sm:$0xff]
    %v513 = vld [vmem:[%s3 + $0x88] sm:$0xff]
    %v514 = vld [vmem:[%s3 + $0x90] sm:$0xff]
    %v515 = vld [vmem:[%s3 + $0x98] sm:$0xff]
    %v516 = vld [vmem:[%s3 + $0xa0] sm:$0xff]
    %v517 = vld [vmem:[%s3 + $0xa8] sm:$0xff]
    %v518 = vld [vmem:[%s3 + $0xb0] sm:$0xff]
    %v519 = vld [vmem:[%s3 + $0xb8] sm:$0xff]
    %v520 = vld [vmem:[%s3 + $0xc0] sm:$0xff]
    %v521 = vld [vmem:[%s3 + $0xc8] sm:$0xff]
    %v522 = vld [vmem:[%s3 + $0xd0] sm:$0xff]
    %v523 = vld [vmem:[%s3 + $0xd8] sm:$0xff]
    %v524 = vld [vmem:[%s3 + $0xe0] sm:$0xff]
    %v525 = vld [vmem:[%s3 + $0xe8] sm:$0xff]
    %v526 = vld [vmem:[%s3 + $0xf0] sm:$0xff]
    %v527 = vld [vmem:[%s3 + $0xf8] sm:$0xff]
    %v528 = vld [vmem:[%s3 + $0x100] sm:$0xff]
    %v529 = vld [vmem:[%s3 + $0x108] sm:$0xff]
    %v530 = vld [vmem:[%s3 + $0x110] sm:$0xff]
    %v531 = vld [vmem:[%s3 + $0x118] sm:$0xff]
    %v532 = vld [vmem:[%s3 + $0x120] sm:$0xff]
    %v533 = vld [vmem:[%s3 + $0x128] sm:$0xff]
    %v534 = vld [vmem:[%s3 + $0x130] sm:$0xff]
    %v535 = vld [vmem:[%s3 + $0x138] sm:$0xff]
    %v536 = vld [vmem:[%s3 + $0x140] sm:$0xff]
    %v537 = vld [vmem:[%s3 + $0x148] sm:$0xff]
    %v538 = vld [vmem:[%s3 + $0x150] sm:$0xff]
    %v539 = vld [vmem:[%s3 + $0x158] sm:$0xff]
    %v540 = vld [vmem:[%s3 + $0x160] sm:$0xff]
    %v541 = vld [vmem:[%s3 + $0x168] sm:$0xff]
    %v542 = vld [vmem:[%s3 + $0x170] sm:$0xff]
    %v543 = vld [vmem:[%s3 + $0x178] sm:$0xff]
    %v544 = vld [vmem:[%s3 + $0x180] sm:$0xff]
    %v545 = vld [vmem:[%s3 + $0x188] sm:$0xff]
    %v546 = vld [vmem:[%s3 + $0x190] sm:$0xff]
    %v547 = vld [vmem:[%s3 + $0x198] sm:$0xff]
    %v548 = vld [vmem:[%s3 + $0x1a0] sm:$0xff]
    %v549 = vld [vmem:[%s3 + $0x1a8] sm:$0xff]
    %v550 = vld [vmem:[%s3 + $0x1b0] sm:$0xff]
    %v551 = vld [vmem:[%s3 + $0x1b8] sm:$0xff]
    %v552 = vld [vmem:[%s3 + $0x1c0] sm:$0xff]
    %v553 = vld [vmem:[%s3 + $0x1c8] sm:$0xff]
    %v554 = vld [vmem:[%s3 + $0x1d0] sm:$0xff]
    %v555 = vld [vmem:[%s3 + $0x1d8] sm:$0xff]
    %v556 = vld [vmem:[%s3 + $0x1e0] sm:$0xff]
    %v557 = vld [vmem:[%s3 + $0x1e8] sm:$0xff]
    %v558 = vld [vmem:[%s3 + $0x1f0] sm:$0xff]
    %v559 = vld [vmem:[%s3 + $0x1f8] sm:$0xff]
    %v560 = vunpack.c.l.bf16 %v496
    %v561 = vunpack.c.h.bf16 %v496
    %v562 = vunpack.c.l.bf16 %v497
    %v563 = vunpack.c.h.bf16 %v497
    %v564 = vunpack.c.l.bf16 %v498
    %v565 = vunpack.c.h.bf16 %v498
    %v566 = vunpack.c.l.bf16 %v499
    %v567 = vunpack.c.h.bf16 %v499
    %v568 = vunpack.c.l.bf16 %v500
    %v569 = vunpack.c.h.bf16 %v500
    %v570 = vunpack.c.l.bf16 %v501
    %v571 = vunpack.c.h.bf16 %v501
    %v572 = vunpack.c.l.bf16 %v502
    %v573 = vunpack.c.h.bf16 %v502
    %v574 = vunpack.c.l.bf16 %v503
    %v575 = vunpack.c.h.bf16 %v503
    %v576 = vunpack.c.l.bf16 %v504
    %v577 = vunpack.c.h.bf16 %v504
    %v578 = vunpack.c.l.bf16 %v505
    %v579 = vunpack.c.h.bf16 %v505
    %v580 = vunpack.c.l.bf16 %v506
    %v581 = vunpack.c.h.bf16 %v506
    %v582 = vunpack.c.l.bf16 %v507
    %v583 = vunpack.c.h.bf16 %v507
    %v584 = vunpack.c.l.bf16 %v508
    %v585 = vunpack.c.h.bf16 %v508
    %v586 = vunpack.c.l.bf16 %v509
    %v587 = vunpack.c.h.bf16 %v509
    %v588 = vunpack.c.l.bf16 %v510
    %v589 = vunpack.c.h.bf16 %v510
    %v590 = vunpack.c.l.bf16 %v511
    %v591 = vunpack.c.h.bf16 %v511
    %v592 = vunpack.c.l.bf16 %v512
    %v593 = vunpack.c.h.bf16 %v512
    %v594 = vunpack.c.l.bf16 %v513
    %v595 = vunpack.c.h.bf16 %v513
    %v596 = vunpack.c.l.bf16 %v514
    %v597 = vunpack.c.h.bf16 %v514
    %v598 = vunpack.c.l.bf16 %v515
    %v599 = vunpack.c.h.bf16 %v515
    %v600 = vunpack.c.l.bf16 %v516
    %v601 = vunpack.c.h.bf16 %v516
    %v602 = vunpack.c.l.bf16 %v517
    %v603 = vunpack.c.h.bf16 %v517
    %v604 = vunpack.c.l.bf16 %v518
    %v605 = vunpack.c.h.bf16 %v518
    %v606 = vunpack.c.l.bf16 %v519
    %v607 = vunpack.c.h.bf16 %v519
    %v608 = vunpack.c.l.bf16 %v520
    %v609 = vunpack.c.h.bf16 %v520
    %v610 = vunpack.c.l.bf16 %v521
    %v611 = vunpack.c.h.bf16 %v521
    %v612 = vunpack.c.l.bf16 %v522
    %v613 = vunpack.c.h.bf16 %v522
    %v614 = vunpack.c.l.bf16 %v523
    %v615 = vunpack.c.h.bf16 %v523
    %v616 = vunpack.c.l.bf16 %v524
    %v617 = vunpack.c.h.bf16 %v524
    %v618 = vunpack.c.l.bf16 %v525
    %v619 = vunpack.c.h.bf16 %v525
    %v620 = vunpack.c.l.bf16 %v526
    %v621 = vunpack.c.h.bf16 %v526
    %v622 = vunpack.c.l.bf16 %v527
    %v623 = vunpack.c.h.bf16 %v527
    %v624 = vunpack.c.l.bf16 %v528
    %v625 = vunpack.c.h.bf16 %v528
    %v626 = vunpack.c.l.bf16 %v529
    %v627 = vunpack.c.h.bf16 %v529
    %v628 = vunpack.c.l.bf16 %v530
    %v629 = vunpack.c.h.bf16 %v530
    %v630 = vunpack.c.l.bf16 %v531
    %v631 = vunpack.c.h.bf16 %v531
    %v632 = vunpack.c.l.bf16 %v532
    %v633 = vunpack.c.h.bf16 %v532
    %v634 = vunpack.c.l.bf16 %v533
    %v635 = vunpack.c.h.bf16 %v533
    %v636 = vunpack.c.l.bf16 %v534
    %v637 = vunpack.c.h.bf16 %v534
    %v638 = vunpack.c.l.bf16 %v535
    %v639 = vunpack.c.h.bf16 %v535
    %v640 = vunpack.c.l.bf16 %v536
    %v641 = vunpack.c.h.bf16 %v536
    %v642 = vunpack.c.l.bf16 %v537
    %v643 = vunpack.c.h.bf16 %v537
    %v644 = vunpack.c.l.bf16 %v538
    %v645 = vunpack.c.h.bf16 %v538
    %v646 = vunpack.c.l.bf16 %v539
    %v647 = vunpack.c.h.bf16 %v539
    %v648 = vunpack.c.l.bf16 %v540
    %v649 = vunpack.c.h.bf16 %v540
    %v650 = vunpack.c.l.bf16 %v541
    %v651 = vunpack.c.h.bf16 %v541
    %v652 = vunpack.c.l.bf16 %v542
    %v653 = vunpack.c.h.bf16 %v542
    %v654 = vunpack.c.l.bf16 %v543
    %v655 = vunpack.c.h.bf16 %v543
    %v656 = vunpack.c.l.bf16 %v544
    %v657 = vunpack.c.h.bf16 %v544
    %v658 = vunpack.c.l.bf16 %v545
    %v659 = vunpack.c.h.bf16 %v545
    %v660 = vunpack.c.l.bf16 %v546
    %v661 = vunpack.c.h.bf16 %v546
    %v662 = vunpack.c.l.bf16 %v547
    %v663 = vunpack.c.h.bf16 %v547
    %v664 = vunpack.c.l.bf16 %v548
    %v665 = vunpack.c.h.bf16 %v548
    %v666 = vunpack.c.l.bf16 %v549
    %v667 = vunpack.c.h.bf16 %v549
    %v668 = vunpack.c.l.bf16 %v550
    %v669 = vunpack.c.h.bf16 %v550
    %v670 = vunpack.c.l.bf16 %v551
    %v671 = vunpack.c.h.bf16 %v551
    %v672 = vunpack.c.l.bf16 %v552
    %v673 = vunpack.c.h.bf16 %v552
    %v674 = vunpack.c.l.bf16 %v553
    %v675 = vunpack.c.h.bf16 %v553
    %v676 = vunpack.c.l.bf16 %v554
    %v677 = vunpack.c.h.bf16 %v554
    %v678 = vunpack.c.l.bf16 %v555
    %v679 = vunpack.c.h.bf16 %v555
    %v680 = vunpack.c.l.bf16 %v556
    %v681 = vunpack.c.h.bf16 %v556
    %v682 = vunpack.c.l.bf16 %v557
    %v683 = vunpack.c.h.bf16 %v557
    %v684 = vunpack.c.l.bf16 %v558
    %v685 = vunpack.c.h.bf16 %v558
    %v686 = vunpack.c.l.bf16 %v559
    %v687 = vunpack.c.h.bf16 %v559
    %v688 = vld [vmem:[%s4] sm:$0x3]
    %v690 = vlaneseq
    %v691 = vshrl.u32 %v690, 7
    %v692 = vsub.s32 0, %v691
    %v693 = vrot.slane %v688, %v692
    %v694 = vlaneseq
    %v695 = vshrl.u32 %v694, 7
    %v696 = vsub.s32 1, %v695
    %v697 = vrot.slane %v688, %v696
    %v700 = vmul.f32 %v560, %v693
    %v701 = vmul.f32 %v561, %v697
    %v702 = vmul.f32 %v562, %v693
    %v703 = vmul.f32 %v563, %v697
    %v704 = vmul.f32 %v564, %v693
    %v705 = vmul.f32 %v565, %v697
    %v706 = vmul.f32 %v566, %v693
    %v707 = vmul.f32 %v567, %v697
    %v708 = vmul.f32 %v568, %v693
    %v709 = vmul.f32 %v569, %v697
    %v710 = vmul.f32 %v570, %v693
    %v711 = vmul.f32 %v571, %v697
    %v712 = vmul.f32 %v572, %v693
    %v713 = vmul.f32 %v573, %v697
    %v714 = vmul.f32 %v574, %v693
    %v715 = vmul.f32 %v575, %v697
    %v716 = vmul.f32 %v576, %v693
    %v717 = vmul.f32 %v577, %v697
    %v718 = vmul.f32 %v578, %v693
    %v719 = vmul.f32 %v579, %v697
    %v720 = vmul.f32 %v580, %v693
    %v721 = vmul.f32 %v581, %v697
    %v722 = vmul.f32 %v582, %v693
    %v723 = vmul.f32 %v583, %v697
    %v724 = vmul.f32 %v584, %v693
    %v725 = vmul.f32 %v585, %v697
    %v726 = vmul.f32 %v586, %v693
    %v727 = vmul.f32 %v587, %v697
    %v728 = vmul.f32 %v588, %v693
    %v729 = vmul.f32 %v589, %v697
    %v730 = vmul.f32 %v590, %v693
    %v731 = vmul.f32 %v591, %v697
    %v732 = vmul.f32 %v592, %v693
    %v733 = vmul.f32 %v593, %v697
    %v734 = vmul.f32 %v594, %v693
    %v735 = vmul.f32 %v595, %v697
    %v736 = vmul.f32 %v596, %v693
    %v737 = vmul.f32 %v597, %v697
    %v738 = vmul.f32 %v598, %v693
    %v739 = vmul.f32 %v599, %v697
    %v740 = vmul.f32 %v600, %v693
    %v741 = vmul.f32 %v601, %v697
    %v742 = vmul.f32 %v602, %v693
    %v743 = vmul.f32 %v603, %v697
    %v744 = vmul.f32 %v604, %v693
    %v745 = vmul.f32 %v605, %v697
    %v746 = vmul.f32 %v606, %v693
    %v747 = vmul.f32 %v607, %v697
    %v748 = vmul.f32 %v608, %v693
    %v749 = vmul.f32 %v609, %v697
    %v750 = vmul.f32 %v610, %v693
    %v751 = vmul.f32 %v611, %v697
    %v752 = vmul.f32 %v612, %v693
    %v753 = vmul.f32 %v613, %v697
    %v754 = vmul.f32 %v614, %v693
    %v755 = vmul.f32 %v615, %v697
    %v756 = vmul.f32 %v616, %v693
    %v757 = vmul.f32 %v617, %v697
    %v758 = vmul.f32 %v618, %v693
    %v759 = vmul.f32 %v619, %v697
    %v760 = vmul.f32 %v620, %v693
    %v761 = vmul.f32 %v621, %v697
    %v762 = vmul.f32 %v622, %v693
    %v763 = vmul.f32 %v623, %v697
    %v764 = vmul.f32 %v624, %v693
    %v765 = vmul.f32 %v625, %v697
    %v766 = vmul.f32 %v626, %v693
    %v767 = vmul.f32 %v627, %v697
    %v768 = vmul.f32 %v628, %v693
    %v769 = vmul.f32 %v629, %v697
    %v770 = vmul.f32 %v630, %v693
    %v771 = vmul.f32 %v631, %v697
    %v772 = vmul.f32 %v632, %v693
    %v773 = vmul.f32 %v633, %v697
    %v774 = vmul.f32 %v634, %v693
    %v775 = vmul.f32 %v635, %v697
    %v776 = vmul.f32 %v636, %v693
    %v777 = vmul.f32 %v637, %v697
    %v778 = vmul.f32 %v638, %v693
    %v779 = vmul.f32 %v639, %v697
    %v780 = vmul.f32 %v640, %v693
    %v781 = vmul.f32 %v641, %v697
    %v782 = vmul.f32 %v642, %v693
    %v783 = vmul.f32 %v643, %v697
    %v784 = vmul.f32 %v644, %v693
    %v785 = vmul.f32 %v645, %v697
    %v786 = vmul.f32 %v646, %v693
    %v787 = vmul.f32 %v647, %v697
    %v788 = vmul.f32 %v648, %v693
    %v789 = vmul.f32 %v649, %v697
    %v790 = vmul.f32 %v650, %v693
    %v791 = vmul.f32 %v651, %v697
    %v792 = vmul.f32 %v652, %v693
    %v793 = vmul.f32 %v653, %v697
    %v794 = vmul.f32 %v654, %v693
    %v795 = vmul.f32 %v655, %v697
    %v796 = vmul.f32 %v656, %v693
    %v797 = vmul.f32 %v657, %v697
    %v798 = vmul.f32 %v658, %v693
    %v799 = vmul.f32 %v659, %v697
    %v800 = vmul.f32 %v660, %v693
    %v801 = vmul.f32 %v661, %v697
    %v802 = vmul.f32 %v662, %v693
    %v803 = vmul.f32 %v663, %v697
    %v804 = vmul.f32 %v664, %v693
    %v805 = vmul.f32 %v665, %v697
    %v806 = vmul.f32 %v666, %v693
    %v807 = vmul.f32 %v667, %v697
    %v808 = vmul.f32 %v668, %v693
    %v809 = vmul.f32 %v669, %v697
    %v810 = vmul.f32 %v670, %v693
    %v811 = vmul.f32 %v671, %v697
    %v812 = vmul.f32 %v672, %v693
    %v813 = vmul.f32 %v673, %v697
    %v814 = vmul.f32 %v674, %v693
    %v815 = vmul.f32 %v675, %v697
    %v816 = vmul.f32 %v676, %v693
    %v817 = vmul.f32 %v677, %v697
    %v818 = vmul.f32 %v678, %v693
    %v819 = vmul.f32 %v679, %v697
    %v820 = vmul.f32 %v680, %v693
    %v821 = vmul.f32 %v681, %v697
    %v822 = vmul.f32 %v682, %v693
    %v823 = vmul.f32 %v683, %v697
    %v824 = vmul.f32 %v684, %v693
    %v825 = vmul.f32 %v685, %v697
    %v826 = vmul.f32 %v686, %v693
    %v827 = vmul.f32 %v687, %v697
    %v828 = vld [vmem:[%s5] sm:$0x3]
    %v830 = vlaneseq
    %v831 = vshrl.u32 %v830, 7
    %v832 = vsub.s32 0, %v831
    %v833 = vrot.slane %v828, %v832
    %v834 = vlaneseq
    %v835 = vshrl.u32 %v834, 7
    %v836 = vsub.s32 1, %v835
    %v837 = vrot.slane %v828, %v836
    %v840 = vadd.f32 %v700, %v833
    %v841 = vadd.f32 %v701, %v837
    %v842 = vadd.f32 %v702, %v833
    %v843 = vadd.f32 %v703, %v837
    %v844 = vadd.f32 %v704, %v833
    %v845 = vadd.f32 %v705, %v837
    %v846 = vadd.f32 %v706, %v833
    %v847 = vadd.f32 %v707, %v837
    %v848 = vadd.f32 %v708, %v833
    %v849 = vadd.f32 %v709, %v837
    %v850 = vadd.f32 %v710, %v833
    %v851 = vadd.f32 %v711, %v837
    %v852 = vadd.f32 %v712, %v833
    %v853 = vadd.f32 %v713, %v837
    %v854 = vadd.f32 %v714, %v833
    %v855 = vadd.f32 %v715, %v837
    %v856 = vadd.f32 %v716, %v833
    %v857 = vadd.f32 %v717, %v837
    %v858 = vadd.f32 %v718, %v833
    %v859 = vadd.f32 %v719, %v837
    %v860 = vadd.f32 %v720, %v833
    %v861 = vadd.f32 %v721, %v837
    %v862 = vadd.f32 %v722, %v833
    %v863 = vadd.f32 %v723, %v837
    %v864 = vadd.f32 %v724, %v833
    %v865 = vadd.f32 %v725, %v837
    %v866 = vadd.f32 %v726, %v833
    %v867 = vadd.f32 %v727, %v837
    %v868 = vadd.f32 %v728, %v833
    %v869 = vadd.f32 %v729, %v837
    %v870 = vadd.f32 %v730, %v833
    %v871 = vadd.f32 %v731, %v837
    %v872 = vadd.f32 %v732, %v833
    %v873 = vadd.f32 %v733, %v837
    %v874 = vadd.f32 %v734, %v833
    %v875 = vadd.f32 %v735, %v837
    %v876 = vadd.f32 %v736, %v833
    %v877 = vadd.f32 %v737, %v837
    %v878 = vadd.f32 %v738, %v833
    %v879 = vadd.f32 %v739, %v837
    %v880 = vadd.f32 %v740, %v833
    %v881 = vadd.f32 %v741, %v837
    %v882 = vadd.f32 %v742, %v833
    %v883 = vadd.f32 %v743, %v837
    %v884 = vadd.f32 %v744, %v833
    %v885 = vadd.f32 %v745, %v837
    %v886 = vadd.f32 %v746, %v833
    %v887 = vadd.f32 %v747, %v837
    %v888 = vadd.f32 %v748, %v833
    %v889 = vadd.f32 %v749, %v837
    %v890 = vadd.f32 %v750, %v833
    %v891 = vadd.f32 %v751, %v837
    %v892 = vadd.f32 %v752, %v833
    %v893 = vadd.f32 %v753, %v837
    %v894 = vadd.f32 %v754, %v833
    %v895 = vadd.f32 %v755, %v837
    %v896 = vadd.f32 %v756, %v833
    %v897 = vadd.f32 %v757, %v837
    %v898 = vadd.f32 %v758, %v833
    %v899 = vadd.f32 %v759, %v837
    %v900 = vadd.f32 %v760, %v833
    %v901 = vadd.f32 %v761, %v837
    %v902 = vadd.f32 %v762, %v833
    %v903 = vadd.f32 %v763, %v837
    %v904 = vadd.f32 %v764, %v833
    %v905 = vadd.f32 %v765, %v837
    %v906 = vadd.f32 %v766, %v833
    %v907 = vadd.f32 %v767, %v837
    %v908 = vadd.f32 %v768, %v833
    %v909 = vadd.f32 %v769, %v837
    %v910 = vadd.f32 %v770, %v833
    %v911 = vadd.f32 %v771, %v837
    %v912 = vadd.f32 %v772, %v833
    %v913 = vadd.f32 %v773, %v837
    %v914 = vadd.f32 %v774, %v833
    %v915 = vadd.f32 %v775, %v837
    %v916 = vadd.f32 %v776, %v833
    %v917 = vadd.f32 %v777, %v837
    %v918 = vadd.f32 %v778, %v833
    %v919 = vadd.f32 %v779, %v837
    %v920 = vadd.f32 %v780, %v833
    %v921 = vadd.f32 %v781, %v837
    %v922 = vadd.f32 %v782, %v833
    %v923 = vadd.f32 %v783, %v837
    %v924 = vadd.f32 %v784, %v833
    %v925 = vadd.f32 %v785, %v837
    %v926 = vadd.f32 %v786, %v833
    %v927 = vadd.f32 %v787, %v837
    %v928 = vadd.f32 %v788, %v833
    %v929 = vadd.f32 %v789, %v837
    %v930 = vadd.f32 %v790, %v833
    %v931 = vadd.f32 %v791, %v837
    %v932 = vadd.f32 %v792, %v833
    %v933 = vadd.f32 %v793, %v837
    %v934 = vadd.f32 %v794, %v833
    %v935 = vadd.f32 %v795, %v837
    %v936 = vadd.f32 %v796, %v833
    %v937 = vadd.f32 %v797, %v837
    %v938 = vadd.f32 %v798, %v833
    %v939 = vadd.f32 %v799, %v837
    %v940 = vadd.f32 %v800, %v833
    %v941 = vadd.f32 %v801, %v837
    %v942 = vadd.f32 %v802, %v833
    %v943 = vadd.f32 %v803, %v837
    %v944 = vadd.f32 %v804, %v833
    %v945 = vadd.f32 %v805, %v837
    %v946 = vadd.f32 %v806, %v833
    %v947 = vadd.f32 %v807, %v837
    %v948 = vadd.f32 %v808, %v833
    %v949 = vadd.f32 %v809, %v837
    %v950 = vadd.f32 %v810, %v833
    %v951 = vadd.f32 %v811, %v837
    %v952 = vadd.f32 %v812, %v833
    %v953 = vadd.f32 %v813, %v837
    %v954 = vadd.f32 %v814, %v833
    %v955 = vadd.f32 %v815, %v837
    %v956 = vadd.f32 %v816, %v833
    %v957 = vadd.f32 %v817, %v837
    %v958 = vadd.f32 %v818, %v833
    %v959 = vadd.f32 %v819, %v837
    %v960 = vadd.f32 %v820, %v833
    %v961 = vadd.f32 %v821, %v837
    %v962 = vadd.f32 %v822, %v833
    %v963 = vadd.f32 %v823, %v837
    %v964 = vadd.f32 %v824, %v833
    %v965 = vadd.f32 %v825, %v837
    %v966 = vadd.f32 %v826, %v833
    %v967 = vadd.f32 %v827, %v837
    %v968 = vadd.f32 %v368, %v840
    %v969 = vadd.f32 %v369, %v841
    %v970 = vadd.f32 %v370, %v842
    %v971 = vadd.f32 %v371, %v843
    %v972 = vadd.f32 %v372, %v844
    %v973 = vadd.f32 %v373, %v845
    %v974 = vadd.f32 %v374, %v846
    %v975 = vadd.f32 %v375, %v847
    %v976 = vadd.f32 %v376, %v848
    %v977 = vadd.f32 %v377, %v849
    %v978 = vadd.f32 %v378, %v850
    %v979 = vadd.f32 %v379, %v851
    %v980 = vadd.f32 %v380, %v852
    %v981 = vadd.f32 %v381, %v853
    %v982 = vadd.f32 %v382, %v854
    %v983 = vadd.f32 %v383, %v855
    %v984 = vadd.f32 %v384, %v856
    %v985 = vadd.f32 %v385, %v857
    %v986 = vadd.f32 %v386, %v858
    %v987 = vadd.f32 %v387, %v859
    %v988 = vadd.f32 %v388, %v860
    %v989 = vadd.f32 %v389, %v861
    %v990 = vadd.f32 %v390, %v862
    %v991 = vadd.f32 %v391, %v863
    %v992 = vadd.f32 %v392, %v864
    %v993 = vadd.f32 %v393, %v865
    %v994 = vadd.f32 %v394, %v866
    %v995 = vadd.f32 %v395, %v867
    %v996 = vadd.f32 %v396, %v868
    %v997 = vadd.f32 %v397, %v869
    %v998 = vadd.f32 %v398, %v870
    %v999 = vadd.f32 %v399, %v871
    %v1000 = vadd.f32 %v400, %v872
    %v1001 = vadd.f32 %v401, %v873
    %v1002 = vadd.f32 %v402, %v874
    %v1003 = vadd.f32 %v403, %v875
    %v1004 = vadd.f32 %v404, %v876
    %v1005 = vadd.f32 %v405, %v877
    %v1006 = vadd.f32 %v406, %v878
    %v1007 = vadd.f32 %v407, %v879
    %v1008 = vadd.f32 %v408, %v880
    %v1009 = vadd.f32 %v409, %v881
    %v1010 = vadd.f32 %v410, %v882
    %v1011 = vadd.f32 %v411, %v883
    %v1012 = vadd.f32 %v412, %v884
    %v1013 = vadd.f32 %v413, %v885
    %v1014 = vadd.f32 %v414, %v886
    %v1015 = vadd.f32 %v415, %v887
    %v1016 = vadd.f32 %v416, %v888
    %v1017 = vadd.f32 %v417, %v889
    %v1018 = vadd.f32 %v418, %v890
    %v1019 = vadd.f32 %v419, %v891
    %v1020 = vadd.f32 %v420, %v892
    %v1021 = vadd.f32 %v421, %v893
    %v1022 = vadd.f32 %v422, %v894
    %v1023 = vadd.f32 %v423, %v895
    %v1024 = vadd.f32 %v424, %v896
    %v1025 = vadd.f32 %v425, %v897
    %v1026 = vadd.f32 %v426, %v898
    %v1027 = vadd.f32 %v427, %v899
    %v1028 = vadd.f32 %v428, %v900
    %v1029 = vadd.f32 %v429, %v901
    %v1030 = vadd.f32 %v430, %v902
    %v1031 = vadd.f32 %v431, %v903
    %v1032 = vadd.f32 %v432, %v904
    %v1033 = vadd.f32 %v433, %v905
    %v1034 = vadd.f32 %v434, %v906
    %v1035 = vadd.f32 %v435, %v907
    %v1036 = vadd.f32 %v436, %v908
    %v1037 = vadd.f32 %v437, %v909
    %v1038 = vadd.f32 %v438, %v910
    %v1039 = vadd.f32 %v439, %v911
    %v1040 = vadd.f32 %v440, %v912
    %v1041 = vadd.f32 %v441, %v913
    %v1042 = vadd.f32 %v442, %v914
    %v1043 = vadd.f32 %v443, %v915
    %v1044 = vadd.f32 %v444, %v916
    %v1045 = vadd.f32 %v445, %v917
    %v1046 = vadd.f32 %v446, %v918
    %v1047 = vadd.f32 %v447, %v919
    %v1048 = vadd.f32 %v448, %v920
    %v1049 = vadd.f32 %v449, %v921
    %v1050 = vadd.f32 %v450, %v922
    %v1051 = vadd.f32 %v451, %v923
    %v1052 = vadd.f32 %v452, %v924
    %v1053 = vadd.f32 %v453, %v925
    %v1054 = vadd.f32 %v454, %v926
    %v1055 = vadd.f32 %v455, %v927
    %v1056 = vadd.f32 %v456, %v928
    %v1057 = vadd.f32 %v457, %v929
    %v1058 = vadd.f32 %v458, %v930
    %v1059 = vadd.f32 %v459, %v931
    %v1060 = vadd.f32 %v460, %v932
    %v1061 = vadd.f32 %v461, %v933
    %v1062 = vadd.f32 %v462, %v934
    %v1063 = vadd.f32 %v463, %v935
    %v1064 = vadd.f32 %v464, %v936
    %v1065 = vadd.f32 %v465, %v937
    %v1066 = vadd.f32 %v466, %v938
    %v1067 = vadd.f32 %v467, %v939
    %v1068 = vadd.f32 %v468, %v940
    %v1069 = vadd.f32 %v469, %v941
    %v1070 = vadd.f32 %v470, %v942
    %v1071 = vadd.f32 %v471, %v943
    %v1072 = vadd.f32 %v472, %v944
    %v1073 = vadd.f32 %v473, %v945
    %v1074 = vadd.f32 %v474, %v946
    %v1075 = vadd.f32 %v475, %v947
    %v1076 = vadd.f32 %v476, %v948
    %v1077 = vadd.f32 %v477, %v949
    %v1078 = vadd.f32 %v478, %v950
    %v1079 = vadd.f32 %v479, %v951
    %v1080 = vadd.f32 %v480, %v952
    %v1081 = vadd.f32 %v481, %v953
    %v1082 = vadd.f32 %v482, %v954
    %v1083 = vadd.f32 %v483, %v955
    %v1084 = vadd.f32 %v484, %v956
    %v1085 = vadd.f32 %v485, %v957
    %v1086 = vadd.f32 %v486, %v958
    %v1087 = vadd.f32 %v487, %v959
    %v1088 = vadd.f32 %v488, %v960
    %v1089 = vadd.f32 %v489, %v961
    %v1090 = vadd.f32 %v490, %v962
    %v1091 = vadd.f32 %v491, %v963
    %v1092 = vadd.f32 %v492, %v964
    %v1093 = vadd.f32 %v493, %v965
    %v1094 = vadd.f32 %v494, %v966
    %v1095 = vadd.f32 %v495, %v967
    %v1096 = vmax.f32 %v968, 0.0
    %v1097 = vmax.f32 %v969, 0.0
    %v1098 = vmax.f32 %v970, 0.0
    %v1099 = vmax.f32 %v971, 0.0
    %v1100 = vmax.f32 %v972, 0.0
    %v1101 = vmax.f32 %v973, 0.0
    %v1102 = vmax.f32 %v974, 0.0
    %v1103 = vmax.f32 %v975, 0.0
    %v1104 = vmax.f32 %v976, 0.0
    %v1105 = vmax.f32 %v977, 0.0
    %v1106 = vmax.f32 %v978, 0.0
    %v1107 = vmax.f32 %v979, 0.0
    %v1108 = vmax.f32 %v980, 0.0
    %v1109 = vmax.f32 %v981, 0.0
    %v1110 = vmax.f32 %v982, 0.0
    %v1111 = vmax.f32 %v983, 0.0
    %v1112 = vmax.f32 %v984, 0.0
    %v1113 = vmax.f32 %v985, 0.0
    %v1114 = vmax.f32 %v986, 0.0
    %v1115 = vmax.f32 %v987, 0.0
    %v1116 = vmax.f32 %v988, 0.0
    %v1117 = vmax.f32 %v989, 0.0
    %v1118 = vmax.f32 %v990, 0.0
    %v1119 = vmax.f32 %v991, 0.0
    %v1120 = vmax.f32 %v992, 0.0
    %v1121 = vmax.f32 %v993, 0.0
    %v1122 = vmax.f32 %v994, 0.0
    %v1123 = vmax.f32 %v995, 0.0
    %v1124 = vmax.f32 %v996, 0.0
    %v1125 = vmax.f32 %v997, 0.0
    %v1126 = vmax.f32 %v998, 0.0
    %v1127 = vmax.f32 %v999, 0.0
    %v1128 = vmax.f32 %v1000, 0.0
    %v1129 = vmax.f32 %v1001, 0.0
    %v1130 = vmax.f32 %v1002, 0.0
    %v1131 = vmax.f32 %v1003, 0.0
    %v1132 = vmax.f32 %v1004, 0.0
    %v1133 = vmax.f32 %v1005, 0.0
    %v1134 = vmax.f32 %v1006, 0.0
    %v1135 = vmax.f32 %v1007, 0.0
    %v1136 = vmax.f32 %v1008, 0.0
    %v1137 = vmax.f32 %v1009, 0.0
    %v1138 = vmax.f32 %v1010, 0.0
    %v1139 = vmax.f32 %v1011, 0.0
    %v1140 = vmax.f32 %v1012, 0.0
    %v1141 = vmax.f32 %v1013, 0.0
    %v1142 = vmax.f32 %v1014, 0.0
    %v1143 = vmax.f32 %v1015, 0.0
    %v1144 = vmax.f32 %v1016, 0.0
    %v1145 = vmax.f32 %v1017, 0.0
    %v1146 = vmax.f32 %v1018, 0.0
    %v1147 = vmax.f32 %v1019, 0.0
    %v1148 = vmax.f32 %v1020, 0.0
    %v1149 = vmax.f32 %v1021, 0.0
    %v1150 = vmax.f32 %v1022, 0.0
    %v1151 = vmax.f32 %v1023, 0.0
    %v1152 = vmax.f32 %v1024, 0.0
    %v1153 = vmax.f32 %v1025, 0.0
    %v1154 = vmax.f32 %v1026, 0.0
    %v1155 = vmax.f32 %v1027, 0.0
    %v1156 = vmax.f32 %v1028, 0.0
    %v1157 = vmax.f32 %v1029, 0.0
    %v1158 = vmax.f32 %v1030, 0.0
    %v1159 = vmax.f32 %v1031, 0.0
    %v1160 = vmax.f32 %v1032, 0.0
    %v1161 = vmax.f32 %v1033, 0.0
    %v1162 = vmax.f32 %v1034, 0.0
    %v1163 = vmax.f32 %v1035, 0.0
    %v1164 = vmax.f32 %v1036, 0.0
    %v1165 = vmax.f32 %v1037, 0.0
    %v1166 = vmax.f32 %v1038, 0.0
    %v1167 = vmax.f32 %v1039, 0.0
    %v1168 = vmax.f32 %v1040, 0.0
    %v1169 = vmax.f32 %v1041, 0.0
    %v1170 = vmax.f32 %v1042, 0.0
    %v1171 = vmax.f32 %v1043, 0.0
    %v1172 = vmax.f32 %v1044, 0.0
    %v1173 = vmax.f32 %v1045, 0.0
    %v1174 = vmax.f32 %v1046, 0.0
    %v1175 = vmax.f32 %v1047, 0.0
    %v1176 = vmax.f32 %v1048, 0.0
    %v1177 = vmax.f32 %v1049, 0.0
    %v1178 = vmax.f32 %v1050, 0.0
    %v1179 = vmax.f32 %v1051, 0.0
    %v1180 = vmax.f32 %v1052, 0.0
    %v1181 = vmax.f32 %v1053, 0.0
    %v1182 = vmax.f32 %v1054, 0.0
    %v1183 = vmax.f32 %v1055, 0.0
    %v1184 = vmax.f32 %v1056, 0.0
    %v1185 = vmax.f32 %v1057, 0.0
    %v1186 = vmax.f32 %v1058, 0.0
    %v1187 = vmax.f32 %v1059, 0.0
    %v1188 = vmax.f32 %v1060, 0.0
    %v1189 = vmax.f32 %v1061, 0.0
    %v1190 = vmax.f32 %v1062, 0.0
    %v1191 = vmax.f32 %v1063, 0.0
    %v1192 = vmax.f32 %v1064, 0.0
    %v1193 = vmax.f32 %v1065, 0.0
    %v1194 = vmax.f32 %v1066, 0.0
    %v1195 = vmax.f32 %v1067, 0.0
    %v1196 = vmax.f32 %v1068, 0.0
    %v1197 = vmax.f32 %v1069, 0.0
    %v1198 = vmax.f32 %v1070, 0.0
    %v1199 = vmax.f32 %v1071, 0.0
    %v1200 = vmax.f32 %v1072, 0.0
    %v1201 = vmax.f32 %v1073, 0.0
    %v1202 = vmax.f32 %v1074, 0.0
    %v1203 = vmax.f32 %v1075, 0.0
    %v1204 = vmax.f32 %v1076, 0.0
    %v1205 = vmax.f32 %v1077, 0.0
    %v1206 = vmax.f32 %v1078, 0.0
    %v1207 = vmax.f32 %v1079, 0.0
    %v1208 = vmax.f32 %v1080, 0.0
    %v1209 = vmax.f32 %v1081, 0.0
    %v1210 = vmax.f32 %v1082, 0.0
    %v1211 = vmax.f32 %v1083, 0.0
    %v1212 = vmax.f32 %v1084, 0.0
    %v1213 = vmax.f32 %v1085, 0.0
    %v1214 = vmax.f32 %v1086, 0.0
    %v1215 = vmax.f32 %v1087, 0.0
    %v1216 = vmax.f32 %v1088, 0.0
    %v1217 = vmax.f32 %v1089, 0.0
    %v1218 = vmax.f32 %v1090, 0.0
    %v1219 = vmax.f32 %v1091, 0.0
    %v1220 = vmax.f32 %v1092, 0.0
    %v1221 = vmax.f32 %v1093, 0.0
    %v1222 = vmax.f32 %v1094, 0.0
    %v1223 = vmax.f32 %v1095, 0.0
    %1224 = vst [vmem:[#allocation2] sm:$0xff] %v1096
    %1225 = vst [vmem:[#allocation2 + $0x8] sm:$0xff] %v1097
    %1226 = vst [vmem:[#allocation2 + $0x10] sm:$0xff] %v1098
    %1227 = vst [vmem:[#allocation2 + $0x18] sm:$0xff] %v1099
    %1228 = vst [vmem:[#allocation2 + $0x20] sm:$0xff] %v1100
    %1229 = vst [vmem:[#allocation2 + $0x28] sm:$0xff] %v1101
    %1230 = vst [vmem:[#allocation2 + $0x30] sm:$0xff] %v1102
    %1231 = vst [vmem:[#allocation2 + $0x38] sm:$0xff] %v1103
    %1232 = vst [vmem:[#allocation2 + $0x40] sm:$0xff] %v1104
    %1233 = vst [vmem:[#allocation2 + $0x48] sm:$0xff] %v1105
    %1234 = vst [vmem:[#allocation2 + $0x50] sm:$0xff] %v1106
    %1235 = vst [vmem:[#allocation2 + $0x58] sm:$0xff] %v1107
    %1236 = vst [vmem:[#allocation2 + $0x60] sm:$0xff] %v1108
    %1237 = vst [vmem:[#allocation2 + $0x68] sm:$0xff] %v1109
    %1238 = vst [vmem:[#allocation2 + $0x70] sm:$0xff] %v1110
    %1239 = vst [vmem:[#allocation2 + $0x78] sm:$0xff] %v1111
    %1240 = vst [vmem:[#allocation2 + $0x80] sm:$0xff] %v1112
    %1241 = vst [vmem:[#allocation2 + $0x88] sm:$0xff] %v1113
    %1242 = vst [vmem:[#allocation2 + $0x90] sm:$0xff] %v1114
    %1243 = vst [vmem:[#allocation2 + $0x98] sm:$0xff] %v1115
    %1244 = vst [vmem:[#allocation2 + $0xa0] sm:$0xff] %v1116
    %1245 = vst [vmem:[#allocation2 + $0xa8] sm:$0xff] %v1117
    %1246 = vst [vmem:[#allocation2 + $0xb0] sm:$0xff] %v1118
    %1247 = vst [vmem:[#allocation2 + $0xb8] sm:$0xff] %v1119
    %1248 = vst [vmem:[#allocation2 + $0xc0] sm:$0xff] %v1120
    %1249 = vst [vmem:[#allocation2 + $0xc8] sm:$0xff] %v1121
    %1250 = vst [vmem:[#allocation2 + $0xd0] sm:$0xff] %v1122
    %1251 = vst [vmem:[#allocation2 + $0xd8] sm:$0xff] %v1123
    %1252 = vst [vmem:[#allocation2 + $0xe0] sm:$0xff] %v1124
    %1253 = vst [vmem:[#allocation2 + $0xe8] sm:$0xff] %v1125
    %1254 = vst [vmem:[#allocation2 + $0xf0] sm:$0xff] %v1126
    %1255 = vst [vmem:[#allocation2 + $0xf8] sm:$0xff] %v1127
    %1256 = vst [vmem:[#allocation2 + $0x100] sm:$0xff] %v1128
    %1257 = vst [vmem:[#allocation2 + $0x108] sm:$0xff] %v1129
    %1258 = vst [vmem:[#allocation2 + $0x110] sm:$0xff] %v1130
    %1259 = vst [vmem:[#allocation2 + $0x118] sm:$0xff] %v1131
    %1260 = vst [vmem:[#allocation2 + $0x120] sm:$0xff] %v1132
    %1261 = vst [vmem:[#allocation2 + $0x128] sm:$0xff] %v1133
    %1262 = vst [vmem:[#allocation2 + $0x130] sm:$0xff] %v1134
    %1263 = vst [vmem:[#allocation2 + $0x138] sm:$0xff] %v1135
    %1264 = vst [vmem:[#allocation2 + $0x140] sm:$0xff] %v1136
    %1265 = vst [vmem:[#allocation2 + $0x148] sm:$0xff] %v1137
    %1266 = vst [vmem:[#allocation2 + $0x150] sm:$0xff] %v1138
    %1267 = vst [vmem:[#allocation2 + $0x158] sm:$0xff] %v1139
    %1268 = vst [vmem:[#allocation2 + $0x160] sm:$0xff] %v1140
    %1269 = vst [vmem:[#allocation2 + $0x168] sm:$0xff] %v1141
    %1270 = vst [vmem:[#allocation2 + $0x170] sm:$0xff] %v1142
    %1271 = vst [vmem:[#allocation2 + $0x178] sm:$0xff] %v1143
    %1272 = vst [vmem:[#allocation2 + $0x180] sm:$0xff] %v1144
    %1273 = vst [vmem:[#allocation2 + $0x188] sm:$0xff] %v1145
    %1274 = vst [vmem:[#allocation2 + $0x190] sm:$0xff] %v1146
    %1275 = vst [vmem:[#allocation2 + $0x198] sm:$0xff] %v1147
    %1276 = vst [vmem:[#allocation2 + $0x1a0] sm:$0xff] %v1148
    %1277 = vst [vmem:[#allocation2 + $0x1a8] sm:$0xff] %v1149
    %1278 = vst [vmem:[#allocation2 + $0x1b0] sm:$0xff] %v1150
    %1279 = vst [vmem:[#allocation2 + $0x1b8] sm:$0xff] %v1151
    %1280 = vst [vmem:[#allocation2 + $0x1c0] sm:$0xff] %v1152
    %1281 = vst [vmem:[#allocation2 + $0x1c8] sm:$0xff] %v1153
    %1282 = vst [vmem:[#allocation2 + $0x1d0] sm:$0xff] %v1154
    %1283 = vst [vmem:[#allocation2 + $0x1d8] sm:$0xff] %v1155
    %1284 = vst [vmem:[#allocation2 + $0x1e0] sm:$0xff] %v1156
    %1285 = vst [vmem:[#allocation2 + $0x1e8] sm:$0xff] %v1157
    %1286 = vst [vmem:[#allocation2 + $0x1f0] sm:$0xff] %v1158
    %1287 = vst [vmem:[#allocation2 + $0x1f8] sm:$0xff] %v1159
    %1288 = vst [vmem:[#allocation2 + $0x200] sm:$0xff] %v1160
    %1289 = vst [vmem:[#allocation2 + $0x208] sm:$0xff] %v1161
    %1290 = vst [vmem:[#allocation2 + $0x210] sm:$0xff] %v1162
    %1291 = vst [vmem:[#allocation2 + $0x218] sm:$0xff] %v1163
    %1292 = vst [vmem:[#allocation2 + $0x220] sm:$0xff] %v1164
    %1293 = vst [vmem:[#allocation2 + $0x228] sm:$0xff] %v1165
    %1294 = vst [vmem:[#allocation2 + $0x230] sm:$0xff] %v1166
    %1295 = vst [vmem:[#allocation2 + $0x238] sm:$0xff] %v1167
    %1296 = vst [vmem:[#allocation2 + $0x240] sm:$0xff] %v1168
    %1297 = vst [vmem:[#allocation2 + $0x248] sm:$0xff] %v1169
    %1298 = vst [vmem:[#allocation2 + $0x250] sm:$0xff] %v1170
    %1299 = vst [vmem:[#allocation2 + $0x258] sm:$0xff] %v1171
    %1300 = vst [vmem:[#allocation2 + $0x260] sm:$0xff] %v1172
    %1301 = vst [vmem:[#allocation2 + $0x268] sm:$0xff] %v1173
    %1302 = vst [vmem:[#allocation2 + $0x270] sm:$0xff] %v1174
    %1303 = vst [vmem:[#allocation2 + $0x278] sm:$0xff] %v1175
    %1304 = vst [vmem:[#allocation2 + $0x280] sm:$0xff] %v1176
    %1305 = vst [vmem:[#allocation2 + $0x288] sm:$0xff] %v1177
    %1306 = vst [vmem:[#allocation2 + $0x290] sm:$0xff] %v1178
    %1307 = vst [vmem:[#allocation2 + $0x298] sm:$0xff] %v1179
    %1308 = vst [vmem:[#allocation2 + $0x2a0] sm:$0xff] %v1180
    %1309 = vst [vmem:[#allocation2 + $0x2a8] sm:$0xff] %v1181
    %1310 = vst [vmem:[#allocation2 + $0x2b0] sm:$0xff] %v1182
    %1311 = vst [vmem:[#allocation2 + $0x2b8] sm:$0xff] %v1183
    %1312 = vst [vmem:[#allocation2 + $0x2c0] sm:$0xff] %v1184
    %1313 = vst [vmem:[#allocation2 + $0x2c8] sm:$0xff] %v1185
    %1314 = vst [vmem:[#allocation2 + $0x2d0] sm:$0xff] %v1186
    %1315 = vst [vmem:[#allocation2 + $0x2d8] sm:$0xff] %v1187
    %1316 = vst [vmem:[#allocation2 + $0x2e0] sm:$0xff] %v1188
    %1317 = vst [vmem:[#allocation2 + $0x2e8] sm:$0xff] %v1189
    %1318 = vst [vmem:[#allocation2 + $0x2f0] sm:$0xff] %v1190
    %1319 = vst [vmem:[#allocation2 + $0x2f8] sm:$0xff] %v1191
    %1320 = vst [vmem:[#allocation2 + $0x300] sm:$0xff] %v1192
    %1321 = vst [vmem:[#allocation2 + $0x308] sm:$0xff] %v1193
    %1322 = vst [vmem:[#allocation2 + $0x310] sm:$0xff] %v1194
    %1323 = vst [vmem:[#allocation2 + $0x318] sm:$0xff] %v1195
    %1324 = vst [vmem:[#allocation2 + $0x320] sm:$0xff] %v1196
    %1325 = vst [vmem:[#allocation2 + $0x328] sm:$0xff] %v1197
    %1326 = vst [vmem:[#allocation2 + $0x330] sm:$0xff] %v1198
    %1327 = vst [vmem:[#allocation2 + $0x338] sm:$0xff] %v1199
    %1328 = vst [vmem:[#allocation2 + $0x340] sm:$0xff] %v1200
    %1329 = vst [vmem:[#allocation2 + $0x348] sm:$0xff] %v1201
    %1330 = vst [vmem:[#allocation2 + $0x350] sm:$0xff] %v1202
    %1331 = vst [vmem:[#allocation2 + $0x358] sm:$0xff] %v1203
    %1332 = vst [vmem:[#allocation2 + $0x360] sm:$0xff] %v1204
    %1333 = vst [vmem:[#allocation2 + $0x368] sm:$0xff] %v1205
    %1334 = vst [vmem:[#allocation2 + $0x370] sm:$0xff] %v1206
    %1335 = vst [vmem:[#allocation2 + $0x378] sm:$0xff] %v1207
    %1336 = vst [vmem:[#allocation2 + $0x380] sm:$0xff] %v1208
    %1337 = vst [vmem:[#allocation2 + $0x388] sm:$0xff] %v1209
    %1338 = vst [vmem:[#allocation2 + $0x390] sm:$0xff] %v1210
    %1339 = vst [vmem:[#allocation2 + $0x398] sm:$0xff] %v1211
    %1340 = vst [vmem:[#allocation2 + $0x3a0] sm:$0xff] %v1212
    %1341 = vst [vmem:[#allocation2 + $0x3a8] sm:$0xff] %v1213
    %1342 = vst [vmem:[#allocation2 + $0x3b0] sm:$0xff] %v1214
    %1343 = vst [vmem:[#allocation2 + $0x3b8] sm:$0xff] %v1215
    %1344 = vst [vmem:[#allocation2 + $0x3c0] sm:$0xff] %v1216
    %1345 = vst [vmem:[#allocation2 + $0x3c8] sm:$0xff] %v1217
    %1346 = vst [vmem:[#allocation2 + $0x3d0] sm:$0xff] %v1218
    %1347 = vst [vmem:[#allocation2 + $0x3d8] sm:$0xff] %v1219
    %1348 = vst [vmem:[#allocation2 + $0x3e0] sm:$0xff] %v1220
    %1349 = vst [vmem:[#allocation2 + $0x3e8] sm:$0xff] %v1221
    %1350 = vst [vmem:[#allocation2 + $0x3f0] sm:$0xff] %v1222
    %1351 = vst [vmem:[#allocation2 + $0x3f8] sm:$0xff] %v1223
    // Predicated region
    $region26: #{bottleneck_forward.9} parent=1 // pred_check
      _
    $region27: #{bottleneck_forward.9} parent=1 // pred_check_branch
      %1353 = sbr.rel (0) target = $region29
    $region28: #{bottleneck_forward.9} parent=1 // pred_region
      %s1355 = ssub.s32 16384, 16384
      %1356 = vsyncadd [#allocation3], %s1355
      %s1357 = sshll.u32 [#allocation2], 4
      %s1358 = int_to_ptr.vmem [resolvable:$true] %s1357
      %1363 = dma.vmem_to_hbm [thread:$0]  %s1358, 16384, %s6, [#allocation3], 256, 256, 16
    $region29: #{bottleneck_forward.9} parent=1 // pred_fallthru
      _
    // Predicated region
    $region30: #{bottleneck_forward.9} parent=1 // pred_check
      _
    $region31: #{bottleneck_forward.9} parent=1 // pred_check_branch
      %1365 = sbr.rel (0) target = $region33
    $region32: #{bottleneck_forward.9} parent=1 // pred_region
      %1366 = dma.done [#allocation3], 16384
    $region33: #{bottleneck_forward.9} parent=1 // pred_fallthru
      _
    %1367 = vsyncpa [#allocation3], 1

// kernel: bottleneck_forward.6
$region0: #{bottleneck_forward.6}
  #allocation0 [shape = 'u32[]', space=smem, size = 0x4, offset = 0x4, fixed_abs, tag = 'smem constant byte address 0x4 - core index']
  #allocation1 [shape = 'u32[144,128]{1,0:T(1,128)}', space=vmem, size = 0x12000, scoped, tag = 'internal scratch']
  %s0 = inlined_call_operand.vmem [shape: bf16[1088,128], index: 0, kind: input, shape index: {}, may-alias: {0,1}]
  %s1 = inlined_call_operand.vmem [shape: bf16[1088,128], index: 1, kind: input, shape index: {}, may-alias: {0,1}]
  %s2 = inlined_call_operand.vmem [shape: bf16[1152,128], index: 2, kind: input, shape index: {}]
  %s3 = inlined_call_operand.vmem [shape: f32[1024,1], index: 3, kind: input, shape index: {}]
  %s4 = inlined_call_operand.vmem [shape: bf16[1024,128], index: 4, kind: output, shape index: {0}]
  %s5 = inlined_call_operand.vmem [shape: f32[2,2,128], index: 5, kind: output, shape index: {1}]
  %6 = xla_tuple %s4, %s5
  %s7 = sld [smem:[#allocation0]]
  $region61: #{bottleneck_forward.6} parent=0
    _
  %s9 = ssub.s32 1, %s7
  %s10 = scalar_select 0, %s9, %s7
  loop: start=0, step=1, limit=6
  $region2: #{bottleneck_forward.6} parent=0 // loop_pre_header
    _
  $region3: #{bottleneck_forward.6} parent=0 // loop_header
    %s12 = sphi 0, %s16
    %p13 = scmp.ge.s32.totalorder %s12, 6
    %s19 = sphi 0, %s38
    %s20 = sphi 0, %s34
    %s21 = sphi 0, %s30
    %s22 = sphi 0, %s19
    %s23 = sphi 0, %s20
    %s24 = sphi 0, %s21
    %s25 = sphi 0, %s22
    %s26 = sphi 0, %s23
    %s27 = sphi 0, %s24
    %s45 = sphi 0, %s47
    %s48 = sphi 0, %s45
    %s49 = sphi 0, %s48
    %s65 = sphi 0, %s49
    %s79 = sphi 0, %s81
    %s82 = sphi 0, %s79
    %s83 = sphi 0, %s82
    %s99 = sphi 0, %s83
    %s105 = sphi 0, %s107
    %s108 = sphi 0, %s105
    %s109 = sphi 0, %s108
    %s125 = sphi 0, %s109
    %s135 = sphi 0, %s137
    %s138 = sphi 0, %s135
    %s139 = sphi 0, %s138
    %s155 = sphi 0, %s139
    %s167 = sphi 0, %s169
    %s170 = sphi 0, %s167
    %s171 = sphi 0, %s170
    %s187 = sphi 0, %s171
    %s195 = sphi 0, %s197
    %s198 = sphi 0, %s195
    %s199 = sphi 0, %s198
    %s215 = sphi 0, %s199
  $region4: #{bottleneck_forward.6} parent=0 // loop_header_branch
    %15 = sbr.rel (%p13) target = $region8
  $region5: #{bottleneck_forward.6} parent=0 // loop_body
    %s17 = ssub.s32 %s12, 1
    %s18 = ssub.s32 %s12, 2
    %s28 = sadd.s32 1, %s21
    %p29 = scmp.ge.s32.totalorder %s28, 2
    %s30 = scalar_select %p29, 0, %s28
    %s31 = sadd.s32 1, %s20
    %s32 = scalar_select %p29, %s31, %s20
    %p33 = scmp.ge.s32.totalorder %s32, 1
    %s34 = scalar_select %p33, 0, %s32
    %s35 = sadd.s32 1, %s19
    %s36 = scalar_select %p33, %s35, %s19
    %p37 = scmp.ge.s32.totalorder %s36, 2
    %s38 = scalar_select %p37, 0, %s36
    %s39 = smul.u32 %s19, 2
    %s40 = sadd.s32 %s39, %s21
    %s41 = smul.u32 %s38, 2
    %s42 = sadd.s32 %s41, %s30
    %s43 = ssub.s32 %s40, %s42
    %p44 = scmp.eq.s32.totalorder %s43, 0
    %s46 = sadd.s32 %s45, 1
    %s47 = scalar_select %p44, %s45, %s46
    %p50 = pneg %p44
    %p51 = scmp.eq.s32.totalorder %s12, 3
    %p52 = por %p50, %p51
    %p53 = scmp.ne.s32.totalorder %s45, %s48
    %p54 = scmp.eq.s32.totalorder %s12, 0
    %p55 = por %p53, %p54
    %p56 = scmp.ne.s32.totalorder %s45, %s48
    %p57 = scmp.eq.s32.totalorder %s17, 3
    %p58 = por %p56, %p57
    %p59 = scmp.ne.s32.totalorder %s48, %s49
    %p60 = scmp.eq.s32.totalorder %s17, 0
    %p61 = por %p59, %p60
    %p62 = scmp.ne.s32.totalorder %s48, %s49
    %p63 = scmp.eq.s32.totalorder %s18, 3
    %p64 = por %p62, %p63
    %p66 = scmp.ne.s32.totalorder %s49, %s65
    %p67 = scmp.eq.s32.totalorder %s18, 0
    %p68 = por %p66, %p67
    %s69 = smul.u32 %s19, 2
    %s70 = sadd.s32 %s69, %s21
    %s71 = sadd.s32 %s70, 1
    %s72 = smul.u32 %s71, 4
    %s73 = smul.u32 %s38, 2
    %s74 = sadd.s32 %s73, %s30
    %s75 = sadd.s32 %s74, 1
    %s76 = smul.u32 %s75, 4
    %s77 = ssub.s32 %s72, %s76
    %p78 = scmp.eq.s32.totalorder %s77, 0
    %s80 = sadd.s32 %s79, 1
    %s81 = scalar_select %p78, %s79, %s80
    %p84 = pneg %p78
    %p85 = scmp.eq.s32.totalorder %s12, 3
    %p86 = por %p84, %p85
    %p87 = scmp.ne.s32.totalorder %s79, %s82
    %p88 = scmp.eq.s32.totalorder %s12, 0
    %p89 = por %p87, %p88
    %p90 = scmp.ne.s32.totalorder %s79, %s82
    %p91 = scmp.eq.s32.totalorder %s17, 3
    %p92 = por %p90, %p91
    %p93 = scmp.ne.s32.totalorder %s82, %s83
    %p94 = scmp.eq.s32.totalorder %s17, 0
    %p95 = por %p93, %p94
    %p96 = scmp.ne.s32.totalorder %s82, %s83
    %p97 = scmp.eq.s32.totalorder %s18, 3
    %p98 = por %p96, %p97
    %p100 = scmp.ne.s32.totalorder %s83, %s99
    %p101 = scmp.eq.s32.totalorder %s18, 0
    %p102 = por %p100, %p101
    %s103 = ssub.s32 %s20, %s34
    %p104 = scmp.eq.s32.totalorder %s103, 0
    %s106 = sadd.s32 %s105, 1
    %s107 = scalar_select %p104, %s105, %s106
    %p110 = pneg %p104
    %p111 = scmp.eq.s32.totalorder %s12, 3
    %p112 = por %p110, %p111
    %p113 = scmp.ne.s32.totalorder %s105, %s108
    %p114 = scmp.eq.s32.totalorder %s12, 0
    %p115 = por %p113, %p114
    %p116 = scmp.ne.s32.totalorder %s105, %s108
    %p117 = scmp.eq.s32.totalorder %s17, 3
    %p118 = por %p116, %p117
    %p119 = scmp.ne.s32.totalorder %s108, %s109
    %p120 = scmp.eq.s32.totalorder %s17, 0
    %p121 = por %p119, %p120
    %p122 = scmp.ne.s32.totalorder %s108, %s109
    %p123 = scmp.eq.s32.totalorder %s18, 3
    %p124 = por %p122, %p123
    %p126 = scmp.ne.s32.totalorder %s109, %s125
    %p127 = scmp.eq.s32.totalorder %s18, 0
    %p128 = por %p126, %p127
    %s129 = smul.u32 %s19, 2
    %s130 = sadd.s32 %s129, %s21
    %s131 = smul.u32 %s38, 2
    %s132 = sadd.s32 %s131, %s30
    %s133 = ssub.s32 %s130, %s132
    %p134 = scmp.eq.s32.totalorder %s133, 0
    %s136 = sadd.s32 %s135, 1
    %s137 = scalar_select %p134, %s135, %s136
    %p140 = pneg %p134
    %p141 = scmp.eq.s32.totalorder %s12, 3
    %p142 = por %p140, %p141
    %p143 = scmp.ne.s32.totalorder %s135, %s138
    %p144 = scmp.eq.s32.totalorder %s12, 0
    %p145 = por %p143, %p144
    %p146 = scmp.ne.s32.totalorder %s135, %s138
    %p147 = scmp.eq.s32.totalorder %s17, 3
    %p148 = por %p146, %p147
    %p149 = scmp.ne.s32.totalorder %s138, %s139
    %p150 = scmp.eq.s32.totalorder %s17, 0
    %p151 = por %p149, %p150
    %p152 = scmp.ne.s32.totalorder %s138, %s139
    %p153 = scmp.eq.s32.totalorder %s18, 3
    %p154 = por %p152, %p153
    %p156 = scmp.ne.s32.totalorder %s139, %s155
    %p157 = scmp.eq.s32.totalorder %s18, 0
    %p158 = por %p156, %p157
    %s159 = smul.u32 %s19, 2
    %s160 = sadd.s32 %s159, %s21
    %s161 = smul.u32 %s38, 2
    %s162 = sadd.s32 %s161, %s30
    %s163 = ssub.s32 %s160, %s162
    %s164 = ssub.s32 %s20, %s34
    %s165 = sor.u32 %s163, %s164
    %p166 = scmp.eq.s32.totalorder %s165, 0
    %s168 = sadd.s32 %s167, 1
    %s169 = scalar_select %p166, %s167, %s168
    %p172 = pneg %p166
    %p173 = scmp.eq.s32.totalorder %s12, 3
    %p174 = por %p172, %p173
    %p175 = scmp.ne.s32.totalorder %s167, %s170
    %p176 = scmp.eq.s32.totalorder %s12, 0
    %p177 = por %p175, %p176
    %p178 = scmp.ne.s32.totalorder %s167, %s170
    %p179 = scmp.eq.s32.totalorder %s17, 3
    %p180 = por %p178, %p179
    %p181 = scmp.ne.s32.totalorder %s170, %s171
    %p182 = scmp.eq.s32.totalorder %s17, 0
    %p183 = por %p181, %p182
    %p184 = scmp.ne.s32.totalorder %s170, %s171
    %p185 = scmp.eq.s32.totalorder %s18, 3
    %p186 = por %p184, %p185
    %p188 = scmp.ne.s32.totalorder %s171, %s187
    %p189 = scmp.eq.s32.totalorder %s18, 0
    %p190 = por %p188, %p189
    %s191 = ssub.s32 %s19, %s38
    %s192 = ssub.s32 %s20, %s34
    %s193 = sor.u32 %s191, %s192
    %p194 = scmp.eq.s32.totalorder %s193, 0
    %s196 = sadd.s32 %s195, 1
    %s197 = scalar_select %p194, %s195, %s196
    %p200 = pneg %p194
    %p201 = scmp.eq.s32.totalorder %s12, 3
    %p202 = por %p200, %p201
    %p203 = scmp.ne.s32.totalorder %s195, %s198
    %p204 = scmp.eq.s32.totalorder %s12, 0
    %p205 = por %p203, %p204
    %p206 = scmp.ne.s32.totalorder %s195, %s198
    %p207 = scmp.eq.s32.totalorder %s17, 3
    %p208 = por %p206, %p207
    %p209 = scmp.ne.s32.totalorder %s198, %s199
    %p210 = scmp.eq.s32.totalorder %s17, 0
    %p211 = por %p209, %p210
    %p212 = scmp.ne.s32.totalorder %s198, %s199
    %p213 = scmp.eq.s32.totalorder %s18, 3
    %p214 = por %p212, %p213
    %p216 = scmp.ne.s32.totalorder %s199, %s215
    %p217 = scmp.eq.s32.totalorder %s18, 0
    %p218 = por %p216, %p217
    %p219 = scmp.le.s32.totalorder 1, %s12
    %p220 = scmp.lt.s32.totalorder %s12, 5
    %p221 = pnand %p219, %p220
    %p222 = pneg %p221
    // Predicated region
    $region9: #{bottleneck_forward.6} parent=5 // pred_check
      _
    $region10: #{bottleneck_forward.6} parent=5 // pred_check_branch
      %224 = sbr.rel (%p221) target = $region12
    $region11: #{bottleneck_forward.6} parent=5 // pred_region
      %s225 = ssub.s32 %s12, 1
      // Predicated region
      $region13: #{bottleneck_forward.6} parent=11 // pred_check
        %p226 = pneg %p121
      $region14: #{bottleneck_forward.6} parent=11 // pred_check_branch
        %228 = sbr.rel (%p226) target = $region16
      $region15: #{bottleneck_forward.6} parent=11 // pred_region
        %p229 = scmp.lt.s32.totalorder %s23, 0
        %s230 = scalar_select %p229, %s23, 0
        %s231 = smul.addr %s230, 4
        %s232 = scalar_lea.vmem %s2, %s231
      $region16: #{bottleneck_forward.6} parent=11 // pred_fallthru
        _
    $region12: #{bottleneck_forward.6} parent=5 // pred_fallthru
      _
    %p233 = scmp.lt.s32.totalorder %s12, 4
    // Predicated region
    $region17: #{bottleneck_forward.6} parent=5 // pred_check
      %p234 = pneg %p233
    $region18: #{bottleneck_forward.6} parent=5 // pred_check_branch
      %236 = sbr.rel (%p234) target = $region20
    $region19: #{bottleneck_forward.6} parent=5 // pred_region
      // Predicated region
      $region21: #{bottleneck_forward.6} parent=19 // pred_check
        %p237 = pneg %p55
      $region22: #{bottleneck_forward.6} parent=19 // pred_check_branch
        %239 = sbr.rel (%p237) target = $region24
      $region23: #{bottleneck_forward.6} parent=19 // pred_region
        %s240 = smul.u32 %s19, 2
        %s241 = sadd.s32 %s240, %s21
        %s242 = smul.u32 32, %s241
        %s243 = ssub.s32 136, %s242
        %p244 = scmp.lt.s32.totalorder %s243, 32
        %s245 = scalar_select %p244, %s243, 32
        %s246 = smul.u32 64, %s245
        %p247 = scmp.lt.s32.totalorder %s242, 135
        %s248 = scalar_select %p247, %s242, 135
        %s249 = smul.addr %s248, 4
        %s250 = scalar_lea.vmem %s0, %s249
        %s251 = smul.u32 %s19, 2
        %s252 = sadd.s32 %s251, %s21
        %s253 = smul.u32 32, %s252
        %s254 = ssub.s32 136, %s253
        %p255 = scmp.lt.s32.totalorder %s254, 32
        %s256 = scalar_select %p255, %s254, 32
        %s257 = smul.u32 64, %s256
      $region24: #{bottleneck_forward.6} parent=19 // pred_fallthru
        _
      // Predicated region
      $region25: #{bottleneck_forward.6} parent=19 // pred_check
        %p258 = pneg %p89
      $region26: #{bottleneck_forward.6} parent=19 // pred_check_branch
        %260 = sbr.rel (%p258) target = $region28
      $region27: #{bottleneck_forward.6} parent=19 // pred_region
        %s261 = smul.u32 %s19, 2
        %s262 = sadd.s32 %s261, %s21
        %s263 = sadd.s32 %s262, 1
        %s264 = smul.u32 %s263, 4
        %s265 = smul.u32 8, %s264
        %p266 = scmp.lt.s32.totalorder %s265, 135
        %s267 = scalar_select %p266, %s265, 135
        %s268 = smul.addr %s267, 4
        %s269 = scalar_lea.vmem %s1, %s268
        %s270 = smul.u32 %s19, 2
        %s271 = sadd.s32 %s270, %s21
        %s272 = sadd.s32 %s271, 1
        %s273 = smul.u32 %s272, 4
        %s274 = smul.u32 8, %s273
      $region28: #{bottleneck_forward.6} parent=19 // pred_fallthru
        _
      // Predicated region
      $region29: #{bottleneck_forward.6} parent=19 // pred_check
        %p275 = pneg %p145
      $region30: #{bottleneck_forward.6} parent=19 // pred_check_branch
        %277 = sbr.rel (%p275) target = $region32
      $region31: #{bottleneck_forward.6} parent=19 // pred_region
        %s278 = smul.u32 %s19, 2
        %s279 = sadd.s32 %s278, %s21
        %s280 = smul.u32 32, %s279
        %p281 = scmp.lt.s32.totalorder %s280, 127
        %s282 = scalar_select %p281, %s280, 127
        %s283 = smul.addr %s282, 8
        %s284 = scalar_lea.vmem %s3, %s283
        %s285 = smul.u32 %s19, 2
        %s286 = sadd.s32 %s285, %s21
        %s287 = smul.u32 32, %s286
      $region32: #{bottleneck_forward.6} parent=19 // pred_fallthru
        _
    $region20: #{bottleneck_forward.6} parent=5 // pred_fallthru
      _
    %p288 = scmp.le.s32.totalorder 1, %s12
    %p289 = scmp.lt.s32.totalorder %s12, 5
    %p290 = pnand %p288, %p289
    %p291 = pneg %p290
    // Predicated region
    $region33: #{bottleneck_forward.6} parent=5 // pred_check
      _
    $region34: #{bottleneck_forward.6} parent=5 // pred_check_branch
      %293 = sbr.rel (%p290) target = $region36
    $region35: #{bottleneck_forward.6} parent=5 // pred_region
      %s294 = ssub.s32 %s12, 1
      %s295 = smul.u32 %s22, 2
      %s296 = sadd.s32 %s295, %s24
      %s297 = smul.u32 32, %s296
      %s298 = ssub.s32 136, %s297
      %p299 = scmp.lt.s32.totalorder %s298, 32
      %s300 = scalar_select %p299, %s298, 32
      %s301 = smul.u32 64, %s300
      %p302 = scmp.lt.s32.totalorder %s297, 135
      %s303 = scalar_select %p302, %s297, 135
      %s304 = smul.addr %s303, 4
      %s305 = scalar_lea.vmem %s0, %s304
      %p306 = pneg %p61
      %p307 = pneg %p58
      %s308 = smul.u32 %s22, 2
      %s309 = sadd.s32 %s308, %s24
      %s310 = sadd.s32 %s309, 1
      %s311 = smul.u32 %s310, 4
      %s312 = smul.u32 8, %s311
      %p313 = scmp.lt.s32.totalorder %s312, 135
      %s314 = scalar_select %p313, %s312, 135
      %s315 = smul.addr %s314, 4
      %s316 = scalar_lea.vmem %s1, %s315
      %p317 = pneg %p95
      %p318 = pneg %p92
      %p319 = scmp.lt.s32.totalorder %s23, 0
      %s320 = scalar_select %p319, %s23, 0
      %s321 = smul.addr %s320, 4
      %s322 = scalar_lea.vmem %s2, %s321
      %p323 = pneg %p121
      %p324 = pneg %p118
      %s325 = smul.u32 %s22, 2
      %s326 = sadd.s32 %s325, %s24
      %s327 = smul.u32 32, %s326
      %p328 = scmp.lt.s32.totalorder %s327, 127
      %s329 = scalar_select %p328, %s327, 127
      %s330 = smul.addr %s329, 8
      %s331 = scalar_lea.vmem %s3, %s330
      %p332 = pneg %p151
      %p333 = pneg %p148
      %p334 = pneg %p183
      %p335 = pneg %p180
      %s336 = smul.u32 %s22, 2
      %s337 = sadd.s32 %s336, %s24
      %s338 = smul.u32 32, %s337
      %p339 = scmp.lt.s32.totalorder %s338, 127
      %s340 = scalar_select %p339, %s338, 127
      %p341 = scmp.lt.s32.totalorder %s23, 0
      %s342 = scalar_select %p341, %s23, 0
      %s343 = sadd.s32 %s342, %s340
      %s344 = smul.addr %s343, 4
      %s345 = scalar_lea.vmem %s4, %s344
      %p346 = pneg %p211
      %p347 = pneg %p208
      %p348 = scmp.lt.s32.totalorder %s22, 1
      %s349 = scalar_select %p348, %s22, 1
      %p350 = scmp.lt.s32.totalorder %s23, 0
      %s351 = scalar_select %p350, %s23, 0
      %s352 = sadd.s32 %s351, %s349
      %s353 = smul.addr %s352, 2
      %s354 = scalar_lea.vmem %s5, %s353
      %s355 = smul.u32 %s22, 2
      %s356 = sadd.s32 %s355, %s24
      %s357 = smul.u32 32, %s356
      %s358 = ssub.s32 136, %s357
      %p359 = scmp.lt.s32.totalorder %s358, 32
      %s360 = scalar_select %p359, %s358, 32
      %s361 = smul.u32 64, %s360
      %p362 = scmp.lt.s32.totalorder %s357, 135
      %s363 = scalar_select %p362, %s357, 135
      %s364 = smul.addr %s363, 4
      %s365 = scalar_lea.vmem %s0, %s364
      %s366 = smul.u32 %s22, 2
      %s367 = sadd.s32 %s366, %s24
      %s368 = smul.u32 32, %s367
      %s369 = ssub.s32 136, %s368
      %p370 = scmp.lt.s32.totalorder %s369, 32
      %s371 = scalar_select %p370, %s369, 32
      %s372 = smul.u32 64, %s371
      %s373 = smul.u32 %s22, 2
      %s374 = sadd.s32 %s373, %s24
      %s375 = sadd.s32 %s374, 1
      %s376 = smul.u32 %s375, 4
      %s377 = smul.u32 8, %s376
      %p378 = scmp.lt.s32.totalorder %s377, 135
      %s379 = scalar_select %p378, %s377, 135
      %s380 = smul.addr %s379, 4
      %s381 = scalar_lea.vmem %s1, %s380
      %s382 = smul.u32 %s22, 2
      %s383 = sadd.s32 %s382, %s24
      %s384 = sadd.s32 %s383, 1
      %s385 = smul.u32 %s384, 4
      %s386 = smul.u32 8, %s385
      %p387 = scmp.lt.s32.totalorder %s23, 0
      %s388 = scalar_select %p387, %s23, 0
      %s389 = smul.addr %s388, 4
      %s390 = scalar_lea.vmem %s2, %s389
      %s391 = smul.u32 %s22, 2
      %s392 = sadd.s32 %s391, %s24
      %s393 = smul.u32 32, %s392
      %p394 = scmp.lt.s32.totalorder %s393, 127
      %s395 = scalar_select %p394, %s393, 127
      %s396 = smul.addr %s395, 8
      %s397 = scalar_lea.vmem %s3, %s396
      %s398 = smul.u32 %s22, 2
      %s399 = sadd.s32 %s398, %s24
      %s400 = smul.u32 32, %s399
      %s401 = smul.u32 %s22, 2
      %s402 = sadd.s32 %s401, %s24
      %s403 = smul.u32 32, %s402
      %p404 = scmp.lt.s32.totalorder %s403, 127
      %s405 = scalar_select %p404, %s403, 127
      %p406 = scmp.lt.s32.totalorder %s23, 0
      %s407 = scalar_select %p406, %s23, 0
      %s408 = sadd.s32 %s407, %s405
      %s409 = smul.addr %s408, 4
      %s410 = scalar_lea.vmem %s4, %s409
      %s411 = smul.u32 %s22, 2
      %s412 = sadd.s32 %s411, %s24
      %s413 = smul.u32 32, %s412
      %p414 = scmp.lt.s32.totalorder %s22, 1
      %s415 = scalar_select %p414, %s22, 1
      %p416 = scmp.lt.s32.totalorder %s23, 0
      %s417 = scalar_select %p416, %s23, 0
      %s418 = sadd.s32 %s417, %s415
      %s419 = smul.addr %s418, 2
      %s420 = scalar_lea.vmem %s5, %s419
      %v422 = vld [vmem:[%s365] sm:$0xf]
      %v423 = vld [vmem:[%s365 + $0x4] sm:$0xf]
      %v424 = vld [vmem:[%s365 + $0x8] sm:$0xf]
      %v425 = vld [vmem:[%s365 + $0xc] sm:$0xf]
      %v426 = vld [vmem:[%s365 + $0x10] sm:$0xf]
      %v427 = vld [vmem:[%s365 + $0x14] sm:$0xf]
      %v428 = vld [vmem:[%s365 + $0x18] sm:$0xf]
      %v429 = vld [vmem:[%s365 + $0x1c] sm:$0xf]
      %v430 = vld [vmem:[%s365 + $0x20] sm:$0xf]
      %v431 = vld [vmem:[%s365 + $0x24] sm:$0xf]
      %v432 = vld [vmem:[%s365 + $0x28] sm:$0xf]
      %v433 = vld [vmem:[%s365 + $0x2c] sm:$0xf]
      %v434 = vld [vmem:[%s365 + $0x30] sm:$0xf]
      %v435 = vld [vmem:[%s365 + $0x34] sm:$0xf]
      %v436 = vld [vmem:[%s365 + $0x38] sm:$0xf]
      %v437 = vld [vmem:[%s365 + $0x3c] sm:$0xf]
      %v438 = vld [vmem:[%s365 + $0x40] sm:$0xf]
      %v439 = vld [vmem:[%s365 + $0x44] sm:$0xf]
      %v440 = vld [vmem:[%s365 + $0x48] sm:$0xf]
      %v441 = vld [vmem:[%s365 + $0x4c] sm:$0xf]
      %v442 = vld [vmem:[%s365 + $0x50] sm:$0xf]
      %v443 = vld [vmem:[%s365 + $0x54] sm:$0xf]
      %v444 = vld [vmem:[%s365 + $0x58] sm:$0xf]
      %v445 = vld [vmem:[%s365 + $0x5c] sm:$0xf]
      %v446 = vld [vmem:[%s365 + $0x60] sm:$0xf]
      %v447 = vld [vmem:[%s365 + $0x64] sm:$0xf]
      %v448 = vld [vmem:[%s365 + $0x68] sm:$0xf]
      %v449 = vld [vmem:[%s365 + $0x6c] sm:$0xf]
      %v450 = vld [vmem:[%s365 + $0x70] sm:$0xf]
      %v451 = vld [vmem:[%s365 + $0x74] sm:$0xf]
      %v452 = vld [vmem:[%s365 + $0x78] sm:$0xf]
      %v453 = vld [vmem:[%s365 + $0x7c] sm:$0xf]
      %v454 = vld [vmem:[%s381] sm:$0xf]
      %v455 = vld [vmem:[%s381 + $0x4] sm:$0xf]
      %v456 = vld [vmem:[%s381 + $0x8] sm:$0xf]
      %v457 = vld [vmem:[%s381 + $0xc] sm:$0xf]
      %v458 = vld [vmem:[%s381 + $0x10] sm:$0xf]
      %v459 = vld [vmem:[%s381 + $0x14] sm:$0xf]
      %v492 = vunpack.c.l.b16 %v422
      %v493 = vunpack.c.l.b16 %v423
      %v494 = vunpack.c.l.b16 %v424
      %v495 = vunpack.c.l.b16 %v425
      %v496 = vunpack.c.l.b16 %v426
      %v497 = vunpack.c.l.b16 %v427
      %v498 = vunpack.c.l.b16 %v428
      %v499 = vunpack.c.l.b16 %v429
      %v500 = vunpack.c.l.b16 %v430
      %v501 = vunpack.c.l.b16 %v431
      %v502 = vunpack.c.l.b16 %v432
      %v503 = vunpack.c.l.b16 %v433
      %v504 = vunpack.c.l.b16 %v434
      %v505 = vunpack.c.l.b16 %v435
      %v506 = vunpack.c.l.b16 %v436
      %v507 = vunpack.c.l.b16 %v437
      %v508 = vunpack.c.l.b16 %v438
      %v509 = vunpack.c.l.b16 %v439
      %v510 = vunpack.c.l.b16 %v440
      %v511 = vunpack.c.l.b16 %v441
      %v512 = vunpack.c.l.b16 %v442
      %v513 = vunpack.c.l.b16 %v443
      %v514 = vunpack.c.l.b16 %v444
      %v515 = vunpack.c.l.b16 %v445
      %v516 = vunpack.c.l.b16 %v446
      %v517 = vunpack.c.l.b16 %v447
      %v518 = vunpack.c.l.b16 %v448
      %v519 = vunpack.c.l.b16 %v449
      %v520 = vunpack.c.l.b16 %v450
      %v521 = vunpack.c.l.b16 %v451
      %v522 = vunpack.c.l.b16 %v452
      %v523 = vunpack.c.l.b16 %v453
      %v524 = vpack.c.b16 %v493, %v492
      %v525 = vpack.c.b16 %v495, %v494
      %v526 = vpack.c.b16 %v497, %v496
      %v527 = vpack.c.b16 %v499, %v498
      %v528 = vpack.c.b16 %v501, %v500
      %v529 = vpack.c.b16 %v503, %v502
      %v530 = vpack.c.b16 %v505, %v504
      %v531 = vpack.c.b16 %v507, %v506
      %v532 = vpack.c.b16 %v509, %v508
      %v533 = vpack.c.b16 %v511, %v510
      %v534 = vpack.c.b16 %v513, %v512
      %v535 = vpack.c.b16 %v515, %v514
      %v536 = vpack.c.b16 %v517, %v516
      %v537 = vpack.c.b16 %v519, %v518
      %v538 = vpack.c.b16 %v521, %v520
      %v539 = vpack.c.b16 %v523, %v522
      %v562 = vunpack.c.l.b16 %v454
      %v563 = vunpack.c.l.b16 %v455
      %v564 = vunpack.c.l.b16 %v456
      %v565 = vunpack.c.l.b16 %v457
      %v566 = vunpack.c.l.b16 %v458
      %v567 = vunpack.c.l.b16 %v459
      %v568 = vpack.c.b16 %v563, %v562
      %v569 = vpack.c.b16 %v565, %v564
      %v570 = vpack.c.b16 %v567, %v566
      %v571 = vld [vmem:[%s390] sm:$0xf]
      %v572 = vld [vmem:[%s390 + $0x4] sm:$0xf]
      %v573 = vld [vmem:[%s390 + $0x8] sm:$0xf]
      %v574 = vld [vmem:[%s390 + $0xc] sm:$0xf]
      %v575 = vld [vmem:[%s390 + $0x10] sm:$0xf]
      %v576 = vld [vmem:[%s390 + $0x14] sm:$0xf]
      %v577 = vld [vmem:[%s390 + $0x18] sm:$0xf]
      %v578 = vld [vmem:[%s390 + $0x1c] sm:$0xf]
      %v579 = vld [vmem:[%s390 + $0x20] sm:$0xf]
      %v580 = vld [vmem:[%s390 + $0x24] sm:$0xf]
      %v581 = vld [vmem:[%s390 + $0x28] sm:$0xf]
      %v582 = vld [vmem:[%s390 + $0x2c] sm:$0xf]
      %v583 = vld [vmem:[%s390 + $0x30] sm:$0xf]
      %v584 = vld [vmem:[%s390 + $0x34] sm:$0xf]
      %v585 = vld [vmem:[%s390 + $0x38] sm:$0xf]
      %v586 = vld [vmem:[%s390 + $0x3c] sm:$0xf]
      %v587 = vld [vmem:[%s390 + $0x40] sm:$0xf]
      %v588 = vld [vmem:[%s390 + $0x44] sm:$0xf]
      %v589 = vld [vmem:[%s390 + $0x48] sm:$0xf]
      %v590 = vld [vmem:[%s390 + $0x4c] sm:$0xf]
      %v591 = vld [vmem:[%s390 + $0x50] sm:$0xf]
      %v592 = vld [vmem:[%s390 + $0x54] sm:$0xf]
      %v593 = vld [vmem:[%s390 + $0x58] sm:$0xf]
      %v594 = vld [vmem:[%s390 + $0x5c] sm:$0xf]
      %v595 = vld [vmem:[%s390 + $0x60] sm:$0xf]
      %v596 = vld [vmem:[%s390 + $0x64] sm:$0xf]
      %v597 = vld [vmem:[%s390 + $0x68] sm:$0xf]
      %v598 = vld [vmem:[%s390 + $0x6c] sm:$0xf]
      %v599 = vld [vmem:[%s390 + $0x70] sm:$0xf]
      %v600 = vld [vmem:[%s390 + $0x74] sm:$0xf]
      %v601 = vld [vmem:[%s390 + $0x78] sm:$0xf]
      %v602 = vld [vmem:[%s390 + $0x7c] sm:$0xf]
      %vm603 = vsmask.f32 7424
      %v605 = vshrl.u32 %v524, 16
      %v607 = vshll.u32 %v524, 16
      %v609 = vrot.slane %v607, 1
      %v610 = vor.u32 %v605, %v609
      %v612 = vshll.u32 %v525, 16
      %v614 = vrot.slane %v612, 1
      %v615 = vsel %vm603, %v610, %v614
      %v616 = vshrl.u32 %v525, 16
      %v618 = vor.u32 %v616, %v614
      %v620 = vshll.u32 %v526, 16
      %v622 = vrot.slane %v620, 1
      %v623 = vsel %vm603, %v618, %v622
      %v624 = vshrl.u32 %v526, 16
      %v626 = vor.u32 %v624, %v622
      %v628 = vshll.u32 %v527, 16
      %v630 = vrot.slane %v628, 1
      %v631 = vsel %vm603, %v626, %v630
      %v632 = vshrl.u32 %v527, 16
      %v634 = vor.u32 %v632, %v630
      %v636 = vshll.u32 %v528, 16
      %v638 = vrot.slane %v636, 1
      %v639 = vsel %vm603, %v634, %v638
      %v640 = vshrl.u32 %v528, 16
      %v642 = vor.u32 %v640, %v638
      %v644 = vshll.u32 %v529, 16
      %v646 = vrot.slane %v644, 1
      %v647 = vsel %vm603, %v642, %v646
      %v648 = vshrl.u32 %v529, 16
      %v650 = vor.u32 %v648, %v646
      %v652 = vshll.u32 %v530, 16
      %v654 = vrot.slane %v652, 1
      %v655 = vsel %vm603, %v650, %v654
      %v656 = vshrl.u32 %v530, 16
      %v658 = vor.u32 %v656, %v654
      %v660 = vshll.u32 %v531, 16
      %v662 = vrot.slane %v660, 1
      %v663 = vsel %vm603, %v658, %v662
      %v664 = vshrl.u32 %v531, 16
      %v666 = vor.u32 %v664, %v662
      %v668 = vshll.u32 %v532, 16
      %v670 = vrot.slane %v668, 1
      %v671 = vsel %vm603, %v666, %v670
      %v672 = vshrl.u32 %v532, 16
      %v674 = vor.u32 %v672, %v670
      %v676 = vshll.u32 %v533, 16
      %v678 = vrot.slane %v676, 1
      %v679 = vsel %vm603, %v674, %v678
      %v680 = vshrl.u32 %v533, 16
      %v682 = vor.u32 %v680, %v678
      %v684 = vshll.u32 %v534, 16
      %v686 = vrot.slane %v684, 1
      %v687 = vsel %vm603, %v682, %v686
      %v688 = vshrl.u32 %v534, 16
      %v690 = vor.u32 %v688, %v686
      %v692 = vshll.u32 %v535, 16
      %v694 = vrot.slane %v692, 1
      %v695 = vsel %vm603, %v690, %v694
      %v696 = vshrl.u32 %v535, 16
      %v698 = vor.u32 %v696, %v694
      %v700 = vshll.u32 %v536, 16
      %v702 = vrot.slane %v700, 1
      %v703 = vsel %vm603, %v698, %v702
      %v704 = vshrl.u32 %v536, 16
      %v706 = vor.u32 %v704, %v702
      %v708 = vshll.u32 %v537, 16
      %v710 = vrot.slane %v708, 1
      %v711 = vsel %vm603, %v706, %v710
      %v712 = vshrl.u32 %v537, 16
      %v714 = vor.u32 %v712, %v710
      %v716 = vshll.u32 %v538, 16
      %v718 = vrot.slane %v716, 1
      %v719 = vsel %vm603, %v714, %v718
      %v720 = vshrl.u32 %v538, 16
      %v722 = vor.u32 %v720, %v718
      %v724 = vshll.u32 %v539, 16
      %v726 = vrot.slane %v724, 1
      %v727 = vsel %vm603, %v722, %v726
      %v728 = vshrl.u32 %v539, 16
      %v730 = vor.u32 %v728, %v726
      %v732 = vshll.u32 %v568, 16
      %v734 = vrot.slane %v732, 1
      %v735 = vsel %vm603, %v730, %v734
      %v768 = vunpack.c.l.b16 %v587
      %v769 = vunpack.c.l.b16 %v588
      %v770 = vunpack.c.l.b16 %v589
      %v771 = vunpack.c.l.b16 %v590
      %v772 = vunpack.c.l.b16 %v591
      %v773 = vunpack.c.l.b16 %v592
      %v774 = vunpack.c.l.b16 %v593
      %v775 = vunpack.c.l.b16 %v594
      %v776 = vunpack.c.l.b16 %v595
      %v777 = vunpack.c.l.b16 %v596
      %v778 = vunpack.c.l.b16 %v597
      %v779 = vunpack.c.l.b16 %v598
      %v780 = vunpack.c.l.b16 %v599
      %v781 = vunpack.c.l.b16 %v600
      %v782 = vunpack.c.l.b16 %v601
      %v783 = vunpack.c.l.b16 %v602
      %v784 = vpack.c.b16 %v769, %v768
      %v785 = vpack.c.b16 %v771, %v770
      %v786 = vpack.c.b16 %v773, %v772
      %v787 = vpack.c.b16 %v775, %v774
      %v788 = vpack.c.b16 %v777, %v776
      %v789 = vpack.c.b16 %v779, %v778
      %v790 = vpack.c.b16 %v781, %v780
      %v791 = vpack.c.b16 %v783, %v782
      %800 = vmatprep.subr.bf16.mxu0 0
      %801 = vmatpush1.bf16.msra.mxu0 %v791
      %802 = vmatprep.subr.bf16.mxu0 0
      %803 = vmatpush1.bf16.msra.mxu0 %v790
      %804 = vmatprep.subr.bf16.mxu0 0
      %805 = vmatpush1.bf16.msra.mxu0 %v789
      %806 = vmatprep.subr.bf16.mxu0 0
      %807 = vmatpush1.bf16.msra.mxu0 %v788
      %808 = vmatprep.subr.bf16.mxu0 0
      %809 = vmatpush1.bf16.msra.mxu0 %v787
      %810 = vmatprep.subr.bf16.mxu0 0
      %811 = vmatpush1.bf16.msra.mxu0 %v786
      %812 = vmatprep.subr.bf16.mxu0 0
      %813 = vmatpush1.bf16.msra.mxu0 %v785
      %814 = vmatprep.subr.bf16.mxu0 0
      %815 = vmatpush1.bf16.msra.mxu0 %v784
      %816 = vmatprep.subr.bf16.mxu0 0
      %817 = vmatpush2.bf16.msra.mxu0 0
      %818 = vmatprep.subr.bf16.mxu0 0
      %819 = vmatpush2.bf16.msra.mxu0 0
      %820 = vmatprep.subr.bf16.mxu0 0
      %821 = vmatpush2.bf16.msra.mxu0 0
      %822 = vmatprep.subr.bf16.mxu0 0
      %823 = vmatpush2.bf16.msra.mxu0 0
      %824 = vmatprep.subr.bf16.mxu0 0
      %825 = vmatpush2.bf16.msra.mxu0 0
      %826 = vmatprep.subr.bf16.mxu0 0
      %827 = vmatpush2.bf16.msra.mxu0 0
      %828 = vmatprep.subr.bf16.mxu0 0
      %829 = vmatpush2.bf16.msra.mxu0 0
      %830 = vmatprep.subr.bf16.mxu0 0
      %831 = vmatpush2.bf16.msra.mxu0 0
      %832 = vmatprep.mubr.bf16.mxu0 0
      %833 = vmatmul.mubr.bf16.gmra.mxu0 %v615
      %v834 = vpop.f32.mrf.mxu0
      %v835 = vadd.f32 0.0, %v834
      %v836 = vpop.f32.mrf.mxu0
      %v837 = vpop.f32.mrf.mxu0
      %v838 = vadd.f32 0.0, %v837
      %v839 = vpop.f32.mrf.mxu0
      %840 = vmatprep.mubr.bf16.mxu0 0
      %841 = vmatmul.mubr.bf16.gmra.mxu0 %v623
      %v842 = vpop.f32.mrf.mxu0
      %v843 = vadd.f32 0.0, %v842
      %v844 = vpop.f32.mrf.mxu0
      %v845 = vpop.f32.mrf.mxu0
      %v846 = vadd.f32 0.0, %v845
      %v847 = vpop.f32.mrf.mxu0
      %848 = vmatprep.mubr.bf16.mxu0 0
      %849 = vmatmul.mubr.bf16.gmra.mxu0 %v631
      %v850 = vpop.f32.mrf.mxu0
      %v851 = vadd.f32 0.0, %v850
      %v852 = vpop.f32.mrf.mxu0
      %v853 = vpop.f32.mrf.mxu0
      %v854 = vadd.f32 0.0, %v853
      %v855 = vpop.f32.mrf.mxu0
      %856 = vmatprep.mubr.bf16.mxu0 0
      %857 = vmatmul.mubr.bf16.gmra.mxu0 %v639
      %v858 = vpop.f32.mrf.mxu0
      %v859 = vadd.f32 0.0, %v858
      %v860 = vpop.f32.mrf.mxu0
      %v861 = vpop.f32.mrf.mxu0
      %v862 = vadd.f32 0.0, %v861
      %v863 = vpop.f32.mrf.mxu0
      %864 = vmatprep.mubr.bf16.mxu0 0
      %865 = vmatmul.mubr.bf16.gmra.mxu0 %v647
      %v866 = vpop.f32.mrf.mxu0
      %v867 = vadd.f32 0.0, %v866
      %v868 = vpop.f32.mrf.mxu0
      %v869 = vpop.f32.mrf.mxu0
      %v870 = vadd.f32 0.0, %v869
      %v871 = vpop.f32.mrf.mxu0
      %872 = vmatprep.mubr.bf16.mxu0 0
      %873 = vmatmul.mubr.bf16.gmra.mxu0 %v655
      %v874 = vpop.f32.mrf.mxu0
      %v875 = vadd.f32 0.0, %v874
      %v876 = vpop.f32.mrf.mxu0
      %v877 = vpop.f32.mrf.mxu0
      %v878 = vadd.f32 0.0, %v877
      %v879 = vpop.f32.mrf.mxu0
      %880 = vmatprep.mubr.bf16.mxu0 0
      %881 = vmatmul.mubr.bf16.gmra.mxu0 %v663
      %v882 = vpop.f32.mrf.mxu0
      %v883 = vadd.f32 0.0, %v882
      %v884 = vpop.f32.mrf.mxu0
      %v885 = vpop.f32.mrf.mxu0
      %v886 = vadd.f32 0.0, %v885
      %v887 = vpop.f32.mrf.mxu0
      %888 = vmatprep.mubr.bf16.mxu0 0
      %889 = vmatmul.mubr.bf16.gmra.mxu0 %v671
      %v890 = vpop.f32.mrf.mxu0
      %v891 = vadd.f32 0.0, %v890
      %v892 = vpop.f32.mrf.mxu0
      %v893 = vpop.f32.mrf.mxu0
      %v894 = vadd.f32 0.0, %v893
      %v895 = vpop.f32.mrf.mxu0
      %896 = vmatprep.mubr.bf16.mxu0 0
      %897 = vmatmul.mubr.bf16.gmra.mxu0 %v679
      %v898 = vpop.f32.mrf.mxu0
      %v899 = vadd.f32 0.0, %v898
      %v900 = vpop.f32.mrf.mxu0
      %v901 = vpop.f32.mrf.mxu0
      %v902 = vadd.f32 0.0, %v901
      %v903 = vpop.f32.mrf.mxu0
      %904 = vmatprep.mubr.bf16.mxu0 0
      %905 = vmatmul.mubr.bf16.gmra.mxu0 %v687
      %v906 = vpop.f32.mrf.mxu0
      %v907 = vadd.f32 0.0, %v906
      %v908 = vpop.f32.mrf.mxu0
      %v909 = vpop.f32.mrf.mxu0
      %v910 = vadd.f32 0.0, %v909
      %v911 = vpop.f32.mrf.mxu0
      %912 = vmatprep.mubr.bf16.mxu0 0
      %913 = vmatmul.mubr.bf16.gmra.mxu0 %v695
      %v914 = vpop.f32.mrf.mxu0
      %v915 = vadd.f32 0.0, %v914
      %v916 = vpop.f32.mrf.mxu0
      %v917 = vpop.f32.mrf.mxu0
      %v918 = vadd.f32 0.0, %v917
      %v919 = vpop.f32.mrf.mxu0
      %920 = vmatprep.mubr.bf16.mxu0 0
      %921 = vmatmul.mubr.bf16.gmra.mxu0 %v703
      %v922 = vpop.f32.mrf.mxu0
      %v923 = vadd.f32 0.0, %v922
      %v924 = vpop.f32.mrf.mxu0
      %v925 = vpop.f32.mrf.mxu0
      %v926 = vadd.f32 0.0, %v925
      %v927 = vpop.f32.mrf.mxu0
      %928 = vmatprep.mubr.bf16.mxu0 0
      %929 = vmatmul.mubr.bf16.gmra.mxu0 %v711
      %v930 = vpop.f32.mrf.mxu0
      %v931 = vadd.f32 0.0, %v930
      %v932 = vpop.f32.mrf.mxu0
      %v933 = vpop.f32.mrf.mxu0
      %v934 = vadd.f32 0.0, %v933
      %v935 = vpop.f32.mrf.mxu0
      %936 = vmatprep.mubr.bf16.mxu0 0
      %937 = vmatmul.mubr.bf16.gmra.mxu0 %v719
      %v938 = vpop.f32.mrf.mxu0
      %v939 = vadd.f32 0.0, %v938
      %v940 = vpop.f32.mrf.mxu0
      %v941 = vpop.f32.mrf.mxu0
      %v942 = vadd.f32 0.0, %v941
      %v943 = vpop.f32.mrf.mxu0
      %944 = vmatprep.mubr.bf16.mxu0 0
      %945 = vmatmul.mubr.bf16.gmra.mxu0 %v727
      %v946 = vpop.f32.mrf.mxu0
      %v947 = vadd.f32 0.0, %v946
      %v948 = vpop.f32.mrf.mxu0
      %v949 = vpop.f32.mrf.mxu0
      %v950 = vadd.f32 0.0, %v949
      %v951 = vpop.f32.mrf.mxu0
      %952 = vmatprep.mubr.bf16.mxu0 0
      %953 = vmatmul.mubr.bf16.gmra.mxu0 %v735
      %v954 = vpop.f32.mrf.mxu0
      %v955 = vadd.f32 0.0, %v954
      %v956 = vpop.f32.mrf.mxu0
      %v957 = vpop.f32.mrf.mxu0
      %v958 = vadd.f32 0.0, %v957
      %v959 = vpop.f32.mrf.mxu0
      %960 = vdwg.mxu0
      %v977 = vunpack.c.l.b16 %v571
      %v978 = vunpack.c.l.b16 %v572
      %v979 = vunpack.c.l.b16 %v573
      %v980 = vunpack.c.l.b16 %v574
      %v981 = vunpack.c.l.b16 %v575
      %v982 = vunpack.c.l.b16 %v576
      %v983 = vunpack.c.l.b16 %v577
      %v984 = vunpack.c.l.b16 %v578
      %v985 = vunpack.c.l.b16 %v579
      %v986 = vunpack.c.l.b16 %v580
      %v987 = vunpack.c.l.b16 %v581
      %v988 = vunpack.c.l.b16 %v582
      %v989 = vunpack.c.l.b16 %v583
      %v990 = vunpack.c.l.b16 %v584
      %v991 = vunpack.c.l.b16 %v585
      %v992 = vunpack.c.l.b16 %v586
      %v993 = vpack.c.b16 %v978, %v977
      %v994 = vpack.c.b16 %v980, %v979
      %v995 = vpack.c.b16 %v982, %v981
      %v996 = vpack.c.b16 %v984, %v983
      %v997 = vpack.c.b16 %v986, %v985
      %v998 = vpack.c.b16 %v988, %v987
      %v999 = vpack.c.b16 %v990, %v989
      %v1000 = vpack.c.b16 %v992, %v991
      %1009 = vmatprep.subr.bf16.mxu0 0
      %1010 = vmatpush1.bf16.msra.mxu0 %v1000
      %1011 = vmatprep.subr.bf16.mxu0 0
      %1012 = vmatpush1.bf16.msra.mxu0 %v999
      %1013 = vmatprep.subr.bf16.mxu0 0
      %1014 = vmatpush1.bf16.msra.mxu0 %v998
      %1015 = vmatprep.subr.bf16.mxu0 0
      %1016 = vmatpush1.bf16.msra.mxu0 %v997
      %1017 = vmatprep.subr.bf16.mxu0 0
      %1018 = vmatpush1.bf16.msra.mxu0 %v996
      %1019 = vmatprep.subr.bf16.mxu0 0
      %1020 = vmatpush1.bf16.msra.mxu0 %v995
      %1021 = vmatprep.subr.bf16.mxu0 0
      %1022 = vmatpush1.bf16.msra.mxu0 %v994
      %1023 = vmatprep.subr.bf16.mxu0 0
      %1024 = vmatpush1.bf16.msra.mxu0 %v993
      %1025 = vmatprep.subr.bf16.mxu0 0
      %1026 = vmatpush2.bf16.msra.mxu0 0
      %1027 = vmatprep.subr.bf16.mxu0 0
      %1028 = vmatpush2.bf16.msra.mxu0 0
      %1029 = vmatprep.subr.bf16.mxu0 0
      %1030 = vmatpush2.bf16.msra.mxu0 0
      %1031 = vmatprep.subr.bf16.mxu0 0
      %1032 = vmatpush2.bf16.msra.mxu0 0
      %1033 = vmatprep.subr.bf16.mxu0 0
      %1034 = vmatpush2.bf16.msra.mxu0 0
      %1035 = vmatprep.subr.bf16.mxu0 0
      %1036 = vmatpush2.bf16.msra.mxu0 0
      %1037 = vmatprep.subr.bf16.mxu0 0
      %1038 = vmatpush2.bf16.msra.mxu0 0
      %1039 = vmatprep.subr.bf16.mxu0 0
      %1040 = vmatpush2.bf16.msra.mxu0 0
      %1041 = vmatprep.mubr.bf16.mxu0 0
      %1042 = vmatmul.mubr.bf16.gmra.mxu0 %v524
      %v1043 = vpop.f32.mrf.mxu0
      %v1044 = vadd.f32 %v835, %v1043
      %v1045 = vpop.f32.mrf.mxu0
      %v1046 = vpop.f32.mrf.mxu0
      %v1047 = vadd.f32 %v838, %v1046
      %v1048 = vpop.f32.mrf.mxu0
      %1049 = vmatprep.mubr.bf16.mxu0 0
      %1050 = vmatmul.mubr.bf16.gmra.mxu0 %v525
      %v1051 = vpop.f32.mrf.mxu0
      %v1052 = vadd.f32 %v843, %v1051
      %v1053 = vpop.f32.mrf.mxu0
      %v1054 = vpop.f32.mrf.mxu0
      %v1055 = vadd.f32 %v846, %v1054
      %v1056 = vpop.f32.mrf.mxu0
      %1057 = vmatprep.mubr.bf16.mxu0 0
      %1058 = vmatmul.mubr.bf16.gmra.mxu0 %v526
      %v1059 = vpop.f32.mrf.mxu0
      %v1060 = vadd.f32 %v851, %v1059
      %v1061 = vpop.f32.mrf.mxu0
      %v1062 = vpop.f32.mrf.mxu0
      %v1063 = vadd.f32 %v854, %v1062
      %v1064 = vpop.f32.mrf.mxu0
      %1065 = vmatprep.mubr.bf16.mxu0 0
      %1066 = vmatmul.mubr.bf16.gmra.mxu0 %v527
      %v1067 = vpop.f32.mrf.mxu0
      %v1068 = vadd.f32 %v859, %v1067
      %v1069 = vpop.f32.mrf.mxu0
      %v1070 = vpop.f32.mrf.mxu0
      %v1071 = vadd.f32 %v862, %v1070
      %v1072 = vpop.f32.mrf.mxu0
      %1073 = vmatprep.mubr.bf16.mxu0 0
      %1074 = vmatmul.mubr.bf16.gmra.mxu0 %v528
      %v1075 = vpop.f32.mrf.mxu0
      %v1076 = vadd.f32 %v867, %v1075
      %v1077 = vpop.f32.mrf.mxu0
      %v1078 = vpop.f32.mrf.mxu0
      %v1079 = vadd.f32 %v870, %v1078
      %v1080 = vpop.f32.mrf.mxu0
      %1081 = vmatprep.mubr.bf16.mxu0 0
      %1082 = vmatmul.mubr.bf16.gmra.mxu0 %v529
      %v1083 = vpop.f32.mrf.mxu0
      %v1084 = vadd.f32 %v875, %v1083
      %v1085 = vpop.f32.mrf.mxu0
      %v1086 = vpop.f32.mrf.mxu0
      %v1087 = vadd.f32 %v878, %v1086
      %v1088 = vpop.f32.mrf.mxu0
      %1089 = vmatprep.mubr.bf16.mxu0 0
      %1090 = vmatmul.mubr.bf16.gmra.mxu0 %v530
      %v1091 = vpop.f32.mrf.mxu0
      %v1092 = vadd.f32 %v883, %v1091
      %v1093 = vpop.f32.mrf.mxu0
      %v1094 = vpop.f32.mrf.mxu0
      %v1095 = vadd.f32 %v886, %v1094
      %v1096 = vpop.f32.mrf.mxu0
      %1097 = vmatprep.mubr.bf16.mxu0 0
      %1098 = vmatmul.mubr.bf16.gmra.mxu0 %v531
      %v1099 = vpop.f32.mrf.mxu0
      %v1100 = vadd.f32 %v891, %v1099
      %v1101 = vpop.f32.mrf.mxu0
      %v1102 = vpop.f32.mrf.mxu0
      %v1103 = vadd.f32 %v894, %v1102
      %v1104 = vpop.f32.mrf.mxu0
      %1105 = vmatprep.mubr.bf16.mxu0 0
      %1106 = vmatmul.mubr.bf16.gmra.mxu0 %v532
      %v1107 = vpop.f32.mrf.mxu0
      %v1108 = vadd.f32 %v899, %v1107
      %v1109 = vpop.f32.mrf.mxu0
      %v1110 = vpop.f32.mrf.mxu0
      %v1111 = vadd.f32 %v902, %v1110
      %v1112 = vpop.f32.mrf.mxu0
      %1113 = vmatprep.mubr.bf16.mxu0 0
      %1114 = vmatmul.mubr.bf16.gmra.mxu0 %v533
      %v1115 = vpop.f32.mrf.mxu0
      %v1116 = vadd.f32 %v907, %v1115
      %v1117 = vpop.f32.mrf.mxu0
      %v1118 = vpop.f32.mrf.mxu0
      %v1119 = vadd.f32 %v910, %v1118
      %v1120 = vpop.f32.mrf.mxu0
      %1121 = vmatprep.mubr.bf16.mxu0 0
      %1122 = vmatmul.mubr.bf16.gmra.mxu0 %v534
      %v1123 = vpop.f32.mrf.mxu0
      %v1124 = vadd.f32 %v915, %v1123
      %v1125 = vpop.f32.mrf.mxu0
      %v1126 = vpop.f32.mrf.mxu0
      %v1127 = vadd.f32 %v918, %v1126
      %v1128 = vpop.f32.mrf.mxu0
      %1129 = vmatprep.mubr.bf16.mxu0 0
      %1130 = vmatmul.mubr.bf16.gmra.mxu0 %v535
      %v1131 = vpop.f32.mrf.mxu0
      %v1132 = vadd.f32 %v923, %v1131
      %v1133 = vpop.f32.mrf.mxu0
      %v1134 = vpop.f32.mrf.mxu0
      %v1135 = vadd.f32 %v926, %v1134
      %v1136 = vpop.f32.mrf.mxu0
      %1137 = vmatprep.mubr.bf16.mxu0 0
      %1138 = vmatmul.mubr.bf16.gmra.mxu0 %v536
      %v1139 = vpop.f32.mrf.mxu0
      %v1140 = vadd.f32 %v931, %v1139
      %v1141 = vpop.f32.mrf.mxu0
      %v1142 = vpop.f32.mrf.mxu0
      %v1143 = vadd.f32 %v934, %v1142
      %v1144 = vpop.f32.mrf.mxu0
      %1145 = vmatprep.mubr.bf16.mxu0 0
      %1146 = vmatmul.mubr.bf16.gmra.mxu0 %v537
      %v1147 = vpop.f32.mrf.mxu0
      %v1148 = vadd.f32 %v939, %v1147
      %v1149 = vpop.f32.mrf.mxu0
      %v1150 = vpop.f32.mrf.mxu0
      %v1151 = vadd.f32 %v942, %v1150
      %v1152 = vpop.f32.mrf.mxu0
      %1153 = vmatprep.mubr.bf16.mxu0 0
      %1154 = vmatmul.mubr.bf16.gmra.mxu0 %v538
      %v1155 = vpop.f32.mrf.mxu0
      %v1156 = vadd.f32 %v947, %v1155
      %v1157 = vpop.f32.mrf.mxu0
      %v1158 = vpop.f32.mrf.mxu0
      %v1159 = vadd.f32 %v950, %v1158
      %v1160 = vpop.f32.mrf.mxu0
      %1161 = vmatprep.mubr.bf16.mxu0 0
      %1162 = vmatmul.mubr.bf16.gmra.mxu0 %v539
      %v1163 = vpop.f32.mrf.mxu0
      %v1164 = vadd.f32 %v955, %v1163
      %v1165 = vpop.f32.mrf.mxu0
      %v1166 = vpop.f32.mrf.mxu0
      %v1167 = vadd.f32 %v958, %v1166
      %v1168 = vpop.f32.mrf.mxu0
      %1169 = vdwg.mxu0
      %v1170 = vld [vmem:[%s390 + $0x80] sm:$0xf]
      %v1171 = vld [vmem:[%s390 + $0x84] sm:$0xf]
      %v1172 = vld [vmem:[%s390 + $0x88] sm:$0xf]
      %v1173 = vld [vmem:[%s390 + $0x8c] sm:$0xf]
      %v1174 = vld [vmem:[%s390 + $0x90] sm:$0xf]
      %v1175 = vld [vmem:[%s390 + $0x94] sm:$0xf]
      %v1176 = vld [vmem:[%s390 + $0x98] sm:$0xf]
      %v1177 = vld [vmem:[%s390 + $0x9c] sm:$0xf]
      %v1178 = vld [vmem:[%s390 + $0xa0] sm:$0xf]
      %v1179 = vld [vmem:[%s390 + $0xa4] sm:$0xf]
      %v1180 = vld [vmem:[%s390 + $0xa8] sm:$0xf]
      %v1181 = vld [vmem:[%s390 + $0xac] sm:$0xf]
      %v1182 = vld [vmem:[%s390 + $0xb0] sm:$0xf]
      %v1183 = vld [vmem:[%s390 + $0xb4] sm:$0xf]
      %v1184 = vld [vmem:[%s390 + $0xb8] sm:$0xf]
      %v1185 = vld [vmem:[%s390 + $0xbc] sm:$0xf]
      %vm1186 = vcmask 1046528
      %v1187 = vrot.slane %v524, 1
      %v1188 = vrot.slane %v525, 1
      %v1189 = vsel %vm1186, %v1187, %v1188
      %v1190 = vrot.slane %v526, 1
      %v1191 = vsel %vm1186, %v1188, %v1190
      %v1192 = vrot.slane %v527, 1
      %v1193 = vsel %vm1186, %v1190, %v1192
      %v1194 = vrot.slane %v528, 1
      %v1195 = vsel %vm1186, %v1192, %v1194
      %v1196 = vrot.slane %v529, 1
      %v1197 = vsel %vm1186, %v1194, %v1196
      %v1198 = vrot.slane %v530, 1
      %v1199 = vsel %vm1186, %v1196, %v1198
      %v1200 = vrot.slane %v531, 1
      %v1201 = vsel %vm1186, %v1198, %v1200
      %v1202 = vrot.slane %v532, 1
      %v1203 = vsel %vm1186, %v1200, %v1202
      %v1204 = vrot.slane %v533, 1
      %v1205 = vsel %vm1186, %v1202, %v1204
      %v1206 = vrot.slane %v534, 1
      %v1207 = vsel %vm1186, %v1204, %v1206
      %v1208 = vrot.slane %v535, 1
      %v1209 = vsel %vm1186, %v1206, %v1208
      %v1210 = vrot.slane %v536, 1
      %v1211 = vsel %vm1186, %v1208, %v1210
      %v1212 = vrot.slane %v537, 1
      %v1213 = vsel %vm1186, %v1210, %v1212
      %v1214 = vrot.slane %v538, 1
      %v1215 = vsel %vm1186, %v1212, %v1214
      %v1216 = vrot.slane %v539, 1
      %v1217 = vsel %vm1186, %v1214, %v1216
      %v1218 = vrot.slane %v568, 1
      %v1219 = vsel %vm1186, %v1216, %v1218
      %v1252 = vunpack.c.l.b16 %v1170
      %v1253 = vunpack.c.l.b16 %v1171
      %v1254 = vunpack.c.l.b16 %v1172
      %v1255 = vunpack.c.l.b16 %v1173
      %v1256 = vunpack.c.l.b16 %v1174
      %v1257 = vunpack.c.l.b16 %v1175
      %v1258 = vunpack.c.l.b16 %v1176
      %v1259 = vunpack.c.l.b16 %v1177
      %v1260 = vunpack.c.l.b16 %v1178
      %v1261 = vunpack.c.l.b16 %v1179
      %v1262 = vunpack.c.l.b16 %v1180
      %v1263 = vunpack.c.l.b16 %v1181
      %v1264 = vunpack.c.l.b16 %v1182
      %v1265 = vunpack.c.l.b16 %v1183
      %v1266 = vunpack.c.l.b16 %v1184
      %v1267 = vunpack.c.l.b16 %v1185
      %v1268 = vpack.c.b16 %v1253, %v1252
      %v1269 = vpack.c.b16 %v1255, %v1254
      %v1270 = vpack.c.b16 %v1257, %v1256
      %v1271 = vpack.c.b16 %v1259, %v1258
      %v1272 = vpack.c.b16 %v1261, %v1260
      %v1273 = vpack.c.b16 %v1263, %v1262
      %v1274 = vpack.c.b16 %v1265, %v1264
      %v1275 = vpack.c.b16 %v1267, %v1266
      %1284 = vmatprep.subr.bf16.mxu0 0
      %1285 = vmatpush1.bf16.msra.mxu0 %v1275
      %1286 = vmatprep.subr.bf16.mxu0 0
      %1287 = vmatpush1.bf16.msra.mxu0 %v1274
      %1288 = vmatprep.subr.bf16.mxu0 0
      %1289 = vmatpush1.bf16.msra.mxu0 %v1273
      %1290 = vmatprep.subr.bf16.mxu0 0
      %1291 = vmatpush1.bf16.msra.mxu0 %v1272
      %1292 = vmatprep.subr.bf16.mxu0 0
      %1293 = vmatpush1.bf16.msra.mxu0 %v1271
      %1294 = vmatprep.subr.bf16.mxu0 0
      %1295 = vmatpush1.bf16.msra.mxu0 %v1270
      %1296 = vmatprep.subr.bf16.mxu0 0
      %1297 = vmatpush1.bf16.msra.mxu0 %v1269
      %1298 = vmatprep.subr.bf16.mxu0 0
      %1299 = vmatpush1.bf16.msra.mxu0 %v1268
      %1300 = vmatprep.subr.bf16.mxu0 0
      %1301 = vmatpush2.bf16.msra.mxu0 0
      %1302 = vmatprep.subr.bf16.mxu0 0
      %1303 = vmatpush2.bf16.msra.mxu0 0
      %1304 = vmatprep.subr.bf16.mxu0 0
      %1305 = vmatpush2.bf16.msra.mxu0 0
      %1306 = vmatprep.subr.bf16.mxu0 0
      %1307 = vmatpush2.bf16.msra.mxu0 0
      %1308 = vmatprep.subr.bf16.mxu0 0
      %1309 = vmatpush2.bf16.msra.mxu0 0
      %1310 = vmatprep.subr.bf16.mxu0 0
      %1311 = vmatpush2.bf16.msra.mxu0 0
      %1312 = vmatprep.subr.bf16.mxu0 0
      %1313 = vmatpush2.bf16.msra.mxu0 0
      %1314 = vmatprep.subr.bf16.mxu0 0
      %1315 = vmatpush2.bf16.msra.mxu0 0
      %1316 = vmatprep.mubr.bf16.mxu0 0
      %1317 = vmatmul.mubr.bf16.gmra.mxu0 %v1189
      %v1318 = vpop.f32.mrf.mxu0
      %v1319 = vadd.f32 0.0, %v1318
      %v1320 = vpop.f32.mrf.mxu0
      %v1321 = vpop.f32.mrf.mxu0
      %v1322 = vadd.f32 0.0, %v1321
      %v1323 = vpop.f32.mrf.mxu0
      %1324 = vmatprep.mubr.bf16.mxu0 0
      %1325 = vmatmul.mubr.bf16.gmra.mxu0 %v1191
      %v1326 = vpop.f32.mrf.mxu0
      %v1327 = vadd.f32 0.0, %v1326
      %v1328 = vpop.f32.mrf.mxu0
      %v1329 = vpop.f32.mrf.mxu0
      %v1330 = vadd.f32 0.0, %v1329
      %v1331 = vpop.f32.mrf.mxu0
      %1332 = vmatprep.mubr.bf16.mxu0 0
      %1333 = vmatmul.mubr.bf16.gmra.mxu0 %v1193
      %v1334 = vpop.f32.mrf.mxu0
      %v1335 = vadd.f32 0.0, %v1334
      %v1336 = vpop.f32.mrf.mxu0
      %v1337 = vpop.f32.mrf.mxu0
      %v1338 = vadd.f32 0.0, %v1337
      %v1339 = vpop.f32.mrf.mxu0
      %1340 = vmatprep.mubr.bf16.mxu0 0
      %1341 = vmatmul.mubr.bf16.gmra.mxu0 %v1195
      %v1342 = vpop.f32.mrf.mxu0
      %v1343 = vadd.f32 0.0, %v1342
      %v1344 = vpop.f32.mrf.mxu0
      %v1345 = vpop.f32.mrf.mxu0
      %v1346 = vadd.f32 0.0, %v1345
      %v1347 = vpop.f32.mrf.mxu0
      %1348 = vmatprep.mubr.bf16.mxu0 0
      %1349 = vmatmul.mubr.bf16.gmra.mxu0 %v1197
      %v1350 = vpop.f32.mrf.mxu0
      %v1351 = vadd.f32 0.0, %v1350
      %v1352 = vpop.f32.mrf.mxu0
      %v1353 = vpop.f32.mrf.mxu0
      %v1354 = vadd.f32 0.0, %v1353
      %v1355 = vpop.f32.mrf.mxu0
      %1356 = vmatprep.mubr.bf16.mxu0 0
      %1357 = vmatmul.mubr.bf16.gmra.mxu0 %v1199
      %v1358 = vpop.f32.mrf.mxu0
      %v1359 = vadd.f32 0.0, %v1358
      %v1360 = vpop.f32.mrf.mxu0
      %v1361 = vpop.f32.mrf.mxu0
      %v1362 = vadd.f32 0.0, %v1361
      %v1363 = vpop.f32.mrf.mxu0
      %1364 = vmatprep.mubr.bf16.mxu0 0
      %1365 = vmatmul.mubr.bf16.gmra.mxu0 %v1201
      %v1366 = vpop.f32.mrf.mxu0
      %v1367 = vadd.f32 0.0, %v1366
      %v1368 = vpop.f32.mrf.mxu0
      %v1369 = vpop.f32.mrf.mxu0
      %v1370 = vadd.f32 0.0, %v1369
      %v1371 = vpop.f32.mrf.mxu0
      %1372 = vmatprep.mubr.bf16.mxu0 0
      %1373 = vmatmul.mubr.bf16.gmra.mxu0 %v1203
      %v1374 = vpop.f32.mrf.mxu0
      %v1375 = vadd.f32 0.0, %v1374
      %v1376 = vpop.f32.mrf.mxu0
      %v1377 = vpop.f32.mrf.mxu0
      %v1378 = vadd.f32 0.0, %v1377
      %v1379 = vpop.f32.mrf.mxu0
      %1380 = vmatprep.mubr.bf16.mxu0 0
      %1381 = vmatmul.mubr.bf16.gmra.mxu0 %v1205
      %v1382 = vpop.f32.mrf.mxu0
      %v1383 = vadd.f32 0.0, %v1382
      %v1384 = vpop.f32.mrf.mxu0
      %v1385 = vpop.f32.mrf.mxu0
      %v1386 = vadd.f32 0.0, %v1385
      %v1387 = vpop.f32.mrf.mxu0
      %1388 = vmatprep.mubr.bf16.mxu0 0
      %1389 = vmatmul.mubr.bf16.gmra.mxu0 %v1207
      %v1390 = vpop.f32.mrf.mxu0
      %v1391 = vadd.f32 0.0, %v1390
      %v1392 = vpop.f32.mrf.mxu0
      %v1393 = vpop.f32.mrf.mxu0
      %v1394 = vadd.f32 0.0, %v1393
      %v1395 = vpop.f32.mrf.mxu0
      %1396 = vmatprep.mubr.bf16.mxu0 0
      %1397 = vmatmul.mubr.bf16.gmra.mxu0 %v1209
      %v1398 = vpop.f32.mrf.mxu0
      %v1399 = vadd.f32 0.0, %v1398
      %v1400 = vpop.f32.mrf.mxu0
      %v1401 = vpop.f32.mrf.mxu0
      %v1402 = vadd.f32 0.0, %v1401
      %v1403 = vpop.f32.mrf.mxu0
      %1404 = vmatprep.mubr.bf16.mxu0 0
      %1405 = vmatmul.mubr.bf16.gmra.mxu0 %v1211
      %v1406 = vpop.f32.mrf.mxu0
      %v1407 = vadd.f32 0.0, %v1406
      %v1408 = vpop.f32.mrf.mxu0
      %v1409 = vpop.f32.mrf.mxu0
      %v1410 = vadd.f32 0.0, %v1409
      %v1411 = vpop.f32.mrf.mxu0
      %1412 = vmatprep.mubr.bf16.mxu0 0
      %1413 = vmatmul.mubr.bf16.gmra.mxu0 %v1213
      %v1414 = vpop.f32.mrf.mxu0
      %v1415 = vadd.f32 0.0, %v1414
      %v1416 = vpop.f32.mrf.mxu0
      %v1417 = vpop.f32.mrf.mxu0
      %v1418 = vadd.f32 0.0, %v1417
      %v1419 = vpop.f32.mrf.mxu0
      %1420 = vmatprep.mubr.bf16.mxu0 0
      %1421 = vmatmul.mubr.bf16.gmra.mxu0 %v1215
      %v1422 = vpop.f32.mrf.mxu0
      %v1423 = vadd.f32 0.0, %v1422
      %v1424 = vpop.f32.mrf.mxu0
      %v1425 = vpop.f32.mrf.mxu0
      %v1426 = vadd.f32 0.0, %v1425
      %v1427 = vpop.f32.mrf.mxu0
      %1428 = vmatprep.mubr.bf16.mxu0 0
      %1429 = vmatmul.mubr.bf16.gmra.mxu0 %v1217
      %v1430 = vpop.f32.mrf.mxu0
      %v1431 = vadd.f32 0.0, %v1430
      %v1432 = vpop.f32.mrf.mxu0
      %v1433 = vpop.f32.mrf.mxu0
      %v1434 = vadd.f32 0.0, %v1433
      %v1435 = vpop.f32.mrf.mxu0
      %1436 = vmatprep.mubr.bf16.mxu0 0
      %1437 = vmatmul.mubr.bf16.gmra.mxu0 %v1219
      %v1438 = vpop.f32.mrf.mxu0
      %v1439 = vadd.f32 0.0, %v1438
      %v1440 = vpop.f32.mrf.mxu0
      %v1441 = vpop.f32.mrf.mxu0
      %v1442 = vadd.f32 0.0, %v1441
      %v1443 = vpop.f32.mrf.mxu0
      %1444 = vdwg.mxu0
      %v1445 = vadd.f32 %v1044, %v1319
      %v1446 = vadd.f32 %v1047, %v1322
      %v1447 = vadd.f32 %v1052, %v1327
      %v1448 = vadd.f32 %v1055, %v1330
      %v1449 = vadd.f32 %v1060, %v1335
      %v1450 = vadd.f32 %v1063, %v1338
      %v1451 = vadd.f32 %v1068, %v1343
      %v1452 = vadd.f32 %v1071, %v1346
      %v1453 = vadd.f32 %v1076, %v1351
      %v1454 = vadd.f32 %v1079, %v1354
      %v1455 = vadd.f32 %v1084, %v1359
      %v1456 = vadd.f32 %v1087, %v1362
      %v1457 = vadd.f32 %v1092, %v1367
      %v1458 = vadd.f32 %v1095, %v1370
      %v1459 = vadd.f32 %v1100, %v1375
      %v1460 = vadd.f32 %v1103, %v1378
      %v1461 = vadd.f32 %v1108, %v1383
      %v1462 = vadd.f32 %v1111, %v1386
      %v1463 = vadd.f32 %v1116, %v1391
      %v1464 = vadd.f32 %v1119, %v1394
      %v1465 = vadd.f32 %v1124, %v1399
      %v1466 = vadd.f32 %v1127, %v1402
      %v1467 = vadd.f32 %v1132, %v1407
      %v1468 = vadd.f32 %v1135, %v1410
      %v1469 = vadd.f32 %v1140, %v1415
      %v1470 = vadd.f32 %v1143, %v1418
      %v1471 = vadd.f32 %v1148, %v1423
      %v1472 = vadd.f32 %v1151, %v1426
      %v1473 = vadd.f32 %v1156, %v1431
      %v1474 = vadd.f32 %v1159, %v1434
      %v1475 = vadd.f32 %v1164, %v1439
      %v1476 = vadd.f32 %v1167, %v1442
      %v1477 = vld [vmem:[%s390 + $0xc0] sm:$0xf]
      %v1478 = vld [vmem:[%s390 + $0xc4] sm:$0xf]
      %v1479 = vld [vmem:[%s390 + $0xc8] sm:$0xf]
      %v1480 = vld [vmem:[%s390 + $0xcc] sm:$0xf]
      %v1481 = vld [vmem:[%s390 + $0xd0] sm:$0xf]
      %v1482 = vld [vmem:[%s390 + $0xd4] sm:$0xf]
      %v1483 = vld [vmem:[%s390 + $0xd8] sm:$0xf]
      %v1484 = vld [vmem:[%s390 + $0xdc] sm:$0xf]
      %v1485 = vld [vmem:[%s390 + $0xe0] sm:$0xf]
      %v1486 = vld [vmem:[%s390 + $0xe4] sm:$0xf]
      %v1487 = vld [vmem:[%s390 + $0xe8] sm:$0xf]
      %v1488 = vld [vmem:[%s390 + $0xec] sm:$0xf]
      %v1489 = vld [vmem:[%s390 + $0xf0] sm:$0xf]
      %v1490 = vld [vmem:[%s390 + $0xf4] sm:$0xf]
      %v1491 = vld [vmem:[%s390 + $0xf8] sm:$0xf]
      %v1492 = vld [vmem:[%s390 + $0xfc] sm:$0xf]
      %v1493 = vrot.slane %v569, 1
      %v1494 = vsel %vm1186, %v1218, %v1493
      %v1512 = vunpack.c.l.b16 %v1477
      %v1513 = vunpack.c.l.b16 %v1478
      %v1514 = vunpack.c.l.b16 %v1479
      %v1515 = vunpack.c.l.b16 %v1480
      %v1516 = vunpack.c.l.b16 %v1481
      %v1517 = vunpack.c.l.b16 %v1482
      %v1518 = vunpack.c.l.b16 %v1483
      %v1519 = vunpack.c.l.b16 %v1484
      %v1520 = vunpack.c.l.b16 %v1485
      %v1521 = vunpack.c.l.b16 %v1486
      %v1522 = vunpack.c.l.b16 %v1487
      %v1523 = vunpack.c.l.b16 %v1488
      %v1524 = vunpack.c.l.b16 %v1489
      %v1525 = vunpack.c.l.b16 %v1490
      %v1526 = vunpack.c.l.b16 %v1491
      %v1527 = vunpack.c.l.b16 %v1492
      %v1528 = vpack.c.b16 %v1513, %v1512
      %v1529 = vpack.c.b16 %v1515, %v1514
      %v1530 = vpack.c.b16 %v1517, %v1516
      %v1531 = vpack.c.b16 %v1519, %v1518
      %v1532 = vpack.c.b16 %v1521, %v1520
      %v1533 = vpack.c.b16 %v1523, %v1522
      %v1534 = vpack.c.b16 %v1525, %v1524
      %v1535 = vpack.c.b16 %v1527, %v1526
      %1544 = vmatprep.subr.bf16.mxu0 0
      %1545 = vmatpush1.bf16.msra.mxu0 %v1535
      %1546 = vmatprep.subr.bf16.mxu0 0
      %1547 = vmatpush1.bf16.msra.mxu0 %v1534
      %1548 = vmatprep.subr.bf16.mxu0 0
      %1549 = vmatpush1.bf16.msra.mxu0 %v1533
      %1550 = vmatprep.subr.bf16.mxu0 0
      %1551 = vmatpush1.bf16.msra.mxu0 %v1532
      %1552 = vmatprep.subr.bf16.mxu0 0
      %1553 = vmatpush1.bf16.msra.mxu0 %v1531
      %1554 = vmatprep.subr.bf16.mxu0 0
      %1555 = vmatpush1.bf16.msra.mxu0 %v1530
      %1556 = vmatprep.subr.bf16.mxu0 0
      %1557 = vmatpush1.bf16.msra.mxu0 %v1529
      %1558 = vmatprep.subr.bf16.mxu0 0
      %1559 = vmatpush1.bf16.msra.mxu0 %v1528
      %1560 = vmatprep.subr.bf16.mxu0 0
      %1561 = vmatpush2.bf16.msra.mxu0 0
      %1562 = vmatprep.subr.bf16.mxu0 0
      %1563 = vmatpush2.bf16.msra.mxu0 0
      %1564 = vmatprep.subr.bf16.mxu0 0
      %1565 = vmatpush2.bf16.msra.mxu0 0
      %1566 = vmatprep.subr.bf16.mxu0 0
      %1567 = vmatpush2.bf16.msra.mxu0 0
      %1568 = vmatprep.subr.bf16.mxu0 0
      %1569 = vmatpush2.bf16.msra.mxu0 0
      %1570 = vmatprep.subr.bf16.mxu0 0
      %1571 = vmatpush2.bf16.msra.mxu0 0
      %1572 = vmatprep.subr.bf16.mxu0 0
      %1573 = vmatpush2.bf16.msra.mxu0 0
      %1574 = vmatprep.subr.bf16.mxu0 0
      %1575 = vmatpush2.bf16.msra.mxu0 0
      %1576 = vmatprep.mubr.bf16.mxu0 0
      %1577 = vmatmul.mubr.bf16.gmra.mxu0 %v1191
      %v1578 = vpop.f32.mrf.mxu0
      %v1579 = vadd.f32 0.0, %v1578
      %v1580 = vpop.f32.mrf.mxu0
      %v1581 = vpop.f32.mrf.mxu0
      %v1582 = vadd.f32 0.0, %v1581
      %v1583 = vpop.f32.mrf.mxu0
      %1584 = vmatprep.mubr.bf16.mxu0 0
      %1585 = vmatmul.mubr.bf16.gmra.mxu0 %v1193
      %v1586 = vpop.f32.mrf.mxu0
      %v1587 = vadd.f32 0.0, %v1586
      %v1588 = vpop.f32.mrf.mxu0
      %v1589 = vpop.f32.mrf.mxu0
      %v1590 = vadd.f32 0.0, %v1589
      %v1591 = vpop.f32.mrf.mxu0
      %1592 = vmatprep.mubr.bf16.mxu0 0
      %1593 = vmatmul.mubr.bf16.gmra.mxu0 %v1195
      %v1594 = vpop.f32.mrf.mxu0
      %v1595 = vadd.f32 0.0, %v1594
      %v1596 = vpop.f32.mrf.mxu0
      %v1597 = vpop.f32.mrf.mxu0
      %v1598 = vadd.f32 0.0, %v1597
      %v1599 = vpop.f32.mrf.mxu0
      %1600 = vmatprep.mubr.bf16.mxu0 0
      %1601 = vmatmul.mubr.bf16.gmra.mxu0 %v1197
      %v1602 = vpop.f32.mrf.mxu0
      %v1603 = vadd.f32 0.0, %v1602
      %v1604 = vpop.f32.mrf.mxu0
      %v1605 = vpop.f32.mrf.mxu0
      %v1606 = vadd.f32 0.0, %v1605
      %v1607 = vpop.f32.mrf.mxu0
      %1608 = vmatprep.mubr.bf16.mxu0 0
      %1609 = vmatmul.mubr.bf16.gmra.mxu0 %v1199
      %v1610 = vpop.f32.mrf.mxu0
      %v1611 = vadd.f32 0.0, %v1610
      %v1612 = vpop.f32.mrf.mxu0
      %v1613 = vpop.f32.mrf.mxu0
      %v1614 = vadd.f32 0.0, %v1613
      %v1615 = vpop.f32.mrf.mxu0
      %1616 = vmatprep.mubr.bf16.mxu0 0
      %1617 = vmatmul.mubr.bf16.gmra.mxu0 %v1201
      %v1618 = vpop.f32.mrf.mxu0
      %v1619 = vadd.f32 0.0, %v1618
      %v1620 = vpop.f32.mrf.mxu0
      %v1621 = vpop.f32.mrf.mxu0
      %v1622 = vadd.f32 0.0, %v1621
      %v1623 = vpop.f32.mrf.mxu0
      %1624 = vmatprep.mubr.bf16.mxu0 0
      %1625 = vmatmul.mubr.bf16.gmra.mxu0 %v1203
      %v1626 = vpop.f32.mrf.mxu0
      %v1627 = vadd.f32 0.0, %v1626
      %v1628 = vpop.f32.mrf.mxu0
      %v1629 = vpop.f32.mrf.mxu0
      %v1630 = vadd.f32 0.0, %v1629
      %v1631 = vpop.f32.mrf.mxu0
      %1632 = vmatprep.mubr.bf16.mxu0 0
      %1633 = vmatmul.mubr.bf16.gmra.mxu0 %v1205
      %v1634 = vpop.f32.mrf.mxu0
      %v1635 = vadd.f32 0.0, %v1634
      %v1636 = vpop.f32.mrf.mxu0
      %v1637 = vpop.f32.mrf.mxu0
      %v1638 = vadd.f32 0.0, %v1637
      %v1639 = vpop.f32.mrf.mxu0
      %1640 = vmatprep.mubr.bf16.mxu0 0
      %1641 = vmatmul.mubr.bf16.gmra.mxu0 %v1207
      %v1642 = vpop.f32.mrf.mxu0
      %v1643 = vadd.f32 0.0, %v1642
      %v1644 = vpop.f32.mrf.mxu0
      %v1645 = vpop.f32.mrf.mxu0
      %v1646 = vadd.f32 0.0, %v1645
      %v1647 = vpop.f32.mrf.mxu0
      %1648 = vmatprep.mubr.bf16.mxu0 0
      %1649 = vmatmul.mubr.bf16.gmra.mxu0 %v1209
      %v1650 = vpop.f32.mrf.mxu0
      %v1651 = vadd.f32 0.0, %v1650
      %v1652 = vpop.f32.mrf.mxu0
      %v1653 = vpop.f32.mrf.mxu0
      %v1654 = vadd.f32 0.0, %v1653
      %v1655 = vpop.f32.mrf.mxu0
      %1656 = vmatprep.mubr.bf16.mxu0 0
      %1657 = vmatmul.mubr.bf16.gmra.mxu0 %v1211
      %v1658 = vpop.f32.mrf.mxu0
      %v1659 = vadd.f32 0.0, %v1658
      %v1660 = vpop.f32.mrf.mxu0
      %v1661 = vpop.f32.mrf.mxu0
      %v1662 = vadd.f32 0.0, %v1661
      %v1663 = vpop.f32.mrf.mxu0
      %1664 = vmatprep.mubr.bf16.mxu0 0
      %1665 = vmatmul.mubr.bf16.gmra.mxu0 %v1213
      %v1666 = vpop.f32.mrf.mxu0
      %v1667 = vadd.f32 0.0, %v1666
      %v1668 = vpop.f32.mrf.mxu0
      %v1669 = vpop.f32.mrf.mxu0
      %v1670 = vadd.f32 0.0, %v1669
      %v1671 = vpop.f32.mrf.mxu0
      %1672 = vmatprep.mubr.bf16.mxu0 0
      %1673 = vmatmul.mubr.bf16.gmra.mxu0 %v1215
      %v1674 = vpop.f32.mrf.mxu0
      %v1675 = vadd.f32 0.0, %v1674
      %v1676 = vpop.f32.mrf.mxu0
      %v1677 = vpop.f32.mrf.mxu0
      %v1678 = vadd.f32 0.0, %v1677
      %v1679 = vpop.f32.mrf.mxu0
      %1680 = vmatprep.mubr.bf16.mxu0 0
      %1681 = vmatmul.mubr.bf16.gmra.mxu0 %v1217
      %v1682 = vpop.f32.mrf.mxu0
      %v1683 = vadd.f32 0.0, %v1682
      %v1684 = vpop.f32.mrf.mxu0
      %v1685 = vpop.f32.mrf.mxu0
      %v1686 = vadd.f32 0.0, %v1685
      %v1687 = vpop.f32.mrf.mxu0
      %1688 = vmatprep.mubr.bf16.mxu0 0
      %1689 = vmatmul.mubr.bf16.gmra.mxu0 %v1219
      %v1690 = vpop.f32.mrf.mxu0
      %v1691 = vadd.f32 0.0, %v1690
      %v1692 = vpop.f32.mrf.mxu0
      %v1693 = vpop.f32.mrf.mxu0
      %v1694 = vadd.f32 0.0, %v1693
      %v1695 = vpop.f32.mrf.mxu0
      %1696 = vmatprep.mubr.bf16.mxu0 0
      %1697 = vmatmul.mubr.bf16.gmra.mxu0 %v1494
      %v1698 = vpop.f32.mrf.mxu0
      %v1699 = vadd.f32 0.0, %v1698
      %v1700 = vpop.f32.mrf.mxu0
      %v1701 = vpop.f32.mrf.mxu0
      %v1702 = vadd.f32 0.0, %v1701
      %v1703 = vpop.f32.mrf.mxu0
      %1704 = vdwg.mxu0
      %v1705 = vadd.f32 %v1445, %v1579
      %v1706 = vadd.f32 %v1446, %v1582
      %v1707 = vadd.f32 %v1447, %v1587
      %v1708 = vadd.f32 %v1448, %v1590
      %v1709 = vadd.f32 %v1449, %v1595
      %v1710 = vadd.f32 %v1450, %v1598
      %v1711 = vadd.f32 %v1451, %v1603
      %v1712 = vadd.f32 %v1452, %v1606
      %v1713 = vadd.f32 %v1453, %v1611
      %v1714 = vadd.f32 %v1454, %v1614
      %v1715 = vadd.f32 %v1455, %v1619
      %v1716 = vadd.f32 %v1456, %v1622
      %v1717 = vadd.f32 %v1457, %v1627
      %v1718 = vadd.f32 %v1458, %v1630
      %v1719 = vadd.f32 %v1459, %v1635
      %v1720 = vadd.f32 %v1460, %v1638
      %v1721 = vadd.f32 %v1461, %v1643
      %v1722 = vadd.f32 %v1462, %v1646
      %v1723 = vadd.f32 %v1463, %v1651
      %v1724 = vadd.f32 %v1464, %v1654
      %v1725 = vadd.f32 %v1465, %v1659
      %v1726 = vadd.f32 %v1466, %v1662
      %v1727 = vadd.f32 %v1467, %v1667
      %v1728 = vadd.f32 %v1468, %v1670
      %v1729 = vadd.f32 %v1469, %v1675
      %v1730 = vadd.f32 %v1470, %v1678
      %v1731 = vadd.f32 %v1471, %v1683
      %v1732 = vadd.f32 %v1472, %v1686
      %v1733 = vadd.f32 %v1473, %v1691
      %v1734 = vadd.f32 %v1474, %v1694
      %v1735 = vadd.f32 %v1475, %v1699
      %v1736 = vadd.f32 %v1476, %v1702
      %v1737 = vld [vmem:[%s390 + $0x100] sm:$0xf]
      %v1738 = vld [vmem:[%s390 + $0x104] sm:$0xf]
      %v1739 = vld [vmem:[%s390 + $0x108] sm:$0xf]
      %v1740 = vld [vmem:[%s390 + $0x10c] sm:$0xf]
      %v1741 = vld [vmem:[%s390 + $0x110] sm:$0xf]
      %v1742 = vld [vmem:[%s390 + $0x114] sm:$0xf]
      %v1743 = vld [vmem:[%s390 + $0x118] sm:$0xf]
      %v1744 = vld [vmem:[%s390 + $0x11c] sm:$0xf]
      %v1745 = vld [vmem:[%s390 + $0x120] sm:$0xf]
      %v1746 = vld [vmem:[%s390 + $0x124] sm:$0xf]
      %v1747 = vld [vmem:[%s390 + $0x128] sm:$0xf]
      %v1748 = vld [vmem:[%s390 + $0x12c] sm:$0xf]
      %v1749 = vld [vmem:[%s390 + $0x130] sm:$0xf]
      %v1750 = vld [vmem:[%s390 + $0x134] sm:$0xf]
      %v1751 = vld [vmem:[%s390 + $0x138] sm:$0xf]
      %v1752 = vld [vmem:[%s390 + $0x13c] sm:$0xf]
      %vm1753 = vsmask.f32 6400
      %v1754 = vrot.slane %v616, 1
      %v1755 = vrot.slane %v612, 2
      %v1756 = vor.u32 %v1754, %v1755
      %v1757 = vrot.slane %v624, 1
      %v1758 = vrot.slane %v620, 2
      %v1759 = vor.u32 %v1757, %v1758
      %v1760 = vsel %vm1753, %v1756, %v1759
      %v1761 = vrot.slane %v632, 1
      %v1762 = vrot.slane %v628, 2
      %v1763 = vor.u32 %v1761, %v1762
      %v1764 = vsel %vm1753, %v1759, %v1763
      %v1765 = vrot.slane %v640, 1
      %v1766 = vrot.slane %v636, 2
      %v1767 = vor.u32 %v1765, %v1766
      %v1768 = vsel %vm1753, %v1763, %v1767
      %v1769 = vrot.slane %v648, 1
      %v1770 = vrot.slane %v644, 2
      %v1771 = vor.u32 %v1769, %v1770
      %v1772 = vsel %vm1753, %v1767, %v1771
      %v1773 = vrot.slane %v656, 1
      %v1774 = vrot.slane %v652, 2
      %v1775 = vor.u32 %v1773, %v1774
      %v1776 = vsel %vm1753, %v1771, %v1775
      %v1777 = vrot.slane %v664, 1
      %v1778 = vrot.slane %v660, 2
      %v1779 = vor.u32 %v1777, %v1778
      %v1780 = vsel %vm1753, %v1775, %v1779
      %v1781 = vrot.slane %v672, 1
      %v1782 = vrot.slane %v668, 2
      %v1783 = vor.u32 %v1781, %v1782
      %v1784 = vsel %vm1753, %v1779, %v1783
      %v1785 = vrot.slane %v680, 1
      %v1786 = vrot.slane %v676, 2
      %v1787 = vor.u32 %v1785, %v1786
      %v1788 = vsel %vm1753, %v1783, %v1787
      %v1789 = vrot.slane %v688, 1
      %v1790 = vrot.slane %v684, 2
      %v1791 = vor.u32 %v1789, %v1790
      %v1792 = vsel %vm1753, %v1787, %v1791
      %v1793 = vrot.slane %v696, 1
      %v1794 = vrot.slane %v692, 2
      %v1795 = vor.u32 %v1793, %v1794
      %v1796 = vsel %vm1753, %v1791, %v1795
      %v1797 = vrot.slane %v704, 1
      %v1798 = vrot.slane %v700, 2
      %v1799 = vor.u32 %v1797, %v1798
      %v1800 = vsel %vm1753, %v1795, %v1799
      %v1801 = vrot.slane %v712, 1
      %v1802 = vrot.slane %v708, 2
      %v1803 = vor.u32 %v1801, %v1802
      %v1804 = vsel %vm1753, %v1799, %v1803
      %v1805 = vrot.slane %v720, 1
      %v1806 = vrot.slane %v716, 2
      %v1807 = vor.u32 %v1805, %v1806
      %v1808 = vsel %vm1753, %v1803, %v1807
      %v1809 = vrot.slane %v728, 1
      %v1810 = vrot.slane %v724, 2
      %v1811 = vor.u32 %v1809, %v1810
      %v1812 = vsel %vm1753, %v1807, %v1811
      %v1813 = vshrl.u32 %v568, 16
      %v1815 = vrot.slane %v1813, 1
      %v1816 = vrot.slane %v732, 2
      %v1817 = vor.u32 %v1815, %v1816
      %v1818 = vsel %vm1753, %v1811, %v1817
      %v1820 = vshrl.u32 %v569, 16
      %v1822 = vrot.slane %v1820, 1
      %v1823 = vshll.u32 %v569, 16
      %v1825 = vrot.slane %v1823, 2
      %v1826 = vor.u32 %v1822, %v1825
      %v1827 = vsel %vm1753, %v1817, %v1826
      %v1860 = vunpack.c.l.b16 %v1737
      %v1861 = vunpack.c.l.b16 %v1738
      %v1862 = vunpack.c.l.b16 %v1739
      %v1863 = vunpack.c.l.b16 %v1740
      %v1864 = vunpack.c.l.b16 %v1741
      %v1865 = vunpack.c.l.b16 %v1742
      %v1866 = vunpack.c.l.b16 %v1743
      %v1867 = vunpack.c.l.b16 %v1744
      %v1868 = vunpack.c.l.b16 %v1745
      %v1869 = vunpack.c.l.b16 %v1746
      %v1870 = vunpack.c.l.b16 %v1747
      %v1871 = vunpack.c.l.b16 %v1748
      %v1872 = vunpack.c.l.b16 %v1749
      %v1873 = vunpack.c.l.b16 %v1750
      %v1874 = vunpack.c.l.b16 %v1751
      %v1875 = vunpack.c.l.b16 %v1752
      %v1876 = vpack.c.b16 %v1861, %v1860
      %v1877 = vpack.c.b16 %v1863, %v1862
      %v1878 = vpack.c.b16 %v1865, %v1864
      %v1879 = vpack.c.b16 %v1867, %v1866
      %v1880 = vpack.c.b16 %v1869, %v1868
      %v1881 = vpack.c.b16 %v1871, %v1870
      %v1882 = vpack.c.b16 %v1873, %v1872
      %v1883 = vpack.c.b16 %v1875, %v1874
      %1892 = vmatprep.subr.bf16.mxu0 0
      %1893 = vmatpush1.bf16.msra.mxu0 %v1883
      %1894 = vmatprep.subr.bf16.mxu0 0
      %1895 = vmatpush1.bf16.msra.mxu0 %v1882
      %1896 = vmatprep.subr.bf16.mxu0 0
      %1897 = vmatpush1.bf16.msra.mxu0 %v1881
      %1898 = vmatprep.subr.bf16.mxu0 0
      %1899 = vmatpush1.bf16.msra.mxu0 %v1880
      %1900 = vmatprep.subr.bf16.mxu0 0
      %1901 = vmatpush1.bf16.msra.mxu0 %v1879
      %1902 = vmatprep.subr.bf16.mxu0 0
      %1903 = vmatpush1.bf16.msra.mxu0 %v1878
      %1904 = vmatprep.subr.bf16.mxu0 0
      %1905 = vmatpush1.bf16.msra.mxu0 %v1877
      %1906 = vmatprep.subr.bf16.mxu0 0
      %1907 = vmatpush1.bf16.msra.mxu0 %v1876
      %1908 = vmatprep.subr.bf16.mxu0 0
      %1909 = vmatpush2.bf16.msra.mxu0 0
      %1910 = vmatprep.subr.bf16.mxu0 0
      %1911 = vmatpush2.bf16.msra.mxu0 0
      %1912 = vmatprep.subr.bf16.mxu0 0
      %1913 = vmatpush2.bf16.msra.mxu0 0
      %1914 = vmatprep.subr.bf16.mxu0 0
      %1915 = vmatpush2.bf16.msra.mxu0 0
      %1916 = vmatprep.subr.bf16.mxu0 0
      %1917 = vmatpush2.bf16.msra.mxu0 0
      %1918 = vmatprep.subr.bf16.mxu0 0
      %1919 = vmatpush2.bf16.msra.mxu0 0
      %1920 = vmatprep.subr.bf16.mxu0 0
      %1921 = vmatpush2.bf16.msra.mxu0 0
      %1922 = vmatprep.subr.bf16.mxu0 0
      %1923 = vmatpush2.bf16.msra.mxu0 0
      %1924 = vmatprep.mubr.bf16.mxu0 0
      %1925 = vmatmul.mubr.bf16.gmra.mxu0 %v1760
      %v1926 = vpop.f32.mrf.mxu0
      %v1927 = vadd.f32 0.0, %v1926
      %v1928 = vpop.f32.mrf.mxu0
      %v1929 = vpop.f32.mrf.mxu0
      %v1930 = vadd.f32 0.0, %v1929
      %v1931 = vpop.f32.mrf.mxu0
      %1932 = vmatprep.mubr.bf16.mxu0 0
      %1933 = vmatmul.mubr.bf16.gmra.mxu0 %v1764
      %v1934 = vpop.f32.mrf.mxu0
      %v1935 = vadd.f32 0.0, %v1934
      %v1936 = vpop.f32.mrf.mxu0
      %v1937 = vpop.f32.mrf.mxu0
      %v1938 = vadd.f32 0.0, %v1937
      %v1939 = vpop.f32.mrf.mxu0
      %1940 = vmatprep.mubr.bf16.mxu0 0
      %1941 = vmatmul.mubr.bf16.gmra.mxu0 %v1768
      %v1942 = vpop.f32.mrf.mxu0
      %v1943 = vadd.f32 0.0, %v1942
      %v1944 = vpop.f32.mrf.mxu0
      %v1945 = vpop.f32.mrf.mxu0
      %v1946 = vadd.f32 0.0, %v1945
      %v1947 = vpop.f32.mrf.mxu0
      %1948 = vmatprep.mubr.bf16.mxu0 0
      %1949 = vmatmul.mubr.bf16.gmra.mxu0 %v1772
      %v1950 = vpop.f32.mrf.mxu0
      %v1951 = vadd.f32 0.0, %v1950
      %v1952 = vpop.f32.mrf.mxu0
      %v1953 = vpop.f32.mrf.mxu0
      %v1954 = vadd.f32 0.0, %v1953
      %v1955 = vpop.f32.mrf.mxu0
      %1956 = vmatprep.mubr.bf16.mxu0 0
      %1957 = vmatmul.mubr.bf16.gmra.mxu0 %v1776
      %v1958 = vpop.f32.mrf.mxu0
      %v1959 = vadd.f32 0.0, %v1958
      %v1960 = vpop.f32.mrf.mxu0
      %v1961 = vpop.f32.mrf.mxu0
      %v1962 = vadd.f32 0.0, %v1961
      %v1963 = vpop.f32.mrf.mxu0
      %1964 = vmatprep.mubr.bf16.mxu0 0
      %1965 = vmatmul.mubr.bf16.gmra.mxu0 %v1780
      %v1966 = vpop.f32.mrf.mxu0
      %v1967 = vadd.f32 0.0, %v1966
      %v1968 = vpop.f32.mrf.mxu0
      %v1969 = vpop.f32.mrf.mxu0
      %v1970 = vadd.f32 0.0, %v1969
      %v1971 = vpop.f32.mrf.mxu0
      %1972 = vmatprep.mubr.bf16.mxu0 0
      %1973 = vmatmul.mubr.bf16.gmra.mxu0 %v1784
      %v1974 = vpop.f32.mrf.mxu0
      %v1975 = vadd.f32 0.0, %v1974
      %v1976 = vpop.f32.mrf.mxu0
      %v1977 = vpop.f32.mrf.mxu0
      %v1978 = vadd.f32 0.0, %v1977
      %v1979 = vpop.f32.mrf.mxu0
      %1980 = vmatprep.mubr.bf16.mxu0 0
      %1981 = vmatmul.mubr.bf16.gmra.mxu0 %v1788
      %v1982 = vpop.f32.mrf.mxu0
      %v1983 = vadd.f32 0.0, %v1982
      %v1984 = vpop.f32.mrf.mxu0
      %v1985 = vpop.f32.mrf.mxu0
      %v1986 = vadd.f32 0.0, %v1985
      %v1987 = vpop.f32.mrf.mxu0
      %1988 = vmatprep.mubr.bf16.mxu0 0
      %1989 = vmatmul.mubr.bf16.gmra.mxu0 %v1792
      %v1990 = vpop.f32.mrf.mxu0
      %v1991 = vadd.f32 0.0, %v1990
      %v1992 = vpop.f32.mrf.mxu0
      %v1993 = vpop.f32.mrf.mxu0
      %v1994 = vadd.f32 0.0, %v1993
      %v1995 = vpop.f32.mrf.mxu0
      %1996 = vmatprep.mubr.bf16.mxu0 0
      %1997 = vmatmul.mubr.bf16.gmra.mxu0 %v1796
      %v1998 = vpop.f32.mrf.mxu0
      %v1999 = vadd.f32 0.0, %v1998
      %v2000 = vpop.f32.mrf.mxu0
      %v2001 = vpop.f32.mrf.mxu0
      %v2002 = vadd.f32 0.0, %v2001
      %v2003 = vpop.f32.mrf.mxu0
      %2004 = vmatprep.mubr.bf16.mxu0 0
      %2005 = vmatmul.mubr.bf16.gmra.mxu0 %v1800
      %v2006 = vpop.f32.mrf.mxu0
      %v2007 = vadd.f32 0.0, %v2006
      %v2008 = vpop.f32.mrf.mxu0
      %v2009 = vpop.f32.mrf.mxu0
      %v2010 = vadd.f32 0.0, %v2009
      %v2011 = vpop.f32.mrf.mxu0
      %2012 = vmatprep.mubr.bf16.mxu0 0
      %2013 = vmatmul.mubr.bf16.gmra.mxu0 %v1804
      %v2014 = vpop.f32.mrf.mxu0
      %v2015 = vadd.f32 0.0, %v2014
      %v2016 = vpop.f32.mrf.mxu0
      %v2017 = vpop.f32.mrf.mxu0
      %v2018 = vadd.f32 0.0, %v2017
      %v2019 = vpop.f32.mrf.mxu0
      %2020 = vmatprep.mubr.bf16.mxu0 0
      %2021 = vmatmul.mubr.bf16.gmra.mxu0 %v1808
      %v2022 = vpop.f32.mrf.mxu0
      %v2023 = vadd.f32 0.0, %v2022
      %v2024 = vpop.f32.mrf.mxu0
      %v2025 = vpop.f32.mrf.mxu0
      %v2026 = vadd.f32 0.0, %v2025
      %v2027 = vpop.f32.mrf.mxu0
      %2028 = vmatprep.mubr.bf16.mxu0 0
      %2029 = vmatmul.mubr.bf16.gmra.mxu0 %v1812
      %v2030 = vpop.f32.mrf.mxu0
      %v2031 = vadd.f32 0.0, %v2030
      %v2032 = vpop.f32.mrf.mxu0
      %v2033 = vpop.f32.mrf.mxu0
      %v2034 = vadd.f32 0.0, %v2033
      %v2035 = vpop.f32.mrf.mxu0
      %2036 = vmatprep.mubr.bf16.mxu0 0
      %2037 = vmatmul.mubr.bf16.gmra.mxu0 %v1818
      %v2038 = vpop.f32.mrf.mxu0
      %v2039 = vadd.f32 0.0, %v2038
      %v2040 = vpop.f32.mrf.mxu0
      %v2041 = vpop.f32.mrf.mxu0
      %v2042 = vadd.f32 0.0, %v2041
      %v2043 = vpop.f32.mrf.mxu0
      %2044 = vmatprep.mubr.bf16.mxu0 0
      %2045 = vmatmul.mubr.bf16.gmra.mxu0 %v1827
      %v2046 = vpop.f32.mrf.mxu0
      %v2047 = vadd.f32 0.0, %v2046
      %v2048 = vpop.f32.mrf.mxu0
      %v2049 = vpop.f32.mrf.mxu0
      %v2050 = vadd.f32 0.0, %v2049
      %v2051 = vpop.f32.mrf.mxu0
      %2052 = vdwg.mxu0
      %v2053 = vadd.f32 %v1705, %v1927
      %v2054 = vadd.f32 %v1706, %v1930
      %v2055 = vadd.f32 %v1707, %v1935
      %v2056 = vadd.f32 %v1708, %v1938
      %v2057 = vadd.f32 %v1709, %v1943
      %v2058 = vadd.f32 %v1710, %v1946
      %v2059 = vadd.f32 %v1711, %v1951
      %v2060 = vadd.f32 %v1712, %v1954
      %v2061 = vadd.f32 %v1713, %v1959
      %v2062 = vadd.f32 %v1714, %v1962
      %v2063 = vadd.f32 %v1715, %v1967
      %v2064 = vadd.f32 %v1716, %v1970
      %v2065 = vadd.f32 %v1717, %v1975
      %v2066 = vadd.f32 %v1718, %v1978
      %v2067 = vadd.f32 %v1719, %v1983
      %v2068 = vadd.f32 %v1720, %v1986
      %v2069 = vadd.f32 %v1721, %v1991
      %v2070 = vadd.f32 %v1722, %v1994
      %v2071 = vadd.f32 %v1723, %v1999
      %v2072 = vadd.f32 %v1724, %v2002
      %v2073 = vadd.f32 %v1725, %v2007
      %v2074 = vadd.f32 %v1726, %v2010
      %v2075 = vadd.f32 %v1727, %v2015
      %v2076 = vadd.f32 %v1728, %v2018
      %v2077 = vadd.f32 %v1729, %v2023
      %v2078 = vadd.f32 %v1730, %v2026
      %v2079 = vadd.f32 %v1731, %v2031
      %v2080 = vadd.f32 %v1732, %v2034
      %v2081 = vadd.f32 %v1733, %v2039
      %v2082 = vadd.f32 %v1734, %v2042
      %v2083 = vadd.f32 %v1735, %v2047
      %v2084 = vadd.f32 %v1736, %v2050
      %v2085 = vld [vmem:[%s390 + $0x140] sm:$0xf]
      %v2086 = vld [vmem:[%s390 + $0x144] sm:$0xf]
      %v2087 = vld [vmem:[%s390 + $0x148] sm:$0xf]
      %v2088 = vld [vmem:[%s390 + $0x14c] sm:$0xf]
      %v2089 = vld [vmem:[%s390 + $0x150] sm:$0xf]
      %v2090 = vld [vmem:[%s390 + $0x154] sm:$0xf]
      %v2091 = vld [vmem:[%s390 + $0x158] sm:$0xf]
      %v2092 = vld [vmem:[%s390 + $0x15c] sm:$0xf]
      %v2093 = vld [vmem:[%s390 + $0x160] sm:$0xf]
      %v2094 = vld [vmem:[%s390 + $0x164] sm:$0xf]
      %v2095 = vld [vmem:[%s390 + $0x168] sm:$0xf]
      %v2096 = vld [vmem:[%s390 + $0x16c] sm:$0xf]
      %v2097 = vld [vmem:[%s390 + $0x170] sm:$0xf]
      %v2098 = vld [vmem:[%s390 + $0x174] sm:$0xf]
      %v2099 = vld [vmem:[%s390 + $0x178] sm:$0xf]
      %v2100 = vld [vmem:[%s390 + $0x17c] sm:$0xf]
      %vm2101 = vcmask 1045504
      %v2102 = vrot.slane %v525, 2
      %v2103 = vrot.slane %v526, 2
      %v2104 = vsel %vm2101, %v2102, %v2103
      %v2105 = vrot.slane %v527, 2
      %v2106 = vsel %vm2101, %v2103, %v2105
      %v2107 = vrot.slane %v528, 2
      %v2108 = vsel %vm2101, %v2105, %v2107
      %v2109 = vrot.slane %v529, 2
      %v2110 = vsel %vm2101, %v2107, %v2109
      %v2111 = vrot.slane %v530, 2
      %v2112 = vsel %vm2101, %v2109, %v2111
      %v2113 = vrot.slane %v531, 2
      %v2114 = vsel %vm2101, %v2111, %v2113
      %v2115 = vrot.slane %v532, 2
      %v2116 = vsel %vm2101, %v2113, %v2115
      %v2117 = vrot.slane %v533, 2
      %v2118 = vsel %vm2101, %v2115, %v2117
      %v2119 = vrot.slane %v534, 2
      %v2120 = vsel %vm2101, %v2117, %v2119
      %v2121 = vrot.slane %v535, 2
      %v2122 = vsel %vm2101, %v2119, %v2121
      %v2123 = vrot.slane %v536, 2
      %v2124 = vsel %vm2101, %v2121, %v2123
      %v2125 = vrot.slane %v537, 2
      %v2126 = vsel %vm2101, %v2123, %v2125
      %v2127 = vrot.slane %v538, 2
      %v2128 = vsel %vm2101, %v2125, %v2127
      %v2129 = vrot.slane %v539, 2
      %v2130 = vsel %vm2101, %v2127, %v2129
      %v2131 = vrot.slane %v568, 2
      %v2132 = vsel %vm2101, %v2129, %v2131
      %v2133 = vrot.slane %v569, 2
      %v2134 = vsel %vm2101, %v2131, %v2133
      %v2167 = vunpack.c.l.b16 %v2085
      %v2168 = vunpack.c.l.b16 %v2086
      %v2169 = vunpack.c.l.b16 %v2087
      %v2170 = vunpack.c.l.b16 %v2088
      %v2171 = vunpack.c.l.b16 %v2089
      %v2172 = vunpack.c.l.b16 %v2090
      %v2173 = vunpack.c.l.b16 %v2091
      %v2174 = vunpack.c.l.b16 %v2092
      %v2175 = vunpack.c.l.b16 %v2093
      %v2176 = vunpack.c.l.b16 %v2094
      %v2177 = vunpack.c.l.b16 %v2095
      %v2178 = vunpack.c.l.b16 %v2096
      %v2179 = vunpack.c.l.b16 %v2097
      %v2180 = vunpack.c.l.b16 %v2098
      %v2181 = vunpack.c.l.b16 %v2099
      %v2182 = vunpack.c.l.b16 %v2100
      %v2183 = vpack.c.b16 %v2168, %v2167
      %v2184 = vpack.c.b16 %v2170, %v2169
      %v2185 = vpack.c.b16 %v2172, %v2171
      %v2186 = vpack.c.b16 %v2174, %v2173
      %v2187 = vpack.c.b16 %v2176, %v2175
      %v2188 = vpack.c.b16 %v2178, %v2177
      %v2189 = vpack.c.b16 %v2180, %v2179
      %v2190 = vpack.c.b16 %v2182, %v2181
      %2199 = vmatprep.subr.bf16.mxu0 0
      %2200 = vmatpush1.bf16.msra.mxu0 %v2190
      %2201 = vmatprep.subr.bf16.mxu0 0
      %2202 = vmatpush1.bf16.msra.mxu0 %v2189
      %2203 = vmatprep.subr.bf16.mxu0 0
      %2204 = vmatpush1.bf16.msra.mxu0 %v2188
      %2205 = vmatprep.subr.bf16.mxu0 0
      %2206 = vmatpush1.bf16.msra.mxu0 %v2187
      %2207 = vmatprep.subr.bf16.mxu0 0
      %2208 = vmatpush1.bf16.msra.mxu0 %v2186
      %2209 = vmatprep.subr.bf16.mxu0 0
      %2210 = vmatpush1.bf16.msra.mxu0 %v2185
      %2211 = vmatprep.subr.bf16.mxu0 0
      %2212 = vmatpush1.bf16.msra.mxu0 %v2184
      %2213 = vmatprep.subr.bf16.mxu0 0
      %2214 = vmatpush1.bf16.msra.mxu0 %v2183
      %2215 = vmatprep.subr.bf16.mxu0 0
      %2216 = vmatpush2.bf16.msra.mxu0 0
      %2217 = vmatprep.subr.bf16.mxu0 0
      %2218 = vmatpush2.bf16.msra.mxu0 0
      %2219 = vmatprep.subr.bf16.mxu0 0
      %2220 = vmatpush2.bf16.msra.mxu0 0
      %2221 = vmatprep.subr.bf16.mxu0 0
      %2222 = vmatpush2.bf16.msra.mxu0 0
      %2223 = vmatprep.subr.bf16.mxu0 0
      %2224 = vmatpush2.bf16.msra.mxu0 0
      %2225 = vmatprep.subr.bf16.mxu0 0
      %2226 = vmatpush2.bf16.msra.mxu0 0
      %2227 = vmatprep.subr.bf16.mxu0 0
      %2228 = vmatpush2.bf16.msra.mxu0 0
      %2229 = vmatprep.subr.bf16.mxu0 0
      %2230 = vmatpush2.bf16.msra.mxu0 0
      %2231 = vmatprep.mubr.bf16.mxu0 0
      %2232 = vmatmul.mubr.bf16.gmra.mxu0 %v2104
      %v2233 = vpop.f32.mrf.mxu0
      %v2234 = vadd.f32 0.0, %v2233
      %v2235 = vpop.f32.mrf.mxu0
      %v2236 = vpop.f32.mrf.mxu0
      %v2237 = vadd.f32 0.0, %v2236
      %v2238 = vpop.f32.mrf.mxu0
      %2239 = vmatprep.mubr.bf16.mxu0 0
      %2240 = vmatmul.mubr.bf16.gmra.mxu0 %v2106
      %v2241 = vpop.f32.mrf.mxu0
      %v2242 = vadd.f32 0.0, %v2241
      %v2243 = vpop.f32.mrf.mxu0
      %v2244 = vpop.f32.mrf.mxu0
      %v2245 = vadd.f32 0.0, %v2244
      %v2246 = vpop.f32.mrf.mxu0
      %2247 = vmatprep.mubr.bf16.mxu0 0
      %2248 = vmatmul.mubr.bf16.gmra.mxu0 %v2108
      %v2249 = vpop.f32.mrf.mxu0
      %v2250 = vadd.f32 0.0, %v2249
      %v2251 = vpop.f32.mrf.mxu0
      %v2252 = vpop.f32.mrf.mxu0
      %v2253 = vadd.f32 0.0, %v2252
      %v2254 = vpop.f32.mrf.mxu0
      %2255 = vmatprep.mubr.bf16.mxu0 0
      %2256 = vmatmul.mubr.bf16.gmra.mxu0 %v2110
      %v2257 = vpop.f32.mrf.mxu0
      %v2258 = vadd.f32 0.0, %v2257
      %v2259 = vpop.f32.mrf.mxu0
      %v2260 = vpop.f32.mrf.mxu0
      %v2261 = vadd.f32 0.0, %v2260
      %v2262 = vpop.f32.mrf.mxu0
      %2263 = vmatprep.mubr.bf16.mxu0 0
      %2264 = vmatmul.mubr.bf16.gmra.mxu0 %v2112
      %v2265 = vpop.f32.mrf.mxu0
      %v2266 = vadd.f32 0.0, %v2265
      %v2267 = vpop.f32.mrf.mxu0
      %v2268 = vpop.f32.mrf.mxu0
      %v2269 = vadd.f32 0.0, %v2268
      %v2270 = vpop.f32.mrf.mxu0
      %2271 = vmatprep.mubr.bf16.mxu0 0
      %2272 = vmatmul.mubr.bf16.gmra.mxu0 %v2114
      %v2273 = vpop.f32.mrf.mxu0
      %v2274 = vadd.f32 0.0, %v2273
      %v2275 = vpop.f32.mrf.mxu0
      %v2276 = vpop.f32.mrf.mxu0
      %v2277 = vadd.f32 0.0, %v2276
      %v2278 = vpop.f32.mrf.mxu0
      %2279 = vmatprep.mubr.bf16.mxu0 0
      %2280 = vmatmul.mubr.bf16.gmra.mxu0 %v2116
      %v2281 = vpop.f32.mrf.mxu0
      %v2282 = vadd.f32 0.0, %v2281
      %v2283 = vpop.f32.mrf.mxu0
      %v2284 = vpop.f32.mrf.mxu0
      %v2285 = vadd.f32 0.0, %v2284
      %v2286 = vpop.f32.mrf.mxu0
      %2287 = vmatprep.mubr.bf16.mxu0 0
      %2288 = vmatmul.mubr.bf16.gmra.mxu0 %v2118
      %v2289 = vpop.f32.mrf.mxu0
      %v2290 = vadd.f32 0.0, %v2289
      %v2291 = vpop.f32.mrf.mxu0
      %v2292 = vpop.f32.mrf.mxu0
      %v2293 = vadd.f32 0.0, %v2292
      %v2294 = vpop.f32.mrf.mxu0
      %2295 = vmatprep.mubr.bf16.mxu0 0
      %2296 = vmatmul.mubr.bf16.gmra.mxu0 %v2120
      %v2297 = vpop.f32.mrf.mxu0
      %v2298 = vadd.f32 0.0, %v2297
      %v2299 = vpop.f32.mrf.mxu0
      %v2300 = vpop.f32.mrf.mxu0
      %v2301 = vadd.f32 0.0, %v2300
      %v2302 = vpop.f32.mrf.mxu0
      %2303 = vmatprep.mubr.bf16.mxu0 0
      %2304 = vmatmul.mubr.bf16.gmra.mxu0 %v2122
      %v2305 = vpop.f32.mrf.mxu0
      %v2306 = vadd.f32 0.0, %v2305
      %v2307 = vpop.f32.mrf.mxu0
      %v2308 = vpop.f32.mrf.mxu0
      %v2309 = vadd.f32 0.0, %v2308
      %v2310 = vpop.f32.mrf.mxu0
      %2311 = vmatprep.mubr.bf16.mxu0 0
      %2312 = vmatmul.mubr.bf16.gmra.mxu0 %v2124
      %v2313 = vpop.f32.mrf.mxu0
      %v2314 = vadd.f32 0.0, %v2313
      %v2315 = vpop.f32.mrf.mxu0
      %v2316 = vpop.f32.mrf.mxu0
      %v2317 = vadd.f32 0.0, %v2316
      %v2318 = vpop.f32.mrf.mxu0
      %2319 = vmatprep.mubr.bf16.mxu0 0
      %2320 = vmatmul.mubr.bf16.gmra.mxu0 %v2126
      %v2321 = vpop.f32.mrf.mxu0
      %v2322 = vadd.f32 0.0, %v2321
      %v2323 = vpop.f32.mrf.mxu0
      %v2324 = vpop.f32.mrf.mxu0
      %v2325 = vadd.f32 0.0, %v2324
      %v2326 = vpop.f32.mrf.mxu0
      %2327 = vmatprep.mubr.bf16.mxu0 0
      %2328 = vmatmul.mubr.bf16.gmra.mxu0 %v2128
      %v2329 = vpop.f32.mrf.mxu0
      %v2330 = vadd.f32 0.0, %v2329
      %v2331 = vpop.f32.mrf.mxu0
      %v2332 = vpop.f32.mrf.mxu0
      %v2333 = vadd.f32 0.0, %v2332
      %v2334 = vpop.f32.mrf.mxu0
      %2335 = vmatprep.mubr.bf16.mxu0 0
      %2336 = vmatmul.mubr.bf16.gmra.mxu0 %v2130
      %v2337 = vpop.f32.mrf.mxu0
      %v2338 = vadd.f32 0.0, %v2337
      %v2339 = vpop.f32.mrf.mxu0
      %v2340 = vpop.f32.mrf.mxu0
      %v2341 = vadd.f32 0.0, %v2340
      %v2342 = vpop.f32.mrf.mxu0
      %2343 = vmatprep.mubr.bf16.mxu0 0
      %2344 = vmatmul.mubr.bf16.gmra.mxu0 %v2132
      %v2345 = vpop.f32.mrf.mxu0
      %v2346 = vadd.f32 0.0, %v2345
      %v2347 = vpop.f32.mrf.mxu0
      %v2348 = vpop.f32.mrf.mxu0
      %v2349 = vadd.f32 0.0, %v2348
      %v2350 = vpop.f32.mrf.mxu0
      %2351 = vmatprep.mubr.bf16.mxu0 0
      %2352 = vmatmul.mubr.bf16.gmra.mxu0 %v2134
      %v2353 = vpop.f32.mrf.mxu0
      %v2354 = vadd.f32 0.0, %v2353
      %v2355 = vpop.f32.mrf.mxu0
      %v2356 = vpop.f32.mrf.mxu0
      %v2357 = vadd.f32 0.0, %v2356
      %v2358 = vpop.f32.mrf.mxu0
      %2359 = vdwg.mxu0
      %v2360 = vadd.f32 %v2053, %v2234
      %v2361 = vadd.f32 %v2054, %v2237
      %v2362 = vadd.f32 %v2055, %v2242
      %v2363 = vadd.f32 %v2056, %v2245
      %v2364 = vadd.f32 %v2057, %v2250
      %v2365 = vadd.f32 %v2058, %v2253
      %v2366 = vadd.f32 %v2059, %v2258
      %v2367 = vadd.f32 %v2060, %v2261
      %v2368 = vadd.f32 %v2061, %v2266
      %v2369 = vadd.f32 %v2062, %v2269
      %v2370 = vadd.f32 %v2063, %v2274
      %v2371 = vadd.f32 %v2064, %v2277
      %v2372 = vadd.f32 %v2065, %v2282
      %v2373 = vadd.f32 %v2066, %v2285
      %v2374 = vadd.f32 %v2067, %v2290
      %v2375 = vadd.f32 %v2068, %v2293
      %v2376 = vadd.f32 %v2069, %v2298
      %v2377 = vadd.f32 %v2070, %v2301
      %v2378 = vadd.f32 %v2071, %v2306
      %v2379 = vadd.f32 %v2072, %v2309
      %v2380 = vadd.f32 %v2073, %v2314
      %v2381 = vadd.f32 %v2074, %v2317
      %v2382 = vadd.f32 %v2075, %v2322
      %v2383 = vadd.f32 %v2076, %v2325
      %v2384 = vadd.f32 %v2077, %v2330
      %v2385 = vadd.f32 %v2078, %v2333
      %v2386 = vadd.f32 %v2079, %v2338
      %v2387 = vadd.f32 %v2080, %v2341
      %v2388 = vadd.f32 %v2081, %v2346
      %v2389 = vadd.f32 %v2082, %v2349
      %v2390 = vadd.f32 %v2083, %v2354
      %v2391 = vadd.f32 %v2084, %v2357
      %v2392 = vld [vmem:[%s390 + $0x180] sm:$0xf]
      %v2393 = vld [vmem:[%s390 + $0x184] sm:$0xf]
      %v2394 = vld [vmem:[%s390 + $0x188] sm:$0xf]
      %v2395 = vld [vmem:[%s390 + $0x18c] sm:$0xf]
      %v2396 = vld [vmem:[%s390 + $0x190] sm:$0xf]
      %v2397 = vld [vmem:[%s390 + $0x194] sm:$0xf]
      %v2398 = vld [vmem:[%s390 + $0x198] sm:$0xf]
      %v2399 = vld [vmem:[%s390 + $0x19c] sm:$0xf]
      %v2400 = vld [vmem:[%s390 + $0x1a0] sm:$0xf]
      %v2401 = vld [vmem:[%s390 + $0x1a4] sm:$0xf]
      %v2402 = vld [vmem:[%s390 + $0x1a8] sm:$0xf]
      %v2403 = vld [vmem:[%s390 + $0x1ac] sm:$0xf]
      %v2404 = vld [vmem:[%s390 + $0x1b0] sm:$0xf]
      %v2405 = vld [vmem:[%s390 + $0x1b4] sm:$0xf]
      %v2406 = vld [vmem:[%s390 + $0x1b8] sm:$0xf]
      %v2407 = vld [vmem:[%s390 + $0x1bc] sm:$0xf]
      %v2408 = vrot.slane %v570, 2
      %v2409 = vsel %vm2101, %v2133, %v2408
      %v2427 = vunpack.c.l.b16 %v2392
      %v2428 = vunpack.c.l.b16 %v2393
      %v2429 = vunpack.c.l.b16 %v2394
      %v2430 = vunpack.c.l.b16 %v2395
      %v2431 = vunpack.c.l.b16 %v2396
      %v2432 = vunpack.c.l.b16 %v2397
      %v2433 = vunpack.c.l.b16 %v2398
      %v2434 = vunpack.c.l.b16 %v2399
      %v2435 = vunpack.c.l.b16 %v2400
      %v2436 = vunpack.c.l.b16 %v2401
      %v2437 = vunpack.c.l.b16 %v2402
      %v2438 = vunpack.c.l.b16 %v2403
      %v2439 = vunpack.c.l.b16 %v2404
      %v2440 = vunpack.c.l.b16 %v2405
      %v2441 = vunpack.c.l.b16 %v2406
      %v2442 = vunpack.c.l.b16 %v2407
      %v2443 = vpack.c.b16 %v2428, %v2427
      %v2444 = vpack.c.b16 %v2430, %v2429
      %v2445 = vpack.c.b16 %v2432, %v2431
      %v2446 = vpack.c.b16 %v2434, %v2433
      %v2447 = vpack.c.b16 %v2436, %v2435
      %v2448 = vpack.c.b16 %v2438, %v2437
      %v2449 = vpack.c.b16 %v2440, %v2439
      %v2450 = vpack.c.b16 %v2442, %v2441
      %2459 = vmatprep.subr.bf16.mxu0 0
      %2460 = vmatpush1.bf16.msra.mxu0 %v2450
      %2461 = vmatprep.subr.bf16.mxu0 0
      %2462 = vmatpush1.bf16.msra.mxu0 %v2449
      %2463 = vmatprep.subr.bf16.mxu0 0
      %2464 = vmatpush1.bf16.msra.mxu0 %v2448
      %2465 = vmatprep.subr.bf16.mxu0 0
      %2466 = vmatpush1.bf16.msra.mxu0 %v2447
      %2467 = vmatprep.subr.bf16.mxu0 0
      %2468 = vmatpush1.bf16.msra.mxu0 %v2446
      %2469 = vmatprep.subr.bf16.mxu0 0
      %2470 = vmatpush1.bf16.msra.mxu0 %v2445
      %2471 = vmatprep.subr.bf16.mxu0 0
      %2472 = vmatpush1.bf16.msra.mxu0 %v2444
      %2473 = vmatprep.subr.bf16.mxu0 0
      %2474 = vmatpush1.bf16.msra.mxu0 %v2443
      %2475 = vmatprep.subr.bf16.mxu0 0
      %2476 = vmatpush2.bf16.msra.mxu0 0
      %2477 = vmatprep.subr.bf16.mxu0 0
      %2478 = vmatpush2.bf16.msra.mxu0 0
      %2479 = vmatprep.subr.bf16.mxu0 0
      %2480 = vmatpush2.bf16.msra.mxu0 0
      %2481 = vmatprep.subr.bf16.mxu0 0
      %2482 = vmatpush2.bf16.msra.mxu0 0
      %2483 = vmatprep.subr.bf16.mxu0 0
      %2484 = vmatpush2.bf16.msra.mxu0 0
      %2485 = vmatprep.subr.bf16.mxu0 0
      %2486 = vmatpush2.bf16.msra.mxu0 0
      %2487 = vmatprep.subr.bf16.mxu0 0
      %2488 = vmatpush2.bf16.msra.mxu0 0
      %2489 = vmatprep.subr.bf16.mxu0 0
      %2490 = vmatpush2.bf16.msra.mxu0 0
      %2491 = vmatprep.mubr.bf16.mxu0 0
      %2492 = vmatmul.mubr.bf16.gmra.mxu0 %v2106
      %v2493 = vpop.f32.mrf.mxu0
      %v2494 = vadd.f32 0.0, %v2493
      %v2495 = vpop.f32.mrf.mxu0
      %v2496 = vpop.f32.mrf.mxu0
      %v2497 = vadd.f32 0.0, %v2496
      %v2498 = vpop.f32.mrf.mxu0
      %2499 = vmatprep.mubr.bf16.mxu0 0
      %2500 = vmatmul.mubr.bf16.gmra.mxu0 %v2108
      %v2501 = vpop.f32.mrf.mxu0
      %v2502 = vadd.f32 0.0, %v2501
      %v2503 = vpop.f32.mrf.mxu0
      %v2504 = vpop.f32.mrf.mxu0
      %v2505 = vadd.f32 0.0, %v2504
      %v2506 = vpop.f32.mrf.mxu0
      %2507 = vmatprep.mubr.bf16.mxu0 0
      %2508 = vmatmul.mubr.bf16.gmra.mxu0 %v2110
      %v2509 = vpop.f32.mrf.mxu0
      %v2510 = vadd.f32 0.0, %v2509
      %v2511 = vpop.f32.mrf.mxu0
      %v2512 = vpop.f32.mrf.mxu0
      %v2513 = vadd.f32 0.0, %v2512
      %v2514 = vpop.f32.mrf.mxu0
      %2515 = vmatprep.mubr.bf16.mxu0 0
      %2516 = vmatmul.mubr.bf16.gmra.mxu0 %v2112
      %v2517 = vpop.f32.mrf.mxu0
      %v2518 = vadd.f32 0.0, %v2517
      %v2519 = vpop.f32.mrf.mxu0
      %v2520 = vpop.f32.mrf.mxu0
      %v2521 = vadd.f32 0.0, %v2520
      %v2522 = vpop.f32.mrf.mxu0
      %2523 = vmatprep.mubr.bf16.mxu0 0
      %2524 = vmatmul.mubr.bf16.gmra.mxu0 %v2114
      %v2525 = vpop.f32.mrf.mxu0
      %v2526 = vadd.f32 0.0, %v2525
      %v2527 = vpop.f32.mrf.mxu0
      %v2528 = vpop.f32.mrf.mxu0
      %v2529 = vadd.f32 0.0, %v2528
      %v2530 = vpop.f32.mrf.mxu0
      %2531 = vmatprep.mubr.bf16.mxu0 0
      %2532 = vmatmul.mubr.bf16.gmra.mxu0 %v2116
      %v2533 = vpop.f32.mrf.mxu0
      %v2534 = vadd.f32 0.0, %v2533
      %v2535 = vpop.f32.mrf.mxu0
      %v2536 = vpop.f32.mrf.mxu0
      %v2537 = vadd.f32 0.0, %v2536
      %v2538 = vpop.f32.mrf.mxu0
      %2539 = vmatprep.mubr.bf16.mxu0 0
      %2540 = vmatmul.mubr.bf16.gmra.mxu0 %v2118
      %v2541 = vpop.f32.mrf.mxu0
      %v2542 = vadd.f32 0.0, %v2541
      %v2543 = vpop.f32.mrf.mxu0
      %v2544 = vpop.f32.mrf.mxu0
      %v2545 = vadd.f32 0.0, %v2544
      %v2546 = vpop.f32.mrf.mxu0
      %2547 = vmatprep.mubr.bf16.mxu0 0
      %2548 = vmatmul.mubr.bf16.gmra.mxu0 %v2120
      %v2549 = vpop.f32.mrf.mxu0
      %v2550 = vadd.f32 0.0, %v2549
      %v2551 = vpop.f32.mrf.mxu0
      %v2552 = vpop.f32.mrf.mxu0
      %v2553 = vadd.f32 0.0, %v2552
      %v2554 = vpop.f32.mrf.mxu0
      %2555 = vmatprep.mubr.bf16.mxu0 0
      %2556 = vmatmul.mubr.bf16.gmra.mxu0 %v2122
      %v2557 = vpop.f32.mrf.mxu0
      %v2558 = vadd.f32 0.0, %v2557
      %v2559 = vpop.f32.mrf.mxu0
      %v2560 = vpop.f32.mrf.mxu0
      %v2561 = vadd.f32 0.0, %v2560
      %v2562 = vpop.f32.mrf.mxu0
      %2563 = vmatprep.mubr.bf16.mxu0 0
      %2564 = vmatmul.mubr.bf16.gmra.mxu0 %v2124
      %v2565 = vpop.f32.mrf.mxu0
      %v2566 = vadd.f32 0.0, %v2565
      %v2567 = vpop.f32.mrf.mxu0
      %v2568 = vpop.f32.mrf.mxu0
      %v2569 = vadd.f32 0.0, %v2568
      %v2570 = vpop.f32.mrf.mxu0
      %2571 = vmatprep.mubr.bf16.mxu0 0
      %2572 = vmatmul.mubr.bf16.gmra.mxu0 %v2126
      %v2573 = vpop.f32.mrf.mxu0
      %v2574 = vadd.f32 0.0, %v2573
      %v2575 = vpop.f32.mrf.mxu0
      %v2576 = vpop.f32.mrf.mxu0
      %v2577 = vadd.f32 0.0, %v2576
      %v2578 = vpop.f32.mrf.mxu0
      %2579 = vmatprep.mubr.bf16.mxu0 0
      %2580 = vmatmul.mubr.bf16.gmra.mxu0 %v2128
      %v2581 = vpop.f32.mrf.mxu0
      %v2582 = vadd.f32 0.0, %v2581
      %v2583 = vpop.f32.mrf.mxu0
      %v2584 = vpop.f32.mrf.mxu0
      %v2585 = vadd.f32 0.0, %v2584
      %v2586 = vpop.f32.mrf.mxu0
      %2587 = vmatprep.mubr.bf16.mxu0 0
      %2588 = vmatmul.mubr.bf16.gmra.mxu0 %v2130
      %v2589 = vpop.f32.mrf.mxu0
      %v2590 = vadd.f32 0.0, %v2589
      %v2591 = vpop.f32.mrf.mxu0
      %v2592 = vpop.f32.mrf.mxu0
      %v2593 = vadd.f32 0.0, %v2592
      %v2594 = vpop.f32.mrf.mxu0
      %2595 = vmatprep.mubr.bf16.mxu0 0
      %2596 = vmatmul.mubr.bf16.gmra.mxu0 %v2132
      %v2597 = vpop.f32.mrf.mxu0
      %v2598 = vadd.f32 0.0, %v2597
      %v2599 = vpop.f32.mrf.mxu0
      %v2600 = vpop.f32.mrf.mxu0
      %v2601 = vadd.f32 0.0, %v2600
      %v2602 = vpop.f32.mrf.mxu0
      %2603 = vmatprep.mubr.bf16.mxu0 0
      %2604 = vmatmul.mubr.bf16.gmra.mxu0 %v2134
      %v2605 = vpop.f32.mrf.mxu0
      %v2606 = vadd.f32 0.0, %v2605
      %v2607 = vpop.f32.mrf.mxu0
      %v2608 = vpop.f32.mrf.mxu0
      %v2609 = vadd.f32 0.0, %v2608
      %v2610 = vpop.f32.mrf.mxu0
      %2611 = vmatprep.mubr.bf16.mxu0 0
      %2612 = vmatmul.mubr.bf16.gmra.mxu0 %v2409
      %v2613 = vpop.f32.mrf.mxu0
      %v2614 = vadd.f32 0.0, %v2613
      %v2615 = vpop.f32.mrf.mxu0
      %v2616 = vpop.f32.mrf.mxu0
      %v2617 = vadd.f32 0.0, %v2616
      %v2618 = vpop.f32.mrf.mxu0
      %2619 = vdwg.mxu0
      %v2620 = vadd.f32 %v2360, %v2494
      %v2621 = vadd.f32 %v2361, %v2497
      %v2622 = vadd.f32 %v2362, %v2502
      %v2623 = vadd.f32 %v2363, %v2505
      %v2624 = vadd.f32 %v2364, %v2510
      %v2625 = vadd.f32 %v2365, %v2513
      %v2626 = vadd.f32 %v2366, %v2518
      %v2627 = vadd.f32 %v2367, %v2521
      %v2628 = vadd.f32 %v2368, %v2526
      %v2629 = vadd.f32 %v2369, %v2529
      %v2630 = vadd.f32 %v2370, %v2534
      %v2631 = vadd.f32 %v2371, %v2537
      %v2632 = vadd.f32 %v2372, %v2542
      %v2633 = vadd.f32 %v2373, %v2545
      %v2634 = vadd.f32 %v2374, %v2550
      %v2635 = vadd.f32 %v2375, %v2553
      %v2636 = vadd.f32 %v2376, %v2558
      %v2637 = vadd.f32 %v2377, %v2561
      %v2638 = vadd.f32 %v2378, %v2566
      %v2639 = vadd.f32 %v2379, %v2569
      %v2640 = vadd.f32 %v2380, %v2574
      %v2641 = vadd.f32 %v2381, %v2577
      %v2642 = vadd.f32 %v2382, %v2582
      %v2643 = vadd.f32 %v2383, %v2585
      %v2644 = vadd.f32 %v2384, %v2590
      %v2645 = vadd.f32 %v2385, %v2593
      %v2646 = vadd.f32 %v2386, %v2598
      %v2647 = vadd.f32 %v2387, %v2601
      %v2648 = vadd.f32 %v2388, %v2606
      %v2649 = vadd.f32 %v2389, %v2609
      %v2650 = vadd.f32 %v2390, %v2614
      %v2651 = vadd.f32 %v2391, %v2617
      %v2652 = vld [vmem:[%s390 + $0x1c0] sm:$0xf]
      %v2653 = vld [vmem:[%s390 + $0x1c4] sm:$0xf]
      %v2654 = vld [vmem:[%s390 + $0x1c8] sm:$0xf]
      %v2655 = vld [vmem:[%s390 + $0x1cc] sm:$0xf]
      %v2656 = vld [vmem:[%s390 + $0x1d0] sm:$0xf]
      %v2657 = vld [vmem:[%s390 + $0x1d4] sm:$0xf]
      %v2658 = vld [vmem:[%s390 + $0x1d8] sm:$0xf]
      %v2659 = vld [vmem:[%s390 + $0x1dc] sm:$0xf]
      %v2660 = vld [vmem:[%s390 + $0x1e0] sm:$0xf]
      %v2661 = vld [vmem:[%s390 + $0x1e4] sm:$0xf]
      %v2662 = vld [vmem:[%s390 + $0x1e8] sm:$0xf]
      %v2663 = vld [vmem:[%s390 + $0x1ec] sm:$0xf]
      %v2664 = vld [vmem:[%s390 + $0x1f0] sm:$0xf]
      %v2665 = vld [vmem:[%s390 + $0x1f4] sm:$0xf]
      %v2666 = vld [vmem:[%s390 + $0x1f8] sm:$0xf]
      %v2667 = vld [vmem:[%s390 + $0x1fc] sm:$0xf]
      %vm2668 = vsmask.f32 5376
      %v2669 = vrot.slane %v624, 2
      %v2670 = vrot.slane %v620, 3
      %v2671 = vor.u32 %v2669, %v2670
      %v2672 = vrot.slane %v632, 2
      %v2673 = vrot.slane %v628, 3
      %v2674 = vor.u32 %v2672, %v2673
      %v2675 = vsel %vm2668, %v2671, %v2674
      %v2676 = vrot.slane %v640, 2
      %v2677 = vrot.slane %v636, 3
      %v2678 = vor.u32 %v2676, %v2677
      %v2679 = vsel %vm2668, %v2674, %v2678
      %v2680 = vrot.slane %v648, 2
      %v2681 = vrot.slane %v644, 3
      %v2682 = vor.u32 %v2680, %v2681
      %v2683 = vsel %vm2668, %v2678, %v2682
      %v2684 = vrot.slane %v656, 2
      %v2685 = vrot.slane %v652, 3
      %v2686 = vor.u32 %v2684, %v2685
      %v2687 = vsel %vm2668, %v2682, %v2686
      %v2688 = vrot.slane %v664, 2
      %v2689 = vrot.slane %v660, 3
      %v2690 = vor.u32 %v2688, %v2689
      %v2691 = vsel %vm2668, %v2686, %v2690
      %v2692 = vrot.slane %v672, 2
      %v2693 = vrot.slane %v668, 3
      %v2694 = vor.u32 %v2692, %v2693
      %v2695 = vsel %vm2668, %v2690, %v2694
      %v2696 = vrot.slane %v680, 2
      %v2697 = vrot.slane %v676, 3
      %v2698 = vor.u32 %v2696, %v2697
      %v2699 = vsel %vm2668, %v2694, %v2698
      %v2700 = vrot.slane %v688, 2
      %v2701 = vrot.slane %v684, 3
      %v2702 = vor.u32 %v2700, %v2701
      %v2703 = vsel %vm2668, %v2698, %v2702
      %v2704 = vrot.slane %v696, 2
      %v2705 = vrot.slane %v692, 3
      %v2706 = vor.u32 %v2704, %v2705
      %v2707 = vsel %vm2668, %v2702, %v2706
      %v2708 = vrot.slane %v704, 2
      %v2709 = vrot.slane %v700, 3
      %v2710 = vor.u32 %v2708, %v2709
      %v2711 = vsel %vm2668, %v2706, %v2710
      %v2712 = vrot.slane %v712, 2
      %v2713 = vrot.slane %v708, 3
      %v2714 = vor.u32 %v2712, %v2713
      %v2715 = vsel %vm2668, %v2710, %v2714
      %v2716 = vrot.slane %v720, 2
      %v2717 = vrot.slane %v716, 3
      %v2718 = vor.u32 %v2716, %v2717
      %v2719 = vsel %vm2668, %v2714, %v2718
      %v2720 = vrot.slane %v728, 2
      %v2721 = vrot.slane %v724, 3
      %v2722 = vor.u32 %v2720, %v2721
      %v2723 = vsel %vm2668, %v2718, %v2722
      %v2724 = vrot.slane %v1813, 2
      %v2725 = vrot.slane %v732, 3
      %v2726 = vor.u32 %v2724, %v2725
      %v2727 = vsel %vm2668, %v2722, %v2726
      %v2728 = vrot.slane %v1820, 2
      %v2729 = vrot.slane %v1823, 3
      %v2730 = vor.u32 %v2728, %v2729
      %v2731 = vsel %vm2668, %v2726, %v2730
      %v2733 = vshrl.u32 %v570, 16
      %v2735 = vrot.slane %v2733, 2
      %v2736 = vshll.u32 %v570, 16
      %v2738 = vrot.slane %v2736, 3
      %v2739 = vor.u32 %v2735, %v2738
      %v2740 = vsel %vm2668, %v2730, %v2739
      %v2773 = vunpack.c.l.b16 %v2652
      %v2774 = vunpack.c.l.b16 %v2653
      %v2775 = vunpack.c.l.b16 %v2654
      %v2776 = vunpack.c.l.b16 %v2655
      %v2777 = vunpack.c.l.b16 %v2656
      %v2778 = vunpack.c.l.b16 %v2657
      %v2779 = vunpack.c.l.b16 %v2658
      %v2780 = vunpack.c.l.b16 %v2659
      %v2781 = vunpack.c.l.b16 %v2660
      %v2782 = vunpack.c.l.b16 %v2661
      %v2783 = vunpack.c.l.b16 %v2662
      %v2784 = vunpack.c.l.b16 %v2663
      %v2785 = vunpack.c.l.b16 %v2664
      %v2786 = vunpack.c.l.b16 %v2665
      %v2787 = vunpack.c.l.b16 %v2666
      %v2788 = vunpack.c.l.b16 %v2667
      %v2789 = vpack.c.b16 %v2774, %v2773
      %v2790 = vpack.c.b16 %v2776, %v2775
      %v2791 = vpack.c.b16 %v2778, %v2777
      %v2792 = vpack.c.b16 %v2780, %v2779
      %v2793 = vpack.c.b16 %v2782, %v2781
      %v2794 = vpack.c.b16 %v2784, %v2783
      %v2795 = vpack.c.b16 %v2786, %v2785
      %v2796 = vpack.c.b16 %v2788, %v2787
      %2805 = vmatprep.subr.bf16.mxu0 0
      %2806 = vmatpush1.bf16.msra.mxu0 %v2796
      %2807 = vmatprep.subr.bf16.mxu0 0
      %2808 = vmatpush1.bf16.msra.mxu0 %v2795
      %2809 = vmatprep.subr.bf16.mxu0 0
      %2810 = vmatpush1.bf16.msra.mxu0 %v2794
      %2811 = vmatprep.subr.bf16.mxu0 0
      %2812 = vmatpush1.bf16.msra.mxu0 %v2793
      %2813 = vmatprep.subr.bf16.mxu0 0
      %2814 = vmatpush1.bf16.msra.mxu0 %v2792
      %2815 = vmatprep.subr.bf16.mxu0 0
      %2816 = vmatpush1.bf16.msra.mxu0 %v2791
      %2817 = vmatprep.subr.bf16.mxu0 0
      %2818 = vmatpush1.bf16.msra.mxu0 %v2790
      %2819 = vmatprep.subr.bf16.mxu0 0
      %2820 = vmatpush1.bf16.msra.mxu0 %v2789
      %2821 = vmatprep.subr.bf16.mxu0 0
      %2822 = vmatpush2.bf16.msra.mxu0 0
      %2823 = vmatprep.subr.bf16.mxu0 0
      %2824 = vmatpush2.bf16.msra.mxu0 0
      %2825 = vmatprep.subr.bf16.mxu0 0
      %2826 = vmatpush2.bf16.msra.mxu0 0
      %2827 = vmatprep.subr.bf16.mxu0 0
      %2828 = vmatpush2.bf16.msra.mxu0 0
      %2829 = vmatprep.subr.bf16.mxu0 0
      %2830 = vmatpush2.bf16.msra.mxu0 0
      %2831 = vmatprep.subr.bf16.mxu0 0
      %2832 = vmatpush2.bf16.msra.mxu0 0
      %2833 = vmatprep.subr.bf16.mxu0 0
      %2834 = vmatpush2.bf16.msra.mxu0 0
      %2835 = vmatprep.subr.bf16.mxu0 0
      %2836 = vmatpush2.bf16.msra.mxu0 0
      %2837 = vmatprep.mubr.bf16.mxu0 0
      %2838 = vmatmul.mubr.bf16.gmra.mxu0 %v2675
      %v2839 = vpop.f32.mrf.mxu0
      %v2840 = vadd.f32 0.0, %v2839
      %v2841 = vpop.f32.mrf.mxu0
      %v2842 = vpop.f32.mrf.mxu0
      %v2843 = vadd.f32 0.0, %v2842
      %v2844 = vpop.f32.mrf.mxu0
      %2845 = vmatprep.mubr.bf16.mxu0 0
      %2846 = vmatmul.mubr.bf16.gmra.mxu0 %v2679
      %v2847 = vpop.f32.mrf.mxu0
      %v2848 = vadd.f32 0.0, %v2847
      %v2849 = vpop.f32.mrf.mxu0
      %v2850 = vpop.f32.mrf.mxu0
      %v2851 = vadd.f32 0.0, %v2850
      %v2852 = vpop.f32.mrf.mxu0
      %2853 = vmatprep.mubr.bf16.mxu0 0
      %2854 = vmatmul.mubr.bf16.gmra.mxu0 %v2683
      %v2855 = vpop.f32.mrf.mxu0
      %v2856 = vadd.f32 0.0, %v2855
      %v2857 = vpop.f32.mrf.mxu0
      %v2858 = vpop.f32.mrf.mxu0
      %v2859 = vadd.f32 0.0, %v2858
      %v2860 = vpop.f32.mrf.mxu0
      %2861 = vmatprep.mubr.bf16.mxu0 0
      %2862 = vmatmul.mubr.bf16.gmra.mxu0 %v2687
      %v2863 = vpop.f32.mrf.mxu0
      %v2864 = vadd.f32 0.0, %v2863
      %v2865 = vpop.f32.mrf.mxu0
      %v2866 = vpop.f32.mrf.mxu0
      %v2867 = vadd.f32 0.0, %v2866
      %v2868 = vpop.f32.mrf.mxu0
      %2869 = vmatprep.mubr.bf16.mxu0 0
      %2870 = vmatmul.mubr.bf16.gmra.mxu0 %v2691
      %v2871 = vpop.f32.mrf.mxu0
      %v2872 = vadd.f32 0.0, %v2871
      %v2873 = vpop.f32.mrf.mxu0
      %v2874 = vpop.f32.mrf.mxu0
      %v2875 = vadd.f32 0.0, %v2874
      %v2876 = vpop.f32.mrf.mxu0
      %2877 = vmatprep.mubr.bf16.mxu0 0
      %2878 = vmatmul.mubr.bf16.gmra.mxu0 %v2695
      %v2879 = vpop.f32.mrf.mxu0
      %v2880 = vadd.f32 0.0, %v2879
      %v2881 = vpop.f32.mrf.mxu0
      %v2882 = vpop.f32.mrf.mxu0
      %v2883 = vadd.f32 0.0, %v2882
      %v2884 = vpop.f32.mrf.mxu0
      %2885 = vmatprep.mubr.bf16.mxu0 0
      %2886 = vmatmul.mubr.bf16.gmra.mxu0 %v2699
      %v2887 = vpop.f32.mrf.mxu0
      %v2888 = vadd.f32 0.0, %v2887
      %v2889 = vpop.f32.mrf.mxu0
      %v2890 = vpop.f32.mrf.mxu0
      %v2891 = vadd.f32 0.0, %v2890
      %v2892 = vpop.f32.mrf.mxu0
      %2893 = vmatprep.mubr.bf16.mxu0 0
      %2894 = vmatmul.mubr.bf16.gmra.mxu0 %v2703
      %v2895 = vpop.f32.mrf.mxu0
      %v2896 = vadd.f32 0.0, %v2895
      %v2897 = vpop.f32.mrf.mxu0
      %v2898 = vpop.f32.mrf.mxu0
      %v2899 = vadd.f32 0.0, %v2898
      %v2900 = vpop.f32.mrf.mxu0
      %2901 = vmatprep.mubr.bf16.mxu0 0
      %2902 = vmatmul.mubr.bf16.gmra.mxu0 %v2707
      %v2903 = vpop.f32.mrf.mxu0
      %v2904 = vadd.f32 0.0, %v2903
      %v2905 = vpop.f32.mrf.mxu0
      %v2906 = vpop.f32.mrf.mxu0
      %v2907 = vadd.f32 0.0, %v2906
      %v2908 = vpop.f32.mrf.mxu0
      %2909 = vmatprep.mubr.bf16.mxu0 0
      %2910 = vmatmul.mubr.bf16.gmra.mxu0 %v2711
      %v2911 = vpop.f32.mrf.mxu0
      %v2912 = vadd.f32 0.0, %v2911
      %v2913 = vpop.f32.mrf.mxu0
      %v2914 = vpop.f32.mrf.mxu0
      %v2915 = vadd.f32 0.0, %v2914
      %v2916 = vpop.f32.mrf.mxu0
      %2917 = vmatprep.mubr.bf16.mxu0 0
      %2918 = vmatmul.mubr.bf16.gmra.mxu0 %v2715
      %v2919 = vpop.f32.mrf.mxu0
      %v2920 = vadd.f32 0.0, %v2919
      %v2921 = vpop.f32.mrf.mxu0
      %v2922 = vpop.f32.mrf.mxu0
      %v2923 = vadd.f32 0.0, %v2922
      %v2924 = vpop.f32.mrf.mxu0
      %2925 = vmatprep.mubr.bf16.mxu0 0
      %2926 = vmatmul.mubr.bf16.gmra.mxu0 %v2719
      %v2927 = vpop.f32.mrf.mxu0
      %v2928 = vadd.f32 0.0, %v2927
      %v2929 = vpop.f32.mrf.mxu0
      %v2930 = vpop.f32.mrf.mxu0
      %v2931 = vadd.f32 0.0, %v2930
      %v2932 = vpop.f32.mrf.mxu0
      %2933 = vmatprep.mubr.bf16.mxu0 0
      %2934 = vmatmul.mubr.bf16.gmra.mxu0 %v2723
      %v2935 = vpop.f32.mrf.mxu0
      %v2936 = vadd.f32 0.0, %v2935
      %v2937 = vpop.f32.mrf.mxu0
      %v2938 = vpop.f32.mrf.mxu0
      %v2939 = vadd.f32 0.0, %v2938
      %v2940 = vpop.f32.mrf.mxu0
      %2941 = vmatprep.mubr.bf16.mxu0 0
      %2942 = vmatmul.mubr.bf16.gmra.mxu0 %v2727
      %v2943 = vpop.f32.mrf.mxu0
      %v2944 = vadd.f32 0.0, %v2943
      %v2945 = vpop.f32.mrf.mxu0
      %v2946 = vpop.f32.mrf.mxu0
      %v2947 = vadd.f32 0.0, %v2946
      %v2948 = vpop.f32.mrf.mxu0
      %2949 = vmatprep.mubr.bf16.mxu0 0
      %2950 = vmatmul.mubr.bf16.gmra.mxu0 %v2731
      %v2951 = vpop.f32.mrf.mxu0
      %v2952 = vadd.f32 0.0, %v2951
      %v2953 = vpop.f32.mrf.mxu0
      %v2954 = vpop.f32.mrf.mxu0
      %v2955 = vadd.f32 0.0, %v2954
      %v2956 = vpop.f32.mrf.mxu0
      %2957 = vmatprep.mubr.bf16.mxu0 0
      %2958 = vmatmul.mubr.bf16.gmra.mxu0 %v2740
      %v2959 = vpop.f32.mrf.mxu0
      %v2960 = vadd.f32 0.0, %v2959
      %v2961 = vpop.f32.mrf.mxu0
      %v2962 = vpop.f32.mrf.mxu0
      %v2963 = vadd.f32 0.0, %v2962
      %v2964 = vpop.f32.mrf.mxu0
      %2965 = vdwg.mxu0
      %v2966 = vadd.f32 %v2620, %v2840
      %v2967 = vadd.f32 %v2621, %v2843
      %v2968 = vadd.f32 %v2622, %v2848
      %v2969 = vadd.f32 %v2623, %v2851
      %v2970 = vadd.f32 %v2624, %v2856
      %v2971 = vadd.f32 %v2625, %v2859
      %v2972 = vadd.f32 %v2626, %v2864
      %v2973 = vadd.f32 %v2627, %v2867
      %v2974 = vadd.f32 %v2628, %v2872
      %v2975 = vadd.f32 %v2629, %v2875
      %v2976 = vadd.f32 %v2630, %v2880
      %v2977 = vadd.f32 %v2631, %v2883
      %v2978 = vadd.f32 %v2632, %v2888
      %v2979 = vadd.f32 %v2633, %v2891
      %v2980 = vadd.f32 %v2634, %v2896
      %v2981 = vadd.f32 %v2635, %v2899
      %v2982 = vadd.f32 %v2636, %v2904
      %v2983 = vadd.f32 %v2637, %v2907
      %v2984 = vadd.f32 %v2638, %v2912
      %v2985 = vadd.f32 %v2639, %v2915
      %v2986 = vadd.f32 %v2640, %v2920
      %v2987 = vadd.f32 %v2641, %v2923
      %v2988 = vadd.f32 %v2642, %v2928
      %v2989 = vadd.f32 %v2643, %v2931
      %v2990 = vadd.f32 %v2644, %v2936
      %v2991 = vadd.f32 %v2645, %v2939
      %v2992 = vadd.f32 %v2646, %v2944
      %v2993 = vadd.f32 %v2647, %v2947
      %v2994 = vadd.f32 %v2648, %v2952
      %v2995 = vadd.f32 %v2649, %v2955
      %v2996 = vadd.f32 %v2650, %v2960
      %v2997 = vadd.f32 %v2651, %v2963
      %v2998 = vld [vmem:[%s390 + $0x200] sm:$0xf]
      %v2999 = vld [vmem:[%s390 + $0x204] sm:$0xf]
      %v3000 = vld [vmem:[%s390 + $0x208] sm:$0xf]
      %v3001 = vld [vmem:[%s390 + $0x20c] sm:$0xf]
      %v3002 = vld [vmem:[%s390 + $0x210] sm:$0xf]
      %v3003 = vld [vmem:[%s390 + $0x214] sm:$0xf]
      %v3004 = vld [vmem:[%s390 + $0x218] sm:$0xf]
      %v3005 = vld [vmem:[%s390 + $0x21c] sm:$0xf]
      %v3006 = vld [vmem:[%s390 + $0x220] sm:$0xf]
      %v3007 = vld [vmem:[%s390 + $0x224] sm:$0xf]
      %v3008 = vld [vmem:[%s390 + $0x228] sm:$0xf]
      %v3009 = vld [vmem:[%s390 + $0x22c] sm:$0xf]
      %v3010 = vld [vmem:[%s390 + $0x230] sm:$0xf]
      %v3011 = vld [vmem:[%s390 + $0x234] sm:$0xf]
      %v3012 = vld [vmem:[%s390 + $0x238] sm:$0xf]
      %v3013 = vld [vmem:[%s390 + $0x23c] sm:$0xf]
      %vm3014 = vcmask 1044480
      %v3015 = vrot.slane %v526, 3
      %v3016 = vrot.slane %v527, 3
      %v3017 = vsel %vm3014, %v3015, %v3016
      %v3018 = vrot.slane %v528, 3
      %v3019 = vsel %vm3014, %v3016, %v3018
      %v3020 = vrot.slane %v529, 3
      %v3021 = vsel %vm3014, %v3018, %v3020
      %v3022 = vrot.slane %v530, 3
      %v3023 = vsel %vm3014, %v3020, %v3022
      %v3024 = vrot.slane %v531, 3
      %v3025 = vsel %vm3014, %v3022, %v3024
      %v3026 = vrot.slane %v532, 3
      %v3027 = vsel %vm3014, %v3024, %v3026
      %v3028 = vrot.slane %v533, 3
      %v3029 = vsel %vm3014, %v3026, %v3028
      %v3030 = vrot.slane %v534, 3
      %v3031 = vsel %vm3014, %v3028, %v3030
      %v3032 = vrot.slane %v535, 3
      %v3033 = vsel %vm3014, %v3030, %v3032
      %v3034 = vrot.slane %v536, 3
      %v3035 = vsel %vm3014, %v3032, %v3034
      %v3036 = vrot.slane %v537, 3
      %v3037 = vsel %vm3014, %v3034, %v3036
      %v3038 = vrot.slane %v538, 3
      %v3039 = vsel %vm3014, %v3036, %v3038
      %v3040 = vrot.slane %v539, 3
      %v3041 = vsel %vm3014, %v3038, %v3040
      %v3042 = vrot.slane %v568, 3
      %v3043 = vsel %vm3014, %v3040, %v3042
      %v3044 = vrot.slane %v569, 3
      %v3045 = vsel %vm3014, %v3042, %v3044
      %v3046 = vrot.slane %v570, 3
      %v3047 = vsel %vm3014, %v3044, %v3046
      %v3080 = vunpack.c.l.b16 %v2998
      %v3081 = vunpack.c.l.b16 %v2999
      %v3082 = vunpack.c.l.b16 %v3000
      %v3083 = vunpack.c.l.b16 %v3001
      %v3084 = vunpack.c.l.b16 %v3002
      %v3085 = vunpack.c.l.b16 %v3003
      %v3086 = vunpack.c.l.b16 %v3004
      %v3087 = vunpack.c.l.b16 %v3005
      %v3088 = vunpack.c.l.b16 %v3006
      %v3089 = vunpack.c.l.b16 %v3007
      %v3090 = vunpack.c.l.b16 %v3008
      %v3091 = vunpack.c.l.b16 %v3009
      %v3092 = vunpack.c.l.b16 %v3010
      %v3093 = vunpack.c.l.b16 %v3011
      %v3094 = vunpack.c.l.b16 %v3012
      %v3095 = vunpack.c.l.b16 %v3013
      %v3096 = vpack.c.b16 %v3081, %v3080
      %v3097 = vpack.c.b16 %v3083, %v3082
      %v3098 = vpack.c.b16 %v3085, %v3084
      %v3099 = vpack.c.b16 %v3087, %v3086
      %v3100 = vpack.c.b16 %v3089, %v3088
      %v3101 = vpack.c.b16 %v3091, %v3090
      %v3102 = vpack.c.b16 %v3093, %v3092
      %v3103 = vpack.c.b16 %v3095, %v3094
      %3112 = vmatprep.subr.bf16.mxu0 0
      %3113 = vmatpush1.bf16.msra.mxu0 %v3103
      %3114 = vmatprep.subr.bf16.mxu0 0
      %3115 = vmatpush1.bf16.msra.mxu0 %v3102
      %3116 = vmatprep.subr.bf16.mxu0 0
      %3117 = vmatpush1.bf16.msra.mxu0 %v3101
      %3118 = vmatprep.subr.bf16.mxu0 0
      %3119 = vmatpush1.bf16.msra.mxu0 %v3100
      %3120 = vmatprep.subr.bf16.mxu0 0
      %3121 = vmatpush1.bf16.msra.mxu0 %v3099
      %3122 = vmatprep.subr.bf16.mxu0 0
      %3123 = vmatpush1.bf16.msra.mxu0 %v3098
      %3124 = vmatprep.subr.bf16.mxu0 0
      %3125 = vmatpush1.bf16.msra.mxu0 %v3097
      %3126 = vmatprep.subr.bf16.mxu0 0
      %3127 = vmatpush1.bf16.msra.mxu0 %v3096
      %3128 = vmatprep.subr.bf16.mxu0 0
      %3129 = vmatpush2.bf16.msra.mxu0 0
      %3130 = vmatprep.subr.bf16.mxu0 0
      %3131 = vmatpush2.bf16.msra.mxu0 0
      %3132 = vmatprep.subr.bf16.mxu0 0
      %3133 = vmatpush2.bf16.msra.mxu0 0
      %3134 = vmatprep.subr.bf16.mxu0 0
      %3135 = vmatpush2.bf16.msra.mxu0 0
      %3136 = vmatprep.subr.bf16.mxu0 0
      %3137 = vmatpush2.bf16.msra.mxu0 0
      %3138 = vmatprep.subr.bf16.mxu0 0
      %3139 = vmatpush2.bf16.msra.mxu0 0
      %3140 = vmatprep.subr.bf16.mxu0 0
      %3141 = vmatpush2.bf16.msra.mxu0 0
      %3142 = vmatprep.subr.bf16.mxu0 0
      %3143 = vmatpush2.bf16.msra.mxu0 0
      %3144 = vmatprep.mubr.bf16.mxu0 0
      %3145 = vmatmul.mubr.bf16.gmra.mxu0 %v3017
      %v3146 = vpop.f32.mrf.mxu0
      %v3147 = vadd.f32 0.0, %v3146
      %v3148 = vpop.f32.mrf.mxu0
      %v3149 = vpop.f32.mrf.mxu0
      %v3150 = vadd.f32 0.0, %v3149
      %v3151 = vpop.f32.mrf.mxu0
      %3152 = vmatprep.mubr.bf16.mxu0 0
      %3153 = vmatmul.mubr.bf16.gmra.mxu0 %v3019
      %v3154 = vpop.f32.mrf.mxu0
      %v3155 = vadd.f32 0.0, %v3154
      %v3156 = vpop.f32.mrf.mxu0
      %v3157 = vpop.f32.mrf.mxu0
      %v3158 = vadd.f32 0.0, %v3157
      %v3159 = vpop.f32.mrf.mxu0
      %3160 = vmatprep.mubr.bf16.mxu0 0
      %3161 = vmatmul.mubr.bf16.gmra.mxu0 %v3021
      %v3162 = vpop.f32.mrf.mxu0
      %v3163 = vadd.f32 0.0, %v3162
      %v3164 = vpop.f32.mrf.mxu0
      %v3165 = vpop.f32.mrf.mxu0
      %v3166 = vadd.f32 0.0, %v3165
      %v3167 = vpop.f32.mrf.mxu0
      %3168 = vmatprep.mubr.bf16.mxu0 0
      %3169 = vmatmul.mubr.bf16.gmra.mxu0 %v3023
      %v3170 = vpop.f32.mrf.mxu0
      %v3171 = vadd.f32 0.0, %v3170
      %v3172 = vpop.f32.mrf.mxu0
      %v3173 = vpop.f32.mrf.mxu0
      %v3174 = vadd.f32 0.0, %v3173
      %v3175 = vpop.f32.mrf.mxu0
      %3176 = vmatprep.mubr.bf16.mxu0 0
      %3177 = vmatmul.mubr.bf16.gmra.mxu0 %v3025
      %v3178 = vpop.f32.mrf.mxu0
      %v3179 = vadd.f32 0.0, %v3178
      %v3180 = vpop.f32.mrf.mxu0
      %v3181 = vpop.f32.mrf.mxu0
      %v3182 = vadd.f32 0.0, %v3181
      %v3183 = vpop.f32.mrf.mxu0
      %3184 = vmatprep.mubr.bf16.mxu0 0
      %3185 = vmatmul.mubr.bf16.gmra.mxu0 %v3027
      %v3186 = vpop.f32.mrf.mxu0
      %v3187 = vadd.f32 0.0, %v3186
      %v3188 = vpop.f32.mrf.mxu0
      %v3189 = vpop.f32.mrf.mxu0
      %v3190 = vadd.f32 0.0, %v3189
      %v3191 = vpop.f32.mrf.mxu0
      %3192 = vmatprep.mubr.bf16.mxu0 0
      %3193 = vmatmul.mubr.bf16.gmra.mxu0 %v3029
      %v3194 = vpop.f32.mrf.mxu0
      %v3195 = vadd.f32 0.0, %v3194
      %v3196 = vpop.f32.mrf.mxu0
      %v3197 = vpop.f32.mrf.mxu0
      %v3198 = vadd.f32 0.0, %v3197
      %v3199 = vpop.f32.mrf.mxu0
      %3200 = vmatprep.mubr.bf16.mxu0 0
      %3201 = vmatmul.mubr.bf16.gmra.mxu0 %v3031
      %v3202 = vpop.f32.mrf.mxu0
      %v3203 = vadd.f32 0.0, %v3202
      %v3204 = vpop.f32.mrf.mxu0
      %v3205 = vpop.f32.mrf.mxu0
      %v3206 = vadd.f32 0.0, %v3205
      %v3207 = vpop.f32.mrf.mxu0
      %3208 = vmatprep.mubr.bf16.mxu0 0
      %3209 = vmatmul.mubr.bf16.gmra.mxu0 %v3033
      %v3210 = vpop.f32.mrf.mxu0
      %v3211 = vadd.f32 0.0, %v3210
      %v3212 = vpop.f32.mrf.mxu0
      %v3213 = vpop.f32.mrf.mxu0
      %v3214 = vadd.f32 0.0, %v3213
      %v3215 = vpop.f32.mrf.mxu0
      %3216 = vmatprep.mubr.bf16.mxu0 0
      %3217 = vmatmul.mubr.bf16.gmra.mxu0 %v3035
      %v3218 = vpop.f32.mrf.mxu0
      %v3219 = vadd.f32 0.0, %v3218
      %v3220 = vpop.f32.mrf.mxu0
      %v3221 = vpop.f32.mrf.mxu0
      %v3222 = vadd.f32 0.0, %v3221
      %v3223 = vpop.f32.mrf.mxu0
      %3224 = vmatprep.mubr.bf16.mxu0 0
      %3225 = vmatmul.mubr.bf16.gmra.mxu0 %v3037
      %v3226 = vpop.f32.mrf.mxu0
      %v3227 = vadd.f32 0.0, %v3226
      %v3228 = vpop.f32.mrf.mxu0
      %v3229 = vpop.f32.mrf.mxu0
      %v3230 = vadd.f32 0.0, %v3229
      %v3231 = vpop.f32.mrf.mxu0
      %3232 = vmatprep.mubr.bf16.mxu0 0
      %3233 = vmatmul.mubr.bf16.gmra.mxu0 %v3039
      %v3234 = vpop.f32.mrf.mxu0
      %v3235 = vadd.f32 0.0, %v3234
      %v3236 = vpop.f32.mrf.mxu0
      %v3237 = vpop.f32.mrf.mxu0
      %v3238 = vadd.f32 0.0, %v3237
      %v3239 = vpop.f32.mrf.mxu0
      %3240 = vmatprep.mubr.bf16.mxu0 0
      %3241 = vmatmul.mubr.bf16.gmra.mxu0 %v3041
      %v3242 = vpop.f32.mrf.mxu0
      %v3243 = vadd.f32 0.0, %v3242
      %v3244 = vpop.f32.mrf.mxu0
      %v3245 = vpop.f32.mrf.mxu0
      %v3246 = vadd.f32 0.0, %v3245
      %v3247 = vpop.f32.mrf.mxu0
      %3248 = vmatprep.mubr.bf16.mxu0 0
      %3249 = vmatmul.mubr.bf16.gmra.mxu0 %v3043
      %v3250 = vpop.f32.mrf.mxu0
      %v3251 = vadd.f32 0.0, %v3250
      %v3252 = vpop.f32.mrf.mxu0
      %v3253 = vpop.f32.mrf.mxu0
      %v3254 = vadd.f32 0.0, %v3253
      %v3255 = vpop.f32.mrf.mxu0
      %3256 = vmatprep.mubr.bf16.mxu0 0
      %3257 = vmatmul.mubr.bf16.gmra.mxu0 %v3045
      %v3258 = vpop.f32.mrf.mxu0
      %v3259 = vadd.f32 0.0, %v3258
      %v3260 = vpop.f32.mrf.mxu0
      %v3261 = vpop.f32.mrf.mxu0
      %v3262 = vadd.f32 0.0, %v3261
      %v3263 = vpop.f32.mrf.mxu0
      %3264 = vmatprep.mubr.bf16.mxu0 0
      %3265 = vmatmul.mubr.bf16.gmra.mxu0 %v3047
      %v3266 = vpop.f32.mrf.mxu0
      %v3267 = vadd.f32 0.0, %v3266
      %v3268 = vpop.f32.mrf.mxu0
      %v3269 = vpop.f32.mrf.mxu0
      %v3270 = vadd.f32 0.0, %v3269
      %v3271 = vpop.f32.mrf.mxu0
      %3272 = vdwg.mxu0
      %v3273 = vadd.f32 %v2966, %v3147
      %v3274 = vadd.f32 %v2967, %v3150
      %v3275 = vadd.f32 %v2968, %v3155
      %v3276 = vadd.f32 %v2969, %v3158
      %v3277 = vadd.f32 %v2970, %v3163
      %v3278 = vadd.f32 %v2971, %v3166
      %v3279 = vadd.f32 %v2972, %v3171
      %v3280 = vadd.f32 %v2973, %v3174
      %v3281 = vadd.f32 %v2974, %v3179
      %v3282 = vadd.f32 %v2975, %v3182
      %v3283 = vadd.f32 %v2976, %v3187
      %v3284 = vadd.f32 %v2977, %v3190
      %v3285 = vadd.f32 %v2978, %v3195
      %v3286 = vadd.f32 %v2979, %v3198
      %v3287 = vadd.f32 %v2980, %v3203
      %v3288 = vadd.f32 %v2981, %v3206
      %v3289 = vadd.f32 %v2982, %v3211
      %v3290 = vadd.f32 %v2983, %v3214
      %v3291 = vadd.f32 %v2984, %v3219
      %v3292 = vadd.f32 %v2985, %v3222
      %v3293 = vadd.f32 %v2986, %v3227
      %v3294 = vadd.f32 %v2987, %v3230
      %v3295 = vadd.f32 %v2988, %v3235
      %v3296 = vadd.f32 %v2989, %v3238
      %v3297 = vadd.f32 %v2990, %v3243
      %v3298 = vadd.f32 %v2991, %v3246
      %v3299 = vadd.f32 %v2992, %v3251
      %v3300 = vadd.f32 %v2993, %v3254
      %v3301 = vadd.f32 %v2994, %v3259
      %v3302 = vadd.f32 %v2995, %v3262
      %v3303 = vadd.f32 %v2996, %v3267
      %v3304 = vadd.f32 %v2997, %v3270
      %v3305 = vld [vmem:[%s397] sm:$0xff]
      %v3306 = vld [vmem:[%s397 + $0x8] sm:$0xff]
      %v3307 = vld [vmem:[%s397 + $0x10] sm:$0xff]
      %v3308 = vld [vmem:[%s397 + $0x18] sm:$0xff]
      %v3309 = vld [vmem:[%s397 + $0x20] sm:$0xff]
      %v3310 = vld [vmem:[%s397 + $0x28] sm:$0xff]
      %v3311 = vld [vmem:[%s397 + $0x30] sm:$0xff]
      %v3312 = vld [vmem:[%s397 + $0x38] sm:$0xff]
      %v3313 = vld [vmem:[%s397 + $0x40] sm:$0xff]
      %v3314 = vld [vmem:[%s397 + $0x48] sm:$0xff]
      %v3315 = vld [vmem:[%s397 + $0x50] sm:$0xff]
      %v3316 = vld [vmem:[%s397 + $0x58] sm:$0xff]
      %v3317 = vld [vmem:[%s397 + $0x60] sm:$0xff]
      %v3318 = vld [vmem:[%s397 + $0x68] sm:$0xff]
      %v3319 = vld [vmem:[%s397 + $0x70] sm:$0xff]
      %v3320 = vld [vmem:[%s397 + $0x78] sm:$0xff]
      %v3321 = vld [vmem:[%s397 + $0x80] sm:$0xff]
      %v3322 = vld [vmem:[%s397 + $0x88] sm:$0xff]
      %v3323 = vld [vmem:[%s397 + $0x90] sm:$0xff]
      %v3324 = vld [vmem:[%s397 + $0x98] sm:$0xff]
      %v3325 = vld [vmem:[%s397 + $0xa0] sm:$0xff]
      %v3326 = vld [vmem:[%s397 + $0xa8] sm:$0xff]
      %v3327 = vld [vmem:[%s397 + $0xb0] sm:$0xff]
      %v3328 = vld [vmem:[%s397 + $0xb8] sm:$0xff]
      %v3329 = vld [vmem:[%s397 + $0xc0] sm:$0xff]
      %v3330 = vld [vmem:[%s397 + $0xc8] sm:$0xff]
      %v3331 = vld [vmem:[%s397 + $0xd0] sm:$0xff]
      %v3332 = vld [vmem:[%s397 + $0xd8] sm:$0xff]
      %v3333 = vld [vmem:[%s397 + $0xe0] sm:$0xff]
      %v3334 = vld [vmem:[%s397 + $0xe8] sm:$0xff]
      %v3335 = vld [vmem:[%s397 + $0xf0] sm:$0xff]
      %v3336 = vld [vmem:[%s397 + $0xf8] sm:$0xff]
      %3338 = vset.pattern.permute.xlu0 0
      %3339 = vperm.xlu0 %3338, %v3305
      %v3340 = vpop.permute.xlu0 %3339
      %3343 = vset.pattern.permute.xlu0 0
      %3344 = vperm.xlu0 %3343, %v3306
      %v3345 = vpop.permute.xlu0 %3344
      %3348 = vset.pattern.permute.xlu0 0
      %3349 = vperm.xlu0 %3348, %v3307
      %v3350 = vpop.permute.xlu0 %3349
      %3353 = vset.pattern.permute.xlu0 0
      %3354 = vperm.xlu0 %3353, %v3308
      %v3355 = vpop.permute.xlu0 %3354
      %3358 = vset.pattern.permute.xlu0 0
      %3359 = vperm.xlu0 %3358, %v3309
      %v3360 = vpop.permute.xlu0 %3359
      %3363 = vset.pattern.permute.xlu0 0
      %3364 = vperm.xlu0 %3363, %v3310
      %v3365 = vpop.permute.xlu0 %3364
      %3368 = vset.pattern.permute.xlu0 0
      %3369 = vperm.xlu0 %3368, %v3311
      %v3370 = vpop.permute.xlu0 %3369
      %3373 = vset.pattern.permute.xlu0 0
      %3374 = vperm.xlu0 %3373, %v3312
      %v3375 = vpop.permute.xlu0 %3374
      %3378 = vset.pattern.permute.xlu0 0
      %3379 = vperm.xlu0 %3378, %v3313
      %v3380 = vpop.permute.xlu0 %3379
      %3383 = vset.pattern.permute.xlu0 0
      %3384 = vperm.xlu0 %3383, %v3314
      %v3385 = vpop.permute.xlu0 %3384
      %3388 = vset.pattern.permute.xlu0 0
      %3389 = vperm.xlu0 %3388, %v3315
      %v3390 = vpop.permute.xlu0 %3389
      %3393 = vset.pattern.permute.xlu0 0
      %3394 = vperm.xlu0 %3393, %v3316
      %v3395 = vpop.permute.xlu0 %3394
      %3398 = vset.pattern.permute.xlu0 0
      %3399 = vperm.xlu0 %3398, %v3317
      %v3400 = vpop.permute.xlu0 %3399
      %3403 = vset.pattern.permute.xlu0 0
      %3404 = vperm.xlu0 %3403, %v3318
      %v3405 = vpop.permute.xlu0 %3404
      %3408 = vset.pattern.permute.xlu0 0
      %3409 = vperm.xlu0 %3408, %v3319
      %v3410 = vpop.permute.xlu0 %3409
      %3413 = vset.pattern.permute.xlu0 0
      %3414 = vperm.xlu0 %3413, %v3320
      %v3415 = vpop.permute.xlu0 %3414
      %3418 = vset.pattern.permute.xlu0 0
      %3419 = vperm.xlu0 %3418, %v3321
      %v3420 = vpop.permute.xlu0 %3419
      %3423 = vset.pattern.permute.xlu0 0
      %3424 = vperm.xlu0 %3423, %v3322
      %v3425 = vpop.permute.xlu0 %3424
      %3428 = vset.pattern.permute.xlu0 0
      %3429 = vperm.xlu0 %3428, %v3323
      %v3430 = vpop.permute.xlu0 %3429
      %3433 = vset.pattern.permute.xlu0 0
      %3434 = vperm.xlu0 %3433, %v3324
      %v3435 = vpop.permute.xlu0 %3434
      %3438 = vset.pattern.permute.xlu0 0
      %3439 = vperm.xlu0 %3438, %v3325
      %v3440 = vpop.permute.xlu0 %3439
      %3443 = vset.pattern.permute.xlu0 0
      %3444 = vperm.xlu0 %3443, %v3326
      %v3445 = vpop.permute.xlu0 %3444
      %3448 = vset.pattern.permute.xlu0 0
      %3449 = vperm.xlu0 %3448, %v3327
      %v3450 = vpop.permute.xlu0 %3449
      %3453 = vset.pattern.permute.xlu0 0
      %3454 = vperm.xlu0 %3453, %v3328
      %v3455 = vpop.permute.xlu0 %3454
      %3458 = vset.pattern.permute.xlu0 0
      %3459 = vperm.xlu0 %3458, %v3329
      %v3460 = vpop.permute.xlu0 %3459
      %3463 = vset.pattern.permute.xlu0 0
      %3464 = vperm.xlu0 %3463, %v3330
      %v3465 = vpop.permute.xlu0 %3464
      %3468 = vset.pattern.permute.xlu0 0
      %3469 = vperm.xlu0 %3468, %v3331
      %v3470 = vpop.permute.xlu0 %3469
      %3473 = vset.pattern.permute.xlu0 0
      %3474 = vperm.xlu0 %3473, %v3332
      %v3475 = vpop.permute.xlu0 %3474
      %3478 = vset.pattern.permute.xlu0 0
      %3479 = vperm.xlu0 %3478, %v3333
      %v3480 = vpop.permute.xlu0 %3479
      %3483 = vset.pattern.permute.xlu0 0
      %3484 = vperm.xlu0 %3483, %v3334
      %v3485 = vpop.permute.xlu0 %3484
      %3488 = vset.pattern.permute.xlu0 0
      %3489 = vperm.xlu0 %3488, %v3335
      %v3490 = vpop.permute.xlu0 %3489
      %3493 = vset.pattern.permute.xlu0 0
      %3494 = vperm.xlu0 %3493, %v3336
      %v3495 = vpop.permute.xlu0 %3494
      %v3497 = vmul.f32 %v3273, %v3340
      %v3498 = vmul.f32 %v3274, %v3345
      %v3499 = vmul.f32 %v3275, %v3350
      %v3500 = vmul.f32 %v3276, %v3355
      %v3501 = vmul.f32 %v3277, %v3360
      %v3502 = vmul.f32 %v3278, %v3365
      %v3503 = vmul.f32 %v3279, %v3370
      %v3504 = vmul.f32 %v3280, %v3375
      %v3505 = vmul.f32 %v3281, %v3380
      %v3506 = vmul.f32 %v3282, %v3385
      %v3507 = vmul.f32 %v3283, %v3390
      %v3508 = vmul.f32 %v3284, %v3395
      %v3509 = vmul.f32 %v3285, %v3400
      %v3510 = vmul.f32 %v3286, %v3405
      %v3511 = vmul.f32 %v3287, %v3410
      %v3512 = vmul.f32 %v3288, %v3415
      %v3513 = vmul.f32 %v3289, %v3420
      %v3514 = vmul.f32 %v3290, %v3425
      %v3515 = vmul.f32 %v3291, %v3430
      %v3516 = vmul.f32 %v3292, %v3435
      %v3517 = vmul.f32 %v3293, %v3440
      %v3518 = vmul.f32 %v3294, %v3445
      %v3519 = vmul.f32 %v3295, %v3450
      %v3520 = vmul.f32 %v3296, %v3455
      %v3521 = vmul.f32 %v3297, %v3460
      %v3522 = vmul.f32 %v3298, %v3465
      %v3523 = vmul.f32 %v3299, %v3470
      %v3524 = vmul.f32 %v3300, %v3475
      %v3525 = vmul.f32 %v3301, %v3480
      %v3526 = vmul.f32 %v3302, %v3485
      %v3527 = vmul.f32 %v3303, %v3490
      %v3528 = vmul.f32 %v3304, %v3495
      %p3529 = scmp.eq.s32.totalorder %s24, 0
      // Predicated region
      $region37: #{bottleneck_forward.6} parent=35 // pred_check
        %p3530 = pneg %p3529
      $region38: #{bottleneck_forward.6} parent=35 // pred_check_branch
        %3532 = sbr.rel (%p3530) target = $region40
      $region39: #{bottleneck_forward.6} parent=35 // pred_region
        %3533 = vst [vmem:[%s420] sm:$0x3] 0.0
      $region40: #{bottleneck_forward.6} parent=35 // pred_fallthru
        _
      %v3534 = vld [vmem:[%s420] sm:$0x3]
      %v3535 = vadd.f32 %v3497, %v3498
      %v3536 = vadd.f32 %v3535, %v3499
      %v3537 = vadd.f32 %v3536, %v3500
      %v3538 = vadd.f32 %v3537, %v3501
      %v3539 = vadd.f32 %v3538, %v3502
      %v3540 = vadd.f32 %v3539, %v3503
      %v3541 = vadd.f32 %v3540, %v3504
      %v3542 = vadd.f32 %v3541, %v3505
      %v3543 = vadd.f32 %v3542, %v3506
      %v3544 = vadd.f32 %v3543, %v3507
      %v3545 = vadd.f32 %v3544, %v3508
      %v3546 = vadd.f32 %v3545, %v3509
      %v3547 = vadd.f32 %v3546, %v3510
      %v3548 = vadd.f32 %v3547, %v3511
      %v3549 = vadd.f32 %v3548, %v3512
      %v3550 = vadd.f32 %v3549, %v3513
      %v3551 = vadd.f32 %v3550, %v3514
      %v3552 = vadd.f32 %v3551, %v3515
      %v3553 = vadd.f32 %v3552, %v3516
      %v3554 = vadd.f32 %v3553, %v3517
      %v3555 = vadd.f32 %v3554, %v3518
      %v3556 = vadd.f32 %v3555, %v3519
      %v3557 = vadd.f32 %v3556, %v3520
      %v3558 = vadd.f32 %v3557, %v3521
      %v3559 = vadd.f32 %v3558, %v3522
      %v3560 = vadd.f32 %v3559, %v3523
      %v3561 = vadd.f32 %v3560, %v3524
      %v3562 = vadd.f32 %v3561, %v3525
      %v3563 = vadd.f32 %v3562, %v3526
      %v3564 = vadd.f32 %v3563, %v3527
      %v3565 = vadd.f32 %v3564, %v3528
      %v3566 = vrot.slane %v3565, 4
      %v3567 = vadd.f32 %v3565, %v3566
      %v3568 = vrot.slane %v3567, 2
      %v3569 = vadd.f32 %v3567, %v3568
      %v3570 = vrot.slane %v3569, 1
      %v3571 = vadd.f32 %v3569, %v3570
      %v3572 = vmul.f32 %v3497, %v3497
      %v3573 = vmul.f32 %v3498, %v3498
      %v3574 = vmul.f32 %v3499, %v3499
      %v3575 = vmul.f32 %v3500, %v3500
      %v3576 = vmul.f32 %v3501, %v3501
      %v3577 = vmul.f32 %v3502, %v3502
      %v3578 = vmul.f32 %v3503, %v3503
      %v3579 = vmul.f32 %v3504, %v3504
      %v3580 = vmul.f32 %v3505, %v3505
      %v3581 = vmul.f32 %v3506, %v3506
      %v3582 = vmul.f32 %v3507, %v3507
      %v3583 = vmul.f32 %v3508, %v3508
      %v3584 = vmul.f32 %v3509, %v3509
      %v3585 = vmul.f32 %v3510, %v3510
      %v3586 = vmul.f32 %v3511, %v3511
      %v3587 = vmul.f32 %v3512, %v3512
      %v3588 = vmul.f32 %v3513, %v3513
      %v3589 = vmul.f32 %v3514, %v3514
      %v3590 = vmul.f32 %v3515, %v3515
      %v3591 = vmul.f32 %v3516, %v3516
      %v3592 = vmul.f32 %v3517, %v3517
      %v3593 = vmul.f32 %v3518, %v3518
      %v3594 = vmul.f32 %v3519, %v3519
      %v3595 = vmul.f32 %v3520, %v3520
      %v3596 = vmul.f32 %v3521, %v3521
      %v3597 = vmul.f32 %v3522, %v3522
      %v3598 = vmul.f32 %v3523, %v3523
      %v3599 = vmul.f32 %v3524, %v3524
      %v3600 = vmul.f32 %v3525, %v3525
      %v3601 = vmul.f32 %v3526, %v3526
      %v3602 = vmul.f32 %v3527, %v3527
      %v3603 = vmul.f32 %v3528, %v3528
      %v3604 = vadd.f32 %v3572, %v3573
      %v3605 = vadd.f32 %v3604, %v3574
      %v3606 = vadd.f32 %v3605, %v3575
      %v3607 = vadd.f32 %v3606, %v3576
      %v3608 = vadd.f32 %v3607, %v3577
      %v3609 = vadd.f32 %v3608, %v3578
      %v3610 = vadd.f32 %v3609, %v3579
      %v3611 = vadd.f32 %v3610, %v3580
      %v3612 = vadd.f32 %v3611, %v3581
      %v3613 = vadd.f32 %v3612, %v3582
      %v3614 = vadd.f32 %v3613, %v3583
      %v3615 = vadd.f32 %v3614, %v3584
      %v3616 = vadd.f32 %v3615, %v3585
      %v3617 = vadd.f32 %v3616, %v3586
      %v3618 = vadd.f32 %v3617, %v3587
      %v3619 = vadd.f32 %v3618, %v3588
      %v3620 = vadd.f32 %v3619, %v3589
      %v3621 = vadd.f32 %v3620, %v3590
      %v3622 = vadd.f32 %v3621, %v3591
      %v3623 = vadd.f32 %v3622, %v3592
      %v3624 = vadd.f32 %v3623, %v3593
      %v3625 = vadd.f32 %v3624, %v3594
      %v3626 = vadd.f32 %v3625, %v3595
      %v3627 = vadd.f32 %v3626, %v3596
      %v3628 = vadd.f32 %v3627, %v3597
      %v3629 = vadd.f32 %v3628, %v3598
      %v3630 = vadd.f32 %v3629, %v3599
      %v3631 = vadd.f32 %v3630, %v3600
      %v3632 = vadd.f32 %v3631, %v3601
      %v3633 = vadd.f32 %v3632, %v3602
      %v3634 = vadd.f32 %v3633, %v3603
      %v3635 = vrot.slane %v3634, 4
      %v3636 = vadd.f32 %v3634, %v3635
      %v3637 = vrot.slane %v3636, 2
      %v3638 = vadd.f32 %v3636, %v3637
      %v3639 = vrot.slane %v3638, 1
      %v3640 = vadd.f32 %v3638, %v3639
      %vm3641 = vcmask 1040384
      %v3642 = vsel %vm3641, %v3571, %v3640
      %v3643 = vadd.f32 %v3534, %v3642
      %3644 = vst [vmem:[%s420] sm:$0x3] %v3643
      %v3645 = vpack.c.bf16 %v3498, %v3497
      %v3646 = vpack.c.bf16 %v3500, %v3499
      %v3647 = vpack.c.bf16 %v3502, %v3501
      %v3648 = vpack.c.bf16 %v3504, %v3503
      %v3649 = vpack.c.bf16 %v3506, %v3505
      %v3650 = vpack.c.bf16 %v3508, %v3507
      %v3651 = vpack.c.bf16 %v3510, %v3509
      %v3652 = vpack.c.bf16 %v3512, %v3511
      %v3653 = vpack.c.bf16 %v3514, %v3513
      %v3654 = vpack.c.bf16 %v3516, %v3515
      %v3655 = vpack.c.bf16 %v3518, %v3517
      %v3656 = vpack.c.bf16 %v3520, %v3519
      %v3657 = vpack.c.bf16 %v3522, %v3521
      %v3658 = vpack.c.bf16 %v3524, %v3523
      %v3659 = vpack.c.bf16 %v3526, %v3525
      %v3660 = vpack.c.bf16 %v3528, %v3527
      %v3677 = vunpack.c.l.b16 %v3645
      %v3678 = vunpack.c.h.b16 %v3645
      %v3679 = vunpack.c.l.b16 %v3646
      %v3680 = vunpack.c.h.b16 %v3646
      %v3681 = vunpack.c.l.b16 %v3647
      %v3682 = vunpack.c.h.b16 %v3647
      %v3683 = vunpack.c.l.b16 %v3648
      %v3684 = vunpack.c.h.b16 %v3648
      %v3685 = vunpack.c.l.b16 %v3649
      %v3686 = vunpack.c.h.b16 %v3649
      %v3687 = vunpack.c.l.b16 %v3650
      %v3688 = vunpack.c.h.b16 %v3650
      %v3689 = vunpack.c.l.b16 %v3651
      %v3690 = vunpack.c.h.b16 %v3651
      %v3691 = vunpack.c.l.b16 %v3652
      %v3692 = vunpack.c.h.b16 %v3652
      %v3693 = vunpack.c.l.b16 %v3653
      %v3694 = vunpack.c.h.b16 %v3653
      %v3695 = vunpack.c.l.b16 %v3654
      %v3696 = vunpack.c.h.b16 %v3654
      %v3697 = vunpack.c.l.b16 %v3655
      %v3698 = vunpack.c.h.b16 %v3655
      %v3699 = vunpack.c.l.b16 %v3656
      %v3700 = vunpack.c.h.b16 %v3656
      %v3701 = vunpack.c.l.b16 %v3657
      %v3702 = vunpack.c.h.b16 %v3657
      %v3703 = vunpack.c.l.b16 %v3658
      %v3704 = vunpack.c.h.b16 %v3658
      %v3705 = vunpack.c.l.b16 %v3659
      %v3706 = vunpack.c.h.b16 %v3659
      %v3707 = vunpack.c.l.b16 %v3660
      %v3708 = vunpack.c.h.b16 %v3660
      %v3709 = vpack.c.b16 %v3677, %v3677
      %v3710 = vpack.c.b16 %v3678, %v3678
      %v3711 = vpack.c.b16 %v3679, %v3679
      %v3712 = vpack.c.b16 %v3680, %v3680
      %v3713 = vpack.c.b16 %v3681, %v3681
      %v3714 = vpack.c.b16 %v3682, %v3682
      %v3715 = vpack.c.b16 %v3683, %v3683
      %v3716 = vpack.c.b16 %v3684, %v3684
      %v3717 = vpack.c.b16 %v3685, %v3685
      %v3718 = vpack.c.b16 %v3686, %v3686
      %v3719 = vpack.c.b16 %v3687, %v3687
      %v3720 = vpack.c.b16 %v3688, %v3688
      %v3721 = vpack.c.b16 %v3689, %v3689
      %v3722 = vpack.c.b16 %v3690, %v3690
      %v3723 = vpack.c.b16 %v3691, %v3691
      %v3724 = vpack.c.b16 %v3692, %v3692
      %v3725 = vpack.c.b16 %v3693, %v3693
      %v3726 = vpack.c.b16 %v3694, %v3694
      %v3727 = vpack.c.b16 %v3695, %v3695
      %v3728 = vpack.c.b16 %v3696, %v3696
      %v3729 = vpack.c.b16 %v3697, %v3697
      %v3730 = vpack.c.b16 %v3698, %v3698
      %v3731 = vpack.c.b16 %v3699, %v3699
      %v3732 = vpack.c.b16 %v3700, %v3700
      %v3733 = vpack.c.b16 %v3701, %v3701
      %v3734 = vpack.c.b16 %v3702, %v3702
      %v3735 = vpack.c.b16 %v3703, %v3703
      %v3736 = vpack.c.b16 %v3704, %v3704
      %v3737 = vpack.c.b16 %v3705, %v3705
      %v3738 = vpack.c.b16 %v3706, %v3706
      %v3739 = vpack.c.b16 %v3707, %v3707
      %v3740 = vpack.c.b16 %v3708, %v3708
      %3773 = vst [vmem:[%s410] sm:$0xf] %v3709
      %3774 = vst [vmem:[%s410 + $0x4] sm:$0xf] %v3710
      %3775 = vst [vmem:[%s410 + $0x8] sm:$0xf] %v3711
      %3776 = vst [vmem:[%s410 + $0xc] sm:$0xf] %v3712
      %3777 = vst [vmem:[%s410 + $0x10] sm:$0xf] %v3713
      %3778 = vst [vmem:[%s410 + $0x14] sm:$0xf] %v3714
      %3779 = vst [vmem:[%s410 + $0x18] sm:$0xf] %v3715
      %3780 = vst [vmem:[%s410 + $0x1c] sm:$0xf] %v3716
      %3781 = vst [vmem:[%s410 + $0x20] sm:$0xf] %v3717
      %3782 = vst [vmem:[%s410 + $0x24] sm:$0xf] %v3718
      %3783 = vst [vmem:[%s410 + $0x28] sm:$0xf] %v3719
      %3784 = vst [vmem:[%s410 + $0x2c] sm:$0xf] %v3720
      %3785 = vst [vmem:[%s410 + $0x30] sm:$0xf] %v3721
      %3786 = vst [vmem:[%s410 + $0x34] sm:$0xf] %v3722
      %3787 = vst [vmem:[%s410 + $0x38] sm:$0xf] %v3723
      %3788 = vst [vmem:[%s410 + $0x3c] sm:$0xf] %v3724
      %3789 = vst [vmem:[%s410 + $0x40] sm:$0xf] %v3725
      %3790 = vst [vmem:[%s410 + $0x44] sm:$0xf] %v3726
      %3791 = vst [vmem:[%s410 + $0x48] sm:$0xf] %v3727
      %3792 = vst [vmem:[%s410 + $0x4c] sm:$0xf] %v3728
      %3793 = vst [vmem:[%s410 + $0x50] sm:$0xf] %v3729
      %3794 = vst [vmem:[%s410 + $0x54] sm:$0xf] %v3730
      %3795 = vst [vmem:[%s410 + $0x58] sm:$0xf] %v3731
      %3796 = vst [vmem:[%s410 + $0x5c] sm:$0xf] %v3732
      %3797 = vst [vmem:[%s410 + $0x60] sm:$0xf] %v3733
      %3798 = vst [vmem:[%s410 + $0x64] sm:$0xf] %v3734
      %3799 = vst [vmem:[%s410 + $0x68] sm:$0xf] %v3735
      %3800 = vst [vmem:[%s410 + $0x6c] sm:$0xf] %v3736
      %3801 = vst [vmem:[%s410 + $0x70] sm:$0xf] %v3737
      %3802 = vst [vmem:[%s410 + $0x74] sm:$0xf] %v3738
      %3803 = vst [vmem:[%s410 + $0x78] sm:$0xf] %v3739
      %3804 = vst [vmem:[%s410 + $0x7c] sm:$0xf] %v3740
      %s3805 = smul.u32 %s22, 2
      %s3806 = sadd.s32 %s3805, %s24
      %s3807 = smul.u32 32, %s3806
      %p3808 = scmp.lt.s32.totalorder %s3807, 127
      %s3809 = scalar_select %p3808, %s3807, 127
      %p3810 = scmp.lt.s32.totalorder %s23, 0
      %s3811 = scalar_select %p3810, %s23, 0
      %s3812 = sadd.s32 %s3811, %s3809
      %s3813 = smul.addr %s3812, 4
      %s3814 = scalar_lea.vmem %s4, %s3813
      %p3815 = scmp.lt.s32.totalorder %s22, 1
      %s3816 = scalar_select %p3815, %s22, 1
      %p3817 = scmp.lt.s32.totalorder %s23, 0
      %s3818 = scalar_select %p3817, %s23, 0
      %s3819 = sadd.s32 %s3818, %s3816
      %s3820 = smul.addr %s3819, 2
      %s3821 = scalar_lea.vmem %s5, %s3820
      // Predicated region
      $region41: #{bottleneck_forward.6} parent=35 // pred_check
        %p3822 = pneg %p180
      $region42: #{bottleneck_forward.6} parent=35 // pred_check_branch
        %3824 = sbr.rel (%p3822) target = $region44
      $region43: #{bottleneck_forward.6} parent=35 // pred_region
        %s3825 = smul.u32 %s22, 2
        %s3826 = sadd.s32 %s3825, %s24
        %s3827 = smul.u32 32, %s3826
      $region44: #{bottleneck_forward.6} parent=35 // pred_fallthru
        _
      // Predicated region
      $region45: #{bottleneck_forward.6} parent=35 // pred_check
        %p3828 = pneg %p208
      $region46: #{bottleneck_forward.6} parent=35 // pred_check_branch
        %3830 = sbr.rel (%p3828) target = $region48
      $region47: #{bottleneck_forward.6} parent=35 // pred_region
        _
      $region48: #{bottleneck_forward.6} parent=35 // pred_fallthru
        _
    $region36: #{bottleneck_forward.6} parent=5 // pred_fallthru
      _
    %p3831 = scmp.le.s32.totalorder 2, %s12
    // Predicated region
    $region49: #{bottleneck_forward.6} parent=5 // pred_check
      %p3832 = pneg %p3831
    $region50: #{bottleneck_forward.6} parent=5 // pred_check_branch
      %3834 = sbr.rel (%p3832) target = $region52
    $region51: #{bottleneck_forward.6} parent=5 // pred_region
      %s3835 = ssub.s32 %s12, 2
      // Predicated region
      $region53: #{bottleneck_forward.6} parent=51 // pred_check
        %p3836 = pneg %p186
      $region54: #{bottleneck_forward.6} parent=51 // pred_check_branch
        %3838 = sbr.rel (%p3836) target = $region56
      $region55: #{bottleneck_forward.6} parent=51 // pred_region
        %s3839 = smul.u32 %s25, 2
        %s3840 = sadd.s32 %s3839, %s27
        %s3841 = smul.u32 32, %s3840
        %p3842 = scmp.lt.s32.totalorder %s3841, 127
        %s3843 = scalar_select %p3842, %s3841, 127
        %p3844 = scmp.lt.s32.totalorder %s26, 0
        %s3845 = scalar_select %p3844, %s26, 0
        %s3846 = sadd.s32 %s3845, %s3843
        %s3847 = smul.addr %s3846, 4
        %s3848 = scalar_lea.vmem %s4, %s3847
      $region56: #{bottleneck_forward.6} parent=51 // pred_fallthru
        _
      // Predicated region
      $region57: #{bottleneck_forward.6} parent=51 // pred_check
        %p3849 = pneg %p214
      $region58: #{bottleneck_forward.6} parent=51 // pred_check_branch
        %3851 = sbr.rel (%p3849) target = $region60
      $region59: #{bottleneck_forward.6} parent=51 // pred_region
        %p3852 = scmp.lt.s32.totalorder %s25, 1
        %s3853 = scalar_select %p3852, %s25, 1
        %p3854 = scmp.lt.s32.totalorder %s26, 0
        %s3855 = scalar_select %p3854, %s26, 0
        %s3856 = sadd.s32 %s3855, %s3853
        %s3857 = smul.addr %s3856, 2
        %s3858 = scalar_lea.vmem %s5, %s3857
      $region60: #{bottleneck_forward.6} parent=51 // pred_fallthru
        _
    $region52: #{bottleneck_forward.6} parent=5 // pred_fallthru
      _
  $region6: #{bottleneck_forward.6} parent=0 // loop_footer
    %s16 = sadd.s32 1, %s12
  $region7: #{bottleneck_forward.6} parent=0 // loop_footer_branch
    %11 = sbr.rel target = $region3
  $region8: #{bottleneck_forward.6} parent=0 // loop_exit
    _

</llo_original>
